<compile_context>
chip_gen: v7x
topology: tpu7x:2x2x1
jax: 0.10.0
libtpu: 0.0.40
codegen_flags: <defaults>
</compile_context>

<pallas_src>
import functools
import math

import jax
import jax.numpy as jnp
from jax import lax
from jax.experimental import pallas as pl
from jax.experimental.pallas import tpu as pltpu

LN_EPS = 1e-5


def _round_up(x, m):
    return (x + m - 1) // m * m


def _pick_tile(dim, candidates):
    """Largest candidate tile that evenly divides `dim`, else the full dim."""
    for c in candidates:
        if dim % c == 0:
            return c
    return dim


@functools.lru_cache(maxsize=None)
def _vmem_limit_bytes():
    """Scoped-VMEM budget: ~3/4 of physical (96 MiB on v5e/v6e, 48 MiB on v7x)."""
    try:
        cap = pltpu.get_tpu_info().vmem_capacity_bytes
        return int(min(96 * 1024 * 1024, (cap * 3) // 4))
    except Exception:  # pragma: no cover - conservative fallback
        return 32 * 1024 * 1024


# ------- fused patch embed: linear + CLS prepend + pos add + S padding ------

def _embed_kernel(patches_ref, w_ref, b_ref, cls_ref, pos_ref, o_ref):
    # patches_ref: [1, N, P] bf16; w: [P, D] bf16; b/cls: [1, D]; pos: [S_pad, D]
    n_tok = patches_ref.shape[1]
    s_pad, d = o_ref.shape[1], o_ref.shape[2]

    tok = jnp.dot(patches_ref[0], w_ref[...],
                  preferred_element_type=jnp.float32)
    tok = tok + b_ref[...].astype(jnp.float32)                    # [N, D] f32
    pos = pos_ref[...].astype(jnp.float32)                        # [S_pad, D]

    cls_row = cls_ref[...].astype(jnp.float32) + pos[0:1]         # [1, D]
    o_ref[0, 0:1, :] = cls_row.astype(o_ref.dtype)
    o_ref[0, 1:n_tok + 1, :] = (tok + pos[1:n_tok + 1]).astype(o_ref.dtype)
    if s_pad > n_tok + 1:                                         # zero padding rows
        o_ref[0, n_tok + 1:, :] = jnp.zeros((s_pad - n_tok - 1, d), o_ref.dtype)


def embed_sequence(patches, w, b, cls_tok, pos, s_pad):
    """patches: [B, N, P] bf16 -> [B, S_pad, D] bf16 (CLS + pos fused in)."""
    B, N, P = patches.shape
    D = w.shape[1]

    return pl.pallas_call(
        _embed_kernel,
        grid=(B,),
        in_specs=[
            pl.BlockSpec((1, N, P), lambda bb: (bb, 0, 0)),
            pl.BlockSpec((P, D), lambda bb: (0, 0)),
            pl.BlockSpec((1, D), lambda bb: (0, 0)),
            pl.BlockSpec((1, D), lambda bb: (0, 0)),
            pl.BlockSpec((s_pad, D), lambda bb: (0, 0)),
        ],
        out_specs=pl.BlockSpec((1, s_pad, D), lambda bb: (bb, 0, 0)),
        out_shape=jax.ShapeDtypeStruct((B, s_pad, D), jnp.bfloat16),
        compiler_params=pltpu.CompilerParams(
            dimension_semantics=("parallel",),
            vmem_limit_bytes=_vmem_limit_bytes()),
    )(patches, w, b.reshape(1, D), cls_tok.reshape(1, D), pos)


# ------- fused attention block: QKV + per-head attn + Wo + residual + LN ----

def _attn_block_kernel(x_ref, wqkv_ref, bqkv_ref, wo_ref, bo_ref, g_ref, b_ref,
                       o_ref, *, n_head, seq_len, eps):
    s_pad, d = x_ref.shape[1], x_ref.shape[2]
    dh = d // n_head
    scale = 1.0 / math.sqrt(dh)

    x = x_ref[0]                                                  # [S_pad, D] bf16

    # Fused QKV projection: one matmul, full-D contraction.
    qkv = jnp.dot(x, wqkv_ref[...], preferred_element_type=jnp.float32)
    qkv = qkv + bqkv_ref[...].astype(jnp.float32)                 # [S_pad, 3D] f32

    # Key-padding mask (rows >= seq_len are padding; they must not attend).
    kidx = lax.broadcasted_iota(jnp.int32, (s_pad, s_pad), 1)
    kmask = kidx < seq_len

    # Short static head loop.  With dh a multiple of 128 (demo: dh=128) every
    # q/k/v slice below is 128-lane aligned -> a free view, no relayout.
    head_outs = []
    for h in range(n_head):
        q = qkv[:, h * dh:(h + 1) * dh].astype(jnp.bfloat16)
        k = qkv[:, d + h * dh:d + (h + 1) * dh].astype(jnp.bfloat16)
        v = qkv[:, 2 * d + h * dh:2 * d + (h + 1) * dh].astype(jnp.bfloat16)
        # Contract on the head dim directly (no k.T relayout).
        s = lax.dot_general(q, k, (((1,), (1,)), ((), ())),
                            preferred_element_type=jnp.float32) * scale
        s = jnp.where(kmask, s, -1e30)
        m = jnp.max(s, axis=-1, keepdims=True)
        p = jnp.exp(s - m)                                        # f32 EUP path
        l = jnp.sum(p, axis=-1, keepdims=True)
        p = p * pl.reciprocal(l, approx=True)                     # EUP slot, ~free
        head_outs.append(jnp.dot(p.astype(jnp.bfloat16), v,
                                 preferred_element_type=jnp.float32))  # [S, dh]

    # ONE output projection contracting over the full D (review item #1).
    attn = jnp.concatenate(head_outs, axis=-1).astype(jnp.bfloat16)    # [S, D]
    proj = jnp.dot(attn, wo_ref[...], preferred_element_type=jnp.float32)

    # Residual recomputed late from the bf16 input (small live set) + post-LN.
    y = x.astype(jnp.float32) + proj + bo_ref[...].astype(jnp.float32)
    mean = jnp.mean(y, axis=-1, keepdims=True)
    yc = y - mean
    var = jnp.mean(yc * yc, axis=-1, keepdims=True)
    out = (yc * lax.rsqrt(var + eps) * g_ref[...].astype(jnp.float32)
           + b_ref[...].astype(jnp.float32))
    o_ref[0] = out.astype(o_ref.dtype)


def attention_block(x, wqkv, bqkv, wo, bo, g, b, n_head, seq_len):
    """x: [B, S_pad, D] bf16 -> LN(x + MHA(x)): [B, S_pad, D] bf16."""
    B, S, D = x.shape

    def full(shape):
        return pl.BlockSpec(shape, lambda bb: (0,) * len(shape))

    return pl.pallas_call(
        functools.partial(_attn_block_kernel, n_head=n_head, seq_len=seq_len,
                          eps=LN_EPS),
        grid=(B,),
        in_specs=[
            pl.BlockSpec((1, S, D), lambda bb: (bb, 0, 0)),
            full((D, 3 * D)),
            full((1, 3 * D)),
            full((D, D)),
            full((1, D)),
            full((1, D)),
            full((1, D)),
        ],
        out_specs=pl.BlockSpec((1, S, D), lambda bb: (bb, 0, 0)),
        out_shape=jax.ShapeDtypeStruct((B, S, D), jnp.bfloat16),
        compiler_params=pltpu.CompilerParams(
            dimension_semantics=("parallel",),
            vmem_limit_bytes=_vmem_limit_bytes()),
    )(x, wqkv, bqkv.reshape(1, 3 * D), wo, bo.reshape(1, D),
      g.reshape(1, D), b.reshape(1, D))


# ---- fused MLP block, d_ff streamed: w1-chunk + ReLU + w2-chunk (+res+LN) ---

def _mlp_block_kernel(x_ref, w1_ref, b1_ref, w2_ref, b2_ref, g_ref, b_ref,
                      o_ref, acc_ref, *, eps):
    # Grid: (M/tm, dff/tf); dff axis is the last, "arbitrary" reduction axis.
    @pl.when(pl.program_id(1) == 0)
    def _():
        acc_ref[...] = jnp.zeros_like(acc_ref)

    x = x_ref[...]                                                # [tm, D] bf16
    h = jnp.dot(x, w1_ref[...], preferred_element_type=jnp.float32)
    h = jnp.maximum(h + b1_ref[...].astype(jnp.float32), 0.0)     # [tm, tf]
    acc_ref[...] += jnp.dot(h.astype(jnp.bfloat16), w2_ref[...],
                            preferred_element_type=jnp.float32)   # [tm, D]

    @pl.when(pl.program_id(1) == pl.num_programs(1) - 1)
    def _():
        y = x.astype(jnp.float32) + acc_ref[...] + b2_ref[...].astype(jnp.float32)
        mean = jnp.mean(y, axis=-1, keepdims=True)
        yc = y - mean
        var = jnp.mean(yc * yc, axis=-1, keepdims=True)
        out = (yc * lax.rsqrt(var + eps) * g_ref[...].astype(jnp.float32)
               + b_ref[...].astype(jnp.float32))
        o_ref[...] = out.astype(o_ref.dtype)


def mlp_block(x2, w1, b1, w2, b2, g, b):
    """x2: [M, D] bf16 -> LN(x2 + MLP(x2)): [M, D] bf16."""
    M, D = x2.shape
    dff = w1.shape[1]
    tm = _pick_tile(M, (256, 128))
    tf = _pick_tile(dff, (512, 256))
    grid = (M // tm, dff // tf)
    return pl.pallas_call(
        functools.partial(_mlp_block_kernel, eps=LN_EPS),
        grid=grid,
        in_specs=[
            pl.BlockSpec((tm, D), lambda i, f: (i, 0)),
            pl.BlockSpec((D, tf), lambda i, f: (0, f)),
            pl.BlockSpec((1, tf), lambda i, f: (0, f)),
            pl.BlockSpec((tf, D), lambda i, f: (f, 0)),
            pl.BlockSpec((1, D), lambda i, f: (0, 0)),
            pl.BlockSpec((1, D), lambda i, f: (0, 0)),
            pl.BlockSpec((1, D), lambda i, f: (0, 0)),
        ],
        out_specs=pl.BlockSpec((tm, D), lambda i, f: (i, 0)),
        out_shape=jax.ShapeDtypeStruct((M, D), jnp.bfloat16),
        scratch_shapes=[pltpu.VMEM((tm, D), jnp.float32)],
        compiler_params=pltpu.CompilerParams(
            dimension_semantics=("parallel", "arbitrary"),
            vmem_limit_bytes=_vmem_limit_bytes()),
    )(x2, w1, b1.reshape(1, dff), w2, b2.reshape(1, D),
      g.reshape(1, D), b.reshape(1, D))


# ------------- fused CLS head: layer_norm (no affine) + classifier ----------

def _cls_head_kernel(x_ref, w_ref, b_ref, o_ref, *, eps):
    x = x_ref[...].astype(jnp.float32)
    mean = jnp.mean(x, axis=-1, keepdims=True)
    xc = x - mean
    var = jnp.mean(xc * xc, axis=-1, keepdims=True)
    xn = xc * lax.rsqrt(var + eps)
    logits = jnp.dot(xn.astype(jnp.bfloat16), w_ref[...],
                     preferred_element_type=jnp.float32)
    o_ref[...] = logits + b_ref[...].astype(jnp.float32)


def cls_head(x, w, b):
    """x: [B, D] -> F.layer_norm(x) @ w + b.  w/b are lane-padded to 128."""
    B, D = x.shape
    Npad = w.shape[1]
    return pl.pallas_call(
        functools.partial(_cls_head_kernel, eps=LN_EPS),
        in_specs=[pl.BlockSpec(memory_space=pltpu.MemorySpace.VMEM)] * 3,
        out_specs=pl.BlockSpec(memory_space=pltpu.MemorySpace.VMEM),
        out_shape=jax.ShapeDtypeStruct((B, Npad), jnp.float32),
    )(x, w, b.reshape(1, Npad))


# ----------------------------- model definition ----------------------------

def init_params(key, *, d_model, n_head, n_layers, n_patch, n_class, max_len,
                in_ch, img_size):
    ph = img_size // n_patch
    patch_dim = in_ch * ph * ph
    d_ff = d_model * 4
    n_class_pad = _round_up(n_class, 128)     # lane-dense classifier output

    def dense(k, fan_in, fan_out):
        kw, kb = jax.random.split(k)
        lim = 1.0 / math.sqrt(fan_in)
        w = jax.random.uniform(kw, (fan_in, fan_out), jnp.float32, -lim, lim)
        b = jax.random.uniform(kb, (fan_out,), jnp.float32, -lim, lim)
        return w.astype(jnp.bfloat16), b       # weights bf16, biases f32

    keys = jax.random.split(key, 4 + n_layers)
    params = {}
    params["patch_w"], params["patch_b"] = dense(keys[0], patch_dim, d_model)
    params["cls"] = (0.02 * jax.random.normal(keys[1], (1, d_model),
                                              jnp.float32)).astype(jnp.bfloat16)
    params["pos"] = (0.02 * jax.random.normal(keys[2], (max_len, d_model),
                                              jnp.float32)).astype(jnp.bfloat16)
    hw, hb = dense(keys[3], d_model, n_class)
    params["head_w"] = jnp.pad(hw, ((0, 0), (0, n_class_pad - n_class)))
    params["head_b"] = jnp.pad(hb, ((0, n_class_pad - n_class),))

    layers = []
    for i in range(n_layers):
        lk = jax.random.split(keys[4 + i], 6)
        lp = {}
        wq, bq = dense(lk[0], d_model, d_model)
        wk, bk = dense(lk[1], d_model, d_model)
        wv, bv = dense(lk[2], d_model, d_model)
        lp["wqkv"] = jnp.concatenate([wq, wk, wv], axis=1)   # fused [D, 3D]
        lp["bqkv"] = jnp.concatenate([bq, bk, bv], axis=0)   # fused [3D]
        lp["wo"], lp["bo"] = dense(lk[3], d_model, d_model)
        lp["w1"], lp["b1"] = dense(lk[4], d_model, d_ff)
        lp["w2"], lp["b2"] = dense(lk[5], d_ff, d_model)
        lp["ln1_g"] = jnp.ones((d_model,), jnp.float32)
        lp["ln1_b"] = jnp.zeros((d_model,), jnp.float32)
        lp["ln2_g"] = jnp.ones((d_model,), jnp.float32)
        lp["ln2_b"] = jnp.zeros((d_model,), jnp.float32)
        layers.append(lp)
    params["layers"] = layers
    return params


def vit_forward(params, x, *, d_model, n_head, n_patch, n_class):
    # x: [B, C, H, W] (NCHW, like PyTorch)
    B, C, H, W = x.shape
    ph, pw = H // n_patch, W // n_patch
    N = n_patch * n_patch
    S = N + 1
    S_pad = _round_up(S, 8)                   # sublane-friendly sequence length
    assert params["pos"].shape[0] >= S_pad, "max_len must cover padded seq"

    # --- patchify (pure layout op, left to XLA) + bf16 cast once ---
    patches = x.reshape(B, C, n_patch, ph, n_patch, pw)
    patches = patches.transpose(0, 2, 4, 1, 3, 5).reshape(B, N, C * ph * pw)
    patches = patches.astype(jnp.bfloat16)

    # --- EmbedSequence: linear embed + CLS + pos + padding, one fused kernel ---
    seq = embed_sequence(patches, params["patch_w"], params["patch_b"],
                         params["cls"], params["pos"][:S_pad], S_pad)

    # --- TransformerEncoder (post-LN): two fused kernels per layer ---
    h = seq
    for lp in params["layers"]:
        h = attention_block(h, lp["wqkv"], lp["bqkv"], lp["wo"], lp["bo"],
                            lp["ln1_g"], lp["ln1_b"], n_head, seq_len=S)
        h = mlp_block(h.reshape(B * S_pad, d_model),
                      lp["w1"], lp["b1"], lp["w2"], lp["b2"],
                      lp["ln2_g"], lp["ln2_b"]).reshape(B, S_pad, d_model)

    # --- head: CLS token -> layer_norm (no affine) + linear (fused) ---
    cls_out = h[:, 0]                                             # [B, D] bf16
    logits = cls_head(cls_out, params["head_w"], params["head_b"])
    return logits[:, :n_class]                                    # drop lane padding


# --------------------------------- main -------------------------------------

if __name__ == "__main__":
    # Small config; d_model is a multiple of 128 and head_dim = 128 so every
    # per-head slice and every output store is lane-dense.
    d_model, n_head, n_layers = 256, 2, 2
    n_patch, n_class, max_len = 4, 10, 32
    B, C, Himg, Wimg = 2, 3, 16, 16

    key = jax.random.PRNGKey(0)
    pkey, xkey = jax.random.split(key)
    params = init_params(pkey, d_model=d_model, n_head=n_head,
                         n_layers=n_layers, n_patch=n_patch,
                         n_class=n_class, max_len=max_len,
                         in_ch=C, img_size=Himg)
    x = jax.random.normal(xkey, (B, C, Himg, Wimg), jnp.float32)

    fwd = jax.jit(functools.partial(vit_forward, d_model=d_model,
                                    n_head=n_head, n_patch=n_patch,
                                    n_class=n_class))
    logits = fwd(params, x)
    jax.block_until_ready(logits)
    assert logits.shape == (B, n_class), logits.shape
    assert jnp.all(jnp.isfinite(logits))
    print("KERNEL_OK")
</pallas_src>

<mosaic_0001>
module attributes {stable_mosaic.version = 11 : i64} {
  func.func @_mlp_block_kernel(%arg0: i32, %arg1: i32, %arg2: memref<48x256xbf16, #tpu.memory_space<vmem>>, %arg3: memref<256x512xbf16, #tpu.memory_space<vmem>>, %arg4: memref<1x512xf32, #tpu.memory_space<vmem>>, %arg5: memref<512x256xbf16, #tpu.memory_space<vmem>>, %arg6: memref<1x256xf32, #tpu.memory_space<vmem>>, %arg7: memref<1x256xf32, #tpu.memory_space<vmem>>, %arg8: memref<1x256xf32, #tpu.memory_space<vmem>>, %arg9: memref<48x256xbf16, #tpu.memory_space<vmem>>, %arg10: memref<48x256xf32, #tpu.memory_space<vmem>>) attributes {dimension_semantics = [#tpu.dimension_semantics<parallel>, #tpu.dimension_semantics<arbitrary>], iteration_bounds = array<i64: 1, 2>, scalar_prefetch = 0 : i64, scratch_operands = 1 : i64, tpu.core_type = #tpu.core_type<tc>, window_params = [{transform_indices = @transform_0, window_bounds = array<i64: 48, 256>}, {transform_indices = @transform_1, window_bounds = array<i64: 256, 512>}, {transform_indices = @transform_2, window_bounds = array<i64: 1, 512>}, {transform_indices = @transform_3, window_bounds = array<i64: 512, 256>}, {pipeline_mode = #tpu.pipeline_mode<synchronous>, transform_indices = @transform_4, window_bounds = array<i64: 1, 256>}, {pipeline_mode = #tpu.pipeline_mode<synchronous>, transform_indices = @transform_5, window_bounds = array<i64: 1, 256>}, {pipeline_mode = #tpu.pipeline_mode<synchronous>, transform_indices = @transform_6, window_bounds = array<i64: 1, 256>}, {transform_indices = @transform_7, window_bounds = array<i64: 48, 256>}]} {
    %c0_i32 = arith.constant 0 : i32
    %0 = arith.cmpi eq, %arg1, %c0_i32 : i32
    %1 = arith.extui %0 : i1 to i32
    %c0_i32_0 = arith.constant 0 : i32
    %2 = arith.cmpi ne, %1, %c0_i32_0 : i32
    scf.if %2 {
      %cst_15 = arith.constant 0.000000e+00 : f32
      %20 = vector.broadcast %cst_15 : f32 to vector<48x256xf32>
      %c0_16 = arith.constant 0 : index
      %c0_17 = arith.constant 0 : index
      %21 = vector.load %arg10[%c0_16, %c0_17] : memref<48x256xf32, #tpu.memory_space<vmem>>, vector<48x256xf32>
      tpu.vector_store %arg10[%c0_16, %c0_17], %20 {strides = array<i32>} : memref<48x256xf32, #tpu.memory_space<vmem>>, vector<48x256xf32>,
    } else {
    }
    %c0 = arith.constant 0 : index
    %c0_1 = arith.constant 0 : index
    %3 = vector.load %arg2[%c0, %c0_1] : memref<48x256xbf16, #tpu.memory_space<vmem>>, vector<48x256xbf16>
    %c0_2 = arith.constant 0 : index
    %c0_3 = arith.constant 0 : index
    %4 = vector.load %arg3[%c0_2, %c0_3] : memref<256x512xbf16, #tpu.memory_space<vmem>>, vector<256x512xbf16>
    %cst = arith.constant dense<0.000000e+00> : vector<48x512xf32>
    %5 = tpu.matmul %3, %4, %cst {dimension_numbers = #tpu.dot_dimension_numbers<[1], [0], [0], [1], [0, 0, 1, 1], [], []>} : vector<48x256xbf16>, vector<256x512xbf16>, vector<48x512xf32> -> vector<48x512xf32>
    %c0_4 = arith.constant 0 : index
    %c0_5 = arith.constant 0 : index
    %6 = vector.load %arg4[%c0_4, %c0_5] : memref<1x512xf32, #tpu.memory_space<vmem>>, vector<1x512xf32>
    %7 = vector.broadcast %6 : vector<1x512xf32> to vector<48x512xf32>
    %8 = arith.addf %5, %7 : vector<48x512xf32>
    %cst_6 = arith.constant 0.000000e+00 : f32
    %9 = vector.broadcast %cst_6 : f32 to vector<48x512xf32>
    %10 = arith.maximumf %8, %9 : vector<48x512xf32>
    %c0_7 = arith.constant 0 : index
    %c0_8 = arith.constant 0 : index
    %11 = vector.load %arg10[%c0_7, %c0_8] : memref<48x256xf32, #tpu.memory_space<vmem>>, vector<48x256xf32>
    %12 = arith.truncf %10 : vector<48x512xf32> to vector<48x512xbf16>
    %c0_9 = arith.constant 0 : index
    %c0_10 = arith.constant 0 : index
    %13 = vector.load %arg5[%c0_9, %c0_10] : memref<512x256xbf16, #tpu.memory_space<vmem>>, vector<512x256xbf16>
    %cst_11 = arith.constant dense<0.000000e+00> : vector<48x256xf32>
    %14 = tpu.matmul %12, %13, %cst_11 {dimension_numbers = #tpu.dot_dimension_numbers<[1], [0], [0], [1], [0, 0, 1, 1], [], []>} : vector<48x512xbf16>, vector<512x256xbf16>, vector<48x256xf32> -> vector<48x256xf32>
    %15 = arith.addf %11, %14 : vector<48x256xf32>
    %c0_12 = arith.constant 0 : index
    %c0_13 = arith.constant 0 : index
    %16 = vector.load %arg10[%c0_12, %c0_13] : memref<48x256xf32, #tpu.memory_space<vmem>>, vector<48x256xf32>
    tpu.vector_store %arg10[%c0_12, %c0_13], %15 {strides = array<i32>} : memref<48x256xf32, #tpu.memory_space<vmem>>, vector<48x256xf32>,
    %c1_i32 = arith.constant 1 : i32
    %17 = arith.cmpi eq, %arg1, %c1_i32 : i32
    %18 = arith.extui %17 : i1 to i32
    %c0_i32_14 = arith.constant 0 : i32
    %19 = arith.cmpi ne, %18, %c0_i32_14 : i32
    scf.if %19 {
      %20 = arith.extf %3 : vector<48x256xbf16> to vector<48x256xf32>
      %c0_15 = arith.constant 0 : index
      %c0_16 = arith.constant 0 : index
      %21 = vector.load %arg10[%c0_15, %c0_16] : memref<48x256xf32, #tpu.memory_space<vmem>>, vector<48x256xf32>
      %22 = arith.addf %20, %21 : vector<48x256xf32>
      %c0_17 = arith.constant 0 : index
      %c0_18 = arith.constant 0 : index
      %23 = vector.load %arg6[%c0_17, %c0_18] : memref<1x256xf32, #tpu.memory_space<vmem>>, vector<1x256xf32>
      %24 = vector.broadcast %23 : vector<1x256xf32> to vector<48x256xf32>
      %25 = arith.addf %22, %24 : vector<48x256xf32>
      %cst_19 = arith.constant dense<0.000000e+00> : vector<48xf32>
      %26 = vector.multi_reduction <add>, %25, %cst_19 [1] : vector<48x256xf32> to vector<48xf32>
      %27 = vector.shape_cast %26 : vector<48xf32> to vector<48x1xf32>
      %cst_20 = arith.constant 2.560000e+02 : f32
      %28 = vector.broadcast %cst_20 : f32 to vector<48x1xf32>
      %29 = arith.divf %27, %28 : vector<48x1xf32>
      %30 = vector.broadcast %29 : vector<48x1xf32> to vector<48x256xf32>
      %31 = arith.subf %25, %30 : vector<48x256xf32>
      %32 = arith.mulf %31, %31 : vector<48x256xf32>
      %cst_21 = arith.constant dense<0.000000e+00> : vector<48xf32>
      %33 = vector.multi_reduction <add>, %32, %cst_21 [1] : vector<48x256xf32> to vector<48xf32>
      %34 = vector.shape_cast %33 : vector<48xf32> to vector<48x1xf32>
      %cst_22 = arith.constant 2.560000e+02 : f32
      %35 = vector.broadcast %cst_22 : f32 to vector<48x1xf32>
      %36 = arith.divf %34, %35 : vector<48x1xf32>
      %cst_23 = arith.constant 9.99999974E-6 : f32
      %37 = vector.broadcast %cst_23 : f32 to vector<48x1xf32>
      %38 = arith.addf %36, %37 : vector<48x1xf32>
      %39 = math.rsqrt %38 : vector<48x1xf32>
      %40 = vector.broadcast %39 : vector<48x1xf32> to vector<48x256xf32>
      %41 = arith.mulf %31, %40 : vector<48x256xf32>
      %c0_24 = arith.constant 0 : index
      %c0_25 = arith.constant 0 : index
      %42 = vector.load %arg7[%c0_24, %c0_25] : memref<1x256xf32, #tpu.memory_space<vmem>>, vector<1x256xf32>
      %43 = vector.broadcast %42 : vector<1x256xf32> to vector<48x256xf32>
      %44 = arith.mulf %41, %43 : vector<48x256xf32>
      %c0_26 = arith.constant 0 : index
      %c0_27 = arith.constant 0 : index
      %45 = vector.load %arg8[%c0_26, %c0_27] : memref<1x256xf32, #tpu.memory_space<vmem>>, vector<1x256xf32>
      %46 = vector.broadcast %45 : vector<1x256xf32> to vector<48x256xf32>
      %47 = arith.addf %44, %46 : vector<48x256xf32>
      %48 = arith.truncf %47 : vector<48x256xf32> to vector<48x256xbf16>
      %c0_28 = arith.constant 0 : index
      %c0_29 = arith.constant 0 : index
      %49 = vector.load %arg9[%c0_28, %c0_29] : memref<48x256xbf16, #tpu.memory_space<vmem>>, vector<48x256xbf16>
      tpu.vector_store %arg9[%c0_28, %c0_29], %48 {strides = array<i32>} : memref<48x256xbf16, #tpu.memory_space<vmem>>, vector<48x256xbf16>,
    } else {
    }
    return
  }
  func.func @transform_0(%arg0: i32, %arg1: i32) -> (i32, i32) {
    %c0_i32 = arith.constant 0 : i32
    %c0_i32_0 = arith.constant 0 : i32
    return %arg0, %c0_i32 : i32, i32
  }
  func.func @transform_1(%arg0: i32, %arg1: i32) -> (i32, i32) {
    %c0_i32 = arith.constant 0 : i32
    %c0_i32_0 = arith.constant 0 : i32
    return %c0_i32, %arg1 : i32, i32
  }
  func.func @transform_2(%arg0: i32, %arg1: i32) -> (i32, i32) {
    %c0_i32 = arith.constant 0 : i32
    %c0_i32_0 = arith.constant 0 : i32
    return %c0_i32, %arg1 : i32, i32
  }
  func.func @transform_3(%arg0: i32, %arg1: i32) -> (i32, i32) {
    %c0_i32 = arith.constant 0 : i32
    %c0_i32_0 = arith.constant 0 : i32
    return %arg1, %c0_i32 : i32, i32
  }
  func.func @transform_4(%arg0: i32, %arg1: i32) -> (i32, i32) {
    %c0_i32 = arith.constant 0 : i32
    %c0_i32_0 = arith.constant 0 : i32
    %c0_i32_1 = arith.constant 0 : i32
    return %c0_i32, %c0_i32_0 : i32, i32
  }
  func.func @transform_5(%arg0: i32, %arg1: i32) -> (i32, i32) {
    %c0_i32 = arith.constant 0 : i32
    %c0_i32_0 = arith.constant 0 : i32
    %c0_i32_1 = arith.constant 0 : i32
    return %c0_i32, %c0_i32_0 : i32, i32
  }
  func.func @transform_6(%arg0: i32, %arg1: i32) -> (i32, i32) {
    %c0_i32 = arith.constant 0 : i32
    %c0_i32_0 = arith.constant 0 : i32
    %c0_i32_1 = arith.constant 0 : i32
    return %c0_i32, %c0_i32_0 : i32, i32
  }
  func.func @transform_7(%arg0: i32, %arg1: i32) -> (i32, i32) {
    %c0_i32 = arith.constant 0 : i32
    %c0_i32_0 = arith.constant 0 : i32
    return %arg0, %c0_i32 : i32, i32
  }
}

module attributes {stable_mosaic.version = 11 : i64} {
  func.func @_attn_block_kernel(%arg0: i32, %arg1: memref<1x24x256xbf16, #tpu.memory_space<vmem>>, %arg2: memref<256x768xbf16, #tpu.memory_space<vmem>>, %arg3: memref<1x768xf32, #tpu.memory_space<vmem>>, %arg4: memref<256x256xbf16, #tpu.memory_space<vmem>>, %arg5: memref<1x256xf32, #tpu.memory_space<vmem>>, %arg6: memref<1x256xf32, #tpu.memory_space<vmem>>, %arg7: memref<1x256xf32, #tpu.memory_space<vmem>>, %arg8: memref<1x24x256xbf16, #tpu.memory_space<vmem>>) attributes {dimension_semantics = [#tpu.dimension_semantics<parallel>], iteration_bounds = array<i64: 2>, scalar_prefetch = 0 : i64, scratch_operands = 0 : i64, tpu.core_type = #tpu.core_type<tc>, window_params = [{transform_indices = @transform_0, window_bounds = array<i64: 1, 24, 256>}, {pipeline_mode = #tpu.pipeline_mode<synchronous>, transform_indices = @transform_1, window_bounds = array<i64: 256, 768>}, {pipeline_mode = #tpu.pipeline_mode<synchronous>, transform_indices = @transform_2, window_bounds = array<i64: 1, 768>}, {pipeline_mode = #tpu.pipeline_mode<synchronous>, transform_indices = @transform_3, window_bounds = array<i64: 256, 256>}, {pipeline_mode = #tpu.pipeline_mode<synchronous>, transform_indices = @transform_4, window_bounds = array<i64: 1, 256>}, {pipeline_mode = #tpu.pipeline_mode<synchronous>, transform_indices = @transform_5, window_bounds = array<i64: 1, 256>}, {pipeline_mode = #tpu.pipeline_mode<synchronous>, transform_indices = @transform_6, window_bounds = array<i64: 1, 256>}, {transform_indices = @transform_7, window_bounds = array<i64: 1, 24, 256>}]} {
    %c0 = arith.constant 0 : index
    %c0_0 = arith.constant 0 : index
    %c0_1 = arith.constant 0 : index
    %0 = vector.load %arg1[%c0, %c0_0, %c0_1] : memref<1x24x256xbf16, #tpu.memory_space<vmem>>, vector<1x24x256xbf16>
    %1 = vector.shape_cast %0 : vector<1x24x256xbf16> to vector<24x256xbf16>
    %c0_2 = arith.constant 0 : index
    %c0_3 = arith.constant 0 : index
    %2 = vector.load %arg2[%c0_2, %c0_3] : memref<256x768xbf16, #tpu.memory_space<vmem>>, vector<256x768xbf16>
    %cst = arith.constant dense<0.000000e+00> : vector<24x768xf32>
    %3 = tpu.matmul %1, %2, %cst {dimension_numbers = #tpu.dot_dimension_numbers<[1], [0], [0], [1], [0, 0, 1, 1], [], []>} : vector<24x256xbf16>, vector<256x768xbf16>, vector<24x768xf32> -> vector<24x768xf32>
    %c0_4 = arith.constant 0 : index
    %c0_5 = arith.constant 0 : index
    %4 = vector.load %arg3[%c0_4, %c0_5] : memref<1x768xf32, #tpu.memory_space<vmem>>, vector<1x768xf32>
    %5 = vector.broadcast %4 : vector<1x768xf32> to vector<24x768xf32>
    %6 = arith.addf %3, %5 : vector<24x768xf32>
    %7 = tpu.iota {dimensions = array<i32: 1>} : vector<24x24xi32>
    %c17_i32 = arith.constant 17 : i32
    %8 = vector.broadcast %c17_i32 : i32 to vector<24x24xi32>
    %9 = arith.cmpi slt, %7, %8 : vector<24x24xi32>
    %10 = vector.extract_strided_slice %6 {offsets = [0, 0], sizes = [24, 128], strides = [1, 1]} : vector<24x768xf32> to vector<24x128xf32>
    %11 = arith.truncf %10 : vector<24x128xf32> to vector<24x128xbf16>
    %12 = vector.extract_strided_slice %6 {offsets = [0, 256], sizes = [24, 128], strides = [1, 1]} : vector<24x768xf32> to vector<24x128xf32>
    %13 = arith.truncf %12 : vector<24x128xf32> to vector<24x128xbf16>
    %14 = vector.extract_strided_slice %6 {offsets = [0, 512], sizes = [24, 128], strides = [1, 1]} : vector<24x768xf32> to vector<24x128xf32>
    %15 = arith.truncf %14 : vector<24x128xf32> to vector<24x128xbf16>
    %cst_6 = arith.constant dense<0.000000e+00> : vector<24x24xf32>
    %16 = tpu.matmul %11, %13, %cst_6 {dimension_numbers = #tpu.dot_dimension_numbers<[1], [1], [0], [0], [0, 0, 1, 0], [], []>} : vector<24x128xbf16>, vector<24x128xbf16>, vector<24x24xf32> -> vector<24x24xf32>
    %cst_7 = arith.constant 0.0883883461 : f32
    %17 = vector.broadcast %cst_7 : f32 to vector<24x24xf32>
    %18 = arith.mulf %16, %17 : vector<24x24xf32>
    %cst_8 = arith.constant -1.000000e+30 : f32
    %19 = vector.broadcast %cst_8 : f32 to vector<24x24xf32>
    %20 = arith.select %9, %18, %19 : vector<24x24xi1>, vector<24x24xf32>
    %cst_9 = arith.constant dense<0xFF800000> : vector<24xf32>
    %21 = vector.multi_reduction <maximumf>, %20, %cst_9 [1] : vector<24x24xf32> to vector<24xf32>
    %22 = vector.shape_cast %21 : vector<24xf32> to vector<24x1xf32>
    %23 = vector.broadcast %22 : vector<24x1xf32> to vector<24x24xf32>
    %24 = arith.subf %20, %23 : vector<24x24xf32>
    %25 = math.exp %24 : vector<24x24xf32>
    %cst_10 = arith.constant dense<0.000000e+00> : vector<24xf32>
    %26 = vector.multi_reduction <add>, %25, %cst_10 [1] : vector<24x24xf32> to vector<24xf32>
    %27 = vector.shape_cast %26 : vector<24xf32> to vector<24x1xf32>
    %28 = tpu.reciprocal %27 {approx = true} : vector<24x1xf32> -> vector<24x1xf32>
    %29 = vector.broadcast %28 : vector<24x1xf32> to vector<24x24xf32>
    %30 = arith.mulf %25, %29 : vector<24x24xf32>
    %31 = arith.truncf %30 : vector<24x24xf32> to vector<24x24xbf16>
    %cst_11 = arith.constant dense<0.000000e+00> : vector<24x128xf32>
    %32 = tpu.matmul %31, %15, %cst_11 {dimension_numbers = #tpu.dot_dimension_numbers<[1], [0], [0], [1], [0, 0, 1, 1], [], []>} : vector<24x24xbf16>, vector<24x128xbf16>, vector<24x128xf32> -> vector<24x128xf32>
    %33 = vector.extract_strided_slice %6 {offsets = [0, 128], sizes = [24, 128], strides = [1, 1]} : vector<24x768xf32> to vector<24x128xf32>
    %34 = arith.truncf %33 : vector<24x128xf32> to vector<24x128xbf16>
    %35 = vector.extract_strided_slice %6 {offsets = [0, 384], sizes = [24, 128], strides = [1, 1]} : vector<24x768xf32> to vector<24x128xf32>
    %36 = arith.truncf %35 : vector<24x128xf32> to vector<24x128xbf16>
    %37 = vector.extract_strided_slice %6 {offsets = [0, 640], sizes = [24, 128], strides = [1, 1]} : vector<24x768xf32> to vector<24x128xf32>
    %38 = arith.truncf %37 : vector<24x128xf32> to vector<24x128xbf16>
    %cst_12 = arith.constant dense<0.000000e+00> : vector<24x24xf32>
    %39 = tpu.matmul %34, %36, %cst_12 {dimension_numbers = #tpu.dot_dimension_numbers<[1], [1], [0], [0], [0, 0, 1, 0], [], []>} : vector<24x128xbf16>, vector<24x128xbf16>, vector<24x24xf32> -> vector<24x24xf32>
    %cst_13 = arith.constant 0.0883883461 : f32
    %40 = vector.broadcast %cst_13 : f32 to vector<24x24xf32>
    %41 = arith.mulf %39, %40 : vector<24x24xf32>
    %cst_14 = arith.constant -1.000000e+30 : f32
    %42 = vector.broadcast %cst_14 : f32 to vector<24x24xf32>
    %43 = arith.select %9, %41, %42 : vector<24x24xi1>, vector<24x24xf32>
    %cst_15 = arith.constant dense<0xFF800000> : vector<24xf32>
    %44 = vector.multi_reduction <maximumf>, %43, %cst_15 [1] : vector<24x24xf32> to vector<24xf32>
    %45 = vector.shape_cast %44 : vector<24xf32> to vector<24x1xf32>
    %46 = vector.broadcast %45 : vector<24x1xf32> to vector<24x24xf32>
    %47 = arith.subf %43, %46 : vector<24x24xf32>
    %48 = math.exp %47 : vector<24x24xf32>
    %cst_16 = arith.constant dense<0.000000e+00> : vector<24xf32>
    %49 = vector.multi_reduction <add>, %48, %cst_16 [1] : vector<24x24xf32> to vector<24xf32>
    %50 = vector.shape_cast %49 : vector<24xf32> to vector<24x1xf32>
    %51 = tpu.reciprocal %50 {approx = true} : vector<24x1xf32> -> vector<24x1xf32>
    %52 = vector.broadcast %51 : vector<24x1xf32> to vector<24x24xf32>
    %53 = arith.mulf %48, %52 : vector<24x24xf32>
    %54 = arith.truncf %53 : vector<24x24xf32> to vector<24x24xbf16>
    %cst_17 = arith.constant dense<0.000000e+00> : vector<24x128xf32>
    %55 = tpu.matmul %54, %38, %cst_17 {dimension_numbers = #tpu.dot_dimension_numbers<[1], [0], [0], [1], [0, 0, 1, 1], [], []>} : vector<24x24xbf16>, vector<24x128xbf16>, vector<24x128xf32> -> vector<24x128xf32>
    %56 = tpu.concatenate %32, %55 in 1 : vector<24x128xf32>, vector<24x128xf32> -> vector<24x256xf32>
    %57 = arith.truncf %56 : vector<24x256xf32> to vector<24x256xbf16>
    %c0_18 = arith.constant 0 : index
    %c0_19 = arith.constant 0 : index
    %58 = vector.load %arg4[%c0_18, %c0_19] : memref<256x256xbf16, #tpu.memory_space<vmem>>, vector<256x256xbf16>
    %cst_20 = arith.constant dense<0.000000e+00> : vector<24x256xf32>
    %59 = tpu.matmul %57, %58, %cst_20 {dimension_numbers = #tpu.dot_dimension_numbers<[1], [0], [0], [1], [0, 0, 1, 1], [], []>} : vector<24x256xbf16>, vector<256x256xbf16>, vector<24x256xf32> -> vector<24x256xf32>
    %60 = arith.extf %1 : vector<24x256xbf16> to vector<24x256xf32>
    %61 = arith.addf %60, %59 : vector<24x256xf32>
    %c0_21 = arith.constant 0 : index
    %c0_22 = arith.constant 0 : index
    %62 = vector.load %arg5[%c0_21, %c0_22] : memref<1x256xf32, #tpu.memory_space<vmem>>, vector<1x256xf32>
    %63 = vector.broadcast %62 : vector<1x256xf32> to vector<24x256xf32>
    %64 = arith.addf %61, %63 : vector<24x256xf32>
    %cst_23 = arith.constant dense<0.000000e+00> : vector<24xf32>
    %65 = vector.multi_reduction <add>, %64, %cst_23 [1] : vector<24x256xf32> to vector<24xf32>
    %66 = vector.shape_cast %65 : vector<24xf32> to vector<24x1xf32>
    %cst_24 = arith.constant 2.560000e+02 : f32
    %67 = vector.broadcast %cst_24 : f32 to vector<24x1xf32>
    %68 = arith.divf %66, %67 : vector<24x1xf32>
    %69 = vector.broadcast %68 : vector<24x1xf32> to vector<24x256xf32>
    %70 = arith.subf %64, %69 : vector<24x256xf32>
    %71 = arith.mulf %70, %70 : vector<24x256xf32>
    %cst_25 = arith.constant dense<0.000000e+00> : vector<24xf32>
    %72 = vector.multi_reduction <add>, %71, %cst_25 [1] : vector<24x256xf32> to vector<24xf32>
    %73 = vector.shape_cast %72 : vector<24xf32> to vector<24x1xf32>
    %cst_26 = arith.constant 2.560000e+02 : f32
    %74 = vector.broadcast %cst_26 : f32 to vector<24x1xf32>
    %75 = arith.divf %73, %74 : vector<24x1xf32>
    %cst_27 = arith.constant 9.99999974E-6 : f32
    %76 = vector.broadcast %cst_27 : f32 to vector<24x1xf32>
    %77 = arith.addf %75, %76 : vector<24x1xf32>
    %78 = math.rsqrt %77 : vector<24x1xf32>
    %79 = vector.broadcast %78 : vector<24x1xf32> to vector<24x256xf32>
    %80 = arith.mulf %70, %79 : vector<24x256xf32>
    %c0_28 = arith.constant 0 : index
    %c0_29 = arith.constant 0 : index
    %81 = vector.load %arg6[%c0_28, %c0_29] : memref<1x256xf32, #tpu.memory_space<vmem>>, vector<1x256xf32>
    %82 = vector.broadcast %81 : vector<1x256xf32> to vector<24x256xf32>
    %83 = arith.mulf %80, %82 : vector<24x256xf32>
    %c0_30 = arith.constant 0 : index
    %c0_31 = arith.constant 0 : index
    %84 = vector.load %arg7[%c0_30, %c0_31] : memref<1x256xf32, #tpu.memory_space<vmem>>, vector<1x256xf32>
    %85 = vector.broadcast %84 : vector<1x256xf32> to vector<24x256xf32>
    %86 = arith.addf %83, %85 : vector<24x256xf32>
    %87 = arith.truncf %86 : vector<24x256xf32> to vector<24x256xbf16>
    %c0_32 = arith.constant 0 : index
    %c0_33 = arith.constant 0 : index
    %c0_34 = arith.constant 0 : index
    %88 = vector.load %arg8[%c0_32, %c0_33, %c0_34] : memref<1x24x256xbf16, #tpu.memory_space<vmem>>, vector<1x24x256xbf16>
    %89 = vector.shape_cast %88 : vector<1x24x256xbf16> to vector<24x256xbf16>
    %90 = vector.shape_cast %87 : vector<24x256xbf16> to vector<1x24x256xbf16>
    tpu.vector_store %arg8[%c0_32, %c0_33, %c0_34], %90 {strides = array<i32>} : memref<1x24x256xbf16, #tpu.memory_space<vmem>>, vector<1x24x256xbf16>,
    return
  }
  func.func @transform_0(%arg0: i32) -> (i32, i32, i32) {
    %c0_i32 = arith.constant 0 : i32
    %c0_i32_0 = arith.constant 0 : i32
    %c0_i32_1 = arith.constant 0 : i32
    return %arg0, %c0_i32, %c0_i32_0 : i32, i32, i32
  }
  func.func @transform_1(%arg0: i32) -> (i32, i32) {
    %c0_i32 = arith.constant 0 : i32
    %c0_i32_0 = arith.constant 0 : i32
    %c0_i32_1 = arith.constant 0 : i32
    return %c0_i32, %c0_i32_0 : i32, i32
  }
  func.func @transform_2(%arg0: i32) -> (i32, i32) {
    %c0_i32 = arith.constant 0 : i32
    %c0_i32_0 = arith.constant 0 : i32
    %c0_i32_1 = arith.constant 0 : i32
    return %c0_i32, %c0_i32_0 : i32, i32
  }
  func.func @transform_3(%arg0: i32) -> (i32, i32) {
    %c0_i32 = arith.constant 0 : i32
    %c0_i32_0 = arith.constant 0 : i32
    %c0_i32_1 = arith.constant 0 : i32
    return %c0_i32, %c0_i32_0 : i32, i32
  }
  func.func @transform_4(%arg0: i32) -> (i32, i32) {
    %c0_i32 = arith.constant 0 : i32
    %c0_i32_0 = arith.constant 0 : i32
    %c0_i32_1 = arith.constant 0 : i32
    return %c0_i32, %c0_i32_0 : i32, i32
  }
  func.func @transform_5(%arg0: i32) -> (i32, i32) {
    %c0_i32 = arith.constant 0 : i32
    %c0_i32_0 = arith.constant 0 : i32
    %c0_i32_1 = arith.constant 0 : i32
    return %c0_i32, %c0_i32_0 : i32, i32
  }
  func.func @transform_6(%arg0: i32) -> (i32, i32) {
    %c0_i32 = arith.constant 0 : i32
    %c0_i32_0 = arith.constant 0 : i32
    %c0_i32_1 = arith.constant 0 : i32
    return %c0_i32, %c0_i32_0 : i32, i32
  }
  func.func @transform_7(%arg0: i32) -> (i32, i32, i32) {
    %c0_i32 = arith.constant 0 : i32
    %c0_i32_0 = arith.constant 0 : i32
    %c0_i32_1 = arith.constant 0 : i32
    return %arg0, %c0_i32, %c0_i32_0 : i32, i32, i32
  }
}

module attributes {stable_mosaic.version = 11 : i64} {
  func.func @_attn_block_kernel(%arg0: i32, %arg1: memref<1x24x256xbf16, #tpu.memory_space<vmem>>, %arg2: memref<256x768xbf16, #tpu.memory_space<vmem>>, %arg3: memref<1x768xf32, #tpu.memory_space<vmem>>, %arg4: memref<256x256xbf16, #tpu.memory_space<vmem>>, %arg5: memref<1x256xf32, #tpu.memory_space<vmem>>, %arg6: memref<1x256xf32, #tpu.memory_space<vmem>>, %arg7: memref<1x256xf32, #tpu.memory_space<vmem>>, %arg8: memref<1x24x256xbf16, #tpu.memory_space<vmem>>) attributes {dimension_semantics = [#tpu.dimension_semantics<parallel>], iteration_bounds = array<i64: 2>, scalar_prefetch = 0 : i64, scratch_operands = 0 : i64, tpu.core_type = #tpu.core_type<tc>, window_params = [{transform_indices = @transform_0, window_bounds = array<i64: 1, 24, 256>}, {pipeline_mode = #tpu.pipeline_mode<synchronous>, transform_indices = @transform_1, window_bounds = array<i64: 256, 768>}, {pipeline_mode = #tpu.pipeline_mode<synchronous>, transform_indices = @transform_2, window_bounds = array<i64: 1, 768>}, {pipeline_mode = #tpu.pipeline_mode<synchronous>, transform_indices = @transform_3, window_bounds = array<i64: 256, 256>}, {pipeline_mode = #tpu.pipeline_mode<synchronous>, transform_indices = @transform_4, window_bounds = array<i64: 1, 256>}, {pipeline_mode = #tpu.pipeline_mode<synchronous>, transform_indices = @transform_5, window_bounds = array<i64: 1, 256>}, {pipeline_mode = #tpu.pipeline_mode<synchronous>, transform_indices = @transform_6, window_bounds = array<i64: 1, 256>}, {transform_indices = @transform_7, window_bounds = array<i64: 1, 24, 256>}]} {
    %c0 = arith.constant 0 : index
    %c0_0 = arith.constant 0 : index
    %c0_1 = arith.constant 0 : index
    %0 = vector.load %arg1[%c0, %c0_0, %c0_1] : memref<1x24x256xbf16, #tpu.memory_space<vmem>>, vector<1x24x256xbf16>
    %1 = vector.shape_cast %0 : vector<1x24x256xbf16> to vector<24x256xbf16>
    %c0_2 = arith.constant 0 : index
    %c0_3 = arith.constant 0 : index
    %2 = vector.load %arg2[%c0_2, %c0_3] : memref<256x768xbf16, #tpu.memory_space<vmem>>, vector<256x768xbf16>
    %cst = arith.constant dense<0.000000e+00> : vector<24x768xf32>
    %3 = tpu.matmul %1, %2, %cst {dimension_numbers = #tpu.dot_dimension_numbers<[1], [0], [0], [1], [0, 0, 1, 1], [], []>} : vector<24x256xbf16>, vector<256x768xbf16>, vector<24x768xf32> -> vector<24x768xf32>
    %c0_4 = arith.constant 0 : index
    %c0_5 = arith.constant 0 : index
    %4 = vector.load %arg3[%c0_4, %c0_5] : memref<1x768xf32, #tpu.memory_space<vmem>>, vector<1x768xf32>
    %5 = vector.broadcast %4 : vector<1x768xf32> to vector<24x768xf32>
    %6 = arith.addf %3, %5 : vector<24x768xf32>
    %7 = tpu.iota {dimensions = array<i32: 1>} : vector<24x24xi32>
    %c17_i32 = arith.constant 17 : i32
    %8 = vector.broadcast %c17_i32 : i32 to vector<24x24xi32>
    %9 = arith.cmpi slt, %7, %8 : vector<24x24xi32>
    %10 = vector.extract_strided_slice %6 {offsets = [0, 0], sizes = [24, 128], strides = [1, 1]} : vector<24x768xf32> to vector<24x128xf32>
    %11 = arith.truncf %10 : vector<24x128xf32> to vector<24x128xbf16>
    %12 = vector.extract_strided_slice %6 {offsets = [0, 256], sizes = [24, 128], strides = [1, 1]} : vector<24x768xf32> to vector<24x128xf32>
    %13 = arith.truncf %12 : vector<24x128xf32> to vector<24x128xbf16>
    %14 = vector.extract_strided_slice %6 {offsets = [0, 512], sizes = [24, 128], strides = [1, 1]} : vector<24x768xf32> to vector<24x128xf32>
    %15 = arith.truncf %14 : vector<24x128xf32> to vector<24x128xbf16>
    %cst_6 = arith.constant dense<0.000000e+00> : vector<24x24xf32>
    %16 = tpu.matmul %11, %13, %cst_6 {dimension_numbers = #tpu.dot_dimension_numbers<[1], [1], [0], [0], [0, 0, 1, 0], [], []>} : vector<24x128xbf16>, vector<24x128xbf16>, vector<24x24xf32> -> vector<24x24xf32>
    %cst_7 = arith.constant 0.0883883461 : f32
    %17 = vector.broadcast %cst_7 : f32 to vector<24x24xf32>
    %18 = arith.mulf %16, %17 : vector<24x24xf32>
    %cst_8 = arith.constant -1.000000e+30 : f32
    %19 = vector.broadcast %cst_8 : f32 to vector<24x24xf32>
    %20 = arith.select %9, %18, %19 : vector<24x24xi1>, vector<24x24xf32>
    %cst_9 = arith.constant dense<0xFF800000> : vector<24xf32>
    %21 = vector.multi_reduction <maximumf>, %20, %cst_9 [1] : vector<24x24xf32> to vector<24xf32>
    %22 = vector.shape_cast %21 : vector<24xf32> to vector<24x1xf32>
    %23 = vector.broadcast %22 : vector<24x1xf32> to vector<24x24xf32>
    %24 = arith.subf %20, %23 : vector<24x24xf32>
    %25 = math.exp %24 : vector<24x24xf32>
    %cst_10 = arith.constant dense<0.000000e+00> : vector<24xf32>
    %26 = vector.multi_reduction <add>, %25, %cst_10 [1] : vector<24x24xf32> to vector<24xf32>
    %27 = vector.shape_cast %26 : vector<24xf32> to vector<24x1xf32>
    %28 = tpu.reciprocal %27 {approx = true} : vector<24x1xf32> -> vector<24x1xf32>
    %29 = vector.broadcast %28 : vector<24x1xf32> to vector<24x24xf32>
    %30 = arith.mulf %25, %29 : vector<24x24xf32>
    %31 = arith.truncf %30 : vector<24x24xf32> to vector<24x24xbf16>
    %cst_11 = arith.constant dense<0.000000e+00> : vector<24x128xf32>
    %32 = tpu.matmul %31, %15, %cst_11 {dimension_numbers = #tpu.dot_dimension_numbers<[1], [0], [0], [1], [0, 0, 1, 1], [], []>} : vector<24x24xbf16>, vector<24x128xbf16>, vector<24x128xf32> -> vector<24x128xf32>
    %33 = vector.extract_strided_slice %6 {offsets = [0, 128], sizes = [24, 128], strides = [1, 1]} : vector<24x768xf32> to vector<24x128xf32>
    %34 = arith.truncf %33 : vector<24x128xf32> to vector<24x128xbf16>
    %35 = vector.extract_strided_slice %6 {offsets = [0, 384], sizes = [24, 128], strides = [1, 1]} : vector<24x768xf32> to vector<24x128xf32>
    %36 = arith.truncf %35 : vector<24x128xf32> to vector<24x128xbf16>
    %37 = vector.extract_strided_slice %6 {offsets = [0, 640], sizes = [24, 128], strides = [1, 1]} : vector<24x768xf32> to vector<24x128xf32>
    %38 = arith.truncf %37 : vector<24x128xf32> to vector<24x128xbf16>
    %cst_12 = arith.constant dense<0.000000e+00> : vector<24x24xf32>
    %39 = tpu.matmul %34, %36, %cst_12 {dimension_numbers = #tpu.dot_dimension_numbers<[1], [1], [0], [0], [0, 0, 1, 0], [], []>} : vector<24x128xbf16>, vector<24x128xbf16>, vector<24x24xf32> -> vector<24x24xf32>
    %cst_13 = arith.constant 0.0883883461 : f32
    %40 = vector.broadcast %cst_13 : f32 to vector<24x24xf32>
    %41 = arith.mulf %39, %40 : vector<24x24xf32>
    %cst_14 = arith.constant -1.000000e+30 : f32
    %42 = vector.broadcast %cst_14 : f32 to vector<24x24xf32>
    %43 = arith.select %9, %41, %42 : vector<24x24xi1>, vector<24x24xf32>
    %cst_15 = arith.constant dense<0xFF800000> : vector<24xf32>
    %44 = vector.multi_reduction <maximumf>, %43, %cst_15 [1] : vector<24x24xf32> to vector<24xf32>
    %45 = vector.shape_cast %44 : vector<24xf32> to vector<24x1xf32>
    %46 = vector.broadcast %45 : vector<24x1xf32> to vector<24x24xf32>
    %47 = arith.subf %43, %46 : vector<24x24xf32>
    %48 = math.exp %47 : vector<24x24xf32>
    %cst_16 = arith.constant dense<0.000000e+00> : vector<24xf32>
    %49 = vector.multi_reduction <add>, %48, %cst_16 [1] : vector<24x24xf32> to vector<24xf32>
    %50 = vector.shape_cast %49 : vector<24xf32> to vector<24x1xf32>
    %51 = tpu.reciprocal %50 {approx = true} : vector<24x1xf32> -> vector<24x1xf32>
    %52 = vector.broadcast %51 : vector<24x1xf32> to vector<24x24xf32>
    %53 = arith.mulf %48, %52 : vector<24x24xf32>
    %54 = arith.truncf %53 : vector<24x24xf32> to vector<24x24xbf16>
    %cst_17 = arith.constant dense<0.000000e+00> : vector<24x128xf32>
    %55 = tpu.matmul %54, %38, %cst_17 {dimension_numbers = #tpu.dot_dimension_numbers<[1], [0], [0], [1], [0, 0, 1, 1], [], []>} : vector<24x24xbf16>, vector<24x128xbf16>, vector<24x128xf32> -> vector<24x128xf32>
    %56 = tpu.concatenate %32, %55 in 1 : vector<24x128xf32>, vector<24x128xf32> -> vector<24x256xf32>
    %57 = arith.truncf %56 : vector<24x256xf32> to vector<24x256xbf16>
    %c0_18 = arith.constant 0 : index
    %c0_19 = arith.constant 0 : index
    %58 = vector.load %arg4[%c0_18, %c0_19] : memref<256x256xbf16, #tpu.memory_space<vmem>>, vector<256x256xbf16>
    %cst_20 = arith.constant dense<0.000000e+00> : vector<24x256xf32>
    %59 = tpu.matmul %57, %58, %cst_20 {dimension_numbers = #tpu.dot_dimension_numbers<[1], [0], [0], [1], [0, 0, 1, 1], [], []>} : vector<24x256xbf16>, vector<256x256xbf16>, vector<24x256xf32> -> vector<24x256xf32>
    %60 = arith.extf %1 : vector<24x256xbf16> to vector<24x256xf32>
    %61 = arith.addf %60, %59 : vector<24x256xf32>
    %c0_21 = arith.constant 0 : index
    %c0_22 = arith.constant 0 : index
    %62 = vector.load %arg5[%c0_21, %c0_22] : memref<1x256xf32, #tpu.memory_space<vmem>>, vector<1x256xf32>
    %63 = vector.broadcast %62 : vector<1x256xf32> to vector<24x256xf32>
    %64 = arith.addf %61, %63 : vector<24x256xf32>
    %cst_23 = arith.constant dense<0.000000e+00> : vector<24xf32>
    %65 = vector.multi_reduction <add>, %64, %cst_23 [1] : vector<24x256xf32> to vector<24xf32>
    %66 = vector.shape_cast %65 : vector<24xf32> to vector<24x1xf32>
    %cst_24 = arith.constant 2.560000e+02 : f32
    %67 = vector.broadcast %cst_24 : f32 to vector<24x1xf32>
    %68 = arith.divf %66, %67 : vector<24x1xf32>
    %69 = vector.broadcast %68 : vector<24x1xf32> to vector<24x256xf32>
    %70 = arith.subf %64, %69 : vector<24x256xf32>
    %71 = arith.mulf %70, %70 : vector<24x256xf32>
    %cst_25 = arith.constant dense<0.000000e+00> : vector<24xf32>
    %72 = vector.multi_reduction <add>, %71, %cst_25 [1] : vector<24x256xf32> to vector<24xf32>
    %73 = vector.shape_cast %72 : vector<24xf32> to vector<24x1xf32>
    %cst_26 = arith.constant 2.560000e+02 : f32
    %74 = vector.broadcast %cst_26 : f32 to vector<24x1xf32>
    %75 = arith.divf %73, %74 : vector<24x1xf32>
    %cst_27 = arith.constant 9.99999974E-6 : f32
    %76 = vector.broadcast %cst_27 : f32 to vector<24x1xf32>
    %77 = arith.addf %75, %76 : vector<24x1xf32>
    %78 = math.rsqrt %77 : vector<24x1xf32>
    %79 = vector.broadcast %78 : vector<24x1xf32> to vector<24x256xf32>
    %80 = arith.mulf %70, %79 : vector<24x256xf32>
    %c0_28 = arith.constant 0 : index
    %c0_29 = arith.constant 0 : index
    %81 = vector.load %arg6[%c0_28, %c0_29] : memref<1x256xf32, #tpu.memory_space<vmem>>, vector<1x256xf32>
    %82 = vector.broadcast %81 : vector<1x256xf32> to vector<24x256xf32>
    %83 = arith.mulf %80, %82 : vector<24x256xf32>
    %c0_30 = arith.constant 0 : index
    %c0_31 = arith.constant 0 : index
    %84 = vector.load %arg7[%c0_30, %c0_31] : memref<1x256xf32, #tpu.memory_space<vmem>>, vector<1x256xf32>
    %85 = vector.broadcast %84 : vector<1x256xf32> to vector<24x256xf32>
    %86 = arith.addf %83, %85 : vector<24x256xf32>
    %87 = arith.truncf %86 : vector<24x256xf32> to vector<24x256xbf16>
    %c0_32 = arith.constant 0 : index
    %c0_33 = arith.constant 0 : index
    %c0_34 = arith.constant 0 : index
    %88 = vector.load %arg8[%c0_32, %c0_33, %c0_34] : memref<1x24x256xbf16, #tpu.memory_space<vmem>>, vector<1x24x256xbf16>
    %89 = vector.shape_cast %88 : vector<1x24x256xbf16> to vector<24x256xbf16>
    %90 = vector.shape_cast %87 : vector<24x256xbf16> to vector<1x24x256xbf16>
    tpu.vector_store %arg8[%c0_32, %c0_33, %c0_34], %90 {strides = array<i32>} : memref<1x24x256xbf16, #tpu.memory_space<vmem>>, vector<1x24x256xbf16>,
    return
  }
  func.func @transform_0(%arg0: i32) -> (i32, i32, i32) {
    %c0_i32 = arith.constant 0 : i32
    %c0_i32_0 = arith.constant 0 : i32
    %c0_i32_1 = arith.constant 0 : i32
    return %arg0, %c0_i32, %c0_i32_0 : i32, i32, i32
  }
  func.func @transform_1(%arg0: i32) -> (i32, i32) {
    %c0_i32 = arith.constant 0 : i32
    %c0_i32_0 = arith.constant 0 : i32
    %c0_i32_1 = arith.constant 0 : i32
    return %c0_i32, %c0_i32_0 : i32, i32
  }
  func.func @transform_2(%arg0: i32) -> (i32, i32) {
    %c0_i32 = arith.constant 0 : i32
    %c0_i32_0 = arith.constant 0 : i32
    %c0_i32_1 = arith.constant 0 : i32
    return %c0_i32, %c0_i32_0 : i32, i32
  }
  func.func @transform_3(%arg0: i32) -> (i32, i32) {
    %c0_i32 = arith.constant 0 : i32
    %c0_i32_0 = arith.constant 0 : i32
    %c0_i32_1 = arith.constant 0 : i32
    return %c0_i32, %c0_i32_0 : i32, i32
  }
  func.func @transform_4(%arg0: i32) -> (i32, i32) {
    %c0_i32 = arith.constant 0 : i32
    %c0_i32_0 = arith.constant 0 : i32
    %c0_i32_1 = arith.constant 0 : i32
    return %c0_i32, %c0_i32_0 : i32, i32
  }
  func.func @transform_5(%arg0: i32) -> (i32, i32) {
    %c0_i32 = arith.constant 0 : i32
    %c0_i32_0 = arith.constant 0 : i32
    %c0_i32_1 = arith.constant 0 : i32
    return %c0_i32, %c0_i32_0 : i32, i32
  }
  func.func @transform_6(%arg0: i32) -> (i32, i32) {
    %c0_i32 = arith.constant 0 : i32
    %c0_i32_0 = arith.constant 0 : i32
    %c0_i32_1 = arith.constant 0 : i32
    return %c0_i32, %c0_i32_0 : i32, i32
  }
  func.func @transform_7(%arg0: i32) -> (i32, i32, i32) {
    %c0_i32 = arith.constant 0 : i32
    %c0_i32_0 = arith.constant 0 : i32
    %c0_i32_1 = arith.constant 0 : i32
    return %arg0, %c0_i32, %c0_i32_0 : i32, i32, i32
  }
}

module attributes {stable_mosaic.version = 11 : i64} {
  func.func @_embed_kernel(%arg0: i32, %arg1: memref<1x16x48xbf16, #tpu.memory_space<vmem>>, %arg2: memref<48x256xbf16, #tpu.memory_space<vmem>>, %arg3: memref<1x256xf32, #tpu.memory_space<vmem>>, %arg4: memref<1x256xbf16, #tpu.memory_space<vmem>>, %arg5: memref<24x256xbf16, #tpu.memory_space<vmem>>, %arg6: memref<1x24x256xbf16, #tpu.memory_space<vmem>>) attributes {dimension_semantics = [#tpu.dimension_semantics<parallel>], iteration_bounds = array<i64: 2>, scalar_prefetch = 0 : i64, scratch_operands = 0 : i64, tpu.core_type = #tpu.core_type<tc>, window_params = [{transform_indices = @transform_0, window_bounds = array<i64: 1, 16, 48>}, {pipeline_mode = #tpu.pipeline_mode<synchronous>, transform_indices = @transform_1, window_bounds = array<i64: 48, 256>}, {pipeline_mode = #tpu.pipeline_mode<synchronous>, transform_indices = @transform_2, window_bounds = array<i64: 1, 256>}, {pipeline_mode = #tpu.pipeline_mode<synchronous>, transform_indices = @transform_3, window_bounds = array<i64: 1, 256>}, {pipeline_mode = #tpu.pipeline_mode<synchronous>, transform_indices = @transform_4, window_bounds = array<i64: 24, 256>}, {transform_indices = @transform_5, window_bounds = array<i64: 1, 24, 256>}]} {
    %c0 = arith.constant 0 : index
    %c0_0 = arith.constant 0 : index
    %c0_1 = arith.constant 0 : index
    %0 = vector.load %arg1[%c0, %c0_0, %c0_1] : memref<1x16x48xbf16, #tpu.memory_space<vmem>>, vector<1x16x48xbf16>
    %1 = vector.shape_cast %0 : vector<1x16x48xbf16> to vector<16x48xbf16>
    %c0_2 = arith.constant 0 : index
    %c0_3 = arith.constant 0 : index
    %2 = vector.load %arg2[%c0_2, %c0_3] : memref<48x256xbf16, #tpu.memory_space<vmem>>, vector<48x256xbf16>
    %cst = arith.constant dense<0.000000e+00> : vector<16x256xf32>
    %3 = tpu.matmul %1, %2, %cst {dimension_numbers = #tpu.dot_dimension_numbers<[1], [0], [0], [1], [0, 0, 1, 1], [], []>} : vector<16x48xbf16>, vector<48x256xbf16>, vector<16x256xf32> -> vector<16x256xf32>
    %c0_4 = arith.constant 0 : index
    %c0_5 = arith.constant 0 : index
    %4 = vector.load %arg3[%c0_4, %c0_5] : memref<1x256xf32, #tpu.memory_space<vmem>>, vector<1x256xf32>
    %5 = vector.broadcast %4 : vector<1x256xf32> to vector<16x256xf32>
    %6 = arith.addf %3, %5 : vector<16x256xf32>
    %c0_6 = arith.constant 0 : index
    %c0_7 = arith.constant 0 : index
    %7 = vector.load %arg5[%c0_6, %c0_7] : memref<24x256xbf16, #tpu.memory_space<vmem>>, vector<24x256xbf16>
    %8 = arith.extf %7 : vector<24x256xbf16> to vector<24x256xf32>
    %c0_8 = arith.constant 0 : index
    %c0_9 = arith.constant 0 : index
    %9 = vector.load %arg4[%c0_8, %c0_9] : memref<1x256xbf16, #tpu.memory_space<vmem>>, vector<1x256xbf16>
    %10 = arith.extf %9 : vector<1x256xbf16> to vector<1x256xf32>
    %11 = vector.extract_strided_slice %8 {offsets = [0, 0], sizes = [1, 256], strides = [1, 1]} : vector<24x256xf32> to vector<1x256xf32>
    %12 = arith.addf %10, %11 : vector<1x256xf32>
    %13 = arith.truncf %12 : vector<1x256xf32> to vector<1x256xbf16>
    %c0_10 = arith.constant 0 : index
    %c0_11 = arith.constant 0 : index
    %c0_12 = arith.constant 0 : index
    %14 = vector.load %arg6[%c0_10, %c0_11, %c0_12] : memref<1x24x256xbf16, #tpu.memory_space<vmem>>, vector<1x1x256xbf16>
    %15 = vector.shape_cast %14 : vector<1x1x256xbf16> to vector<1x256xbf16>
    %16 = vector.shape_cast %13 : vector<1x256xbf16> to vector<1x1x256xbf16>
    tpu.vector_store %arg6[%c0_10, %c0_11, %c0_12], %16 {strides = array<i32>} : memref<1x24x256xbf16, #tpu.memory_space<vmem>>, vector<1x1x256xbf16>,
    %17 = vector.extract_strided_slice %8 {offsets = [1, 0], sizes = [16, 256], strides = [1, 1]} : vector<24x256xf32> to vector<16x256xf32>
    %18 = arith.addf %6, %17 : vector<16x256xf32>
    %19 = arith.truncf %18 : vector<16x256xf32> to vector<16x256xbf16>
    %c0_13 = arith.constant 0 : index
    %c1 = arith.constant 1 : index
    %c0_14 = arith.constant 0 : index
    %20 = vector.load %arg6[%c0_13, %c1, %c0_14] : memref<1x24x256xbf16, #tpu.memory_space<vmem>>, vector<1x16x256xbf16>
    %21 = vector.shape_cast %20 : vector<1x16x256xbf16> to vector<16x256xbf16>
    %22 = vector.shape_cast %19 : vector<16x256xbf16> to vector<1x16x256xbf16>
    tpu.vector_store %arg6[%c0_13, %c1, %c0_14], %22 {strides = array<i32>} : memref<1x24x256xbf16, #tpu.memory_space<vmem>>, vector<1x16x256xbf16>,
    %cst_15 = arith.constant 0.000000e+00 : bf16
    %23 = vector.broadcast %cst_15 : bf16 to vector<7x256xbf16>
    %c0_16 = arith.constant 0 : index
    %c17 = arith.constant 17 : index
    %c0_17 = arith.constant 0 : index
    %24 = vector.load %arg6[%c0_16, %c17, %c0_17] : memref<1x24x256xbf16, #tpu.memory_space<vmem>>, vector<1x7x256xbf16>
    %25 = vector.shape_cast %24 : vector<1x7x256xbf16> to vector<7x256xbf16>
    %26 = vector.shape_cast %23 : vector<7x256xbf16> to vector<1x7x256xbf16>
    tpu.vector_store %arg6[%c0_16, %c17, %c0_17], %26 {strides = array<i32>} : memref<1x24x256xbf16, #tpu.memory_space<vmem>>, vector<1x7x256xbf16>,
    return
  }
  func.func @transform_0(%arg0: i32) -> (i32, i32, i32) {
    %c0_i32 = arith.constant 0 : i32
    %c0_i32_0 = arith.constant 0 : i32
    %c0_i32_1 = arith.constant 0 : i32
    return %arg0, %c0_i32, %c0_i32_0 : i32, i32, i32
  }
  func.func @transform_1(%arg0: i32) -> (i32, i32) {
    %c0_i32 = arith.constant 0 : i32
    %c0_i32_0 = arith.constant 0 : i32
    %c0_i32_1 = arith.constant 0 : i32
    return %c0_i32, %c0_i32_0 : i32, i32
  }
  func.func @transform_2(%arg0: i32) -> (i32, i32) {
    %c0_i32 = arith.constant 0 : i32
    %c0_i32_0 = arith.constant 0 : i32
    %c0_i32_1 = arith.constant 0 : i32
    return %c0_i32, %c0_i32_0 : i32, i32
  }
  func.func @transform_3(%arg0: i32) -> (i32, i32) {
    %c0_i32 = arith.constant 0 : i32
    %c0_i32_0 = arith.constant 0 : i32
    %c0_i32_1 = arith.constant 0 : i32
    return %c0_i32, %c0_i32_0 : i32, i32
  }
  func.func @transform_4(%arg0: i32) -> (i32, i32) {
    %c0_i32 = arith.constant 0 : i32
    %c0_i32_0 = arith.constant 0 : i32
    %c0_i32_1 = arith.constant 0 : i32
    return %c0_i32, %c0_i32_0 : i32, i32
  }
  func.func @transform_5(%arg0: i32) -> (i32, i32, i32) {
    %c0_i32 = arith.constant 0 : i32
    %c0_i32_0 = arith.constant 0 : i32
    %c0_i32_1 = arith.constant 0 : i32
    return %arg0, %c0_i32, %c0_i32_0 : i32, i32, i32
  }
}

module attributes {stable_mosaic.version = 11 : i64} {
  func.func @_cls_head_kernel(%arg0: memref<2x256xbf16, #tpu.memory_space<vmem>>, %arg1: memref<256x128xbf16, #tpu.memory_space<vmem>>, %arg2: memref<1x128xf32, #tpu.memory_space<vmem>>, %arg3: memref<2x128xf32, #tpu.memory_space<vmem>>) attributes {dimension_semantics = [], scalar_prefetch = 0 : i64, scratch_operands = 0 : i64, tpu.core_type = #tpu.core_type<tc>} {
    %c0 = arith.constant 0 : index
    %c0_0 = arith.constant 0 : index
    %0 = vector.load %arg0[%c0, %c0_0] : memref<2x256xbf16, #tpu.memory_space<vmem>>, vector<2x256xbf16>
    %1 = arith.extf %0 : vector<2x256xbf16> to vector<2x256xf32>
    %cst = arith.constant dense<0.000000e+00> : vector<2xf32>
    %2 = vector.multi_reduction <add>, %1, %cst [1] : vector<2x256xf32> to vector<2xf32>
    %3 = vector.shape_cast %2 : vector<2xf32> to vector<2x1xf32>
    %cst_1 = arith.constant 2.560000e+02 : f32
    %4 = vector.broadcast %cst_1 : f32 to vector<2x1xf32>
    %5 = arith.divf %3, %4 : vector<2x1xf32>
    %6 = vector.broadcast %5 : vector<2x1xf32> to vector<2x256xf32>
    %7 = arith.subf %1, %6 : vector<2x256xf32>
    %8 = arith.mulf %7, %7 : vector<2x256xf32>
    %cst_2 = arith.constant dense<0.000000e+00> : vector<2xf32>
    %9 = vector.multi_reduction <add>, %8, %cst_2 [1] : vector<2x256xf32> to vector<2xf32>
    %10 = vector.shape_cast %9 : vector<2xf32> to vector<2x1xf32>
    %cst_3 = arith.constant 2.560000e+02 : f32
    %11 = vector.broadcast %cst_3 : f32 to vector<2x1xf32>
    %12 = arith.divf %10, %11 : vector<2x1xf32>
    %cst_4 = arith.constant 9.99999974E-6 : f32
    %13 = vector.broadcast %cst_4 : f32 to vector<2x1xf32>
    %14 = arith.addf %12, %13 : vector<2x1xf32>
    %15 = math.rsqrt %14 : vector<2x1xf32>
    %16 = vector.broadcast %15 : vector<2x1xf32> to vector<2x256xf32>
    %17 = arith.mulf %7, %16 : vector<2x256xf32>
    %18 = arith.truncf %17 : vector<2x256xf32> to vector<2x256xbf16>
    %c0_5 = arith.constant 0 : index
    %c0_6 = arith.constant 0 : index
    %19 = vector.load %arg1[%c0_5, %c0_6] : memref<256x128xbf16, #tpu.memory_space<vmem>>, vector<256x128xbf16>
    %cst_7 = arith.constant dense<0.000000e+00> : vector<2x128xf32>
    %20 = tpu.matmul %18, %19, %cst_7 {dimension_numbers = #tpu.dot_dimension_numbers<[1], [0], [0], [1], [0, 0, 1, 1], [], []>} : vector<2x256xbf16>, vector<256x128xbf16>, vector<2x128xf32> -> vector<2x128xf32>
    %c0_8 = arith.constant 0 : index
    %c0_9 = arith.constant 0 : index
    %21 = vector.load %arg2[%c0_8, %c0_9] : memref<1x128xf32, #tpu.memory_space<vmem>>, vector<1x128xf32>
    %22 = vector.broadcast %21 : vector<1x128xf32> to vector<2x128xf32>
    %23 = arith.addf %20, %22 : vector<2x128xf32>
    %c0_10 = arith.constant 0 : index
    %c0_11 = arith.constant 0 : index
    %24 = vector.load %arg3[%c0_10, %c0_11] : memref<2x128xf32, #tpu.memory_space<vmem>>, vector<2x128xf32>
    tpu.vector_store %arg3[%c0_10, %c0_11], %23 {strides = array<i32>} : memref<2x128xf32, #tpu.memory_space<vmem>>, vector<2x128xf32>,
    return
  }
}

</mosaic_0001>

<llo_original>
// kernel: vit_forward.6
$region0: #{vit_forward.6}
  #allocation0 [shape = 'u32[]', space=smem, size = 0x4, offset = 0x4, fixed_abs, tag = 'smem constant byte address 0x4 - core index']
  #allocation1 [shape = 'u32[144,128]{1,0:T(1,128)}', space=vmem, size = 0x12000, scoped, tag = 'internal scratch']
  %s0 = inlined_call_operand.vmem [shape: bf16[2,16,48], index: 0, kind: input, shape index: {}]
  %s1 = inlined_call_operand.hbm [shape: bf16[48,256], index: 1, kind: input, shape index: {}]
  %s2 = inlined_call_operand.vmem [shape: f32[1,256], index: 2, kind: input, shape index: {}]
  %s3 = inlined_call_operand.vmem [shape: bf16[1,256], index: 3, kind: input, shape index: {}]
  %s4 = inlined_call_operand.vmem [shape: bf16[24,256], index: 4, kind: input, shape index: {}]
  %s5 = inlined_call_operand.vmem [shape: bf16[2,24,256], index: 5, kind: output, shape index: {}]
  %s6 = sld [smem:[#allocation0]]
  $region57: #{vit_forward.6} parent=0
    _
  %s8 = ssub.s32 1, %s6
  %s9 = scalar_select 0, %s8, %s6
  $region1: #{vit_forward.6} parent=0
    #allocation2 [shape = 'u8[24576]{0}', space=vmem, size = 0x6000, scoped, tag = 'input window, operand 1, single buffered']
    #allocation3 [shape = 's32[2]{0}', space=sflag, size = 0x8, scoped, tag = 'scoped memory for vit_forward.6']
    %10 = vsyncpa [#allocation3], 0
    loop: start=0, step=1, limit=4
    $region2: #{vit_forward.6} parent=1 // loop_pre_header
      _
    $region3: #{vit_forward.6} parent=1 // loop_header
      %s12 = sphi 0, %s16
      %p13 = scmp.ge.s32.totalorder %s12, 4
      %s22 = sphi 0, %s24
      %s25 = sphi 0, %s22
      %s26 = sphi 0, %s25
      %s42 = sphi 0, %s26
      %s46 = sphi 0, %s46
      %s48 = sphi 0, %s46
      %s49 = sphi 0, %s48
      %s63 = sphi 0, %s49
      %s67 = sphi 0, %s67
      %s69 = sphi 0, %s67
      %s70 = sphi 0, %s69
      %s84 = sphi 0, %s70
      %s88 = sphi 0, %s88
      %s90 = sphi 0, %s88
      %s91 = sphi 0, %s90
      %s105 = sphi 0, %s91
      %s109 = sphi 0, %s109
      %s111 = sphi 0, %s109
      %s112 = sphi 0, %s111
      %s126 = sphi 0, %s112
      %s132 = sphi 0, %s134
      %s135 = sphi 0, %s132
      %s136 = sphi 0, %s135
      %s152 = sphi 0, %s136
    $region4: #{vit_forward.6} parent=1 // loop_header_branch
      %15 = sbr.rel (%p13) target = $region8
    $region5: #{vit_forward.6} parent=1 // loop_body
      %s17 = ssub.s32 %s12, 1
      %s18 = ssub.s32 %s12, 2
      %s19 = sadd.s32 %s12, 1
      %s20 = ssub.s32 %s12, %s19
      %p21 = scmp.eq.s32.totalorder %s20, 0
      %s23 = sadd.s32 %s22, 1
      %s24 = scalar_select %p21, %s22, %s23
      %p27 = pneg %p21
      %p28 = scmp.eq.s32.totalorder %s12, 1
      %p29 = por %p27, %p28
      %p30 = scmp.ne.s32.totalorder %s22, %s25
      %p31 = scmp.eq.s32.totalorder %s12, 0
      %p32 = por %p30, %p31
      %p33 = scmp.ne.s32.totalorder %s22, %s25
      %p34 = scmp.eq.s32.totalorder %s17, 1
      %p35 = por %p33, %p34
      %p36 = scmp.ne.s32.totalorder %s25, %s26
      %p37 = scmp.eq.s32.totalorder %s17, 0
      %p38 = por %p36, %p37
      %p39 = scmp.ne.s32.totalorder %s25, %s26
      %p40 = scmp.eq.s32.totalorder %s18, 1
      %p41 = por %p39, %p40
      %p43 = scmp.ne.s32.totalorder %s26, %s42
      %p44 = scmp.eq.s32.totalorder %s18, 0
      %p45 = por %p43, %p44
      %s47 = sadd.s32 %s46, 1
      %p50 = scmp.eq.s32.totalorder %s12, 1
      %p51 = scmp.ne.s32.totalorder %s46, %s48
      %p52 = scmp.eq.s32.totalorder %s12, 0
      %p53 = por %p51, %p52
      %p54 = scmp.ne.s32.totalorder %s46, %s48
      %p55 = scmp.eq.s32.totalorder %s17, 1
      %p56 = por %p54, %p55
      %p57 = scmp.ne.s32.totalorder %s48, %s49
      %p58 = scmp.eq.s32.totalorder %s17, 0
      %p59 = por %p57, %p58
      %p60 = scmp.ne.s32.totalorder %s48, %s49
      %p61 = scmp.eq.s32.totalorder %s18, 1
      %p62 = por %p60, %p61
      %p64 = scmp.ne.s32.totalorder %s49, %s63
      %p65 = scmp.eq.s32.totalorder %s18, 0
      %p66 = por %p64, %p65
      %s68 = sadd.s32 %s67, 1
      %p71 = scmp.eq.s32.totalorder %s12, 1
      %p72 = scmp.ne.s32.totalorder %s67, %s69
      %p73 = scmp.eq.s32.totalorder %s12, 0
      %p74 = por %p72, %p73
      %p75 = scmp.ne.s32.totalorder %s67, %s69
      %p76 = scmp.eq.s32.totalorder %s17, 1
      %p77 = por %p75, %p76
      %p78 = scmp.ne.s32.totalorder %s69, %s70
      %p79 = scmp.eq.s32.totalorder %s17, 0
      %p80 = por %p78, %p79
      %p81 = scmp.ne.s32.totalorder %s69, %s70
      %p82 = scmp.eq.s32.totalorder %s18, 1
      %p83 = por %p81, %p82
      %p85 = scmp.ne.s32.totalorder %s70, %s84
      %p86 = scmp.eq.s32.totalorder %s18, 0
      %p87 = por %p85, %p86
      %s89 = sadd.s32 %s88, 1
      %p92 = scmp.eq.s32.totalorder %s12, 1
      %p93 = scmp.ne.s32.totalorder %s88, %s90
      %p94 = scmp.eq.s32.totalorder %s12, 0
      %p95 = por %p93, %p94
      %p96 = scmp.ne.s32.totalorder %s88, %s90
      %p97 = scmp.eq.s32.totalorder %s17, 1
      %p98 = por %p96, %p97
      %p99 = scmp.ne.s32.totalorder %s90, %s91
      %p100 = scmp.eq.s32.totalorder %s17, 0
      %p101 = por %p99, %p100
      %p102 = scmp.ne.s32.totalorder %s90, %s91
      %p103 = scmp.eq.s32.totalorder %s18, 1
      %p104 = por %p102, %p103
      %p106 = scmp.ne.s32.totalorder %s91, %s105
      %p107 = scmp.eq.s32.totalorder %s18, 0
      %p108 = por %p106, %p107
      %s110 = sadd.s32 %s109, 1
      %p113 = scmp.eq.s32.totalorder %s12, 1
      %p114 = scmp.ne.s32.totalorder %s109, %s111
      %p115 = scmp.eq.s32.totalorder %s12, 0
      %p116 = por %p114, %p115
      %p117 = scmp.ne.s32.totalorder %s109, %s111
      %p118 = scmp.eq.s32.totalorder %s17, 1
      %p119 = por %p117, %p118
      %p120 = scmp.ne.s32.totalorder %s111, %s112
      %p121 = scmp.eq.s32.totalorder %s17, 0
      %p122 = por %p120, %p121
      %p123 = scmp.ne.s32.totalorder %s111, %s112
      %p124 = scmp.eq.s32.totalorder %s18, 1
      %p125 = por %p123, %p124
      %p127 = scmp.ne.s32.totalorder %s112, %s126
      %p128 = scmp.eq.s32.totalorder %s18, 0
      %p129 = por %p127, %p128
      %s130 = ssub.s32 %s12, %s19
      %p131 = scmp.eq.s32.totalorder %s130, 0
      %s133 = sadd.s32 %s132, 1
      %s134 = scalar_select %p131, %s132, %s133
      %p137 = pneg %p131
      %p138 = scmp.eq.s32.totalorder %s12, 1
      %p139 = por %p137, %p138
      %p140 = scmp.ne.s32.totalorder %s132, %s135
      %p141 = scmp.eq.s32.totalorder %s12, 0
      %p142 = por %p140, %p141
      %p143 = scmp.ne.s32.totalorder %s132, %s135
      %p144 = scmp.eq.s32.totalorder %s17, 1
      %p145 = por %p143, %p144
      %p146 = scmp.ne.s32.totalorder %s135, %s136
      %p147 = scmp.eq.s32.totalorder %s17, 0
      %p148 = por %p146, %p147
      %p149 = scmp.ne.s32.totalorder %s135, %s136
      %p150 = scmp.eq.s32.totalorder %s18, 1
      %p151 = por %p149, %p150
      %p153 = scmp.ne.s32.totalorder %s136, %s152
      %p154 = scmp.eq.s32.totalorder %s18, 0
      %p155 = por %p153, %p154
      %p156 = scmp.le.s32.totalorder 1, %s12
      %p157 = scmp.lt.s32.totalorder %s12, 3
      %p158 = pnand %p156, %p157
      %p159 = pneg %p158
      // Predicated region
      $region9: #{vit_forward.6} parent=5 // pred_check
        _
      $region10: #{vit_forward.6} parent=5 // pred_check_branch
        %161 = sbr.rel (%p158) target = $region12
      $region11: #{vit_forward.6} parent=5 // pred_region
        %s162 = ssub.s32 %s12, 1
        // Predicated region
        $region13: #{vit_forward.6} parent=11 // pred_check
          %p163 = pneg %p59
        $region14: #{vit_forward.6} parent=11 // pred_check_branch
          %165 = sbr.rel (%p163) target = $region16
        $region15: #{vit_forward.6} parent=11 // pred_region
          %s167 = ssub.s32 768, 768
          %168 = vsyncadd [#allocation3], %s167
          %s169 = sshll.u32 [#allocation2], 4
          %s170 = int_to_ptr.vmem [resolvable:$true] %s169
          %175 = dma.hbm_to_vmem [thread:$0]  %s1, 768, %s170, [#allocation3], 128, 128, 8
        $region16: #{vit_forward.6} parent=11 // pred_fallthru
          _
        // Predicated region
        $region17: #{vit_forward.6} parent=11 // pred_check
          %p176 = pneg %p80
        $region18: #{vit_forward.6} parent=11 // pred_check_branch
          %178 = sbr.rel (%p176) target = $region20
        $region19: #{vit_forward.6} parent=11 // pred_region
          _
        $region20: #{vit_forward.6} parent=11 // pred_fallthru
          _
        // Predicated region
        $region21: #{vit_forward.6} parent=11 // pred_check
          %p179 = pneg %p101
        $region22: #{vit_forward.6} parent=11 // pred_check_branch
          %181 = sbr.rel (%p179) target = $region24
        $region23: #{vit_forward.6} parent=11 // pred_region
          _
        $region24: #{vit_forward.6} parent=11 // pred_fallthru
          _
        // Predicated region
        $region25: #{vit_forward.6} parent=11 // pred_check
          %p182 = pneg %p122
        $region26: #{vit_forward.6} parent=11 // pred_check_branch
          %184 = sbr.rel (%p182) target = $region28
        $region27: #{vit_forward.6} parent=11 // pred_region
          _
        $region28: #{vit_forward.6} parent=11 // pred_fallthru
          _
      $region12: #{vit_forward.6} parent=5 // pred_fallthru
        _
      %p185 = scmp.lt.s32.totalorder %s12, 2
      // Predicated region
      $region29: #{vit_forward.6} parent=5 // pred_check
        %p186 = pneg %p185
      $region30: #{vit_forward.6} parent=5 // pred_check_branch
        %188 = sbr.rel (%p186) target = $region32
      $region31: #{vit_forward.6} parent=5 // pred_region
        // Predicated region
        $region33: #{vit_forward.6} parent=31 // pred_check
          %p189 = pneg %p32
        $region34: #{vit_forward.6} parent=31 // pred_check_branch
          %191 = sbr.rel (%p189) target = $region36
        $region35: #{vit_forward.6} parent=31 // pred_region
          %p192 = scmp.lt.s32.totalorder %s12, 1
          %s193 = scalar_select %p192, %s12, 1
          %s194 = smul.addr %s193, 2
          %s195 = smul.addr %s194, 4
          %s196 = scalar_lea.vmem %s0, %s195
        $region36: #{vit_forward.6} parent=31 // pred_fallthru
          _
      $region32: #{vit_forward.6} parent=5 // pred_fallthru
        _
      %p197 = scmp.le.s32.totalorder 1, %s12
      %p198 = scmp.lt.s32.totalorder %s12, 3
      %p199 = pnand %p197, %p198
      %p200 = pneg %p199
      // Predicated region
      $region37: #{vit_forward.6} parent=5 // pred_check
        _
      $region38: #{vit_forward.6} parent=5 // pred_check_branch
        %202 = sbr.rel (%p199) target = $region40
      $region39: #{vit_forward.6} parent=5 // pred_region
        %s203 = ssub.s32 %s12, 1
        // Predicated region
        $region41: #{vit_forward.6} parent=39 // pred_check
          %p204 = pneg %p59
        $region42: #{vit_forward.6} parent=39 // pred_check_branch
          %206 = sbr.rel (%p204) target = $region44
        $region43: #{vit_forward.6} parent=39 // pred_region
          %207 = dma.done [#allocation3], 768
        $region44: #{vit_forward.6} parent=39 // pred_fallthru
          _
        %p208 = scmp.lt.s32.totalorder %s17, 1
        %s209 = scalar_select %p208, %s17, 1
        %s210 = smul.addr %s209, 2
        %s211 = smul.addr %s210, 4
        %s212 = scalar_lea.vmem %s0, %s211
        %p213 = pneg %p38
        %p214 = pneg %p35
        %p215 = pneg %p59
        %p216 = pneg %p56
        %p217 = pneg %p80
        %p218 = pneg %p77
        %p219 = pneg %p101
        %p220 = pneg %p98
        %p221 = pneg %p122
        %p222 = pneg %p119
        %p223 = pneg %p148
        %p224 = pneg %p145
        %p225 = scmp.lt.s32.totalorder %s17, 1
        %s226 = scalar_select %p225, %s17, 1
        %s227 = smul.addr %s226, 6
        %s228 = smul.addr %s227, 4
        %s229 = scalar_lea.vmem %s5, %s228
        %p230 = scmp.lt.s32.totalorder %s17, 1
        %s231 = scalar_select %p230, %s17, 1
        %s232 = smul.addr %s231, 2
        %s233 = smul.addr %s232, 4
        %s234 = scalar_lea.vmem %s0, %s233
        %p235 = scmp.lt.s32.totalorder %s17, 1
        %s236 = scalar_select %p235, %s17, 1
        %s237 = smul.addr %s236, 6
        %s238 = smul.addr %s237, 4
        %s239 = scalar_lea.vmem %s5, %s238
        %v241 = vld [vmem:[%s234] sm:$0xf]
        %v242 = vld [vmem:[%s234 + $0x4] sm:$0xf]
        %v243 = vld [vmem:[#allocation2] sm:$0xff]
        %v244 = vld [vmem:[#allocation2 + $0x8] sm:$0xff]
        %v245 = vld [vmem:[#allocation2 + $0x10] sm:$0xff]
        %v246 = vld [vmem:[#allocation2 + $0x18] sm:$0xff]
        %v247 = vld [vmem:[#allocation2 + $0x20] sm:$0xff]
        %v248 = vld [vmem:[#allocation2 + $0x28] sm:$0xff]
        %v249 = vld [vmem:[%s2] sm:$0x3]
        %v251 = vlaneseq
        %v252 = vshrl.u32 %v251, 7
        %v253 = vsub.s32 0, %v252
        %v254 = vrot.slane %v249, %v253
        %v255 = vlaneseq
        %v256 = vshrl.u32 %v255, 7
        %v257 = vsub.s32 1, %v256
        %v258 = vrot.slane %v249, %v257
        %v263 = vunpack.c.l.b16 %v241
        %v264 = vunpack.c.l.b16 %v242
        %v265 = vpack.c.b16 %v264, %v263
        %v272 = vunpack.c.l.b16 %v243
        %v273 = vunpack.c.h.b16 %v243
        %v274 = vunpack.c.l.b16 %v244
        %v275 = vunpack.c.h.b16 %v244
        %v276 = vunpack.c.l.b16 %v245
        %v277 = vunpack.c.h.b16 %v245
        %v278 = vunpack.c.l.b16 %v246
        %v279 = vunpack.c.h.b16 %v246
        %v280 = vunpack.c.l.b16 %v247
        %v281 = vunpack.c.h.b16 %v247
        %v282 = vunpack.c.l.b16 %v248
        %v283 = vunpack.c.h.b16 %v248
        %v284 = vpack.c.b16 %v274, %v272
        %v285 = vpack.c.b16 %v275, %v273
        %v286 = vpack.c.b16 %v278, %v276
        %v287 = vpack.c.b16 %v279, %v277
        %v288 = vpack.c.b16 %v282, %v280
        %v289 = vpack.c.b16 %v283, %v281
        %vm296 = vcmask 392192
        %v298 = vsel %vm296, %v265, 0
        %300 = vmatprep.subr.bf16.mxu0 %v285
        %301 = vmatpush1.bf16.msra.mxu0 %v284
        %302 = vmatprep.subr.bf16.mxu0 %v287
        %303 = vmatpush1.bf16.msra.mxu0 %v286
        %304 = vmatprep.subr.bf16.mxu0 %v289
        %305 = vmatpush1.bf16.msra.mxu0 %v288
        %306 = vmatprep.subr.bf16.mxu0 0
        %307 = vmatpush1.bf16.msra.mxu0 0
        %308 = vmatprep.subr.bf16.mxu0 0
        %309 = vmatpush1.bf16.msra.mxu0 0
        %310 = vmatprep.subr.bf16.mxu0 0
        %311 = vmatpush1.bf16.msra.mxu0 0
        %312 = vmatprep.subr.bf16.mxu0 0
        %313 = vmatpush1.bf16.msra.mxu0 0
        %314 = vmatprep.subr.bf16.mxu0 0
        %315 = vmatpush1.bf16.msra.mxu0 0
        %316 = vmatprep.subr.bf16.mxu0 0
        %317 = vmatpush1.bf16.msra.mxu0 0
        %318 = vmatprep.subr.bf16.mxu0 0
        %319 = vmatpush1.bf16.msra.mxu0 0
        %320 = vmatprep.subr.bf16.mxu0 0
        %321 = vmatpush1.bf16.msra.mxu0 0
        %322 = vmatprep.subr.bf16.mxu0 0
        %323 = vmatpush1.bf16.msra.mxu0 0
        %324 = vmatprep.subr.bf16.mxu0 0
        %325 = vmatpush1.bf16.msra.mxu0 0
        %326 = vmatprep.subr.bf16.mxu0 0
        %327 = vmatpush1.bf16.msra.mxu0 0
        %328 = vmatprep.subr.bf16.mxu0 0
        %329 = vmatpush1.bf16.msra.mxu0 0
        %330 = vmatprep.subr.bf16.mxu0 0
        %331 = vmatpush1.bf16.msra.mxu0 0
        %332 = vmatprep.mubr.bf16.mxu0 0
        %333 = vmatmul.mubr.bf16.gmra.mrb[0].mxu0 %v298
        %v334 = vpop.f32.mrb[0].mxu0
        %v335 = vadd.f32 %v254, %v334
        %v336 = vpop.f32.mrb[0].mxu0
        %v337 = vadd.f32 %v258, %v336
        %v338 = vpop.f32.mrb[0].mxu0
        %v339 = vadd.f32 %v254, %v338
        %v340 = vpop.f32.mrb[0].mxu0
        %v341 = vadd.f32 %v258, %v340
        %342 = vdwg.mxu0
        %v343 = vld [vmem:[%s4] sm:$0xff]
        %v344 = vld [vmem:[%s4 + $0x8] sm:$0xff]
        %v345 = vld [vmem:[%s4 + $0x10] sm:$0xff]
        %v346 = vunpack.c.l.bf16 %v343
        %v347 = vunpack.c.h.bf16 %v343
        %v348 = vunpack.c.l.bf16 %v344
        %v349 = vunpack.c.h.bf16 %v344
        %v350 = vunpack.c.l.bf16 %v345
        %v351 = vunpack.c.h.bf16 %v345
        %v352 = vld [vmem:[%s3] sm:$0x3]
        %v353 = vunpack.c.l.bf16 %v352
        %v356 = vcombine.low %v346, %v347
        %v358 = vunpack.c.l.s4 1983009808
        %v359 = vunpack.c.0.s8 %v358
        %v360 = vlaneseq
        %v361 = vshrl.u32 %v360, 7
        %v362 = vsub.s32 %v359, %v361
        %v363 = vrot.slane %v356, %v362
        %v365 = vadd.f32 %v353, %v363
        %v367 = vlaneseq
        %v368 = vshrl.u32 %v367, 7
        %v369 = vsub.s32 0, %v368
        %v370 = vrot.slane %v365, %v369
        %v371 = vlaneseq
        %v372 = vshrl.u32 %v371, 7
        %v373 = vsub.s32 2, %v372
        %v374 = vrot.slane %v365, %v373
        %v377 = vpack.c.bf16 %v370, %v370
        %v378 = vpack.c.bf16 %v374, %v374
        %v381 = vunpack.c.l.b16 %v377
        %v382 = vunpack.c.l.b16 %v378
        %v383 = vpack.c.b16 %v382, %v381
        %vm385 = vcmask 1040384
        %vm386 = vsmask.f32 256
        %vm387 = vmand %vm385, %vm386
        %vm388 = vcmask 1044484
        %vm389 = vsmask.f32 4352
        %vm390 = vmand %vm388, %vm389
        %vm391 = vmor %vm390, %vm387
        %v392 = vld [vmem:[%s239] sm:$0x11]
        %v393 = vsel %vm391, %v383, %v392
        %394 = vst [vmem:[%s239] sm:$0x11] %v393
        %vm399 = vcmask 1046528
        %v400 = vrot.slane %v346, 1
        %v401 = vrot.slane %v348, 1
        %v402 = vsel %vm399, %v400, %v401
        %v403 = vrot.slane %v347, 1
        %v404 = vrot.slane %v349, 1
        %v405 = vsel %vm399, %v403, %v404
        %v406 = vrot.slane %v350, 1
        %v407 = vsel %vm399, %v401, %v406
        %v408 = vrot.slane %v351, 1
        %v409 = vsel %vm399, %v404, %v408
        %v414 = vadd.f32 %v335, %v402
        %v415 = vadd.f32 %v337, %v405
        %v416 = vadd.f32 %v339, %v407
        %v417 = vadd.f32 %v341, %v409
        %v418 = vpack.c.bf16 %v416, %v414
        %v419 = vpack.c.bf16 %v417, %v415
        %v422 = vunpack.c.l.b16 %v418
        %v423 = vunpack.c.l.b16 %v419
        %v424 = vunpack.c.h.b16 %v418
        %v425 = vunpack.c.h.b16 %v419
        %v426 = vpack.c.b16 %v423, %v422
        %v427 = vpack.c.b16 %v425, %v424
        %vm428 = vsmask.f32 4368
        %vm429 = vmor %vm386, %vm428
        %v431 = vshrl.u32 %v426, 16
        %v433 = vrot.slane %v431, 7
        %v434 = vshll.u32 %v426, 16
        %v436 = vor.u32 %v433, %v434
        %v437 = vrot.slane %v433, 4
        %v439 = vshrl.u32 %v427, 16
        %v441 = vrot.slane %v439, 7
        %v442 = vshll.u32 %v427, 16
        %v444 = vor.u32 %v441, %v442
        %v445 = vsel %vm429, %v437, %v444
        %v446 = vrot.slane %v441, 4
        %vm450 = vcmask 1043456
        %vm451 = vsmask.f32 7938
        %vm452 = vmand %vm450, %vm451
        %vm453 = vcmask 1047556
        %vm454 = vsmask.f32 7954
        %vm455 = vmand %vm453, %vm454
        %vm456 = vmor %vm455, %vm452
        %v457 = vld [vmem:[%s239] sm:$0xff]
        %v458 = vsel %vm456, %v436, %v457
        %459 = vst [vmem:[%s239] sm:$0xff] %v458
        %460 = vst [vmem:[%s239 + $0x8] sm:$0xff] %v445
        %v461 = vld [vmem:[%s239 + $0x10] sm:$0x11]
        %v462 = vsel %vm391, %v446, %v461
        %463 = vst [vmem:[%s239 + $0x10] sm:$0x11] %v462
        %v464 = vld [vmem:[%s239 + $0x10] sm:$0xff]
        %v465 = vsel %vm456, 0, %v464
        %466 = vst [vmem:[%s239 + $0x10] sm:$0xff] %v465
        %p467 = scmp.lt.s32.totalorder %s17, 1
        %s468 = scalar_select %p467, %s17, 1
        %s469 = smul.addr %s468, 6
        %s470 = smul.addr %s469, 4
        %s471 = scalar_lea.vmem %s5, %s470
        // Predicated region
        $region45: #{vit_forward.6} parent=39 // pred_check
          %p472 = pneg %p145
        $region46: #{vit_forward.6} parent=39 // pred_check_branch
          %474 = sbr.rel (%p472) target = $region48
        $region47: #{vit_forward.6} parent=39 // pred_region
          _
        $region48: #{vit_forward.6} parent=39 // pred_fallthru
          _
      $region40: #{vit_forward.6} parent=5 // pred_fallthru
        _
      %p475 = scmp.le.s32.totalorder 2, %s12
      // Predicated region
      $region49: #{vit_forward.6} parent=5 // pred_check
        %p476 = pneg %p475
      $region50: #{vit_forward.6} parent=5 // pred_check_branch
        %478 = sbr.rel (%p476) target = $region52
      $region51: #{vit_forward.6} parent=5 // pred_region
        %s479 = ssub.s32 %s12, 2
        // Predicated region
        $region53: #{vit_forward.6} parent=51 // pred_check
          %p480 = pneg %p151
        $region54: #{vit_forward.6} parent=51 // pred_check_branch
          %482 = sbr.rel (%p480) target = $region56
        $region55: #{vit_forward.6} parent=51 // pred_region
          %p483 = scmp.lt.s32.totalorder %s18, 1
          %s484 = scalar_select %p483, %s18, 1
          %s485 = smul.addr %s484, 6
          %s486 = smul.addr %s485, 4
          %s487 = scalar_lea.vmem %s5, %s486
        $region56: #{vit_forward.6} parent=51 // pred_fallthru
          _
      $region52: #{vit_forward.6} parent=5 // pred_fallthru
        _
    $region6: #{vit_forward.6} parent=1 // loop_footer
      %s16 = sadd.s32 1, %s12
    $region7: #{vit_forward.6} parent=1 // loop_footer_branch
      %11 = sbr.rel target = $region3
    $region8: #{vit_forward.6} parent=1 // loop_exit
      _
    %488 = vsyncpa [#allocation3], 1
    %s489 = scalar_lea.sflag [#allocation3], 1
    %490 = vsyncpa %s489, 1

// kernel: vit_forward.9
$region0: #{vit_forward.9}
  #allocation0 [shape = 'u32[]', space=smem, size = 0x4, offset = 0x4, fixed_abs, tag = 'smem constant byte address 0x4 - core index']
  #allocation1 [shape = 'u32[144,128]{1,0:T(1,128)}', space=vmem, size = 0x12000, scoped, tag = 'internal scratch']
  %s0 = inlined_call_operand.vmem [shape: bf16[2,24,256], index: 0, kind: input, shape index: {}]
  %s1 = inlined_call_operand.vmem [shape: bf16[256,768], index: 1, kind: input, shape index: {}]
  %s2 = inlined_call_operand.vmem [shape: f32[1,768], index: 2, kind: input, shape index: {}]
  %s3 = inlined_call_operand.vmem [shape: bf16[256,256], index: 3, kind: input, shape index: {}]
  %s4 = inlined_call_operand.vmem [shape: f32[1,256], index: 4, kind: input, shape index: {}]
  %s5 = inlined_call_operand.vmem [shape: f32[1,256], index: 5, kind: input, shape index: {}]
  %s6 = inlined_call_operand.vmem [shape: f32[1,256], index: 6, kind: input, shape index: {}]
  %s7 = inlined_call_operand.vmem [shape: bf16[2,24,256], index: 7, kind: output, shape index: {}]
  %s8 = sld [smem:[#allocation0]]
  $region61: #{vit_forward.9} parent=0
    _
  %s10 = ssub.s32 1, %s8
  %s11 = scalar_select 0, %s10, %s8
  loop: start=0, step=1, limit=4
  $region2: #{vit_forward.9} parent=0 // loop_pre_header
    _
  $region3: #{vit_forward.9} parent=0 // loop_header
    %s13 = sphi 0, %s17
    %p14 = scmp.ge.s32.totalorder %s13, 4
    %s23 = sphi 0, %s25
    %s26 = sphi 0, %s23
    %s27 = sphi 0, %s26
    %s43 = sphi 0, %s27
    %s47 = sphi 0, %s47
    %s49 = sphi 0, %s47
    %s50 = sphi 0, %s49
    %s64 = sphi 0, %s50
    %s68 = sphi 0, %s68
    %s70 = sphi 0, %s68
    %s71 = sphi 0, %s70
    %s85 = sphi 0, %s71
    %s89 = sphi 0, %s89
    %s91 = sphi 0, %s89
    %s92 = sphi 0, %s91
    %s106 = sphi 0, %s92
    %s110 = sphi 0, %s110
    %s112 = sphi 0, %s110
    %s113 = sphi 0, %s112
    %s127 = sphi 0, %s113
    %s131 = sphi 0, %s131
    %s133 = sphi 0, %s131
    %s134 = sphi 0, %s133
    %s148 = sphi 0, %s134
    %s152 = sphi 0, %s152
    %s154 = sphi 0, %s152
    %s155 = sphi 0, %s154
    %s169 = sphi 0, %s155
    %s175 = sphi 0, %s177
    %s178 = sphi 0, %s175
    %s179 = sphi 0, %s178
    %s195 = sphi 0, %s179
  $region4: #{vit_forward.9} parent=0 // loop_header_branch
    %16 = sbr.rel (%p14) target = $region8
  $region5: #{vit_forward.9} parent=0 // loop_body
    %s18 = ssub.s32 %s13, 1
    %s19 = ssub.s32 %s13, 2
    %s20 = sadd.s32 %s13, 1
    %s21 = ssub.s32 %s13, %s20
    %p22 = scmp.eq.s32.totalorder %s21, 0
    %s24 = sadd.s32 %s23, 1
    %s25 = scalar_select %p22, %s23, %s24
    %p28 = pneg %p22
    %p29 = scmp.eq.s32.totalorder %s13, 1
    %p30 = por %p28, %p29
    %p31 = scmp.ne.s32.totalorder %s23, %s26
    %p32 = scmp.eq.s32.totalorder %s13, 0
    %p33 = por %p31, %p32
    %p34 = scmp.ne.s32.totalorder %s23, %s26
    %p35 = scmp.eq.s32.totalorder %s18, 1
    %p36 = por %p34, %p35
    %p37 = scmp.ne.s32.totalorder %s26, %s27
    %p38 = scmp.eq.s32.totalorder %s18, 0
    %p39 = por %p37, %p38
    %p40 = scmp.ne.s32.totalorder %s26, %s27
    %p41 = scmp.eq.s32.totalorder %s19, 1
    %p42 = por %p40, %p41
    %p44 = scmp.ne.s32.totalorder %s27, %s43
    %p45 = scmp.eq.s32.totalorder %s19, 0
    %p46 = por %p44, %p45
    %s48 = sadd.s32 %s47, 1
    %p51 = scmp.eq.s32.totalorder %s13, 1
    %p52 = scmp.ne.s32.totalorder %s47, %s49
    %p53 = scmp.eq.s32.totalorder %s13, 0
    %p54 = por %p52, %p53
    %p55 = scmp.ne.s32.totalorder %s47, %s49
    %p56 = scmp.eq.s32.totalorder %s18, 1
    %p57 = por %p55, %p56
    %p58 = scmp.ne.s32.totalorder %s49, %s50
    %p59 = scmp.eq.s32.totalorder %s18, 0
    %p60 = por %p58, %p59
    %p61 = scmp.ne.s32.totalorder %s49, %s50
    %p62 = scmp.eq.s32.totalorder %s19, 1
    %p63 = por %p61, %p62
    %p65 = scmp.ne.s32.totalorder %s50, %s64
    %p66 = scmp.eq.s32.totalorder %s19, 0
    %p67 = por %p65, %p66
    %s69 = sadd.s32 %s68, 1
    %p72 = scmp.eq.s32.totalorder %s13, 1
    %p73 = scmp.ne.s32.totalorder %s68, %s70
    %p74 = scmp.eq.s32.totalorder %s13, 0
    %p75 = por %p73, %p74
    %p76 = scmp.ne.s32.totalorder %s68, %s70
    %p77 = scmp.eq.s32.totalorder %s18, 1
    %p78 = por %p76, %p77
    %p79 = scmp.ne.s32.totalorder %s70, %s71
    %p80 = scmp.eq.s32.totalorder %s18, 0
    %p81 = por %p79, %p80
    %p82 = scmp.ne.s32.totalorder %s70, %s71
    %p83 = scmp.eq.s32.totalorder %s19, 1
    %p84 = por %p82, %p83
    %p86 = scmp.ne.s32.totalorder %s71, %s85
    %p87 = scmp.eq.s32.totalorder %s19, 0
    %p88 = por %p86, %p87
    %s90 = sadd.s32 %s89, 1
    %p93 = scmp.eq.s32.totalorder %s13, 1
    %p94 = scmp.ne.s32.totalorder %s89, %s91
    %p95 = scmp.eq.s32.totalorder %s13, 0
    %p96 = por %p94, %p95
    %p97 = scmp.ne.s32.totalorder %s89, %s91
    %p98 = scmp.eq.s32.totalorder %s18, 1
    %p99 = por %p97, %p98
    %p100 = scmp.ne.s32.totalorder %s91, %s92
    %p101 = scmp.eq.s32.totalorder %s18, 0
    %p102 = por %p100, %p101
    %p103 = scmp.ne.s32.totalorder %s91, %s92
    %p104 = scmp.eq.s32.totalorder %s19, 1
    %p105 = por %p103, %p104
    %p107 = scmp.ne.s32.totalorder %s92, %s106
    %p108 = scmp.eq.s32.totalorder %s19, 0
    %p109 = por %p107, %p108
    %s111 = sadd.s32 %s110, 1
    %p114 = scmp.eq.s32.totalorder %s13, 1
    %p115 = scmp.ne.s32.totalorder %s110, %s112
    %p116 = scmp.eq.s32.totalorder %s13, 0
    %p117 = por %p115, %p116
    %p118 = scmp.ne.s32.totalorder %s110, %s112
    %p119 = scmp.eq.s32.totalorder %s18, 1
    %p120 = por %p118, %p119
    %p121 = scmp.ne.s32.totalorder %s112, %s113
    %p122 = scmp.eq.s32.totalorder %s18, 0
    %p123 = por %p121, %p122
    %p124 = scmp.ne.s32.totalorder %s112, %s113
    %p125 = scmp.eq.s32.totalorder %s19, 1
    %p126 = por %p124, %p125
    %p128 = scmp.ne.s32.totalorder %s113, %s127
    %p129 = scmp.eq.s32.totalorder %s19, 0
    %p130 = por %p128, %p129
    %s132 = sadd.s32 %s131, 1
    %p135 = scmp.eq.s32.totalorder %s13, 1
    %p136 = scmp.ne.s32.totalorder %s131, %s133
    %p137 = scmp.eq.s32.totalorder %s13, 0
    %p138 = por %p136, %p137
    %p139 = scmp.ne.s32.totalorder %s131, %s133
    %p140 = scmp.eq.s32.totalorder %s18, 1
    %p141 = por %p139, %p140
    %p142 = scmp.ne.s32.totalorder %s133, %s134
    %p143 = scmp.eq.s32.totalorder %s18, 0
    %p144 = por %p142, %p143
    %p145 = scmp.ne.s32.totalorder %s133, %s134
    %p146 = scmp.eq.s32.totalorder %s19, 1
    %p147 = por %p145, %p146
    %p149 = scmp.ne.s32.totalorder %s134, %s148
    %p150 = scmp.eq.s32.totalorder %s19, 0
    %p151 = por %p149, %p150
    %s153 = sadd.s32 %s152, 1
    %p156 = scmp.eq.s32.totalorder %s13, 1
    %p157 = scmp.ne.s32.totalorder %s152, %s154
    %p158 = scmp.eq.s32.totalorder %s13, 0
    %p159 = por %p157, %p158
    %p160 = scmp.ne.s32.totalorder %s152, %s154
    %p161 = scmp.eq.s32.totalorder %s18, 1
    %p162 = por %p160, %p161
    %p163 = scmp.ne.s32.totalorder %s154, %s155
    %p164 = scmp.eq.s32.totalorder %s18, 0
    %p165 = por %p163, %p164
    %p166 = scmp.ne.s32.totalorder %s154, %s155
    %p167 = scmp.eq.s32.totalorder %s19, 1
    %p168 = por %p166, %p167
    %p170 = scmp.ne.s32.totalorder %s155, %s169
    %p171 = scmp.eq.s32.totalorder %s19, 0
    %p172 = por %p170, %p171
    %s173 = ssub.s32 %s13, %s20
    %p174 = scmp.eq.s32.totalorder %s173, 0
    %s176 = sadd.s32 %s175, 1
    %s177 = scalar_select %p174, %s175, %s176
    %p180 = pneg %p174
    %p181 = scmp.eq.s32.totalorder %s13, 1
    %p182 = por %p180, %p181
    %p183 = scmp.ne.s32.totalorder %s175, %s178
    %p184 = scmp.eq.s32.totalorder %s13, 0
    %p185 = por %p183, %p184
    %p186 = scmp.ne.s32.totalorder %s175, %s178
    %p187 = scmp.eq.s32.totalorder %s18, 1
    %p188 = por %p186, %p187
    %p189 = scmp.ne.s32.totalorder %s178, %s179
    %p190 = scmp.eq.s32.totalorder %s18, 0
    %p191 = por %p189, %p190
    %p192 = scmp.ne.s32.totalorder %s178, %s179
    %p193 = scmp.eq.s32.totalorder %s19, 1
    %p194 = por %p192, %p193
    %p196 = scmp.ne.s32.totalorder %s179, %s195
    %p197 = scmp.eq.s32.totalorder %s19, 0
    %p198 = por %p196, %p197
    %p199 = scmp.le.s32.totalorder 1, %s13
    %p200 = scmp.lt.s32.totalorder %s13, 3
    %p201 = pnand %p199, %p200
    %p202 = pneg %p201
    // Predicated region
    $region9: #{vit_forward.9} parent=5 // pred_check
      _
    $region10: #{vit_forward.9} parent=5 // pred_check_branch
      %204 = sbr.rel (%p201) target = $region12
    $region11: #{vit_forward.9} parent=5 // pred_region
      %s205 = ssub.s32 %s13, 1
      // Predicated region
      $region13: #{vit_forward.9} parent=11 // pred_check
        %p206 = pneg %p60
      $region14: #{vit_forward.9} parent=11 // pred_check_branch
        %208 = sbr.rel (%p206) target = $region16
      $region15: #{vit_forward.9} parent=11 // pred_region
        _
      $region16: #{vit_forward.9} parent=11 // pred_fallthru
        _
      // Predicated region
      $region17: #{vit_forward.9} parent=11 // pred_check
        %p209 = pneg %p81
      $region18: #{vit_forward.9} parent=11 // pred_check_branch
        %211 = sbr.rel (%p209) target = $region20
      $region19: #{vit_forward.9} parent=11 // pred_region
        _
      $region20: #{vit_forward.9} parent=11 // pred_fallthru
        _
      // Predicated region
      $region21: #{vit_forward.9} parent=11 // pred_check
        %p212 = pneg %p102
      $region22: #{vit_forward.9} parent=11 // pred_check_branch
        %214 = sbr.rel (%p212) target = $region24
      $region23: #{vit_forward.9} parent=11 // pred_region
        _
      $region24: #{vit_forward.9} parent=11 // pred_fallthru
        _
      // Predicated region
      $region25: #{vit_forward.9} parent=11 // pred_check
        %p215 = pneg %p123
      $region26: #{vit_forward.9} parent=11 // pred_check_branch
        %217 = sbr.rel (%p215) target = $region28
      $region27: #{vit_forward.9} parent=11 // pred_region
        _
      $region28: #{vit_forward.9} parent=11 // pred_fallthru
        _
      // Predicated region
      $region29: #{vit_forward.9} parent=11 // pred_check
        %p218 = pneg %p144
      $region30: #{vit_forward.9} parent=11 // pred_check_branch
        %220 = sbr.rel (%p218) target = $region32
      $region31: #{vit_forward.9} parent=11 // pred_region
        _
      $region32: #{vit_forward.9} parent=11 // pred_fallthru
        _
      // Predicated region
      $region33: #{vit_forward.9} parent=11 // pred_check
        %p221 = pneg %p165
      $region34: #{vit_forward.9} parent=11 // pred_check_branch
        %223 = sbr.rel (%p221) target = $region36
      $region35: #{vit_forward.9} parent=11 // pred_region
        _
      $region36: #{vit_forward.9} parent=11 // pred_fallthru
        _
    $region12: #{vit_forward.9} parent=5 // pred_fallthru
      _
    %p224 = scmp.lt.s32.totalorder %s13, 2
    // Predicated region
    $region37: #{vit_forward.9} parent=5 // pred_check
      %p225 = pneg %p224
    $region38: #{vit_forward.9} parent=5 // pred_check_branch
      %227 = sbr.rel (%p225) target = $region40
    $region39: #{vit_forward.9} parent=5 // pred_region
      // Predicated region
      $region41: #{vit_forward.9} parent=39 // pred_check
        %p228 = pneg %p33
      $region42: #{vit_forward.9} parent=39 // pred_check_branch
        %230 = sbr.rel (%p228) target = $region44
      $region43: #{vit_forward.9} parent=39 // pred_region
        %p231 = scmp.lt.s32.totalorder %s13, 1
        %s232 = scalar_select %p231, %s13, 1
        %s233 = smul.addr %s232, 6
        %s234 = smul.addr %s233, 4
        %s235 = scalar_lea.vmem %s0, %s234
      $region44: #{vit_forward.9} parent=39 // pred_fallthru
        _
    $region40: #{vit_forward.9} parent=5 // pred_fallthru
      _
    %p236 = scmp.le.s32.totalorder 1, %s13
    %p237 = scmp.lt.s32.totalorder %s13, 3
    %p238 = pnand %p236, %p237
    %p239 = pneg %p238
    // Predicated region
    $region45: #{vit_forward.9} parent=5 // pred_check
      _
    $region46: #{vit_forward.9} parent=5 // pred_check_branch
      %241 = sbr.rel (%p238) target = $region48
    $region47: #{vit_forward.9} parent=5 // pred_region
      %s242 = ssub.s32 %s13, 1
      %p243 = scmp.lt.s32.totalorder %s18, 1
      %s244 = scalar_select %p243, %s18, 1
      %s245 = smul.addr %s244, 6
      %s246 = smul.addr %s245, 4
      %s247 = scalar_lea.vmem %s0, %s246
      %p248 = pneg %p39
      %p249 = pneg %p36
      %p250 = pneg %p60
      %p251 = pneg %p57
      %p252 = pneg %p81
      %p253 = pneg %p78
      %p254 = pneg %p102
      %p255 = pneg %p99
      %p256 = pneg %p123
      %p257 = pneg %p120
      %p258 = pneg %p144
      %p259 = pneg %p141
      %p260 = pneg %p165
      %p261 = pneg %p162
      %p262 = pneg %p191
      %p263 = pneg %p188
      %p264 = scmp.lt.s32.totalorder %s18, 1
      %s265 = scalar_select %p264, %s18, 1
      %s266 = smul.addr %s265, 6
      %s267 = smul.addr %s266, 4
      %s268 = scalar_lea.vmem %s7, %s267
      %p269 = scmp.lt.s32.totalorder %s18, 1
      %s270 = scalar_select %p269, %s18, 1
      %s271 = smul.addr %s270, 6
      %s272 = smul.addr %s271, 4
      %s273 = scalar_lea.vmem %s0, %s272
      %p274 = scmp.lt.s32.totalorder %s18, 1
      %s275 = scalar_select %p274, %s18, 1
      %s276 = smul.addr %s275, 6
      %s277 = smul.addr %s276, 4
      %s278 = scalar_lea.vmem %s7, %s277
      %v280 = vld [vmem:[%s273] sm:$0xff]
      %v281 = vld [vmem:[%s273 + $0x8] sm:$0xff]
      %v282 = vld [vmem:[%s273 + $0x10] sm:$0xff]
      %v283 = vld [vmem:[%s1] sm:$0xff]
      %v284 = vld [vmem:[%s1 + $0x8] sm:$0xff]
      %v285 = vld [vmem:[%s1 + $0x10] sm:$0xff]
      %v286 = vld [vmem:[%s1 + $0x18] sm:$0xff]
      %v287 = vld [vmem:[%s1 + $0x20] sm:$0xff]
      %v288 = vld [vmem:[%s1 + $0x28] sm:$0xff]
      %v289 = vld [vmem:[%s1 + $0x30] sm:$0xff]
      %v290 = vld [vmem:[%s1 + $0x38] sm:$0xff]
      %v291 = vld [vmem:[%s1 + $0x40] sm:$0xff]
      %v292 = vld [vmem:[%s1 + $0x48] sm:$0xff]
      %v293 = vld [vmem:[%s1 + $0x50] sm:$0xff]
      %v294 = vld [vmem:[%s1 + $0x58] sm:$0xff]
      %v295 = vld [vmem:[%s1 + $0x60] sm:$0xff]
      %v296 = vld [vmem:[%s1 + $0x68] sm:$0xff]
      %v297 = vld [vmem:[%s1 + $0x70] sm:$0xff]
      %v298 = vld [vmem:[%s1 + $0x78] sm:$0xff]
      %v299 = vld [vmem:[%s1 + $0x80] sm:$0xff]
      %v300 = vld [vmem:[%s1 + $0x88] sm:$0xff]
      %v301 = vld [vmem:[%s1 + $0x90] sm:$0xff]
      %v302 = vld [vmem:[%s1 + $0x98] sm:$0xff]
      %v303 = vld [vmem:[%s1 + $0xa0] sm:$0xff]
      %v304 = vld [vmem:[%s1 + $0xa8] sm:$0xff]
      %v305 = vld [vmem:[%s1 + $0xb0] sm:$0xff]
      %v306 = vld [vmem:[%s1 + $0xb8] sm:$0xff]
      %v307 = vld [vmem:[%s1 + $0xc0] sm:$0xff]
      %v308 = vld [vmem:[%s1 + $0xc8] sm:$0xff]
      %v309 = vld [vmem:[%s1 + $0xd0] sm:$0xff]
      %v310 = vld [vmem:[%s1 + $0xd8] sm:$0xff]
      %v311 = vld [vmem:[%s1 + $0xe0] sm:$0xff]
      %v312 = vld [vmem:[%s1 + $0xe8] sm:$0xff]
      %v313 = vld [vmem:[%s1 + $0xf0] sm:$0xff]
      %v314 = vld [vmem:[%s1 + $0xf8] sm:$0xff]
      %v315 = vld [vmem:[%s1 + $0x100] sm:$0xff]
      %v316 = vld [vmem:[%s1 + $0x108] sm:$0xff]
      %v317 = vld [vmem:[%s1 + $0x110] sm:$0xff]
      %v318 = vld [vmem:[%s1 + $0x118] sm:$0xff]
      %v319 = vld [vmem:[%s1 + $0x120] sm:$0xff]
      %v320 = vld [vmem:[%s1 + $0x128] sm:$0xff]
      %v321 = vld [vmem:[%s1 + $0x130] sm:$0xff]
      %v322 = vld [vmem:[%s1 + $0x138] sm:$0xff]
      %v323 = vld [vmem:[%s1 + $0x140] sm:$0xff]
      %v324 = vld [vmem:[%s1 + $0x148] sm:$0xff]
      %v325 = vld [vmem:[%s1 + $0x150] sm:$0xff]
      %v326 = vld [vmem:[%s1 + $0x158] sm:$0xff]
      %v327 = vld [vmem:[%s1 + $0x160] sm:$0xff]
      %v328 = vld [vmem:[%s1 + $0x168] sm:$0xff]
      %v329 = vld [vmem:[%s1 + $0x170] sm:$0xff]
      %v330 = vld [vmem:[%s1 + $0x178] sm:$0xff]
      %v331 = vld [vmem:[%s1 + $0x180] sm:$0xff]
      %v332 = vld [vmem:[%s1 + $0x188] sm:$0xff]
      %v333 = vld [vmem:[%s1 + $0x190] sm:$0xff]
      %v334 = vld [vmem:[%s1 + $0x198] sm:$0xff]
      %v335 = vld [vmem:[%s1 + $0x1a0] sm:$0xff]
      %v336 = vld [vmem:[%s1 + $0x1a8] sm:$0xff]
      %v337 = vld [vmem:[%s1 + $0x1b0] sm:$0xff]
      %v338 = vld [vmem:[%s1 + $0x1b8] sm:$0xff]
      %v339 = vld [vmem:[%s1 + $0x1c0] sm:$0xff]
      %v340 = vld [vmem:[%s1 + $0x1c8] sm:$0xff]
      %v341 = vld [vmem:[%s1 + $0x1d0] sm:$0xff]
      %v342 = vld [vmem:[%s1 + $0x1d8] sm:$0xff]
      %v343 = vld [vmem:[%s1 + $0x1e0] sm:$0xff]
      %v344 = vld [vmem:[%s1 + $0x1e8] sm:$0xff]
      %v345 = vld [vmem:[%s1 + $0x1f0] sm:$0xff]
      %v346 = vld [vmem:[%s1 + $0x1f8] sm:$0xff]
      %v347 = vld [vmem:[%s1 + $0x200] sm:$0xff]
      %v348 = vld [vmem:[%s1 + $0x208] sm:$0xff]
      %v349 = vld [vmem:[%s1 + $0x210] sm:$0xff]
      %v350 = vld [vmem:[%s1 + $0x218] sm:$0xff]
      %v351 = vld [vmem:[%s1 + $0x220] sm:$0xff]
      %v352 = vld [vmem:[%s1 + $0x228] sm:$0xff]
      %v353 = vld [vmem:[%s1 + $0x230] sm:$0xff]
      %v354 = vld [vmem:[%s1 + $0x238] sm:$0xff]
      %v355 = vld [vmem:[%s1 + $0x240] sm:$0xff]
      %v356 = vld [vmem:[%s1 + $0x248] sm:$0xff]
      %v357 = vld [vmem:[%s1 + $0x250] sm:$0xff]
      %v358 = vld [vmem:[%s1 + $0x258] sm:$0xff]
      %v359 = vld [vmem:[%s1 + $0x260] sm:$0xff]
      %v360 = vld [vmem:[%s1 + $0x268] sm:$0xff]
      %v361 = vld [vmem:[%s1 + $0x270] sm:$0xff]
      %v362 = vld [vmem:[%s1 + $0x278] sm:$0xff]
      %v363 = vld [vmem:[%s1 + $0x280] sm:$0xff]
      %v364 = vld [vmem:[%s1 + $0x288] sm:$0xff]
      %v365 = vld [vmem:[%s1 + $0x290] sm:$0xff]
      %v366 = vld [vmem:[%s1 + $0x298] sm:$0xff]
      %v367 = vld [vmem:[%s1 + $0x2a0] sm:$0xff]
      %v368 = vld [vmem:[%s1 + $0x2a8] sm:$0xff]
      %v369 = vld [vmem:[%s1 + $0x2b0] sm:$0xff]
      %v370 = vld [vmem:[%s1 + $0x2b8] sm:$0xff]
      %v371 = vld [vmem:[%s1 + $0x2c0] sm:$0xff]
      %v372 = vld [vmem:[%s1 + $0x2c8] sm:$0xff]
      %v373 = vld [vmem:[%s1 + $0x2d0] sm:$0xff]
      %v374 = vld [vmem:[%s1 + $0x2d8] sm:$0xff]
      %v375 = vld [vmem:[%s1 + $0x2e0] sm:$0xff]
      %v376 = vld [vmem:[%s1 + $0x2e8] sm:$0xff]
      %v377 = vld [vmem:[%s1 + $0x2f0] sm:$0xff]
      %v378 = vld [vmem:[%s1 + $0x2f8] sm:$0xff]
      %v379 = vld [vmem:[%s2] sm:$0x3f]
      %v381 = vlaneseq
      %v382 = vshrl.u32 %v381, 7
      %v383 = vsub.s32 0, %v382
      %v384 = vrot.slane %v379, %v383
      %v385 = vlaneseq
      %v386 = vshrl.u32 %v385, 7
      %v387 = vsub.s32 1, %v386
      %v388 = vrot.slane %v379, %v387
      %v389 = vlaneseq
      %v390 = vshrl.u32 %v389, 7
      %v391 = vsub.s32 2, %v390
      %v392 = vrot.slane %v379, %v391
      %v393 = vlaneseq
      %v394 = vshrl.u32 %v393, 7
      %v395 = vsub.s32 3, %v394
      %v396 = vrot.slane %v379, %v395
      %v397 = vlaneseq
      %v398 = vshrl.u32 %v397, 7
      %v399 = vsub.s32 4, %v398
      %v400 = vrot.slane %v379, %v399
      %v401 = vlaneseq
      %v402 = vshrl.u32 %v401, 7
      %v403 = vsub.s32 5, %v402
      %v404 = vrot.slane %v379, %v403
      %v414 = vunpack.c.l.b16 %v280
      %v415 = vunpack.c.h.b16 %v280
      %v416 = vunpack.c.l.b16 %v281
      %v417 = vunpack.c.h.b16 %v281
      %v418 = vunpack.c.l.b16 %v282
      %v419 = vunpack.c.h.b16 %v282
      %v420 = vpack.c.b16 %v416, %v414
      %v421 = vpack.c.b16 %v417, %v415
      %v422 = vpack.c.b16 %v418, %v418
      %v423 = vpack.c.b16 %v419, %v419
      %v524 = vunpack.c.l.b16 %v283
      %v525 = vunpack.c.h.b16 %v283
      %v526 = vunpack.c.l.b16 %v284
      %v527 = vunpack.c.h.b16 %v284
      %v528 = vunpack.c.l.b16 %v285
      %v529 = vunpack.c.h.b16 %v285
      %v530 = vunpack.c.l.b16 %v286
      %v531 = vunpack.c.h.b16 %v286
      %v532 = vunpack.c.l.b16 %v287
      %v533 = vunpack.c.h.b16 %v287
      %v534 = vunpack.c.l.b16 %v288
      %v535 = vunpack.c.h.b16 %v288
      %v536 = vunpack.c.l.b16 %v289
      %v537 = vunpack.c.h.b16 %v289
      %v538 = vunpack.c.l.b16 %v290
      %v539 = vunpack.c.h.b16 %v290
      %v540 = vunpack.c.l.b16 %v291
      %v541 = vunpack.c.h.b16 %v291
      %v542 = vunpack.c.l.b16 %v292
      %v543 = vunpack.c.h.b16 %v292
      %v544 = vunpack.c.l.b16 %v293
      %v545 = vunpack.c.h.b16 %v293
      %v546 = vunpack.c.l.b16 %v294
      %v547 = vunpack.c.h.b16 %v294
      %v548 = vunpack.c.l.b16 %v295
      %v549 = vunpack.c.h.b16 %v295
      %v550 = vunpack.c.l.b16 %v296
      %v551 = vunpack.c.h.b16 %v296
      %v552 = vunpack.c.l.b16 %v297
      %v553 = vunpack.c.h.b16 %v297
      %v554 = vunpack.c.l.b16 %v298
      %v555 = vunpack.c.h.b16 %v298
      %v556 = vunpack.c.l.b16 %v299
      %v557 = vunpack.c.h.b16 %v299
      %v558 = vunpack.c.l.b16 %v300
      %v559 = vunpack.c.h.b16 %v300
      %v560 = vunpack.c.l.b16 %v301
      %v561 = vunpack.c.h.b16 %v301
      %v562 = vunpack.c.l.b16 %v302
      %v563 = vunpack.c.h.b16 %v302
      %v564 = vunpack.c.l.b16 %v303
      %v565 = vunpack.c.h.b16 %v303
      %v566 = vunpack.c.l.b16 %v304
      %v567 = vunpack.c.h.b16 %v304
      %v568 = vunpack.c.l.b16 %v305
      %v569 = vunpack.c.h.b16 %v305
      %v570 = vunpack.c.l.b16 %v306
      %v571 = vunpack.c.h.b16 %v306
      %v572 = vunpack.c.l.b16 %v307
      %v573 = vunpack.c.h.b16 %v307
      %v574 = vunpack.c.l.b16 %v308
      %v575 = vunpack.c.h.b16 %v308
      %v576 = vunpack.c.l.b16 %v309
      %v577 = vunpack.c.h.b16 %v309
      %v578 = vunpack.c.l.b16 %v310
      %v579 = vunpack.c.h.b16 %v310
      %v580 = vunpack.c.l.b16 %v311
      %v581 = vunpack.c.h.b16 %v311
      %v582 = vunpack.c.l.b16 %v312
      %v583 = vunpack.c.h.b16 %v312
      %v584 = vunpack.c.l.b16 %v313
      %v585 = vunpack.c.h.b16 %v313
      %v586 = vunpack.c.l.b16 %v314
      %v587 = vunpack.c.h.b16 %v314
      %v588 = vunpack.c.l.b16 %v315
      %v589 = vunpack.c.h.b16 %v315
      %v590 = vunpack.c.l.b16 %v316
      %v591 = vunpack.c.h.b16 %v316
      %v592 = vunpack.c.l.b16 %v317
      %v593 = vunpack.c.h.b16 %v317
      %v594 = vunpack.c.l.b16 %v318
      %v595 = vunpack.c.h.b16 %v318
      %v596 = vunpack.c.l.b16 %v319
      %v597 = vunpack.c.h.b16 %v319
      %v598 = vunpack.c.l.b16 %v320
      %v599 = vunpack.c.h.b16 %v320
      %v600 = vunpack.c.l.b16 %v321
      %v601 = vunpack.c.h.b16 %v321
      %v602 = vunpack.c.l.b16 %v322
      %v603 = vunpack.c.h.b16 %v322
      %v604 = vunpack.c.l.b16 %v323
      %v605 = vunpack.c.h.b16 %v323
      %v606 = vunpack.c.l.b16 %v324
      %v607 = vunpack.c.h.b16 %v324
      %v608 = vunpack.c.l.b16 %v325
      %v609 = vunpack.c.h.b16 %v325
      %v610 = vunpack.c.l.b16 %v326
      %v611 = vunpack.c.h.b16 %v326
      %v612 = vunpack.c.l.b16 %v327
      %v613 = vunpack.c.h.b16 %v327
      %v614 = vunpack.c.l.b16 %v328
      %v615 = vunpack.c.h.b16 %v328
      %v616 = vunpack.c.l.b16 %v329
      %v617 = vunpack.c.h.b16 %v329
      %v618 = vunpack.c.l.b16 %v330
      %v619 = vunpack.c.h.b16 %v330
      %v620 = vunpack.c.l.b16 %v331
      %v621 = vunpack.c.h.b16 %v331
      %v622 = vunpack.c.l.b16 %v332
      %v623 = vunpack.c.h.b16 %v332
      %v624 = vunpack.c.l.b16 %v333
      %v625 = vunpack.c.h.b16 %v333
      %v626 = vunpack.c.l.b16 %v334
      %v627 = vunpack.c.h.b16 %v334
      %v628 = vunpack.c.l.b16 %v335
      %v629 = vunpack.c.h.b16 %v335
      %v630 = vunpack.c.l.b16 %v336
      %v631 = vunpack.c.h.b16 %v336
      %v632 = vunpack.c.l.b16 %v337
      %v633 = vunpack.c.h.b16 %v337
      %v634 = vunpack.c.l.b16 %v338
      %v635 = vunpack.c.h.b16 %v338
      %v636 = vunpack.c.l.b16 %v339
      %v637 = vunpack.c.h.b16 %v339
      %v638 = vunpack.c.l.b16 %v340
      %v639 = vunpack.c.h.b16 %v340
      %v640 = vunpack.c.l.b16 %v341
      %v641 = vunpack.c.h.b16 %v341
      %v642 = vunpack.c.l.b16 %v342
      %v643 = vunpack.c.h.b16 %v342
      %v644 = vunpack.c.l.b16 %v343
      %v645 = vunpack.c.h.b16 %v343
      %v646 = vunpack.c.l.b16 %v344
      %v647 = vunpack.c.h.b16 %v344
      %v648 = vunpack.c.l.b16 %v345
      %v649 = vunpack.c.h.b16 %v345
      %v650 = vunpack.c.l.b16 %v346
      %v651 = vunpack.c.h.b16 %v346
      %v652 = vunpack.c.l.b16 %v347
      %v653 = vunpack.c.h.b16 %v347
      %v654 = vunpack.c.l.b16 %v348
      %v655 = vunpack.c.h.b16 %v348
      %v656 = vunpack.c.l.b16 %v349
      %v657 = vunpack.c.h.b16 %v349
      %v658 = vunpack.c.l.b16 %v350
      %v659 = vunpack.c.h.b16 %v350
      %v660 = vunpack.c.l.b16 %v351
      %v661 = vunpack.c.h.b16 %v351
      %v662 = vunpack.c.l.b16 %v352
      %v663 = vunpack.c.h.b16 %v352
      %v664 = vunpack.c.l.b16 %v353
      %v665 = vunpack.c.h.b16 %v353
      %v666 = vunpack.c.l.b16 %v354
      %v667 = vunpack.c.h.b16 %v354
      %v668 = vunpack.c.l.b16 %v355
      %v669 = vunpack.c.h.b16 %v355
      %v670 = vunpack.c.l.b16 %v356
      %v671 = vunpack.c.h.b16 %v356
      %v672 = vunpack.c.l.b16 %v357
      %v673 = vunpack.c.h.b16 %v357
      %v674 = vunpack.c.l.b16 %v358
      %v675 = vunpack.c.h.b16 %v358
      %v676 = vunpack.c.l.b16 %v359
      %v677 = vunpack.c.h.b16 %v359
      %v678 = vunpack.c.l.b16 %v360
      %v679 = vunpack.c.h.b16 %v360
      %v680 = vunpack.c.l.b16 %v361
      %v681 = vunpack.c.h.b16 %v361
      %v682 = vunpack.c.l.b16 %v362
      %v683 = vunpack.c.h.b16 %v362
      %v684 = vunpack.c.l.b16 %v363
      %v685 = vunpack.c.h.b16 %v363
      %v686 = vunpack.c.l.b16 %v364
      %v687 = vunpack.c.h.b16 %v364
      %v688 = vunpack.c.l.b16 %v365
      %v689 = vunpack.c.h.b16 %v365
      %v690 = vunpack.c.l.b16 %v366
      %v691 = vunpack.c.h.b16 %v366
      %v692 = vunpack.c.l.b16 %v367
      %v693 = vunpack.c.h.b16 %v367
      %v694 = vunpack.c.l.b16 %v368
      %v695 = vunpack.c.h.b16 %v368
      %v696 = vunpack.c.l.b16 %v369
      %v697 = vunpack.c.h.b16 %v369
      %v698 = vunpack.c.l.b16 %v370
      %v699 = vunpack.c.h.b16 %v370
      %v700 = vunpack.c.l.b16 %v371
      %v701 = vunpack.c.h.b16 %v371
      %v702 = vunpack.c.l.b16 %v372
      %v703 = vunpack.c.h.b16 %v372
      %v704 = vunpack.c.l.b16 %v373
      %v705 = vunpack.c.h.b16 %v373
      %v706 = vunpack.c.l.b16 %v374
      %v707 = vunpack.c.h.b16 %v374
      %v708 = vunpack.c.l.b16 %v375
      %v709 = vunpack.c.h.b16 %v375
      %v710 = vunpack.c.l.b16 %v376
      %v711 = vunpack.c.h.b16 %v376
      %v712 = vunpack.c.l.b16 %v377
      %v713 = vunpack.c.h.b16 %v377
      %v714 = vunpack.c.l.b16 %v378
      %v715 = vunpack.c.h.b16 %v378
      %v716 = vpack.c.b16 %v530, %v524
      %v717 = vpack.c.b16 %v531, %v525
      %v718 = vpack.c.b16 %v532, %v526
      %v719 = vpack.c.b16 %v533, %v527
      %v720 = vpack.c.b16 %v534, %v528
      %v721 = vpack.c.b16 %v535, %v529
      %v722 = vpack.c.b16 %v542, %v536
      %v723 = vpack.c.b16 %v543, %v537
      %v724 = vpack.c.b16 %v544, %v538
      %v725 = vpack.c.b16 %v545, %v539
      %v726 = vpack.c.b16 %v546, %v540
      %v727 = vpack.c.b16 %v547, %v541
      %v728 = vpack.c.b16 %v554, %v548
      %v729 = vpack.c.b16 %v555, %v549
      %v730 = vpack.c.b16 %v556, %v550
      %v731 = vpack.c.b16 %v557, %v551
      %v732 = vpack.c.b16 %v558, %v552
      %v733 = vpack.c.b16 %v559, %v553
      %v734 = vpack.c.b16 %v566, %v560
      %v735 = vpack.c.b16 %v567, %v561
      %v736 = vpack.c.b16 %v568, %v562
      %v737 = vpack.c.b16 %v569, %v563
      %v738 = vpack.c.b16 %v570, %v564
      %v739 = vpack.c.b16 %v571, %v565
      %v740 = vpack.c.b16 %v578, %v572
      %v741 = vpack.c.b16 %v579, %v573
      %v742 = vpack.c.b16 %v580, %v574
      %v743 = vpack.c.b16 %v581, %v575
      %v744 = vpack.c.b16 %v582, %v576
      %v745 = vpack.c.b16 %v583, %v577
      %v746 = vpack.c.b16 %v590, %v584
      %v747 = vpack.c.b16 %v591, %v585
      %v748 = vpack.c.b16 %v592, %v586
      %v749 = vpack.c.b16 %v593, %v587
      %v750 = vpack.c.b16 %v594, %v588
      %v751 = vpack.c.b16 %v595, %v589
      %v752 = vpack.c.b16 %v602, %v596
      %v753 = vpack.c.b16 %v603, %v597
      %v754 = vpack.c.b16 %v604, %v598
      %v755 = vpack.c.b16 %v605, %v599
      %v756 = vpack.c.b16 %v606, %v600
      %v757 = vpack.c.b16 %v607, %v601
      %v758 = vpack.c.b16 %v614, %v608
      %v759 = vpack.c.b16 %v615, %v609
      %v760 = vpack.c.b16 %v616, %v610
      %v761 = vpack.c.b16 %v617, %v611
      %v762 = vpack.c.b16 %v618, %v612
      %v763 = vpack.c.b16 %v619, %v613
      %v764 = vpack.c.b16 %v626, %v620
      %v765 = vpack.c.b16 %v627, %v621
      %v766 = vpack.c.b16 %v628, %v622
      %v767 = vpack.c.b16 %v629, %v623
      %v768 = vpack.c.b16 %v630, %v624
      %v769 = vpack.c.b16 %v631, %v625
      %v770 = vpack.c.b16 %v638, %v632
      %v771 = vpack.c.b16 %v639, %v633
      %v772 = vpack.c.b16 %v640, %v634
      %v773 = vpack.c.b16 %v641, %v635
      %v774 = vpack.c.b16 %v642, %v636
      %v775 = vpack.c.b16 %v643, %v637
      %v776 = vpack.c.b16 %v650, %v644
      %v777 = vpack.c.b16 %v651, %v645
      %v778 = vpack.c.b16 %v652, %v646
      %v779 = vpack.c.b16 %v653, %v647
      %v780 = vpack.c.b16 %v654, %v648
      %v781 = vpack.c.b16 %v655, %v649
      %v782 = vpack.c.b16 %v662, %v656
      %v783 = vpack.c.b16 %v663, %v657
      %v784 = vpack.c.b16 %v664, %v658
      %v785 = vpack.c.b16 %v665, %v659
      %v786 = vpack.c.b16 %v666, %v660
      %v787 = vpack.c.b16 %v667, %v661
      %v788 = vpack.c.b16 %v674, %v668
      %v789 = vpack.c.b16 %v675, %v669
      %v790 = vpack.c.b16 %v676, %v670
      %v791 = vpack.c.b16 %v677, %v671
      %v792 = vpack.c.b16 %v678, %v672
      %v793 = vpack.c.b16 %v679, %v673
      %v794 = vpack.c.b16 %v686, %v680
      %v795 = vpack.c.b16 %v687, %v681
      %v796 = vpack.c.b16 %v688, %v682
      %v797 = vpack.c.b16 %v689, %v683
      %v798 = vpack.c.b16 %v690, %v684
      %v799 = vpack.c.b16 %v691, %v685
      %v800 = vpack.c.b16 %v698, %v692
      %v801 = vpack.c.b16 %v699, %v693
      %v802 = vpack.c.b16 %v700, %v694
      %v803 = vpack.c.b16 %v701, %v695
      %v804 = vpack.c.b16 %v702, %v696
      %v805 = vpack.c.b16 %v703, %v697
      %v806 = vpack.c.b16 %v710, %v704
      %v807 = vpack.c.b16 %v711, %v705
      %v808 = vpack.c.b16 %v712, %v706
      %v809 = vpack.c.b16 %v713, %v707
      %v810 = vpack.c.b16 %v714, %v708
      %v811 = vpack.c.b16 %v715, %v709
      %908 = vmatprep.subr.bf16.mxu0 %v717
      %909 = vmatpush1.bf16.msra.mxu0 %v716
      %910 = vmatprep.subr.bf16.mxu0 %v723
      %911 = vmatpush1.bf16.msra.mxu0 %v722
      %912 = vmatprep.subr.bf16.mxu0 %v729
      %913 = vmatpush1.bf16.msra.mxu0 %v728
      %914 = vmatprep.subr.bf16.mxu0 %v735
      %915 = vmatpush1.bf16.msra.mxu0 %v734
      %916 = vmatprep.subr.bf16.mxu0 %v741
      %917 = vmatpush1.bf16.msra.mxu0 %v740
      %918 = vmatprep.subr.bf16.mxu0 %v747
      %919 = vmatpush1.bf16.msra.mxu0 %v746
      %920 = vmatprep.subr.bf16.mxu0 %v753
      %921 = vmatpush1.bf16.msra.mxu0 %v752
      %922 = vmatprep.subr.bf16.mxu0 %v759
      %923 = vmatpush1.bf16.msra.mxu0 %v758
      %924 = vmatprep.subr.bf16.mxu0 %v765
      %925 = vmatpush1.bf16.msra.mxu0 %v764
      %926 = vmatprep.subr.bf16.mxu0 %v771
      %927 = vmatpush1.bf16.msra.mxu0 %v770
      %928 = vmatprep.subr.bf16.mxu0 %v777
      %929 = vmatpush1.bf16.msra.mxu0 %v776
      %930 = vmatprep.subr.bf16.mxu0 %v783
      %931 = vmatpush1.bf16.msra.mxu0 %v782
      %932 = vmatprep.subr.bf16.mxu0 %v789
      %933 = vmatpush1.bf16.msra.mxu0 %v788
      %934 = vmatprep.subr.bf16.mxu0 %v795
      %935 = vmatpush1.bf16.msra.mxu0 %v794
      %936 = vmatprep.subr.bf16.mxu0 %v801
      %937 = vmatpush1.bf16.msra.mxu0 %v800
      %938 = vmatprep.subr.bf16.mxu0 %v807
      %939 = vmatpush1.bf16.msra.mxu0 %v806
      %940 = vmatprep.mubr.bf16.mxu0 %v421
      %941 = vmatmul.mubr.bf16.gmra.mrb[0].mxu0 %v420
      %v942 = vpop.f32.mrb[0].mxu0
      %v943 = vadd.f32 %v384, %v942
      %v944 = vpop.f32.mrb[0].mxu0
      %v945 = vadd.f32 %v388, %v944
      %v946 = vpop.f32.mrb[0].mxu0
      %v947 = vadd.f32 %v384, %v946
      %v948 = vpop.f32.mrb[0].mxu0
      %v949 = vadd.f32 %v388, %v948
      %950 = vmatprep.mubr.bf16.mxu0 %v423
      %951 = vmatmul.mubr.bf16.gmra.mrb[0].mxu0 %v422
      %v952 = vpop.f32.mrb[0].mxu0
      %v953 = vadd.f32 %v384, %v952
      %v954 = vpop.f32.mrb[0].mxu0
      %v955 = vadd.f32 %v388, %v954
      %v956 = vpop.f32.mrb[0].mxu0
      %v957 = vpop.f32.mrb[0].mxu0
      %958 = vdwg.mxu0
      %959 = vmatprep.subr.bf16.mxu0 %v719
      %960 = vmatpush1.bf16.msra.mxu0 %v718
      %961 = vmatprep.subr.bf16.mxu0 %v725
      %962 = vmatpush1.bf16.msra.mxu0 %v724
      %963 = vmatprep.subr.bf16.mxu0 %v731
      %964 = vmatpush1.bf16.msra.mxu0 %v730
      %965 = vmatprep.subr.bf16.mxu0 %v737
      %966 = vmatpush1.bf16.msra.mxu0 %v736
      %967 = vmatprep.subr.bf16.mxu0 %v743
      %968 = vmatpush1.bf16.msra.mxu0 %v742
      %969 = vmatprep.subr.bf16.mxu0 %v749
      %970 = vmatpush1.bf16.msra.mxu0 %v748
      %971 = vmatprep.subr.bf16.mxu0 %v755
      %972 = vmatpush1.bf16.msra.mxu0 %v754
      %973 = vmatprep.subr.bf16.mxu0 %v761
      %974 = vmatpush1.bf16.msra.mxu0 %v760
      %975 = vmatprep.subr.bf16.mxu0 %v767
      %976 = vmatpush1.bf16.msra.mxu0 %v766
      %977 = vmatprep.subr.bf16.mxu0 %v773
      %978 = vmatpush1.bf16.msra.mxu0 %v772
      %979 = vmatprep.subr.bf16.mxu0 %v779
      %980 = vmatpush1.bf16.msra.mxu0 %v778
      %981 = vmatprep.subr.bf16.mxu0 %v785
      %982 = vmatpush1.bf16.msra.mxu0 %v784
      %983 = vmatprep.subr.bf16.mxu0 %v791
      %984 = vmatpush1.bf16.msra.mxu0 %v790
      %985 = vmatprep.subr.bf16.mxu0 %v797
      %986 = vmatpush1.bf16.msra.mxu0 %v796
      %987 = vmatprep.subr.bf16.mxu0 %v803
      %988 = vmatpush1.bf16.msra.mxu0 %v802
      %989 = vmatprep.subr.bf16.mxu0 %v809
      %990 = vmatpush1.bf16.msra.mxu0 %v808
      %991 = vmatprep.mubr.bf16.mxu0 %v421
      %992 = vmatmul.mubr.bf16.gmra.mrb[0].mxu0 %v420
      %v993 = vpop.f32.mrb[0].mxu0
      %v994 = vadd.f32 %v392, %v993
      %v995 = vpop.f32.mrb[0].mxu0
      %v996 = vadd.f32 %v396, %v995
      %v997 = vpop.f32.mrb[0].mxu0
      %v998 = vadd.f32 %v392, %v997
      %v999 = vpop.f32.mrb[0].mxu0
      %v1000 = vadd.f32 %v396, %v999
      %1001 = vmatprep.mubr.bf16.mxu0 %v423
      %1002 = vmatmul.mubr.bf16.gmra.mrb[0].mxu0 %v422
      %v1003 = vpop.f32.mrb[0].mxu0
      %v1004 = vadd.f32 %v392, %v1003
      %v1005 = vpop.f32.mrb[0].mxu0
      %v1006 = vadd.f32 %v396, %v1005
      %v1007 = vpop.f32.mrb[0].mxu0
      %v1008 = vpop.f32.mrb[0].mxu0
      %1009 = vdwg.mxu0
      %1010 = vmatprep.subr.bf16.mxu0 %v721
      %1011 = vmatpush1.bf16.msra.mxu0 %v720
      %1012 = vmatprep.subr.bf16.mxu0 %v727
      %1013 = vmatpush1.bf16.msra.mxu0 %v726
      %1014 = vmatprep.subr.bf16.mxu0 %v733
      %1015 = vmatpush1.bf16.msra.mxu0 %v732
      %1016 = vmatprep.subr.bf16.mxu0 %v739
      %1017 = vmatpush1.bf16.msra.mxu0 %v738
      %1018 = vmatprep.subr.bf16.mxu0 %v745
      %1019 = vmatpush1.bf16.msra.mxu0 %v744
      %1020 = vmatprep.subr.bf16.mxu0 %v751
      %1021 = vmatpush1.bf16.msra.mxu0 %v750
      %1022 = vmatprep.subr.bf16.mxu0 %v757
      %1023 = vmatpush1.bf16.msra.mxu0 %v756
      %1024 = vmatprep.subr.bf16.mxu0 %v763
      %1025 = vmatpush1.bf16.msra.mxu0 %v762
      %1026 = vmatprep.subr.bf16.mxu0 %v769
      %1027 = vmatpush1.bf16.msra.mxu0 %v768
      %1028 = vmatprep.subr.bf16.mxu0 %v775
      %1029 = vmatpush1.bf16.msra.mxu0 %v774
      %1030 = vmatprep.subr.bf16.mxu0 %v781
      %1031 = vmatpush1.bf16.msra.mxu0 %v780
      %1032 = vmatprep.subr.bf16.mxu0 %v787
      %1033 = vmatpush1.bf16.msra.mxu0 %v786
      %1034 = vmatprep.subr.bf16.mxu0 %v793
      %1035 = vmatpush1.bf16.msra.mxu0 %v792
      %1036 = vmatprep.subr.bf16.mxu0 %v799
      %1037 = vmatpush1.bf16.msra.mxu0 %v798
      %1038 = vmatprep.subr.bf16.mxu0 %v805
      %1039 = vmatpush1.bf16.msra.mxu0 %v804
      %1040 = vmatprep.subr.bf16.mxu0 %v811
      %1041 = vmatpush1.bf16.msra.mxu0 %v810
      %1042 = vmatprep.mubr.bf16.mxu0 %v421
      %1043 = vmatmul.mubr.bf16.gmra.mrb[0].mxu0 %v420
      %v1044 = vpop.f32.mrb[0].mxu0
      %v1045 = vadd.f32 %v400, %v1044
      %v1046 = vpop.f32.mrb[0].mxu0
      %v1047 = vadd.f32 %v404, %v1046
      %v1048 = vpop.f32.mrb[0].mxu0
      %v1049 = vadd.f32 %v400, %v1048
      %v1050 = vpop.f32.mrb[0].mxu0
      %v1051 = vadd.f32 %v404, %v1050
      %1052 = vmatprep.mubr.bf16.mxu0 %v423
      %1053 = vmatmul.mubr.bf16.gmra.mrb[0].mxu0 %v422
      %v1054 = vpop.f32.mrb[0].mxu0
      %v1055 = vadd.f32 %v400, %v1054
      %v1056 = vpop.f32.mrb[0].mxu0
      %v1057 = vadd.f32 %v404, %v1056
      %v1058 = vpop.f32.mrb[0].mxu0
      %v1059 = vpop.f32.mrb[0].mxu0
      %1060 = vdwg.mxu0
      %v1061 = vlaneseq
      %v1062 = vand.u32 %v1061, 127
      %vm1063 = vcmp.lt.s32.totalorder %v1062, 17
      %v1064 = vpack.c.bf16 %v947, %v943
      %v1065 = vpack.c.bf16 %v953, %v953
      %v1066 = vpack.c.bf16 %v998, %v994
      %v1067 = vpack.c.bf16 %v1004, %v1004
      %v1068 = vpack.c.bf16 %v1049, %v1045
      %v1069 = vpack.c.bf16 %v1055, %v1055
      %1070 = vmatprep.subr.bf16.mxu0 0
      %1071 = vmatpush1.bf16.xpose.msra.mxu0 %v1066
      %1072 = vmatprep.subr.bf16.mxu0 0
      %1073 = vmatpush1.bf16.xpose.msra.mxu0 %v1067
      %1074 = vmatprep.subr.bf16.mxu0 0
      %1075 = vmatpush1.bf16.xpose.msra.mxu0 0
      %1076 = vmatprep.subr.bf16.mxu0 0
      %1077 = vmatpush1.bf16.xpose.msra.mxu0 0
      %1078 = vmatprep.subr.bf16.mxu0 0
      %1079 = vmatpush1.bf16.xpose.msra.mxu0 0
      %1080 = vmatprep.subr.bf16.mxu0 0
      %1081 = vmatpush1.bf16.xpose.msra.mxu0 0
      %1082 = vmatprep.subr.bf16.mxu0 0
      %1083 = vmatpush1.bf16.xpose.msra.mxu0 0
      %1084 = vmatprep.subr.bf16.mxu0 0
      %1085 = vmatpush1.bf16.xpose.msra.mxu0 0
      %1086 = vmatprep.subr.bf16.mxu0 0
      %1087 = vmatpush1.bf16.xpose.msra.mxu0 0
      %1088 = vmatprep.subr.bf16.mxu0 0
      %1089 = vmatpush1.bf16.xpose.msra.mxu0 0
      %1090 = vmatprep.subr.bf16.mxu0 0
      %1091 = vmatpush1.bf16.xpose.msra.mxu0 0
      %1092 = vmatprep.subr.bf16.mxu0 0
      %1093 = vmatpush1.bf16.xpose.msra.mxu0 0
      %1094 = vmatprep.subr.bf16.mxu0 0
      %1095 = vmatpush1.bf16.xpose.msra.mxu0 0
      %1096 = vmatprep.subr.bf16.mxu0 0
      %1097 = vmatpush1.bf16.xpose.msra.mxu0 0
      %1098 = vmatprep.subr.bf16.mxu0 0
      %1099 = vmatpush1.bf16.xpose.msra.mxu0 0
      %1100 = vmatprep.subr.bf16.mxu0 0
      %1101 = vmatpush1.bf16.xpose.msra.mxu0 0
      %1102 = vmatprep.mubr.bf16.mxu0 0
      %1103 = vmatmul.mubr.bf16.gmra.mrb[0].mxu0 %v1064
      %v1104 = vpop.f32.mrb[0].mxu0
      %v1105 = vadd.f32 0.0, %v1104
      %v1106 = vpop.f32.mrb[0].mxu0
      %v1107 = vpop.f32.mrb[0].mxu0
      %v1108 = vadd.f32 0.0, %v1107
      %v1109 = vpop.f32.mrb[0].mxu0
      %1110 = vmatprep.mubr.bf16.mxu0 0
      %1111 = vmatmul.mubr.bf16.gmra.mrb[0].mxu0 %v1065
      %v1112 = vpop.f32.mrb[0].mxu0
      %v1113 = vadd.f32 0.0, %v1112
      %v1114 = vpop.f32.mrb[0].mxu0
      %v1115 = vpop.f32.mrb[0].mxu0
      %v1116 = vpop.f32.mrb[0].mxu0
      %1117 = vdwg.mxu0
      %v1118 = vmul.f32 %v1105, 0.088388346
      %v1119 = vmul.f32 %v1108, 0.088388346
      %v1120 = vmul.f32 %v1113, 0.088388346
      %v1121 = vsel %vm1063, %v1118, -1e+30
      %v1122 = vsel %vm1063, %v1119, -1e+30
      %v1123 = vsel %vm1063, %v1120, -1e+30
      %vm1124 = vcmask 195584
      %v1125 = vsel %vm1124, %v1121, -inf
      %1126 = vmax.xlane.f32.xlu0 %v1125
      %v1127 = vpop.xlane.xlu0 %1126
      %v1128 = vsel %vm1124, %v1122, -inf
      %1129 = vmax.xlane.f32.xlu0 %v1128
      %v1130 = vpop.xlane.xlu0 %1129
      %v1131 = vsel %vm1124, %v1123, -inf
      %1132 = vmax.xlane.f32.xlu0 %v1131
      %v1133 = vpop.xlane.xlu0 %1132
      %v1134 = vsub.f32 %v1121, %v1127
      %v1135 = vsub.f32 %v1122, %v1130
      %v1136 = vsub.f32 %v1123, %v1133
      %v1137 = vmul.f32 %v1134, 1.442695
      %v1138 = vpow.pop %v1137
      %v1139 = vmul.f32 %v1135, 1.442695
      %v1140 = vpow.pop %v1139
      %v1141 = vmul.f32 %v1136, 1.442695
      %v1142 = vpow.pop %v1141
      %v1143 = vsel %vm1124, %v1138, 0.0
      %1144 = vadd.xlane.f32.xlu0 %v1143
      %v1145 = vpop.xlane.xlu0 %1144
      %v1146 = vsel %vm1124, %v1140, 0.0
      %1147 = vadd.xlane.f32.xlu0 %v1146
      %v1148 = vpop.xlane.xlu0 %1147
      %v1149 = vsel %vm1124, %v1142, 0.0
      %1150 = vadd.xlane.f32.xlu0 %v1149
      %v1151 = vpop.xlane.xlu0 %1150
      %v1152 = vrcp.pop %v1145
      %v1153 = vrcp.pop %v1148
      %v1154 = vrcp.pop %v1151
      %v1155 = vmul.f32 %v1138, %v1152
      %v1156 = vmul.f32 %v1140, %v1153
      %v1157 = vmul.f32 %v1142, %v1154
      %v1158 = vpack.c.bf16 %v1156, %v1155
      %v1159 = vpack.c.bf16 %v1157, %v1157
      %v1161 = vsel %vm1124, %v1158, 0
      %v1164 = vsel %vm1124, %v1159, 0
      %vm1166 = vcmask 1043456
      %v1168 = vsel %vm1166, %v1069, 0
      %1170 = vmatprep.subr.bf16.mxu0 0
      %1171 = vmatpush1.bf16.msra.mxu0 %v1068
      %1172 = vmatprep.subr.bf16.mxu0 0
      %1173 = vmatpush1.bf16.msra.mxu0 %v1168
      %1174 = vmatprep.subr.bf16.mxu0 0
      %1175 = vmatpush1.bf16.msra.mxu0 0
      %1176 = vmatprep.subr.bf16.mxu0 0
      %1177 = vmatpush1.bf16.msra.mxu0 0
      %1178 = vmatprep.subr.bf16.mxu0 0
      %1179 = vmatpush1.bf16.msra.mxu0 0
      %1180 = vmatprep.subr.bf16.mxu0 0
      %1181 = vmatpush1.bf16.msra.mxu0 0
      %1182 = vmatprep.subr.bf16.mxu0 0
      %1183 = vmatpush1.bf16.msra.mxu0 0
      %1184 = vmatprep.subr.bf16.mxu0 0
      %1185 = vmatpush1.bf16.msra.mxu0 0
      %1186 = vmatprep.subr.bf16.mxu0 0
      %1187 = vmatpush1.bf16.msra.mxu0 0
      %1188 = vmatprep.subr.bf16.mxu0 0
      %1189 = vmatpush1.bf16.msra.mxu0 0
      %1190 = vmatprep.subr.bf16.mxu0 0
      %1191 = vmatpush1.bf16.msra.mxu0 0
      %1192 = vmatprep.subr.bf16.mxu0 0
      %1193 = vmatpush1.bf16.msra.mxu0 0
      %1194 = vmatprep.subr.bf16.mxu0 0
      %1195 = vmatpush1.bf16.msra.mxu0 0
      %1196 = vmatprep.subr.bf16.mxu0 0
      %1197 = vmatpush1.bf16.msra.mxu0 0
      %1198 = vmatprep.subr.bf16.mxu0 0
      %1199 = vmatpush1.bf16.msra.mxu0 0
      %1200 = vmatprep.subr.bf16.mxu0 0
      %1201 = vmatpush1.bf16.msra.mxu0 0
      %1202 = vmatprep.mubr.bf16.mxu0 0
      %1203 = vmatmul.mubr.bf16.gmra.mrb[0].mxu0 %v1161
      %v1204 = vpop.f32.mrb[0].mxu0
      %v1205 = vadd.f32 0.0, %v1204
      %v1206 = vpop.f32.mrb[0].mxu0
      %v1207 = vpop.f32.mrb[0].mxu0
      %v1208 = vadd.f32 0.0, %v1207
      %v1209 = vpop.f32.mrb[0].mxu0
      %1210 = vmatprep.mubr.bf16.mxu0 0
      %1211 = vmatmul.mubr.bf16.gmra.mrb[0].mxu0 %v1164
      %v1212 = vpop.f32.mrb[0].mxu0
      %v1213 = vadd.f32 0.0, %v1212
      %v1214 = vpop.f32.mrb[0].mxu0
      %v1215 = vpop.f32.mrb[0].mxu0
      %v1216 = vpop.f32.mrb[0].mxu0
      %1217 = vdwg.mxu0
      %v1218 = vpack.c.bf16 %v949, %v945
      %v1219 = vpack.c.bf16 %v955, %v955
      %v1220 = vpack.c.bf16 %v1000, %v996
      %v1221 = vpack.c.bf16 %v1006, %v1006
      %v1222 = vpack.c.bf16 %v1051, %v1047
      %v1223 = vpack.c.bf16 %v1057, %v1057
      %1224 = vmatprep.subr.bf16.mxu0 0
      %1225 = vmatpush1.bf16.xpose.msra.mxu0 %v1220
      %1226 = vmatprep.subr.bf16.mxu0 0
      %1227 = vmatpush1.bf16.xpose.msra.mxu0 %v1221
      %1228 = vmatprep.subr.bf16.mxu0 0
      %1229 = vmatpush1.bf16.xpose.msra.mxu0 0
      %1230 = vmatprep.subr.bf16.mxu0 0
      %1231 = vmatpush1.bf16.xpose.msra.mxu0 0
      %1232 = vmatprep.subr.bf16.mxu0 0
      %1233 = vmatpush1.bf16.xpose.msra.mxu0 0
      %1234 = vmatprep.subr.bf16.mxu0 0
      %1235 = vmatpush1.bf16.xpose.msra.mxu0 0
      %1236 = vmatprep.subr.bf16.mxu0 0
      %1237 = vmatpush1.bf16.xpose.msra.mxu0 0
      %1238 = vmatprep.subr.bf16.mxu0 0
      %1239 = vmatpush1.bf16.xpose.msra.mxu0 0
      %1240 = vmatprep.subr.bf16.mxu0 0
      %1241 = vmatpush1.bf16.xpose.msra.mxu0 0
      %1242 = vmatprep.subr.bf16.mxu0 0
      %1243 = vmatpush1.bf16.xpose.msra.mxu0 0
      %1244 = vmatprep.subr.bf16.mxu0 0
      %1245 = vmatpush1.bf16.xpose.msra.mxu0 0
      %1246 = vmatprep.subr.bf16.mxu0 0
      %1247 = vmatpush1.bf16.xpose.msra.mxu0 0
      %1248 = vmatprep.subr.bf16.mxu0 0
      %1249 = vmatpush1.bf16.xpose.msra.mxu0 0
      %1250 = vmatprep.subr.bf16.mxu0 0
      %1251 = vmatpush1.bf16.xpose.msra.mxu0 0
      %1252 = vmatprep.subr.bf16.mxu0 0
      %1253 = vmatpush1.bf16.xpose.msra.mxu0 0
      %1254 = vmatprep.subr.bf16.mxu0 0
      %1255 = vmatpush1.bf16.xpose.msra.mxu0 0
      %1256 = vmatprep.mubr.bf16.mxu0 0
      %1257 = vmatmul.mubr.bf16.gmra.mrb[0].mxu0 %v1218
      %v1258 = vpop.f32.mrb[0].mxu0
      %v1259 = vadd.f32 0.0, %v1258
      %v1260 = vpop.f32.mrb[0].mxu0
      %v1261 = vpop.f32.mrb[0].mxu0
      %v1262 = vadd.f32 0.0, %v1261
      %v1263 = vpop.f32.mrb[0].mxu0
      %1264 = vmatprep.mubr.bf16.mxu0 0
      %1265 = vmatmul.mubr.bf16.gmra.mrb[0].mxu0 %v1219
      %v1266 = vpop.f32.mrb[0].mxu0
      %v1267 = vadd.f32 0.0, %v1266
      %v1268 = vpop.f32.mrb[0].mxu0
      %v1269 = vpop.f32.mrb[0].mxu0
      %v1270 = vpop.f32.mrb[0].mxu0
      %1271 = vdwg.mxu0
      %v1272 = vmul.f32 %v1259, 0.088388346
      %v1273 = vmul.f32 %v1262, 0.088388346
      %v1274 = vmul.f32 %v1267, 0.088388346
      %v1275 = vsel %vm1063, %v1272, -1e+30
      %v1276 = vsel %vm1063, %v1273, -1e+30
      %v1277 = vsel %vm1063, %v1274, -1e+30
      %v1278 = vsel %vm1124, %v1275, -inf
      %1279 = vmax.xlane.f32.xlu0 %v1278
      %v1280 = vpop.xlane.xlu0 %1279
      %v1281 = vsel %vm1124, %v1276, -inf
      %1282 = vmax.xlane.f32.xlu0 %v1281
      %v1283 = vpop.xlane.xlu0 %1282
      %v1284 = vsel %vm1124, %v1277, -inf
      %1285 = vmax.xlane.f32.xlu0 %v1284
      %v1286 = vpop.xlane.xlu0 %1285
      %v1287 = vsub.f32 %v1275, %v1280
      %v1288 = vsub.f32 %v1276, %v1283
      %v1289 = vsub.f32 %v1277, %v1286
      %v1290 = vmul.f32 %v1287, 1.442695
      %v1291 = vpow.pop %v1290
      %v1292 = vmul.f32 %v1288, 1.442695
      %v1293 = vpow.pop %v1292
      %v1294 = vmul.f32 %v1289, 1.442695
      %v1295 = vpow.pop %v1294
      %v1296 = vsel %vm1124, %v1291, 0.0
      %1297 = vadd.xlane.f32.xlu0 %v1296
      %v1298 = vpop.xlane.xlu0 %1297
      %v1299 = vsel %vm1124, %v1293, 0.0
      %1300 = vadd.xlane.f32.xlu0 %v1299
      %v1301 = vpop.xlane.xlu0 %1300
      %v1302 = vsel %vm1124, %v1295, 0.0
      %1303 = vadd.xlane.f32.xlu0 %v1302
      %v1304 = vpop.xlane.xlu0 %1303
      %v1305 = vrcp.pop %v1298
      %v1306 = vrcp.pop %v1301
      %v1307 = vrcp.pop %v1304
      %v1308 = vmul.f32 %v1291, %v1305
      %v1309 = vmul.f32 %v1293, %v1306
      %v1310 = vmul.f32 %v1295, %v1307
      %v1311 = vpack.c.bf16 %v1309, %v1308
      %v1312 = vpack.c.bf16 %v1310, %v1310
      %v1314 = vsel %vm1124, %v1311, 0
      %v1317 = vsel %vm1124, %v1312, 0
      %v1320 = vsel %vm1166, %v1223, 0
      %1322 = vmatprep.subr.bf16.mxu0 0
      %1323 = vmatpush1.bf16.msra.mxu0 %v1222
      %1324 = vmatprep.subr.bf16.mxu0 0
      %1325 = vmatpush1.bf16.msra.mxu0 %v1320
      %1326 = vmatprep.subr.bf16.mxu0 0
      %1327 = vmatpush1.bf16.msra.mxu0 0
      %1328 = vmatprep.subr.bf16.mxu0 0
      %1329 = vmatpush1.bf16.msra.mxu0 0
      %1330 = vmatprep.subr.bf16.mxu0 0
      %1331 = vmatpush1.bf16.msra.mxu0 0
      %1332 = vmatprep.subr.bf16.mxu0 0
      %1333 = vmatpush1.bf16.msra.mxu0 0
      %1334 = vmatprep.subr.bf16.mxu0 0
      %1335 = vmatpush1.bf16.msra.mxu0 0
      %1336 = vmatprep.subr.bf16.mxu0 0
      %1337 = vmatpush1.bf16.msra.mxu0 0
      %1338 = vmatprep.subr.bf16.mxu0 0
      %1339 = vmatpush1.bf16.msra.mxu0 0
      %1340 = vmatprep.subr.bf16.mxu0 0
      %1341 = vmatpush1.bf16.msra.mxu0 0
      %1342 = vmatprep.subr.bf16.mxu0 0
      %1343 = vmatpush1.bf16.msra.mxu0 0
      %1344 = vmatprep.subr.bf16.mxu0 0
      %1345 = vmatpush1.bf16.msra.mxu0 0
      %1346 = vmatprep.subr.bf16.mxu0 0
      %1347 = vmatpush1.bf16.msra.mxu0 0
      %1348 = vmatprep.subr.bf16.mxu0 0
      %1349 = vmatpush1.bf16.msra.mxu0 0
      %1350 = vmatprep.subr.bf16.mxu0 0
      %1351 = vmatpush1.bf16.msra.mxu0 0
      %1352 = vmatprep.subr.bf16.mxu0 0
      %1353 = vmatpush1.bf16.msra.mxu0 0
      %1354 = vmatprep.mubr.bf16.mxu0 0
      %1355 = vmatmul.mubr.bf16.gmra.mrb[0].mxu0 %v1314
      %v1356 = vpop.f32.mrb[0].mxu0
      %v1357 = vadd.f32 0.0, %v1356
      %v1358 = vpop.f32.mrb[0].mxu0
      %v1359 = vpop.f32.mrb[0].mxu0
      %v1360 = vadd.f32 0.0, %v1359
      %v1361 = vpop.f32.mrb[0].mxu0
      %1362 = vmatprep.mubr.bf16.mxu0 0
      %1363 = vmatmul.mubr.bf16.gmra.mrb[0].mxu0 %v1317
      %v1364 = vpop.f32.mrb[0].mxu0
      %v1365 = vadd.f32 0.0, %v1364
      %v1366 = vpop.f32.mrb[0].mxu0
      %v1367 = vpop.f32.mrb[0].mxu0
      %v1368 = vpop.f32.mrb[0].mxu0
      %1369 = vdwg.mxu0
      %v1370 = vpack.c.bf16 %v1208, %v1205
      %v1371 = vpack.c.bf16 %v1360, %v1357
      %v1372 = vpack.c.bf16 %v1213, %v1213
      %v1373 = vpack.c.bf16 %v1365, %v1365
      %v1374 = vld [vmem:[%s3] sm:$0xff]
      %v1375 = vld [vmem:[%s3 + $0x8] sm:$0xff]
      %v1376 = vld [vmem:[%s3 + $0x10] sm:$0xff]
      %v1377 = vld [vmem:[%s3 + $0x18] sm:$0xff]
      %v1378 = vld [vmem:[%s3 + $0x20] sm:$0xff]
      %v1379 = vld [vmem:[%s3 + $0x28] sm:$0xff]
      %v1380 = vld [vmem:[%s3 + $0x30] sm:$0xff]
      %v1381 = vld [vmem:[%s3 + $0x38] sm:$0xff]
      %v1382 = vld [vmem:[%s3 + $0x40] sm:$0xff]
      %v1383 = vld [vmem:[%s3 + $0x48] sm:$0xff]
      %v1384 = vld [vmem:[%s3 + $0x50] sm:$0xff]
      %v1385 = vld [vmem:[%s3 + $0x58] sm:$0xff]
      %v1386 = vld [vmem:[%s3 + $0x60] sm:$0xff]
      %v1387 = vld [vmem:[%s3 + $0x68] sm:$0xff]
      %v1388 = vld [vmem:[%s3 + $0x70] sm:$0xff]
      %v1389 = vld [vmem:[%s3 + $0x78] sm:$0xff]
      %v1390 = vld [vmem:[%s3 + $0x80] sm:$0xff]
      %v1391 = vld [vmem:[%s3 + $0x88] sm:$0xff]
      %v1392 = vld [vmem:[%s3 + $0x90] sm:$0xff]
      %v1393 = vld [vmem:[%s3 + $0x98] sm:$0xff]
      %v1394 = vld [vmem:[%s3 + $0xa0] sm:$0xff]
      %v1395 = vld [vmem:[%s3 + $0xa8] sm:$0xff]
      %v1396 = vld [vmem:[%s3 + $0xb0] sm:$0xff]
      %v1397 = vld [vmem:[%s3 + $0xb8] sm:$0xff]
      %v1398 = vld [vmem:[%s3 + $0xc0] sm:$0xff]
      %v1399 = vld [vmem:[%s3 + $0xc8] sm:$0xff]
      %v1400 = vld [vmem:[%s3 + $0xd0] sm:$0xff]
      %v1401 = vld [vmem:[%s3 + $0xd8] sm:$0xff]
      %v1402 = vld [vmem:[%s3 + $0xe0] sm:$0xff]
      %v1403 = vld [vmem:[%s3 + $0xe8] sm:$0xff]
      %v1404 = vld [vmem:[%s3 + $0xf0] sm:$0xff]
      %v1405 = vld [vmem:[%s3 + $0xf8] sm:$0xff]
      %v1438 = vunpack.c.l.b16 %v1374
      %v1439 = vunpack.c.h.b16 %v1374
      %v1440 = vunpack.c.l.b16 %v1375
      %v1441 = vunpack.c.h.b16 %v1375
      %v1442 = vunpack.c.l.b16 %v1376
      %v1443 = vunpack.c.h.b16 %v1376
      %v1444 = vunpack.c.l.b16 %v1377
      %v1445 = vunpack.c.h.b16 %v1377
      %v1446 = vunpack.c.l.b16 %v1378
      %v1447 = vunpack.c.h.b16 %v1378
      %v1448 = vunpack.c.l.b16 %v1379
      %v1449 = vunpack.c.h.b16 %v1379
      %v1450 = vunpack.c.l.b16 %v1380
      %v1451 = vunpack.c.h.b16 %v1380
      %v1452 = vunpack.c.l.b16 %v1381
      %v1453 = vunpack.c.h.b16 %v1381
      %v1454 = vunpack.c.l.b16 %v1382
      %v1455 = vunpack.c.h.b16 %v1382
      %v1456 = vunpack.c.l.b16 %v1383
      %v1457 = vunpack.c.h.b16 %v1383
      %v1458 = vunpack.c.l.b16 %v1384
      %v1459 = vunpack.c.h.b16 %v1384
      %v1460 = vunpack.c.l.b16 %v1385
      %v1461 = vunpack.c.h.b16 %v1385
      %v1462 = vunpack.c.l.b16 %v1386
      %v1463 = vunpack.c.h.b16 %v1386
      %v1464 = vunpack.c.l.b16 %v1387
      %v1465 = vunpack.c.h.b16 %v1387
      %v1466 = vunpack.c.l.b16 %v1388
      %v1467 = vunpack.c.h.b16 %v1388
      %v1468 = vunpack.c.l.b16 %v1389
      %v1469 = vunpack.c.h.b16 %v1389
      %v1470 = vunpack.c.l.b16 %v1390
      %v1471 = vunpack.c.h.b16 %v1390
      %v1472 = vunpack.c.l.b16 %v1391
      %v1473 = vunpack.c.h.b16 %v1391
      %v1474 = vunpack.c.l.b16 %v1392
      %v1475 = vunpack.c.h.b16 %v1392
      %v1476 = vunpack.c.l.b16 %v1393
      %v1477 = vunpack.c.h.b16 %v1393
      %v1478 = vunpack.c.l.b16 %v1394
      %v1479 = vunpack.c.h.b16 %v1394
      %v1480 = vunpack.c.l.b16 %v1395
      %v1481 = vunpack.c.h.b16 %v1395
      %v1482 = vunpack.c.l.b16 %v1396
      %v1483 = vunpack.c.h.b16 %v1396
      %v1484 = vunpack.c.l.b16 %v1397
      %v1485 = vunpack.c.h.b16 %v1397
      %v1486 = vunpack.c.l.b16 %v1398
      %v1487 = vunpack.c.h.b16 %v1398
      %v1488 = vunpack.c.l.b16 %v1399
      %v1489 = vunpack.c.h.b16 %v1399
      %v1490 = vunpack.c.l.b16 %v1400
      %v1491 = vunpack.c.h.b16 %v1400
      %v1492 = vunpack.c.l.b16 %v1401
      %v1493 = vunpack.c.h.b16 %v1401
      %v1494 = vunpack.c.l.b16 %v1402
      %v1495 = vunpack.c.h.b16 %v1402
      %v1496 = vunpack.c.l.b16 %v1403
      %v1497 = vunpack.c.h.b16 %v1403
      %v1498 = vunpack.c.l.b16 %v1404
      %v1499 = vunpack.c.h.b16 %v1404
      %v1500 = vunpack.c.l.b16 %v1405
      %v1501 = vunpack.c.h.b16 %v1405
      %v1502 = vpack.c.b16 %v1440, %v1438
      %v1503 = vpack.c.b16 %v1441, %v1439
      %v1504 = vpack.c.b16 %v1444, %v1442
      %v1505 = vpack.c.b16 %v1445, %v1443
      %v1506 = vpack.c.b16 %v1448, %v1446
      %v1507 = vpack.c.b16 %v1449, %v1447
      %v1508 = vpack.c.b16 %v1452, %v1450
      %v1509 = vpack.c.b16 %v1453, %v1451
      %v1510 = vpack.c.b16 %v1456, %v1454
      %v1511 = vpack.c.b16 %v1457, %v1455
      %v1512 = vpack.c.b16 %v1460, %v1458
      %v1513 = vpack.c.b16 %v1461, %v1459
      %v1514 = vpack.c.b16 %v1464, %v1462
      %v1515 = vpack.c.b16 %v1465, %v1463
      %v1516 = vpack.c.b16 %v1468, %v1466
      %v1517 = vpack.c.b16 %v1469, %v1467
      %v1518 = vpack.c.b16 %v1472, %v1470
      %v1519 = vpack.c.b16 %v1473, %v1471
      %v1520 = vpack.c.b16 %v1476, %v1474
      %v1521 = vpack.c.b16 %v1477, %v1475
      %v1522 = vpack.c.b16 %v1480, %v1478
      %v1523 = vpack.c.b16 %v1481, %v1479
      %v1524 = vpack.c.b16 %v1484, %v1482
      %v1525 = vpack.c.b16 %v1485, %v1483
      %v1526 = vpack.c.b16 %v1488, %v1486
      %v1527 = vpack.c.b16 %v1489, %v1487
      %v1528 = vpack.c.b16 %v1492, %v1490
      %v1529 = vpack.c.b16 %v1493, %v1491
      %v1530 = vpack.c.b16 %v1496, %v1494
      %v1531 = vpack.c.b16 %v1497, %v1495
      %v1532 = vpack.c.b16 %v1500, %v1498
      %v1533 = vpack.c.b16 %v1501, %v1499
      %1566 = vmatprep.subr.bf16.mxu0 %v1503
      %1567 = vmatpush1.bf16.msra.mxu0 %v1502
      %1568 = vmatprep.subr.bf16.mxu0 %v1505
      %1569 = vmatpush1.bf16.msra.mxu0 %v1504
      %1570 = vmatprep.subr.bf16.mxu0 %v1507
      %1571 = vmatpush1.bf16.msra.mxu0 %v1506
      %1572 = vmatprep.subr.bf16.mxu0 %v1509
      %1573 = vmatpush1.bf16.msra.mxu0 %v1508
      %1574 = vmatprep.subr.bf16.mxu0 %v1511
      %1575 = vmatpush1.bf16.msra.mxu0 %v1510
      %1576 = vmatprep.subr.bf16.mxu0 %v1513
      %1577 = vmatpush1.bf16.msra.mxu0 %v1512
      %1578 = vmatprep.subr.bf16.mxu0 %v1515
      %1579 = vmatpush1.bf16.msra.mxu0 %v1514
      %1580 = vmatprep.subr.bf16.mxu0 %v1517
      %1581 = vmatpush1.bf16.msra.mxu0 %v1516
      %1582 = vmatprep.subr.bf16.mxu0 %v1519
      %1583 = vmatpush1.bf16.msra.mxu0 %v1518
      %1584 = vmatprep.subr.bf16.mxu0 %v1521
      %1585 = vmatpush1.bf16.msra.mxu0 %v1520
      %1586 = vmatprep.subr.bf16.mxu0 %v1523
      %1587 = vmatpush1.bf16.msra.mxu0 %v1522
      %1588 = vmatprep.subr.bf16.mxu0 %v1525
      %1589 = vmatpush1.bf16.msra.mxu0 %v1524
      %1590 = vmatprep.subr.bf16.mxu0 %v1527
      %1591 = vmatpush1.bf16.msra.mxu0 %v1526
      %1592 = vmatprep.subr.bf16.mxu0 %v1529
      %1593 = vmatpush1.bf16.msra.mxu0 %v1528
      %1594 = vmatprep.subr.bf16.mxu0 %v1531
      %1595 = vmatpush1.bf16.msra.mxu0 %v1530
      %1596 = vmatprep.subr.bf16.mxu0 %v1533
      %1597 = vmatpush1.bf16.msra.mxu0 %v1532
      %1598 = vmatprep.mubr.bf16.mxu0 %v1371
      %1599 = vmatmul.mubr.bf16.gmra.mrb[0].mxu0 %v1370
      %v1600 = vpop.f32.mrb[0].mxu0
      %v1601 = vadd.f32 0.0, %v1600
      %v1602 = vpop.f32.mrb[0].mxu0
      %v1603 = vadd.f32 0.0, %v1602
      %v1604 = vpop.f32.mrb[0].mxu0
      %v1605 = vadd.f32 0.0, %v1604
      %v1606 = vpop.f32.mrb[0].mxu0
      %v1607 = vadd.f32 0.0, %v1606
      %1608 = vmatprep.mubr.bf16.mxu0 %v1373
      %1609 = vmatmul.mubr.bf16.gmra.mrb[0].mxu0 %v1372
      %v1610 = vpop.f32.mrb[0].mxu0
      %v1611 = vadd.f32 0.0, %v1610
      %v1612 = vpop.f32.mrb[0].mxu0
      %v1613 = vadd.f32 0.0, %v1612
      %v1614 = vpop.f32.mrb[0].mxu0
      %v1615 = vpop.f32.mrb[0].mxu0
      %1616 = vdwg.mxu0
      %v1617 = vunpack.c.l.bf16 %v280
      %v1618 = vunpack.c.h.bf16 %v280
      %v1619 = vunpack.c.l.bf16 %v281
      %v1620 = vunpack.c.h.bf16 %v281
      %v1621 = vunpack.c.l.bf16 %v282
      %v1622 = vunpack.c.h.bf16 %v282
      %v1623 = vadd.f32 %v1617, %v1601
      %v1624 = vadd.f32 %v1618, %v1603
      %v1625 = vadd.f32 %v1619, %v1605
      %v1626 = vadd.f32 %v1620, %v1607
      %v1627 = vadd.f32 %v1621, %v1611
      %v1628 = vadd.f32 %v1622, %v1613
      %v1629 = vld [vmem:[%s4] sm:$0x3]
      %v1631 = vlaneseq
      %v1632 = vshrl.u32 %v1631, 7
      %v1633 = vsub.s32 0, %v1632
      %v1634 = vrot.slane %v1629, %v1633
      %v1635 = vlaneseq
      %v1636 = vshrl.u32 %v1635, 7
      %v1637 = vsub.s32 1, %v1636
      %v1638 = vrot.slane %v1629, %v1637
      %v1641 = vadd.f32 %v1623, %v1634
      %v1642 = vadd.f32 %v1624, %v1638
      %v1643 = vadd.f32 %v1625, %v1634
      %v1644 = vadd.f32 %v1626, %v1638
      %v1645 = vadd.f32 %v1627, %v1634
      %v1646 = vadd.f32 %v1628, %v1638
      %v1647 = vadd.f32 %v1641, %v1642
      %1648 = vadd.xlane.f32.xlu0 %v1647
      %v1649 = vpop.xlane.xlu0 %1648
      %v1650 = vadd.f32 %v1643, %v1644
      %1651 = vadd.xlane.f32.xlu0 %v1650
      %v1652 = vpop.xlane.xlu0 %1651
      %v1653 = vadd.f32 %v1645, %v1646
      %1654 = vadd.xlane.f32.xlu0 %v1653
      %v1655 = vpop.xlane.xlu0 %1654
      %v1656 = vrcp.pop 256.0
      %v1657 = vmul.f32 %v1649, %v1656
      %v1658 = vmul.f32 %v1652, %v1656
      %v1659 = vmul.f32 %v1655, %v1656
      %v1660 = vsub.f32 %v1641, %v1657
      %v1661 = vsub.f32 %v1642, %v1657
      %v1662 = vsub.f32 %v1643, %v1658
      %v1663 = vsub.f32 %v1644, %v1658
      %v1664 = vsub.f32 %v1645, %v1659
      %v1665 = vsub.f32 %v1646, %v1659
      %v1666 = vmul.f32 %v1660, %v1660
      %v1667 = vmul.f32 %v1661, %v1661
      %v1668 = vmul.f32 %v1662, %v1662
      %v1669 = vmul.f32 %v1663, %v1663
      %v1670 = vmul.f32 %v1664, %v1664
      %v1671 = vmul.f32 %v1665, %v1665
      %v1672 = vadd.f32 %v1666, %v1667
      %1673 = vadd.xlane.f32.xlu0 %v1672
      %v1674 = vpop.xlane.xlu0 %1673
      %v1675 = vadd.f32 %v1668, %v1669
      %1676 = vadd.xlane.f32.xlu0 %v1675
      %v1677 = vpop.xlane.xlu0 %1676
      %v1678 = vadd.f32 %v1670, %v1671
      %1679 = vadd.xlane.f32.xlu0 %v1678
      %v1680 = vpop.xlane.xlu0 %1679
      %v1681 = vmul.f32 %v1674, %v1656
      %v1682 = vmul.f32 %v1677, %v1656
      %v1683 = vmul.f32 %v1680, %v1656
      %v1684 = vadd.f32 %v1681, 1e-05
      %v1685 = vadd.f32 %v1682, 1e-05
      %v1686 = vadd.f32 %v1683, 1e-05
      %v1687 = vrsqrt.pop %v1684
      %v1688 = vrsqrt.pop %v1685
      %v1689 = vrsqrt.pop %v1686
      %v1690 = vmul.f32 %v1660, %v1687
      %v1691 = vmul.f32 %v1661, %v1687
      %v1692 = vmul.f32 %v1662, %v1688
      %v1693 = vmul.f32 %v1663, %v1688
      %v1694 = vmul.f32 %v1664, %v1689
      %v1695 = vmul.f32 %v1665, %v1689
      %v1696 = vld [vmem:[%s5] sm:$0x3]
      %v1698 = vlaneseq
      %v1699 = vshrl.u32 %v1698, 7
      %v1700 = vsub.s32 0, %v1699
      %v1701 = vrot.slane %v1696, %v1700
      %v1702 = vlaneseq
      %v1703 = vshrl.u32 %v1702, 7
      %v1704 = vsub.s32 1, %v1703
      %v1705 = vrot.slane %v1696, %v1704
      %v1708 = vmul.f32 %v1690, %v1701
      %v1709 = vmul.f32 %v1691, %v1705
      %v1710 = vmul.f32 %v1692, %v1701
      %v1711 = vmul.f32 %v1693, %v1705
      %v1712 = vmul.f32 %v1694, %v1701
      %v1713 = vmul.f32 %v1695, %v1705
      %v1714 = vld [vmem:[%s6] sm:$0x3]
      %v1716 = vlaneseq
      %v1717 = vshrl.u32 %v1716, 7
      %v1718 = vsub.s32 0, %v1717
      %v1719 = vrot.slane %v1714, %v1718
      %v1720 = vlaneseq
      %v1721 = vshrl.u32 %v1720, 7
      %v1722 = vsub.s32 1, %v1721
      %v1723 = vrot.slane %v1714, %v1722
      %v1726 = vadd.f32 %v1708, %v1719
      %v1727 = vadd.f32 %v1709, %v1723
      %v1728 = vadd.f32 %v1710, %v1719
      %v1729 = vadd.f32 %v1711, %v1723
      %v1730 = vadd.f32 %v1712, %v1719
      %v1731 = vadd.f32 %v1713, %v1723
      %v1732 = vpack.c.bf16 %v1728, %v1726
      %v1733 = vpack.c.bf16 %v1729, %v1727
      %v1734 = vpack.c.bf16 %v1730, %v1730
      %v1735 = vpack.c.bf16 %v1731, %v1731
      %v1740 = vunpack.c.l.b16 %v1732
      %v1741 = vunpack.c.l.b16 %v1733
      %v1742 = vunpack.c.h.b16 %v1732
      %v1743 = vunpack.c.h.b16 %v1733
      %v1744 = vunpack.c.l.b16 %v1734
      %v1745 = vunpack.c.l.b16 %v1735
      %v1746 = vpack.c.b16 %v1741, %v1740
      %v1747 = vpack.c.b16 %v1743, %v1742
      %v1748 = vpack.c.b16 %v1745, %v1744
      %1752 = vst [vmem:[%s278] sm:$0xff] %v1746
      %1753 = vst [vmem:[%s278 + $0x8] sm:$0xff] %v1747
      %1754 = vst [vmem:[%s278 + $0x10] sm:$0xff] %v1748
      %p1755 = scmp.lt.s32.totalorder %s18, 1
      %s1756 = scalar_select %p1755, %s18, 1
      %s1757 = smul.addr %s1756, 6
      %s1758 = smul.addr %s1757, 4
      %s1759 = scalar_lea.vmem %s7, %s1758
      // Predicated region
      $region49: #{vit_forward.9} parent=47 // pred_check
        %p1760 = pneg %p188
      $region50: #{vit_forward.9} parent=47 // pred_check_branch
        %1762 = sbr.rel (%p1760) target = $region52
      $region51: #{vit_forward.9} parent=47 // pred_region
        _
      $region52: #{vit_forward.9} parent=47 // pred_fallthru
        _
    $region48: #{vit_forward.9} parent=5 // pred_fallthru
      _
    %p1763 = scmp.le.s32.totalorder 2, %s13
    // Predicated region
    $region53: #{vit_forward.9} parent=5 // pred_check
      %p1764 = pneg %p1763
    $region54: #{vit_forward.9} parent=5 // pred_check_branch
      %1766 = sbr.rel (%p1764) target = $region56
    $region55: #{vit_forward.9} parent=5 // pred_region
      %s1767 = ssub.s32 %s13, 2
      // Predicated region
      $region57: #{vit_forward.9} parent=55 // pred_check
        %p1768 = pneg %p194
      $region58: #{vit_forward.9} parent=55 // pred_check_branch
        %1770 = sbr.rel (%p1768) target = $region60
      $region59: #{vit_forward.9} parent=55 // pred_region
        %p1771 = scmp.lt.s32.totalorder %s19, 1
        %s1772 = scalar_select %p1771, %s19, 1
        %s1773 = smul.addr %s1772, 6
        %s1774 = smul.addr %s1773, 4
        %s1775 = scalar_lea.vmem %s7, %s1774
      $region60: #{vit_forward.9} parent=55 // pred_fallthru
        _
    $region56: #{vit_forward.9} parent=5 // pred_fallthru
      _
  $region6: #{vit_forward.9} parent=0 // loop_footer
    %s17 = sadd.s32 1, %s13
  $region7: #{vit_forward.9} parent=0 // loop_footer_branch
    %12 = sbr.rel target = $region3
  $region8: #{vit_forward.9} parent=0 // loop_exit
    _

// kernel: vit_forward.8
$region0: #{vit_forward.8}
  #allocation0 [shape = 'u32[]', space=smem, size = 0x4, offset = 0x4, fixed_abs, tag = 'smem constant byte address 0x4 - core index']
  #allocation1 [shape = 'u32[144,128]{1,0:T(1,128)}', space=vmem, size = 0x12000, scoped, tag = 'internal scratch']
  #allocation2 [shape = 'f32[48,256]{1,0:T(8,128)}', space=vmem, size = 0xc000, scoped, tag = 'scratch operand']
  %s0 = inlined_call_operand.vmem [shape: bf16[48,256], index: 0, kind: input, shape index: {}]
  %s1 = inlined_call_operand.vmem [shape: bf16[256,1024], index: 1, kind: input, shape index: {}]
  %s2 = inlined_call_operand.vmem [shape: f32[1,1024], index: 2, kind: input, shape index: {}]
  %s3 = inlined_call_operand.vmem [shape: bf16[1024,256], index: 3, kind: input, shape index: {}]
  %s4 = inlined_call_operand.vmem [shape: f32[1,256], index: 4, kind: input, shape index: {}]
  %s5 = inlined_call_operand.vmem [shape: f32[1,256], index: 5, kind: input, shape index: {}]
  %s6 = inlined_call_operand.vmem [shape: f32[1,256], index: 6, kind: input, shape index: {}]
  %s7 = inlined_call_operand.vmem [shape: bf16[48,256], index: 7, kind: output, shape index: {}]
  %s8 = sld [smem:[#allocation0]]
  $region92: #{vit_forward.8} parent=0
    _
  %s10 = ssub.s32 1, %s8
  %s11 = scalar_select 0, %s10, %s8
  $region1: #{vit_forward.8} parent=0
    #allocation3 [shape = 'u8[524288]{0}', space=vmem, size = 0x80000, scoped, tag = 'input window, operand 1']
    loop: start=0, step=1, limit=4
    $region2: #{vit_forward.8} parent=1 // loop_pre_header
      _
    $region3: #{vit_forward.8} parent=1 // loop_header
      %s13 = sphi 0, %s17
      %p14 = scmp.ge.s32.totalorder %s13, 4
      %s20 = sphi 0, %s32
      %s21 = sphi 0, %s28
      %s22 = sphi 0, %s20
      %s23 = sphi 0, %s21
      %s24 = sphi 0, %s22
      %s25 = sphi 0, %s23
      %s35 = sphi 0, %s37
      %s38 = sphi 0, %s35
      %s39 = sphi 0, %s38
      %s55 = sphi 0, %s39
      %s61 = sphi 0, %s63
      %s64 = sphi 0, %s61
      %s65 = sphi 0, %s64
      %s81 = sphi 0, %s65
      %s87 = sphi 0, %s89
      %s90 = sphi 0, %s87
      %s91 = sphi 0, %s90
      %s107 = sphi 0, %s91
      %s113 = sphi 0, %s115
      %s116 = sphi 0, %s113
      %s117 = sphi 0, %s116
      %s133 = sphi 0, %s117
      %s137 = sphi 0, %s137
      %s139 = sphi 0, %s137
      %s140 = sphi 0, %s139
      %s154 = sphi 0, %s140
      %s158 = sphi 0, %s158
      %s160 = sphi 0, %s158
      %s161 = sphi 0, %s160
      %s175 = sphi 0, %s161
      %s179 = sphi 0, %s179
      %s181 = sphi 0, %s179
      %s182 = sphi 0, %s181
      %s196 = sphi 0, %s182
      %s202 = sphi 0, %s204
      %s205 = sphi 0, %s202
      %s206 = sphi 0, %s205
      %s222 = sphi 0, %s206
    $region4: #{vit_forward.8} parent=1 // loop_header_branch
      %16 = sbr.rel (%p14) target = $region8
    $region5: #{vit_forward.8} parent=1 // loop_body
      %s18 = ssub.s32 %s13, 1
      %s19 = ssub.s32 %s13, 2
      %s26 = sadd.s32 1, %s21
      %p27 = scmp.ge.s32.totalorder %s26, 2
      %s28 = scalar_select %p27, 0, %s26
      %s29 = sadd.s32 1, %s20
      %s30 = scalar_select %p27, %s29, %s20
      %p31 = scmp.ge.s32.totalorder %s30, 1
      %s32 = scalar_select %p31, 0, %s30
      %s33 = ssub.s32 %s20, %s32
      %p34 = scmp.eq.s32.totalorder %s33, 0
      %s36 = sadd.s32 %s35, 1
      %s37 = scalar_select %p34, %s35, %s36
      %p40 = pneg %p34
      %p41 = scmp.eq.s32.totalorder %s13, 1
      %p42 = por %p40, %p41
      %p43 = scmp.ne.s32.totalorder %s35, %s38
      %p44 = scmp.eq.s32.totalorder %s13, 0
      %p45 = por %p43, %p44
      %p46 = scmp.ne.s32.totalorder %s35, %s38
      %p47 = scmp.eq.s32.totalorder %s18, 1
      %p48 = por %p46, %p47
      %p49 = scmp.ne.s32.totalorder %s38, %s39
      %p50 = scmp.eq.s32.totalorder %s18, 0
      %p51 = por %p49, %p50
      %p52 = scmp.ne.s32.totalorder %s38, %s39
      %p53 = scmp.eq.s32.totalorder %s19, 1
      %p54 = por %p52, %p53
      %p56 = scmp.ne.s32.totalorder %s39, %s55
      %p57 = scmp.eq.s32.totalorder %s19, 0
      %p58 = por %p56, %p57
      %s59 = ssub.s32 %s21, %s28
      %p60 = scmp.eq.s32.totalorder %s59, 0
      %s62 = sadd.s32 %s61, 1
      %s63 = scalar_select %p60, %s61, %s62
      %p66 = pneg %p60
      %p67 = scmp.eq.s32.totalorder %s13, 1
      %p68 = por %p66, %p67
      %p69 = scmp.ne.s32.totalorder %s61, %s64
      %p70 = scmp.eq.s32.totalorder %s13, 0
      %p71 = por %p69, %p70
      %p72 = scmp.ne.s32.totalorder %s61, %s64
      %p73 = scmp.eq.s32.totalorder %s18, 1
      %p74 = por %p72, %p73
      %p75 = scmp.ne.s32.totalorder %s64, %s65
      %p76 = scmp.eq.s32.totalorder %s18, 0
      %p77 = por %p75, %p76
      %p78 = scmp.ne.s32.totalorder %s64, %s65
      %p79 = scmp.eq.s32.totalorder %s19, 1
      %p80 = por %p78, %p79
      %p82 = scmp.ne.s32.totalorder %s65, %s81
      %p83 = scmp.eq.s32.totalorder %s19, 0
      %p84 = por %p82, %p83
      %s85 = ssub.s32 %s21, %s28
      %p86 = scmp.eq.s32.totalorder %s85, 0
      %s88 = sadd.s32 %s87, 1
      %s89 = scalar_select %p86, %s87, %s88
      %p92 = pneg %p86
      %p93 = scmp.eq.s32.totalorder %s13, 1
      %p94 = por %p92, %p93
      %p95 = scmp.ne.s32.totalorder %s87, %s90
      %p96 = scmp.eq.s32.totalorder %s13, 0
      %p97 = por %p95, %p96
      %p98 = scmp.ne.s32.totalorder %s87, %s90
      %p99 = scmp.eq.s32.totalorder %s18, 1
      %p100 = por %p98, %p99
      %p101 = scmp.ne.s32.totalorder %s90, %s91
      %p102 = scmp.eq.s32.totalorder %s18, 0
      %p103 = por %p101, %p102
      %p104 = scmp.ne.s32.totalorder %s90, %s91
      %p105 = scmp.eq.s32.totalorder %s19, 1
      %p106 = por %p104, %p105
      %p108 = scmp.ne.s32.totalorder %s91, %s107
      %p109 = scmp.eq.s32.totalorder %s19, 0
      %p110 = por %p108, %p109
      %s111 = ssub.s32 %s21, %s28
      %p112 = scmp.eq.s32.totalorder %s111, 0
      %s114 = sadd.s32 %s113, 1
      %s115 = scalar_select %p112, %s113, %s114
      %p118 = pneg %p112
      %p119 = scmp.eq.s32.totalorder %s13, 1
      %p120 = por %p118, %p119
      %p121 = scmp.ne.s32.totalorder %s113, %s116
      %p122 = scmp.eq.s32.totalorder %s13, 0
      %p123 = por %p121, %p122
      %p124 = scmp.ne.s32.totalorder %s113, %s116
      %p125 = scmp.eq.s32.totalorder %s18, 1
      %p126 = por %p124, %p125
      %p127 = scmp.ne.s32.totalorder %s116, %s117
      %p128 = scmp.eq.s32.totalorder %s18, 0
      %p129 = por %p127, %p128
      %p130 = scmp.ne.s32.totalorder %s116, %s117
      %p131 = scmp.eq.s32.totalorder %s19, 1
      %p132 = por %p130, %p131
      %p134 = scmp.ne.s32.totalorder %s117, %s133
      %p135 = scmp.eq.s32.totalorder %s19, 0
      %p136 = por %p134, %p135
      %s138 = sadd.s32 %s137, 1
      %p141 = scmp.eq.s32.totalorder %s13, 1
      %p142 = scmp.ne.s32.totalorder %s137, %s139
      %p143 = scmp.eq.s32.totalorder %s13, 0
      %p144 = por %p142, %p143
      %p145 = scmp.ne.s32.totalorder %s137, %s139
      %p146 = scmp.eq.s32.totalorder %s18, 1
      %p147 = por %p145, %p146
      %p148 = scmp.ne.s32.totalorder %s139, %s140
      %p149 = scmp.eq.s32.totalorder %s18, 0
      %p150 = por %p148, %p149
      %p151 = scmp.ne.s32.totalorder %s139, %s140
      %p152 = scmp.eq.s32.totalorder %s19, 1
      %p153 = por %p151, %p152
      %p155 = scmp.ne.s32.totalorder %s140, %s154
      %p156 = scmp.eq.s32.totalorder %s19, 0
      %p157 = por %p155, %p156
      %s159 = sadd.s32 %s158, 1
      %p162 = scmp.eq.s32.totalorder %s13, 1
      %p163 = scmp.ne.s32.totalorder %s158, %s160
      %p164 = scmp.eq.s32.totalorder %s13, 0
      %p165 = por %p163, %p164
      %p166 = scmp.ne.s32.totalorder %s158, %s160
      %p167 = scmp.eq.s32.totalorder %s18, 1
      %p168 = por %p166, %p167
      %p169 = scmp.ne.s32.totalorder %s160, %s161
      %p170 = scmp.eq.s32.totalorder %s18, 0
      %p171 = por %p169, %p170
      %p172 = scmp.ne.s32.totalorder %s160, %s161
      %p173 = scmp.eq.s32.totalorder %s19, 1
      %p174 = por %p172, %p173
      %p176 = scmp.ne.s32.totalorder %s161, %s175
      %p177 = scmp.eq.s32.totalorder %s19, 0
      %p178 = por %p176, %p177
      %s180 = sadd.s32 %s179, 1
      %p183 = scmp.eq.s32.totalorder %s13, 1
      %p184 = scmp.ne.s32.totalorder %s179, %s181
      %p185 = scmp.eq.s32.totalorder %s13, 0
      %p186 = por %p184, %p185
      %p187 = scmp.ne.s32.totalorder %s179, %s181
      %p188 = scmp.eq.s32.totalorder %s18, 1
      %p189 = por %p187, %p188
      %p190 = scmp.ne.s32.totalorder %s181, %s182
      %p191 = scmp.eq.s32.totalorder %s18, 0
      %p192 = por %p190, %p191
      %p193 = scmp.ne.s32.totalorder %s181, %s182
      %p194 = scmp.eq.s32.totalorder %s19, 1
      %p195 = por %p193, %p194
      %p197 = scmp.ne.s32.totalorder %s182, %s196
      %p198 = scmp.eq.s32.totalorder %s19, 0
      %p199 = por %p197, %p198
      %s200 = ssub.s32 %s20, %s32
      %p201 = scmp.eq.s32.totalorder %s200, 0
      %s203 = sadd.s32 %s202, 1
      %s204 = scalar_select %p201, %s202, %s203
      %p207 = pneg %p201
      %p208 = scmp.eq.s32.totalorder %s13, 1
      %p209 = por %p207, %p208
      %p210 = scmp.ne.s32.totalorder %s202, %s205
      %p211 = scmp.eq.s32.totalorder %s13, 0
      %p212 = por %p210, %p211
      %p213 = scmp.ne.s32.totalorder %s202, %s205
      %p214 = scmp.eq.s32.totalorder %s18, 1
      %p215 = por %p213, %p214
      %p216 = scmp.ne.s32.totalorder %s205, %s206
      %p217 = scmp.eq.s32.totalorder %s18, 0
      %p218 = por %p216, %p217
      %p219 = scmp.ne.s32.totalorder %s205, %s206
      %p220 = scmp.eq.s32.totalorder %s19, 1
      %p221 = por %p219, %p220
      %p223 = scmp.ne.s32.totalorder %s206, %s222
      %p224 = scmp.eq.s32.totalorder %s19, 0
      %p225 = por %p223, %p224
      %p226 = scmp.le.s32.totalorder 1, %s13
      %p227 = scmp.lt.s32.totalorder %s13, 3
      %p228 = pnand %p226, %p227
      %p229 = pneg %p228
      // Predicated region
      $region9: #{vit_forward.8} parent=5 // pred_check
        _
      $region10: #{vit_forward.8} parent=5 // pred_check_branch
        %231 = sbr.rel (%p228) target = $region12
      $region11: #{vit_forward.8} parent=5 // pred_region
        %s232 = ssub.s32 %s13, 1
        // Predicated region
        $region13: #{vit_forward.8} parent=11 // pred_check
          %p233 = pneg %p51
        $region14: #{vit_forward.8} parent=11 // pred_check_branch
          %235 = sbr.rel (%p233) target = $region16
        $region15: #{vit_forward.8} parent=11 // pred_region
          %s236 = smul.u32 6, %s22
          %p237 = scmp.lt.s32.totalorder %s236, 5
          %s238 = scalar_select %p237, %s236, 5
          %s239 = smul.addr %s238, 2
          %s240 = smul.addr %s239, 4
          %s241 = scalar_lea.vmem %s0, %s240
          %s242 = smul.u32 6, %s22
        $region16: #{vit_forward.8} parent=11 // pred_fallthru
          _
        // Predicated region
        $region17: #{vit_forward.8} parent=11 // pred_check
          %p243 = pneg %p150
        $region18: #{vit_forward.8} parent=11 // pred_check_branch
          %245 = sbr.rel (%p243) target = $region20
        $region19: #{vit_forward.8} parent=11 // pred_region
          _
        $region20: #{vit_forward.8} parent=11 // pred_fallthru
          _
        // Predicated region
        $region21: #{vit_forward.8} parent=11 // pred_check
          %p246 = pneg %p171
        $region22: #{vit_forward.8} parent=11 // pred_check_branch
          %248 = sbr.rel (%p246) target = $region24
        $region23: #{vit_forward.8} parent=11 // pred_region
          _
        $region24: #{vit_forward.8} parent=11 // pred_fallthru
          _
        // Predicated region
        $region25: #{vit_forward.8} parent=11 // pred_check
          %p249 = pneg %p192
        $region26: #{vit_forward.8} parent=11 // pred_check_branch
          %251 = sbr.rel (%p249) target = $region28
        $region27: #{vit_forward.8} parent=11 // pred_region
          _
        $region28: #{vit_forward.8} parent=11 // pred_fallthru
          _
      $region12: #{vit_forward.8} parent=5 // pred_fallthru
        _
      %p252 = scmp.lt.s32.totalorder %s13, 2
      // Predicated region
      $region29: #{vit_forward.8} parent=5 // pred_check
        %p253 = pneg %p252
      $region30: #{vit_forward.8} parent=5 // pred_check_branch
        %255 = sbr.rel (%p253) target = $region32
      $region31: #{vit_forward.8} parent=5 // pred_region
        // Predicated region
        $region33: #{vit_forward.8} parent=31 // pred_check
          %p256 = pneg %p71
        $region34: #{vit_forward.8} parent=31 // pred_check_branch
          %258 = sbr.rel (%p256) target = $region36
        $region35: #{vit_forward.8} parent=31 // pred_region
          %s259 = sand.u32 %s61, 1
          %s260 = sand.u32 %s61, 1
          %s261 = smul.addr %s260, 512
          %s262 = scalar_lea.vmem [#allocation3], %s261
          %s263 = smul.u32 4, %s21
          %s264 = smul.addr %s263, 4
          %s265 = scalar_lea.vmem %s1, %s264
          // Predicated region
          $region37: #{vit_forward.8} parent=35 // pred_check
            _
          $region38: #{vit_forward.8} parent=35 // pred_check_branch
            %267 = sbr.rel (0) target = $region40
          $region39: #{vit_forward.8} parent=35 // pred_region
            // Predicated region
            $region41: #{vit_forward.8} parent=39 // pred_check
              _
            $region42: #{vit_forward.8} parent=39 // pred_check_branch
              %269 = sbr.rel (0) target = $region44
            $region43: #{vit_forward.8} parent=39 // pred_region
              loop: start=0, step=1, limit=1
              $region45: #{vit_forward.8} parent=43 // loop_pre_header
                _
              $region46: #{vit_forward.8} parent=43 // loop_header
                %s271 = sphi 0, %s275
                %p272 = scmp.ge.s32.totalorder %s271, 1
                %s276 = sphi %s265, %s265
                %s277 = sphi %s262, %s262
              $region47: #{vit_forward.8} parent=43 // loop_header_branch
                %274 = sbr.rel (%p272) target = $region51
              $region48: #{vit_forward.8} parent=43 // loop_body
                %v278 = vld [vmem:[%s276] sm:$0xff]
                %279 = vst [vmem:[%s277] sm:$0xff] %v278
                %v280 = vld [vmem:[%s276 + $0x8] sm:$0xff]
                %281 = vst [vmem:[%s277 + $0x8] sm:$0xff] %v280
                %v282 = vld [vmem:[%s276 + $0x20] sm:$0xff]
                %283 = vst [vmem:[%s277 + $0x10] sm:$0xff] %v282
                %v284 = vld [vmem:[%s276 + $0x28] sm:$0xff]
                %285 = vst [vmem:[%s277 + $0x18] sm:$0xff] %v284
                %v286 = vld [vmem:[%s276 + $0x40] sm:$0xff]
                %287 = vst [vmem:[%s277 + $0x20] sm:$0xff] %v286
                %v288 = vld [vmem:[%s276 + $0x48] sm:$0xff]
                %289 = vst [vmem:[%s277 + $0x28] sm:$0xff] %v288
                %v290 = vld [vmem:[%s276 + $0x60] sm:$0xff]
                %291 = vst [vmem:[%s277 + $0x30] sm:$0xff] %v290
                %v292 = vld [vmem:[%s276 + $0x68] sm:$0xff]
                %293 = vst [vmem:[%s277 + $0x38] sm:$0xff] %v292
                %v294 = vld [vmem:[%s276 + $0x80] sm:$0xff]
                %295 = vst [vmem:[%s277 + $0x40] sm:$0xff] %v294
                %v296 = vld [vmem:[%s276 + $0x88] sm:$0xff]
                %297 = vst [vmem:[%s277 + $0x48] sm:$0xff] %v296
                %v298 = vld [vmem:[%s276 + $0xa0] sm:$0xff]
                %299 = vst [vmem:[%s277 + $0x50] sm:$0xff] %v298
                %v300 = vld [vmem:[%s276 + $0xa8] sm:$0xff]
                %301 = vst [vmem:[%s277 + $0x58] sm:$0xff] %v300
                %v302 = vld [vmem:[%s276 + $0xc0] sm:$0xff]
                %303 = vst [vmem:[%s277 + $0x60] sm:$0xff] %v302
                %v304 = vld [vmem:[%s276 + $0xc8] sm:$0xff]
                %305 = vst [vmem:[%s277 + $0x68] sm:$0xff] %v304
                %v306 = vld [vmem:[%s276 + $0xe0] sm:$0xff]
                %307 = vst [vmem:[%s277 + $0x70] sm:$0xff] %v306
                %v308 = vld [vmem:[%s276 + $0xe8] sm:$0xff]
                %309 = vst [vmem:[%s277 + $0x78] sm:$0xff] %v308
                %v310 = vld [vmem:[%s276 + $0x100] sm:$0xff]
                %311 = vst [vmem:[%s277 + $0x80] sm:$0xff] %v310
                %v312 = vld [vmem:[%s276 + $0x108] sm:$0xff]
                %313 = vst [vmem:[%s277 + $0x88] sm:$0xff] %v312
                %v314 = vld [vmem:[%s276 + $0x120] sm:$0xff]
                %315 = vst [vmem:[%s277 + $0x90] sm:$0xff] %v314
                %v316 = vld [vmem:[%s276 + $0x128] sm:$0xff]
                %317 = vst [vmem:[%s277 + $0x98] sm:$0xff] %v316
                %v318 = vld [vmem:[%s276 + $0x140] sm:$0xff]
                %319 = vst [vmem:[%s277 + $0xa0] sm:$0xff] %v318
                %v320 = vld [vmem:[%s276 + $0x148] sm:$0xff]
                %321 = vst [vmem:[%s277 + $0xa8] sm:$0xff] %v320
                %v322 = vld [vmem:[%s276 + $0x160] sm:$0xff]
                %323 = vst [vmem:[%s277 + $0xb0] sm:$0xff] %v322
                %v324 = vld [vmem:[%s276 + $0x168] sm:$0xff]
                %325 = vst [vmem:[%s277 + $0xb8] sm:$0xff] %v324
                %v326 = vld [vmem:[%s276 + $0x180] sm:$0xff]
                %327 = vst [vmem:[%s277 + $0xc0] sm:$0xff] %v326
                %v328 = vld [vmem:[%s276 + $0x188] sm:$0xff]
                %329 = vst [vmem:[%s277 + $0xc8] sm:$0xff] %v328
                %v330 = vld [vmem:[%s276 + $0x1a0] sm:$0xff]
                %331 = vst [vmem:[%s277 + $0xd0] sm:$0xff] %v330
                %v332 = vld [vmem:[%s276 + $0x1a8] sm:$0xff]
                %333 = vst [vmem:[%s277 + $0xd8] sm:$0xff] %v332
                %v334 = vld [vmem:[%s276 + $0x1c0] sm:$0xff]
                %335 = vst [vmem:[%s277 + $0xe0] sm:$0xff] %v334
                %v336 = vld [vmem:[%s276 + $0x1c8] sm:$0xff]
                %337 = vst [vmem:[%s277 + $0xe8] sm:$0xff] %v336
                %v338 = vld [vmem:[%s276 + $0x1e0] sm:$0xff]
                %339 = vst [vmem:[%s277 + $0xf0] sm:$0xff] %v338
                %v340 = vld [vmem:[%s276 + $0x1e8] sm:$0xff]
                %341 = vst [vmem:[%s277 + $0xf8] sm:$0xff] %v340
                %v342 = vld [vmem:[%s276 + $0x200] sm:$0xff]
                %343 = vst [vmem:[%s277 + $0x100] sm:$0xff] %v342
                %v344 = vld [vmem:[%s276 + $0x208] sm:$0xff]
                %345 = vst [vmem:[%s277 + $0x108] sm:$0xff] %v344
                %v346 = vld [vmem:[%s276 + $0x220] sm:$0xff]
                %347 = vst [vmem:[%s277 + $0x110] sm:$0xff] %v346
                %v348 = vld [vmem:[%s276 + $0x228] sm:$0xff]
                %349 = vst [vmem:[%s277 + $0x118] sm:$0xff] %v348
                %v350 = vld [vmem:[%s276 + $0x240] sm:$0xff]
                %351 = vst [vmem:[%s277 + $0x120] sm:$0xff] %v350
                %v352 = vld [vmem:[%s276 + $0x248] sm:$0xff]
                %353 = vst [vmem:[%s277 + $0x128] sm:$0xff] %v352
                %v354 = vld [vmem:[%s276 + $0x260] sm:$0xff]
                %355 = vst [vmem:[%s277 + $0x130] sm:$0xff] %v354
                %v356 = vld [vmem:[%s276 + $0x268] sm:$0xff]
                %357 = vst [vmem:[%s277 + $0x138] sm:$0xff] %v356
                %v358 = vld [vmem:[%s276 + $0x280] sm:$0xff]
                %359 = vst [vmem:[%s277 + $0x140] sm:$0xff] %v358
                %v360 = vld [vmem:[%s276 + $0x288] sm:$0xff]
                %361 = vst [vmem:[%s277 + $0x148] sm:$0xff] %v360
                %v362 = vld [vmem:[%s276 + $0x2a0] sm:$0xff]
                %363 = vst [vmem:[%s277 + $0x150] sm:$0xff] %v362
                %v364 = vld [vmem:[%s276 + $0x2a8] sm:$0xff]
                %365 = vst [vmem:[%s277 + $0x158] sm:$0xff] %v364
                %v366 = vld [vmem:[%s276 + $0x2c0] sm:$0xff]
                %367 = vst [vmem:[%s277 + $0x160] sm:$0xff] %v366
                %v368 = vld [vmem:[%s276 + $0x2c8] sm:$0xff]
                %369 = vst [vmem:[%s277 + $0x168] sm:$0xff] %v368
                %v370 = vld [vmem:[%s276 + $0x2e0] sm:$0xff]
                %371 = vst [vmem:[%s277 + $0x170] sm:$0xff] %v370
                %v372 = vld [vmem:[%s276 + $0x2e8] sm:$0xff]
                %373 = vst [vmem:[%s277 + $0x178] sm:$0xff] %v372
                %v374 = vld [vmem:[%s276 + $0x300] sm:$0xff]
                %375 = vst [vmem:[%s277 + $0x180] sm:$0xff] %v374
                %v376 = vld [vmem:[%s276 + $0x308] sm:$0xff]
                %377 = vst [vmem:[%s277 + $0x188] sm:$0xff] %v376
                %v378 = vld [vmem:[%s276 + $0x320] sm:$0xff]
                %379 = vst [vmem:[%s277 + $0x190] sm:$0xff] %v378
                %v380 = vld [vmem:[%s276 + $0x328] sm:$0xff]
                %381 = vst [vmem:[%s277 + $0x198] sm:$0xff] %v380
                %v382 = vld [vmem:[%s276 + $0x340] sm:$0xff]
                %383 = vst [vmem:[%s277 + $0x1a0] sm:$0xff] %v382
                %v384 = vld [vmem:[%s276 + $0x348] sm:$0xff]
                %385 = vst [vmem:[%s277 + $0x1a8] sm:$0xff] %v384
                %v386 = vld [vmem:[%s276 + $0x360] sm:$0xff]
                %387 = vst [vmem:[%s277 + $0x1b0] sm:$0xff] %v386
                %v388 = vld [vmem:[%s276 + $0x368] sm:$0xff]
                %389 = vst [vmem:[%s277 + $0x1b8] sm:$0xff] %v388
                %v390 = vld [vmem:[%s276 + $0x380] sm:$0xff]
                %391 = vst [vmem:[%s277 + $0x1c0] sm:$0xff] %v390
                %v392 = vld [vmem:[%s276 + $0x388] sm:$0xff]
                %393 = vst [vmem:[%s277 + $0x1c8] sm:$0xff] %v392
                %v394 = vld [vmem:[%s276 + $0x3a0] sm:$0xff]
                %395 = vst [vmem:[%s277 + $0x1d0] sm:$0xff] %v394
                %v396 = vld [vmem:[%s276 + $0x3a8] sm:$0xff]
                %397 = vst [vmem:[%s277 + $0x1d8] sm:$0xff] %v396
                %v398 = vld [vmem:[%s276 + $0x3c0] sm:$0xff]
                %399 = vst [vmem:[%s277 + $0x1e0] sm:$0xff] %v398
                %v400 = vld [vmem:[%s276 + $0x3c8] sm:$0xff]
                %401 = vst [vmem:[%s277 + $0x1e8] sm:$0xff] %v400
                %v402 = vld [vmem:[%s276 + $0x3e0] sm:$0xff]
                %403 = vst [vmem:[%s277 + $0x1f0] sm:$0xff] %v402
                %v404 = vld [vmem:[%s276 + $0x3e8] sm:$0xff]
                %405 = vst [vmem:[%s277 + $0x1f8] sm:$0xff] %v404
              $region49: #{vit_forward.8} parent=43 // loop_footer
                %s275 = sadd.s32 1, %s271
              $region50: #{vit_forward.8} parent=43 // loop_footer_branch
                %270 = sbr.rel target = $region46
              $region51: #{vit_forward.8} parent=43 // loop_exit
                _
            $region44: #{vit_forward.8} parent=39 // pred_fallthru
              _
            // Predicated region
            $region52: #{vit_forward.8} parent=39 // pred_check
              _
            $region53: #{vit_forward.8} parent=39 // pred_check_branch
              %407 = sbr.rel target = $region55
            $region54: #{vit_forward.8} parent=39 // pred_region
              _
            $region55: #{vit_forward.8} parent=39 // pred_fallthru
              _
          $region40: #{vit_forward.8} parent=35 // pred_fallthru
            _
          %408 = vnop
        $region36: #{vit_forward.8} parent=31 // pred_fallthru
          _
        // Predicated region
        $region56: #{vit_forward.8} parent=31 // pred_check
          %p409 = pneg %p97
        $region57: #{vit_forward.8} parent=31 // pred_check_branch
          %411 = sbr.rel (%p409) target = $region59
        $region58: #{vit_forward.8} parent=31 // pred_region
          %s412 = smul.u32 4, %s21
          %p413 = scmp.lt.s32.totalorder %s412, 7
          %s414 = scalar_select %p413, %s412, 7
          %s415 = scalar_lea.vmem %s2, %s414
          %s416 = smul.u32 4, %s21
        $region59: #{vit_forward.8} parent=31 // pred_fallthru
          _
        // Predicated region
        $region60: #{vit_forward.8} parent=31 // pred_check
          %p417 = pneg %p123
        $region61: #{vit_forward.8} parent=31 // pred_check_branch
          %419 = sbr.rel (%p417) target = $region63
        $region62: #{vit_forward.8} parent=31 // pred_region
          %s420 = smul.u32 64, %s21
          %p421 = scmp.lt.s32.totalorder %s420, 127
          %s422 = scalar_select %p421, %s420, 127
          %s423 = smul.addr %s422, 2
          %s424 = smul.addr %s423, 4
          %s425 = scalar_lea.vmem %s3, %s424
          %s426 = smul.u32 64, %s21
        $region63: #{vit_forward.8} parent=31 // pred_fallthru
          _
      $region32: #{vit_forward.8} parent=5 // pred_fallthru
        _
      %p427 = scmp.le.s32.totalorder 1, %s13
      %p428 = scmp.lt.s32.totalorder %s13, 3
      %p429 = pnand %p427, %p428
      %p430 = pneg %p429
      // Predicated region
      $region64: #{vit_forward.8} parent=5 // pred_check
        _
      $region65: #{vit_forward.8} parent=5 // pred_check_branch
        %432 = sbr.rel (%p429) target = $region67
      $region66: #{vit_forward.8} parent=5 // pred_region
        %s433 = ssub.s32 %s13, 1
        %s434 = sand.u32 %s64, 1
        %s435 = sand.u32 %s64, 1
        %s436 = smul.addr %s435, 512
        %s437 = scalar_lea.vmem [#allocation3], %s436
        // Predicated region
        $region68: #{vit_forward.8} parent=66 // pred_check
          %p438 = pneg %p77
        $region69: #{vit_forward.8} parent=66 // pred_check_branch
          %440 = sbr.rel (%p438) target = $region71
        $region70: #{vit_forward.8} parent=66 // pred_region
          _
        $region71: #{vit_forward.8} parent=66 // pred_fallthru
          _
        %s441 = smul.u32 6, %s22
        %p442 = scmp.lt.s32.totalorder %s441, 5
        %s443 = scalar_select %p442, %s441, 5
        %s444 = smul.addr %s443, 2
        %s445 = smul.addr %s444, 4
        %s446 = scalar_lea.vmem %s0, %s445
        %p447 = pneg %p51
        %p448 = pneg %p48
        %s449 = sand.u32 %s64, 1
        %s450 = sand.u32 %s64, 1
        %s451 = smul.addr %s450, 512
        %s452 = scalar_lea.vmem [#allocation3], %s451
        %p453 = pneg %p77
        %p454 = pneg %p74
        %s455 = smul.u32 4, %s23
        %p456 = scmp.lt.s32.totalorder %s455, 7
        %s457 = scalar_select %p456, %s455, 7
        %s458 = scalar_lea.vmem %s2, %s457
        %p459 = pneg %p103
        %p460 = pneg %p100
        %s461 = smul.u32 64, %s23
        %p462 = scmp.lt.s32.totalorder %s461, 127
        %s463 = scalar_select %p462, %s461, 127
        %s464 = smul.addr %s463, 2
        %s465 = smul.addr %s464, 4
        %s466 = scalar_lea.vmem %s3, %s465
        %p467 = pneg %p129
        %p468 = pneg %p126
        %p469 = pneg %p150
        %p470 = pneg %p147
        %p471 = pneg %p171
        %p472 = pneg %p168
        %p473 = pneg %p192
        %p474 = pneg %p189
        %p475 = pneg %p218
        %p476 = pneg %p215
        %s477 = smul.u32 6, %s22
        %p478 = scmp.lt.s32.totalorder %s477, 5
        %s479 = scalar_select %p478, %s477, 5
        %s480 = smul.addr %s479, 2
        %s481 = smul.addr %s480, 4
        %s482 = scalar_lea.vmem %s7, %s481
        %s483 = smul.u32 6, %s22
        %p484 = scmp.lt.s32.totalorder %s483, 5
        %s485 = scalar_select %p484, %s483, 5
        %s486 = smul.addr %s485, 2
        %s487 = smul.addr %s486, 4
        %s488 = scalar_lea.vmem %s0, %s487
        %s489 = smul.u32 6, %s22
        %s490 = smul.u32 4, %s23
        %s491 = smul.u32 4, %s23
        %p492 = scmp.lt.s32.totalorder %s491, 7
        %s493 = scalar_select %p492, %s491, 7
        %s494 = scalar_lea.vmem %s2, %s493
        %s495 = smul.u32 4, %s23
        %s496 = smul.u32 64, %s23
        %p497 = scmp.lt.s32.totalorder %s496, 127
        %s498 = scalar_select %p497, %s496, 127
        %s499 = smul.addr %s498, 2
        %s500 = smul.addr %s499, 4
        %s501 = scalar_lea.vmem %s3, %s500
        %s502 = smul.u32 64, %s23
        %s503 = smul.u32 6, %s22
        %p504 = scmp.lt.s32.totalorder %s503, 5
        %s505 = scalar_select %p504, %s503, 5
        %s506 = smul.addr %s505, 2
        %s507 = smul.addr %s506, 4
        %s508 = scalar_lea.vmem %s7, %s507
        %s509 = smul.u32 6, %s22
        %p510 = scmp.eq.s32.totalorder %s23, 0
        // Predicated region
        $region72: #{vit_forward.8} parent=66 // pred_check
          %p511 = pneg %p510
        $region73: #{vit_forward.8} parent=66 // pred_check_branch
          %513 = sbr.rel (%p511) target = $region75
        $region74: #{vit_forward.8} parent=66 // pred_region
          %514 = vst [vmem:[#allocation2] sm:$0xff] 0.0
          %515 = vst [vmem:[#allocation2 + $0x8] sm:$0xff] 0.0
          %516 = vst [vmem:[#allocation2 + $0x10] sm:$0xff] 0.0
          %517 = vst [vmem:[#allocation2 + $0x18] sm:$0xff] 0.0
          %518 = vst [vmem:[#allocation2 + $0x20] sm:$0xff] 0.0
          %519 = vst [vmem:[#allocation2 + $0x28] sm:$0xff] 0.0
          %520 = vst [vmem:[#allocation2 + $0x30] sm:$0xff] 0.0
          %521 = vst [vmem:[#allocation2 + $0x38] sm:$0xff] 0.0
          %522 = vst [vmem:[#allocation2 + $0x40] sm:$0xff] 0.0
          %523 = vst [vmem:[#allocation2 + $0x48] sm:$0xff] 0.0
          %524 = vst [vmem:[#allocation2 + $0x50] sm:$0xff] 0.0
          %525 = vst [vmem:[#allocation2 + $0x58] sm:$0xff] 0.0
        $region75: #{vit_forward.8} parent=66 // pred_fallthru
          _
        %v526 = vld [vmem:[%s488] sm:$0xff]
        %v527 = vld [vmem:[%s488 + $0x8] sm:$0xff]
        %v528 = vld [vmem:[%s488 + $0x10] sm:$0xff]
        %v529 = vld [vmem:[%s488 + $0x18] sm:$0xff]
        %v530 = vld [vmem:[%s488 + $0x20] sm:$0xff]
        %v531 = vld [vmem:[%s488 + $0x28] sm:$0xff]
        %v532 = vld [vmem:[%s437] sm:$0xff]
        %v533 = vld [vmem:[%s437 + $0x8] sm:$0xff]
        %v534 = vld [vmem:[%s437 + $0x10] sm:$0xff]
        %v535 = vld [vmem:[%s437 + $0x18] sm:$0xff]
        %v536 = vld [vmem:[%s437 + $0x20] sm:$0xff]
        %v537 = vld [vmem:[%s437 + $0x28] sm:$0xff]
        %v538 = vld [vmem:[%s437 + $0x30] sm:$0xff]
        %v539 = vld [vmem:[%s437 + $0x38] sm:$0xff]
        %v540 = vld [vmem:[%s437 + $0x40] sm:$0xff]
        %v541 = vld [vmem:[%s437 + $0x48] sm:$0xff]
        %v542 = vld [vmem:[%s437 + $0x50] sm:$0xff]
        %v543 = vld [vmem:[%s437 + $0x58] sm:$0xff]
        %v544 = vld [vmem:[%s437 + $0x60] sm:$0xff]
        %v545 = vld [vmem:[%s437 + $0x68] sm:$0xff]
        %v546 = vld [vmem:[%s437 + $0x70] sm:$0xff]
        %v547 = vld [vmem:[%s437 + $0x78] sm:$0xff]
        %v548 = vld [vmem:[%s437 + $0x80] sm:$0xff]
        %v549 = vld [vmem:[%s437 + $0x88] sm:$0xff]
        %v550 = vld [vmem:[%s437 + $0x90] sm:$0xff]
        %v551 = vld [vmem:[%s437 + $0x98] sm:$0xff]
        %v552 = vld [vmem:[%s437 + $0xa0] sm:$0xff]
        %v553 = vld [vmem:[%s437 + $0xa8] sm:$0xff]
        %v554 = vld [vmem:[%s437 + $0xb0] sm:$0xff]
        %v555 = vld [vmem:[%s437 + $0xb8] sm:$0xff]
        %v556 = vld [vmem:[%s437 + $0xc0] sm:$0xff]
        %v557 = vld [vmem:[%s437 + $0xc8] sm:$0xff]
        %v558 = vld [vmem:[%s437 + $0xd0] sm:$0xff]
        %v559 = vld [vmem:[%s437 + $0xd8] sm:$0xff]
        %v560 = vld [vmem:[%s437 + $0xe0] sm:$0xff]
        %v561 = vld [vmem:[%s437 + $0xe8] sm:$0xff]
        %v562 = vld [vmem:[%s437 + $0xf0] sm:$0xff]
        %v563 = vld [vmem:[%s437 + $0xf8] sm:$0xff]
        %v564 = vld [vmem:[%s437 + $0x100] sm:$0xff]
        %v565 = vld [vmem:[%s437 + $0x108] sm:$0xff]
        %v566 = vld [vmem:[%s437 + $0x110] sm:$0xff]
        %v567 = vld [vmem:[%s437 + $0x118] sm:$0xff]
        %v568 = vld [vmem:[%s437 + $0x120] sm:$0xff]
        %v569 = vld [vmem:[%s437 + $0x128] sm:$0xff]
        %v570 = vld [vmem:[%s437 + $0x130] sm:$0xff]
        %v571 = vld [vmem:[%s437 + $0x138] sm:$0xff]
        %v572 = vld [vmem:[%s437 + $0x140] sm:$0xff]
        %v573 = vld [vmem:[%s437 + $0x148] sm:$0xff]
        %v574 = vld [vmem:[%s437 + $0x150] sm:$0xff]
        %v575 = vld [vmem:[%s437 + $0x158] sm:$0xff]
        %v576 = vld [vmem:[%s437 + $0x160] sm:$0xff]
        %v577 = vld [vmem:[%s437 + $0x168] sm:$0xff]
        %v578 = vld [vmem:[%s437 + $0x170] sm:$0xff]
        %v579 = vld [vmem:[%s437 + $0x178] sm:$0xff]
        %v580 = vld [vmem:[%s437 + $0x180] sm:$0xff]
        %v581 = vld [vmem:[%s437 + $0x188] sm:$0xff]
        %v582 = vld [vmem:[%s437 + $0x190] sm:$0xff]
        %v583 = vld [vmem:[%s437 + $0x198] sm:$0xff]
        %v584 = vld [vmem:[%s437 + $0x1a0] sm:$0xff]
        %v585 = vld [vmem:[%s437 + $0x1a8] sm:$0xff]
        %v586 = vld [vmem:[%s437 + $0x1b0] sm:$0xff]
        %v587 = vld [vmem:[%s437 + $0x1b8] sm:$0xff]
        %v588 = vld [vmem:[%s437 + $0x1c0] sm:$0xff]
        %v589 = vld [vmem:[%s437 + $0x1c8] sm:$0xff]
        %v590 = vld [vmem:[%s437 + $0x1d0] sm:$0xff]
        %v591 = vld [vmem:[%s437 + $0x1d8] sm:$0xff]
        %v592 = vld [vmem:[%s437 + $0x1e0] sm:$0xff]
        %v593 = vld [vmem:[%s437 + $0x1e8] sm:$0xff]
        %v594 = vld [vmem:[%s437 + $0x1f0] sm:$0xff]
        %v595 = vld [vmem:[%s437 + $0x1f8] sm:$0xff]
        %v596 = vld [vmem:[%s494] sm:$0xf]
        %v598 = vlaneseq
        %v599 = vshrl.u32 %v598, 7
        %v600 = vsub.s32 0, %v599
        %v601 = vrot.slane %v596, %v600
        %v602 = vlaneseq
        %v603 = vshrl.u32 %v602, 7
        %v604 = vsub.s32 1, %v603
        %v605 = vrot.slane %v596, %v604
        %v606 = vlaneseq
        %v607 = vshrl.u32 %v606, 7
        %v608 = vsub.s32 2, %v607
        %v609 = vrot.slane %v596, %v608
        %v610 = vlaneseq
        %v611 = vshrl.u32 %v610, 7
        %v612 = vsub.s32 3, %v611
        %v613 = vrot.slane %v596, %v612
        %v624 = vunpack.c.l.b16 %v526
        %v625 = vunpack.c.h.b16 %v526
        %v626 = vunpack.c.l.b16 %v527
        %v627 = vunpack.c.h.b16 %v527
        %v628 = vunpack.c.l.b16 %v528
        %v629 = vunpack.c.h.b16 %v528
        %v630 = vunpack.c.l.b16 %v529
        %v631 = vunpack.c.h.b16 %v529
        %v632 = vunpack.c.l.b16 %v530
        %v633 = vunpack.c.h.b16 %v530
        %v634 = vunpack.c.l.b16 %v531
        %v635 = vunpack.c.h.b16 %v531
        %v636 = vpack.c.b16 %v626, %v624
        %v637 = vpack.c.b16 %v627, %v625
        %v638 = vpack.c.b16 %v630, %v628
        %v639 = vpack.c.b16 %v631, %v629
        %v640 = vpack.c.b16 %v634, %v632
        %v641 = vpack.c.b16 %v635, %v633
        %v712 = vunpack.c.l.b16 %v532
        %v713 = vunpack.c.h.b16 %v532
        %v714 = vunpack.c.l.b16 %v533
        %v715 = vunpack.c.h.b16 %v533
        %v716 = vunpack.c.l.b16 %v534
        %v717 = vunpack.c.h.b16 %v534
        %v718 = vunpack.c.l.b16 %v535
        %v719 = vunpack.c.h.b16 %v535
        %v720 = vunpack.c.l.b16 %v536
        %v721 = vunpack.c.h.b16 %v536
        %v722 = vunpack.c.l.b16 %v537
        %v723 = vunpack.c.h.b16 %v537
        %v724 = vunpack.c.l.b16 %v538
        %v725 = vunpack.c.h.b16 %v538
        %v726 = vunpack.c.l.b16 %v539
        %v727 = vunpack.c.h.b16 %v539
        %v728 = vunpack.c.l.b16 %v540
        %v729 = vunpack.c.h.b16 %v540
        %v730 = vunpack.c.l.b16 %v541
        %v731 = vunpack.c.h.b16 %v541
        %v732 = vunpack.c.l.b16 %v542
        %v733 = vunpack.c.h.b16 %v542
        %v734 = vunpack.c.l.b16 %v543
        %v735 = vunpack.c.h.b16 %v543
        %v736 = vunpack.c.l.b16 %v544
        %v737 = vunpack.c.h.b16 %v544
        %v738 = vunpack.c.l.b16 %v545
        %v739 = vunpack.c.h.b16 %v545
        %v740 = vunpack.c.l.b16 %v546
        %v741 = vunpack.c.h.b16 %v546
        %v742 = vunpack.c.l.b16 %v547
        %v743 = vunpack.c.h.b16 %v547
        %v744 = vunpack.c.l.b16 %v548
        %v745 = vunpack.c.h.b16 %v548
        %v746 = vunpack.c.l.b16 %v549
        %v747 = vunpack.c.h.b16 %v549
        %v748 = vunpack.c.l.b16 %v550
        %v749 = vunpack.c.h.b16 %v550
        %v750 = vunpack.c.l.b16 %v551
        %v751 = vunpack.c.h.b16 %v551
        %v752 = vunpack.c.l.b16 %v552
        %v753 = vunpack.c.h.b16 %v552
        %v754 = vunpack.c.l.b16 %v553
        %v755 = vunpack.c.h.b16 %v553
        %v756 = vunpack.c.l.b16 %v554
        %v757 = vunpack.c.h.b16 %v554
        %v758 = vunpack.c.l.b16 %v555
        %v759 = vunpack.c.h.b16 %v555
        %v760 = vunpack.c.l.b16 %v556
        %v761 = vunpack.c.h.b16 %v556
        %v762 = vunpack.c.l.b16 %v557
        %v763 = vunpack.c.h.b16 %v557
        %v764 = vunpack.c.l.b16 %v558
        %v765 = vunpack.c.h.b16 %v558
        %v766 = vunpack.c.l.b16 %v559
        %v767 = vunpack.c.h.b16 %v559
        %v768 = vunpack.c.l.b16 %v560
        %v769 = vunpack.c.h.b16 %v560
        %v770 = vunpack.c.l.b16 %v561
        %v771 = vunpack.c.h.b16 %v561
        %v772 = vunpack.c.l.b16 %v562
        %v773 = vunpack.c.h.b16 %v562
        %v774 = vunpack.c.l.b16 %v563
        %v775 = vunpack.c.h.b16 %v563
        %v776 = vunpack.c.l.b16 %v564
        %v777 = vunpack.c.h.b16 %v564
        %v778 = vunpack.c.l.b16 %v565
        %v779 = vunpack.c.h.b16 %v565
        %v780 = vunpack.c.l.b16 %v566
        %v781 = vunpack.c.h.b16 %v566
        %v782 = vunpack.c.l.b16 %v567
        %v783 = vunpack.c.h.b16 %v567
        %v784 = vunpack.c.l.b16 %v568
        %v785 = vunpack.c.h.b16 %v568
        %v786 = vunpack.c.l.b16 %v569
        %v787 = vunpack.c.h.b16 %v569
        %v788 = vunpack.c.l.b16 %v570
        %v789 = vunpack.c.h.b16 %v570
        %v790 = vunpack.c.l.b16 %v571
        %v791 = vunpack.c.h.b16 %v571
        %v792 = vunpack.c.l.b16 %v572
        %v793 = vunpack.c.h.b16 %v572
        %v794 = vunpack.c.l.b16 %v573
        %v795 = vunpack.c.h.b16 %v573
        %v796 = vunpack.c.l.b16 %v574
        %v797 = vunpack.c.h.b16 %v574
        %v798 = vunpack.c.l.b16 %v575
        %v799 = vunpack.c.h.b16 %v575
        %v800 = vunpack.c.l.b16 %v576
        %v801 = vunpack.c.h.b16 %v576
        %v802 = vunpack.c.l.b16 %v577
        %v803 = vunpack.c.h.b16 %v577
        %v804 = vunpack.c.l.b16 %v578
        %v805 = vunpack.c.h.b16 %v578
        %v806 = vunpack.c.l.b16 %v579
        %v807 = vunpack.c.h.b16 %v579
        %v808 = vunpack.c.l.b16 %v580
        %v809 = vunpack.c.h.b16 %v580
        %v810 = vunpack.c.l.b16 %v581
        %v811 = vunpack.c.h.b16 %v581
        %v812 = vunpack.c.l.b16 %v582
        %v813 = vunpack.c.h.b16 %v582
        %v814 = vunpack.c.l.b16 %v583
        %v815 = vunpack.c.h.b16 %v583
        %v816 = vunpack.c.l.b16 %v584
        %v817 = vunpack.c.h.b16 %v584
        %v818 = vunpack.c.l.b16 %v585
        %v819 = vunpack.c.h.b16 %v585
        %v820 = vunpack.c.l.b16 %v586
        %v821 = vunpack.c.h.b16 %v586
        %v822 = vunpack.c.l.b16 %v587
        %v823 = vunpack.c.h.b16 %v587
        %v824 = vunpack.c.l.b16 %v588
        %v825 = vunpack.c.h.b16 %v588
        %v826 = vunpack.c.l.b16 %v589
        %v827 = vunpack.c.h.b16 %v589
        %v828 = vunpack.c.l.b16 %v590
        %v829 = vunpack.c.h.b16 %v590
        %v830 = vunpack.c.l.b16 %v591
        %v831 = vunpack.c.h.b16 %v591
        %v832 = vunpack.c.l.b16 %v592
        %v833 = vunpack.c.h.b16 %v592
        %v834 = vunpack.c.l.b16 %v593
        %v835 = vunpack.c.h.b16 %v593
        %v836 = vunpack.c.l.b16 %v594
        %v837 = vunpack.c.h.b16 %v594
        %v838 = vunpack.c.l.b16 %v595
        %v839 = vunpack.c.h.b16 %v595
        %v840 = vpack.c.b16 %v716, %v712
        %v841 = vpack.c.b16 %v717, %v713
        %v842 = vpack.c.b16 %v718, %v714
        %v843 = vpack.c.b16 %v719, %v715
        %v844 = vpack.c.b16 %v724, %v720
        %v845 = vpack.c.b16 %v725, %v721
        %v846 = vpack.c.b16 %v726, %v722
        %v847 = vpack.c.b16 %v727, %v723
        %v848 = vpack.c.b16 %v732, %v728
        %v849 = vpack.c.b16 %v733, %v729
        %v850 = vpack.c.b16 %v734, %v730
        %v851 = vpack.c.b16 %v735, %v731
        %v852 = vpack.c.b16 %v740, %v736
        %v853 = vpack.c.b16 %v741, %v737
        %v854 = vpack.c.b16 %v742, %v738
        %v855 = vpack.c.b16 %v743, %v739
        %v856 = vpack.c.b16 %v748, %v744
        %v857 = vpack.c.b16 %v749, %v745
        %v858 = vpack.c.b16 %v750, %v746
        %v859 = vpack.c.b16 %v751, %v747
        %v860 = vpack.c.b16 %v756, %v752
        %v861 = vpack.c.b16 %v757, %v753
        %v862 = vpack.c.b16 %v758, %v754
        %v863 = vpack.c.b16 %v759, %v755
        %v864 = vpack.c.b16 %v764, %v760
        %v865 = vpack.c.b16 %v765, %v761
        %v866 = vpack.c.b16 %v766, %v762
        %v867 = vpack.c.b16 %v767, %v763
        %v868 = vpack.c.b16 %v772, %v768
        %v869 = vpack.c.b16 %v773, %v769
        %v870 = vpack.c.b16 %v774, %v770
        %v871 = vpack.c.b16 %v775, %v771
        %v872 = vpack.c.b16 %v780, %v776
        %v873 = vpack.c.b16 %v781, %v777
        %v874 = vpack.c.b16 %v782, %v778
        %v875 = vpack.c.b16 %v783, %v779
        %v876 = vpack.c.b16 %v788, %v784
        %v877 = vpack.c.b16 %v789, %v785
        %v878 = vpack.c.b16 %v790, %v786
        %v879 = vpack.c.b16 %v791, %v787
        %v880 = vpack.c.b16 %v796, %v792
        %v881 = vpack.c.b16 %v797, %v793
        %v882 = vpack.c.b16 %v798, %v794
        %v883 = vpack.c.b16 %v799, %v795
        %v884 = vpack.c.b16 %v804, %v800
        %v885 = vpack.c.b16 %v805, %v801
        %v886 = vpack.c.b16 %v806, %v802
        %v887 = vpack.c.b16 %v807, %v803
        %v888 = vpack.c.b16 %v812, %v808
        %v889 = vpack.c.b16 %v813, %v809
        %v890 = vpack.c.b16 %v814, %v810
        %v891 = vpack.c.b16 %v815, %v811
        %v892 = vpack.c.b16 %v820, %v816
        %v893 = vpack.c.b16 %v821, %v817
        %v894 = vpack.c.b16 %v822, %v818
        %v895 = vpack.c.b16 %v823, %v819
        %v896 = vpack.c.b16 %v828, %v824
        %v897 = vpack.c.b16 %v829, %v825
        %v898 = vpack.c.b16 %v830, %v826
        %v899 = vpack.c.b16 %v831, %v827
        %v900 = vpack.c.b16 %v836, %v832
        %v901 = vpack.c.b16 %v837, %v833
        %v902 = vpack.c.b16 %v838, %v834
        %v903 = vpack.c.b16 %v839, %v835
        %968 = vmatprep.subr.bf16.mxu0 %v841
        %969 = vmatpush1.bf16.msra.mxu0 %v840
        %970 = vmatprep.subr.bf16.mxu0 %v845
        %971 = vmatpush1.bf16.msra.mxu0 %v844
        %972 = vmatprep.subr.bf16.mxu0 %v849
        %973 = vmatpush1.bf16.msra.mxu0 %v848
        %974 = vmatprep.subr.bf16.mxu0 %v853
        %975 = vmatpush1.bf16.msra.mxu0 %v852
        %976 = vmatprep.subr.bf16.mxu0 %v857
        %977 = vmatpush1.bf16.msra.mxu0 %v856
        %978 = vmatprep.subr.bf16.mxu0 %v861
        %979 = vmatpush1.bf16.msra.mxu0 %v860
        %980 = vmatprep.subr.bf16.mxu0 %v865
        %981 = vmatpush1.bf16.msra.mxu0 %v864
        %982 = vmatprep.subr.bf16.mxu0 %v869
        %983 = vmatpush1.bf16.msra.mxu0 %v868
        %984 = vmatprep.subr.bf16.mxu0 %v873
        %985 = vmatpush1.bf16.msra.mxu0 %v872
        %986 = vmatprep.subr.bf16.mxu0 %v877
        %987 = vmatpush1.bf16.msra.mxu0 %v876
        %988 = vmatprep.subr.bf16.mxu0 %v881
        %989 = vmatpush1.bf16.msra.mxu0 %v880
        %990 = vmatprep.subr.bf16.mxu0 %v885
        %991 = vmatpush1.bf16.msra.mxu0 %v884
        %992 = vmatprep.subr.bf16.mxu0 %v889
        %993 = vmatpush1.bf16.msra.mxu0 %v888
        %994 = vmatprep.subr.bf16.mxu0 %v893
        %995 = vmatpush1.bf16.msra.mxu0 %v892
        %996 = vmatprep.subr.bf16.mxu0 %v897
        %997 = vmatpush1.bf16.msra.mxu0 %v896
        %998 = vmatprep.subr.bf16.mxu0 %v901
        %999 = vmatpush1.bf16.msra.mxu0 %v900
        %1000 = vmatprep.mubr.bf16.mxu0 %v637
        %1001 = vmatmul.mubr.bf16.gmra.mrb[0].mxu0 %v636
        %v1002 = vpop.f32.mrb[0].mxu0
        %v1003 = vadd.f32 %v601, %v1002
        %v1004 = vpop.f32.mrb[0].mxu0
        %v1005 = vadd.f32 %v605, %v1004
        %v1006 = vpop.f32.mrb[0].mxu0
        %v1007 = vadd.f32 %v601, %v1006
        %v1008 = vpop.f32.mrb[0].mxu0
        %v1009 = vadd.f32 %v605, %v1008
        %1010 = vmatprep.mubr.bf16.mxu0 %v639
        %1011 = vmatmul.mubr.bf16.gmra.mrb[0].mxu0 %v638
        %v1012 = vpop.f32.mrb[0].mxu0
        %v1013 = vadd.f32 %v601, %v1012
        %v1014 = vpop.f32.mrb[0].mxu0
        %v1015 = vadd.f32 %v605, %v1014
        %v1016 = vpop.f32.mrb[0].mxu0
        %v1017 = vadd.f32 %v601, %v1016
        %v1018 = vpop.f32.mrb[0].mxu0
        %v1019 = vadd.f32 %v605, %v1018
        %1020 = vmatprep.mubr.bf16.mxu0 %v641
        %1021 = vmatmul.mubr.bf16.gmra.mrb[0].mxu0 %v640
        %v1022 = vpop.f32.mrb[0].mxu0
        %v1023 = vadd.f32 %v601, %v1022
        %v1024 = vpop.f32.mrb[0].mxu0
        %v1025 = vadd.f32 %v605, %v1024
        %v1026 = vpop.f32.mrb[0].mxu0
        %v1027 = vadd.f32 %v601, %v1026
        %v1028 = vpop.f32.mrb[0].mxu0
        %v1029 = vadd.f32 %v605, %v1028
        %1030 = vdwg.mxu0
        %1031 = vmatprep.subr.bf16.mxu0 %v843
        %1032 = vmatpush1.bf16.msra.mxu0 %v842
        %1033 = vmatprep.subr.bf16.mxu0 %v847
        %1034 = vmatpush1.bf16.msra.mxu0 %v846
        %1035 = vmatprep.subr.bf16.mxu0 %v851
        %1036 = vmatpush1.bf16.msra.mxu0 %v850
        %1037 = vmatprep.subr.bf16.mxu0 %v855
        %1038 = vmatpush1.bf16.msra.mxu0 %v854
        %1039 = vmatprep.subr.bf16.mxu0 %v859
        %1040 = vmatpush1.bf16.msra.mxu0 %v858
        %1041 = vmatprep.subr.bf16.mxu0 %v863
        %1042 = vmatpush1.bf16.msra.mxu0 %v862
        %1043 = vmatprep.subr.bf16.mxu0 %v867
        %1044 = vmatpush1.bf16.msra.mxu0 %v866
        %1045 = vmatprep.subr.bf16.mxu0 %v871
        %1046 = vmatpush1.bf16.msra.mxu0 %v870
        %1047 = vmatprep.subr.bf16.mxu0 %v875
        %1048 = vmatpush1.bf16.msra.mxu0 %v874
        %1049 = vmatprep.subr.bf16.mxu0 %v879
        %1050 = vmatpush1.bf16.msra.mxu0 %v878
        %1051 = vmatprep.subr.bf16.mxu0 %v883
        %1052 = vmatpush1.bf16.msra.mxu0 %v882
        %1053 = vmatprep.subr.bf16.mxu0 %v887
        %1054 = vmatpush1.bf16.msra.mxu0 %v886
        %1055 = vmatprep.subr.bf16.mxu0 %v891
        %1056 = vmatpush1.bf16.msra.mxu0 %v890
        %1057 = vmatprep.subr.bf16.mxu0 %v895
        %1058 = vmatpush1.bf16.msra.mxu0 %v894
        %1059 = vmatprep.subr.bf16.mxu0 %v899
        %1060 = vmatpush1.bf16.msra.mxu0 %v898
        %1061 = vmatprep.subr.bf16.mxu0 %v903
        %1062 = vmatpush1.bf16.msra.mxu0 %v902
        %1063 = vmatprep.mubr.bf16.mxu0 %v637
        %1064 = vmatmul.mubr.bf16.gmra.mrb[0].mxu0 %v636
        %v1065 = vpop.f32.mrb[0].mxu0
        %v1066 = vadd.f32 %v609, %v1065
        %v1067 = vpop.f32.mrb[0].mxu0
        %v1068 = vadd.f32 %v613, %v1067
        %v1069 = vpop.f32.mrb[0].mxu0
        %v1070 = vadd.f32 %v609, %v1069
        %v1071 = vpop.f32.mrb[0].mxu0
        %v1072 = vadd.f32 %v613, %v1071
        %1073 = vmatprep.mubr.bf16.mxu0 %v639
        %1074 = vmatmul.mubr.bf16.gmra.mrb[0].mxu0 %v638
        %v1075 = vpop.f32.mrb[0].mxu0
        %v1076 = vadd.f32 %v609, %v1075
        %v1077 = vpop.f32.mrb[0].mxu0
        %v1078 = vadd.f32 %v613, %v1077
        %v1079 = vpop.f32.mrb[0].mxu0
        %v1080 = vadd.f32 %v609, %v1079
        %v1081 = vpop.f32.mrb[0].mxu0
        %v1082 = vadd.f32 %v613, %v1081
        %1083 = vmatprep.mubr.bf16.mxu0 %v641
        %1084 = vmatmul.mubr.bf16.gmra.mrb[0].mxu0 %v640
        %v1085 = vpop.f32.mrb[0].mxu0
        %v1086 = vadd.f32 %v609, %v1085
        %v1087 = vpop.f32.mrb[0].mxu0
        %v1088 = vadd.f32 %v613, %v1087
        %v1089 = vpop.f32.mrb[0].mxu0
        %v1090 = vadd.f32 %v609, %v1089
        %v1091 = vpop.f32.mrb[0].mxu0
        %v1092 = vadd.f32 %v613, %v1091
        %1093 = vdwg.mxu0
        %v1094 = vmax.f32 %v1003, 0.0
        %v1095 = vmax.f32 %v1005, 0.0
        %v1096 = vmax.f32 %v1066, 0.0
        %v1097 = vmax.f32 %v1068, 0.0
        %v1098 = vmax.f32 %v1007, 0.0
        %v1099 = vmax.f32 %v1009, 0.0
        %v1100 = vmax.f32 %v1070, 0.0
        %v1101 = vmax.f32 %v1072, 0.0
        %v1102 = vmax.f32 %v1013, 0.0
        %v1103 = vmax.f32 %v1015, 0.0
        %v1104 = vmax.f32 %v1076, 0.0
        %v1105 = vmax.f32 %v1078, 0.0
        %v1106 = vmax.f32 %v1017, 0.0
        %v1107 = vmax.f32 %v1019, 0.0
        %v1108 = vmax.f32 %v1080, 0.0
        %v1109 = vmax.f32 %v1082, 0.0
        %v1110 = vmax.f32 %v1023, 0.0
        %v1111 = vmax.f32 %v1025, 0.0
        %v1112 = vmax.f32 %v1086, 0.0
        %v1113 = vmax.f32 %v1088, 0.0
        %v1114 = vmax.f32 %v1027, 0.0
        %v1115 = vmax.f32 %v1029, 0.0
        %v1116 = vmax.f32 %v1090, 0.0
        %v1117 = vmax.f32 %v1092, 0.0
        %v1118 = vld [vmem:[#allocation2] sm:$0xff]
        %v1119 = vld [vmem:[#allocation2 + $0x8] sm:$0xff]
        %v1120 = vld [vmem:[#allocation2 + $0x10] sm:$0xff]
        %v1121 = vld [vmem:[#allocation2 + $0x18] sm:$0xff]
        %v1122 = vld [vmem:[#allocation2 + $0x20] sm:$0xff]
        %v1123 = vld [vmem:[#allocation2 + $0x28] sm:$0xff]
        %v1124 = vld [vmem:[#allocation2 + $0x30] sm:$0xff]
        %v1125 = vld [vmem:[#allocation2 + $0x38] sm:$0xff]
        %v1126 = vld [vmem:[#allocation2 + $0x40] sm:$0xff]
        %v1127 = vld [vmem:[#allocation2 + $0x48] sm:$0xff]
        %v1128 = vld [vmem:[#allocation2 + $0x50] sm:$0xff]
        %v1129 = vld [vmem:[#allocation2 + $0x58] sm:$0xff]
        %v1130 = vpack.c.bf16 %v1098, %v1094
        %v1131 = vpack.c.bf16 %v1099, %v1095
        %v1132 = vpack.c.bf16 %v1100, %v1096
        %v1133 = vpack.c.bf16 %v1101, %v1097
        %v1134 = vpack.c.bf16 %v1106, %v1102
        %v1135 = vpack.c.bf16 %v1107, %v1103
        %v1136 = vpack.c.bf16 %v1108, %v1104
        %v1137 = vpack.c.bf16 %v1109, %v1105
        %v1138 = vpack.c.bf16 %v1114, %v1110
        %v1139 = vpack.c.bf16 %v1115, %v1111
        %v1140 = vpack.c.bf16 %v1116, %v1112
        %v1141 = vpack.c.bf16 %v1117, %v1113
        %v1142 = vld [vmem:[%s501] sm:$0xff]
        %v1143 = vld [vmem:[%s501 + $0x8] sm:$0xff]
        %v1144 = vld [vmem:[%s501 + $0x10] sm:$0xff]
        %v1145 = vld [vmem:[%s501 + $0x18] sm:$0xff]
        %v1146 = vld [vmem:[%s501 + $0x20] sm:$0xff]
        %v1147 = vld [vmem:[%s501 + $0x28] sm:$0xff]
        %v1148 = vld [vmem:[%s501 + $0x30] sm:$0xff]
        %v1149 = vld [vmem:[%s501 + $0x38] sm:$0xff]
        %v1150 = vld [vmem:[%s501 + $0x40] sm:$0xff]
        %v1151 = vld [vmem:[%s501 + $0x48] sm:$0xff]
        %v1152 = vld [vmem:[%s501 + $0x50] sm:$0xff]
        %v1153 = vld [vmem:[%s501 + $0x58] sm:$0xff]
        %v1154 = vld [vmem:[%s501 + $0x60] sm:$0xff]
        %v1155 = vld [vmem:[%s501 + $0x68] sm:$0xff]
        %v1156 = vld [vmem:[%s501 + $0x70] sm:$0xff]
        %v1157 = vld [vmem:[%s501 + $0x78] sm:$0xff]
        %v1158 = vld [vmem:[%s501 + $0x80] sm:$0xff]
        %v1159 = vld [vmem:[%s501 + $0x88] sm:$0xff]
        %v1160 = vld [vmem:[%s501 + $0x90] sm:$0xff]
        %v1161 = vld [vmem:[%s501 + $0x98] sm:$0xff]
        %v1162 = vld [vmem:[%s501 + $0xa0] sm:$0xff]
        %v1163 = vld [vmem:[%s501 + $0xa8] sm:$0xff]
        %v1164 = vld [vmem:[%s501 + $0xb0] sm:$0xff]
        %v1165 = vld [vmem:[%s501 + $0xb8] sm:$0xff]
        %v1166 = vld [vmem:[%s501 + $0xc0] sm:$0xff]
        %v1167 = vld [vmem:[%s501 + $0xc8] sm:$0xff]
        %v1168 = vld [vmem:[%s501 + $0xd0] sm:$0xff]
        %v1169 = vld [vmem:[%s501 + $0xd8] sm:$0xff]
        %v1170 = vld [vmem:[%s501 + $0xe0] sm:$0xff]
        %v1171 = vld [vmem:[%s501 + $0xe8] sm:$0xff]
        %v1172 = vld [vmem:[%s501 + $0xf0] sm:$0xff]
        %v1173 = vld [vmem:[%s501 + $0xf8] sm:$0xff]
        %v1174 = vld [vmem:[%s501 + $0x100] sm:$0xff]
        %v1175 = vld [vmem:[%s501 + $0x108] sm:$0xff]
        %v1176 = vld [vmem:[%s501 + $0x110] sm:$0xff]
        %v1177 = vld [vmem:[%s501 + $0x118] sm:$0xff]
        %v1178 = vld [vmem:[%s501 + $0x120] sm:$0xff]
        %v1179 = vld [vmem:[%s501 + $0x128] sm:$0xff]
        %v1180 = vld [vmem:[%s501 + $0x130] sm:$0xff]
        %v1181 = vld [vmem:[%s501 + $0x138] sm:$0xff]
        %v1182 = vld [vmem:[%s501 + $0x140] sm:$0xff]
        %v1183 = vld [vmem:[%s501 + $0x148] sm:$0xff]
        %v1184 = vld [vmem:[%s501 + $0x150] sm:$0xff]
        %v1185 = vld [vmem:[%s501 + $0x158] sm:$0xff]
        %v1186 = vld [vmem:[%s501 + $0x160] sm:$0xff]
        %v1187 = vld [vmem:[%s501 + $0x168] sm:$0xff]
        %v1188 = vld [vmem:[%s501 + $0x170] sm:$0xff]
        %v1189 = vld [vmem:[%s501 + $0x178] sm:$0xff]
        %v1190 = vld [vmem:[%s501 + $0x180] sm:$0xff]
        %v1191 = vld [vmem:[%s501 + $0x188] sm:$0xff]
        %v1192 = vld [vmem:[%s501 + $0x190] sm:$0xff]
        %v1193 = vld [vmem:[%s501 + $0x198] sm:$0xff]
        %v1194 = vld [vmem:[%s501 + $0x1a0] sm:$0xff]
        %v1195 = vld [vmem:[%s501 + $0x1a8] sm:$0xff]
        %v1196 = vld [vmem:[%s501 + $0x1b0] sm:$0xff]
        %v1197 = vld [vmem:[%s501 + $0x1b8] sm:$0xff]
        %v1198 = vld [vmem:[%s501 + $0x1c0] sm:$0xff]
        %v1199 = vld [vmem:[%s501 + $0x1c8] sm:$0xff]
        %v1200 = vld [vmem:[%s501 + $0x1d0] sm:$0xff]
        %v1201 = vld [vmem:[%s501 + $0x1d8] sm:$0xff]
        %v1202 = vld [vmem:[%s501 + $0x1e0] sm:$0xff]
        %v1203 = vld [vmem:[%s501 + $0x1e8] sm:$0xff]
        %v1204 = vld [vmem:[%s501 + $0x1f0] sm:$0xff]
        %v1205 = vld [vmem:[%s501 + $0x1f8] sm:$0xff]
        %v1270 = vunpack.c.l.b16 %v1142
        %v1271 = vunpack.c.h.b16 %v1142
        %v1272 = vunpack.c.l.b16 %v1143
        %v1273 = vunpack.c.h.b16 %v1143
        %v1274 = vunpack.c.l.b16 %v1144
        %v1275 = vunpack.c.h.b16 %v1144
        %v1276 = vunpack.c.l.b16 %v1145
        %v1277 = vunpack.c.h.b16 %v1145
        %v1278 = vunpack.c.l.b16 %v1146
        %v1279 = vunpack.c.h.b16 %v1146
        %v1280 = vunpack.c.l.b16 %v1147
        %v1281 = vunpack.c.h.b16 %v1147
        %v1282 = vunpack.c.l.b16 %v1148
        %v1283 = vunpack.c.h.b16 %v1148
        %v1284 = vunpack.c.l.b16 %v1149
        %v1285 = vunpack.c.h.b16 %v1149
        %v1286 = vunpack.c.l.b16 %v1150
        %v1287 = vunpack.c.h.b16 %v1150
        %v1288 = vunpack.c.l.b16 %v1151
        %v1289 = vunpack.c.h.b16 %v1151
        %v1290 = vunpack.c.l.b16 %v1152
        %v1291 = vunpack.c.h.b16 %v1152
        %v1292 = vunpack.c.l.b16 %v1153
        %v1293 = vunpack.c.h.b16 %v1153
        %v1294 = vunpack.c.l.b16 %v1154
        %v1295 = vunpack.c.h.b16 %v1154
        %v1296 = vunpack.c.l.b16 %v1155
        %v1297 = vunpack.c.h.b16 %v1155
        %v1298 = vunpack.c.l.b16 %v1156
        %v1299 = vunpack.c.h.b16 %v1156
        %v1300 = vunpack.c.l.b16 %v1157
        %v1301 = vunpack.c.h.b16 %v1157
        %v1302 = vunpack.c.l.b16 %v1158
        %v1303 = vunpack.c.h.b16 %v1158
        %v1304 = vunpack.c.l.b16 %v1159
        %v1305 = vunpack.c.h.b16 %v1159
        %v1306 = vunpack.c.l.b16 %v1160
        %v1307 = vunpack.c.h.b16 %v1160
        %v1308 = vunpack.c.l.b16 %v1161
        %v1309 = vunpack.c.h.b16 %v1161
        %v1310 = vunpack.c.l.b16 %v1162
        %v1311 = vunpack.c.h.b16 %v1162
        %v1312 = vunpack.c.l.b16 %v1163
        %v1313 = vunpack.c.h.b16 %v1163
        %v1314 = vunpack.c.l.b16 %v1164
        %v1315 = vunpack.c.h.b16 %v1164
        %v1316 = vunpack.c.l.b16 %v1165
        %v1317 = vunpack.c.h.b16 %v1165
        %v1318 = vunpack.c.l.b16 %v1166
        %v1319 = vunpack.c.h.b16 %v1166
        %v1320 = vunpack.c.l.b16 %v1167
        %v1321 = vunpack.c.h.b16 %v1167
        %v1322 = vunpack.c.l.b16 %v1168
        %v1323 = vunpack.c.h.b16 %v1168
        %v1324 = vunpack.c.l.b16 %v1169
        %v1325 = vunpack.c.h.b16 %v1169
        %v1326 = vunpack.c.l.b16 %v1170
        %v1327 = vunpack.c.h.b16 %v1170
        %v1328 = vunpack.c.l.b16 %v1171
        %v1329 = vunpack.c.h.b16 %v1171
        %v1330 = vunpack.c.l.b16 %v1172
        %v1331 = vunpack.c.h.b16 %v1172
        %v1332 = vunpack.c.l.b16 %v1173
        %v1333 = vunpack.c.h.b16 %v1173
        %v1334 = vunpack.c.l.b16 %v1174
        %v1335 = vunpack.c.h.b16 %v1174
        %v1336 = vunpack.c.l.b16 %v1175
        %v1337 = vunpack.c.h.b16 %v1175
        %v1338 = vunpack.c.l.b16 %v1176
        %v1339 = vunpack.c.h.b16 %v1176
        %v1340 = vunpack.c.l.b16 %v1177
        %v1341 = vunpack.c.h.b16 %v1177
        %v1342 = vunpack.c.l.b16 %v1178
        %v1343 = vunpack.c.h.b16 %v1178
        %v1344 = vunpack.c.l.b16 %v1179
        %v1345 = vunpack.c.h.b16 %v1179
        %v1346 = vunpack.c.l.b16 %v1180
        %v1347 = vunpack.c.h.b16 %v1180
        %v1348 = vunpack.c.l.b16 %v1181
        %v1349 = vunpack.c.h.b16 %v1181
        %v1350 = vunpack.c.l.b16 %v1182
        %v1351 = vunpack.c.h.b16 %v1182
        %v1352 = vunpack.c.l.b16 %v1183
        %v1353 = vunpack.c.h.b16 %v1183
        %v1354 = vunpack.c.l.b16 %v1184
        %v1355 = vunpack.c.h.b16 %v1184
        %v1356 = vunpack.c.l.b16 %v1185
        %v1357 = vunpack.c.h.b16 %v1185
        %v1358 = vunpack.c.l.b16 %v1186
        %v1359 = vunpack.c.h.b16 %v1186
        %v1360 = vunpack.c.l.b16 %v1187
        %v1361 = vunpack.c.h.b16 %v1187
        %v1362 = vunpack.c.l.b16 %v1188
        %v1363 = vunpack.c.h.b16 %v1188
        %v1364 = vunpack.c.l.b16 %v1189
        %v1365 = vunpack.c.h.b16 %v1189
        %v1366 = vunpack.c.l.b16 %v1190
        %v1367 = vunpack.c.h.b16 %v1190
        %v1368 = vunpack.c.l.b16 %v1191
        %v1369 = vunpack.c.h.b16 %v1191
        %v1370 = vunpack.c.l.b16 %v1192
        %v1371 = vunpack.c.h.b16 %v1192
        %v1372 = vunpack.c.l.b16 %v1193
        %v1373 = vunpack.c.h.b16 %v1193
        %v1374 = vunpack.c.l.b16 %v1194
        %v1375 = vunpack.c.h.b16 %v1194
        %v1376 = vunpack.c.l.b16 %v1195
        %v1377 = vunpack.c.h.b16 %v1195
        %v1378 = vunpack.c.l.b16 %v1196
        %v1379 = vunpack.c.h.b16 %v1196
        %v1380 = vunpack.c.l.b16 %v1197
        %v1381 = vunpack.c.h.b16 %v1197
        %v1382 = vunpack.c.l.b16 %v1198
        %v1383 = vunpack.c.h.b16 %v1198
        %v1384 = vunpack.c.l.b16 %v1199
        %v1385 = vunpack.c.h.b16 %v1199
        %v1386 = vunpack.c.l.b16 %v1200
        %v1387 = vunpack.c.h.b16 %v1200
        %v1388 = vunpack.c.l.b16 %v1201
        %v1389 = vunpack.c.h.b16 %v1201
        %v1390 = vunpack.c.l.b16 %v1202
        %v1391 = vunpack.c.h.b16 %v1202
        %v1392 = vunpack.c.l.b16 %v1203
        %v1393 = vunpack.c.h.b16 %v1203
        %v1394 = vunpack.c.l.b16 %v1204
        %v1395 = vunpack.c.h.b16 %v1204
        %v1396 = vunpack.c.l.b16 %v1205
        %v1397 = vunpack.c.h.b16 %v1205
        %v1398 = vpack.c.b16 %v1272, %v1270
        %v1399 = vpack.c.b16 %v1273, %v1271
        %v1400 = vpack.c.b16 %v1276, %v1274
        %v1401 = vpack.c.b16 %v1277, %v1275
        %v1402 = vpack.c.b16 %v1280, %v1278
        %v1403 = vpack.c.b16 %v1281, %v1279
        %v1404 = vpack.c.b16 %v1284, %v1282
        %v1405 = vpack.c.b16 %v1285, %v1283
        %v1406 = vpack.c.b16 %v1288, %v1286
        %v1407 = vpack.c.b16 %v1289, %v1287
        %v1408 = vpack.c.b16 %v1292, %v1290
        %v1409 = vpack.c.b16 %v1293, %v1291
        %v1410 = vpack.c.b16 %v1296, %v1294
        %v1411 = vpack.c.b16 %v1297, %v1295
        %v1412 = vpack.c.b16 %v1300, %v1298
        %v1413 = vpack.c.b16 %v1301, %v1299
        %v1414 = vpack.c.b16 %v1304, %v1302
        %v1415 = vpack.c.b16 %v1305, %v1303
        %v1416 = vpack.c.b16 %v1308, %v1306
        %v1417 = vpack.c.b16 %v1309, %v1307
        %v1418 = vpack.c.b16 %v1312, %v1310
        %v1419 = vpack.c.b16 %v1313, %v1311
        %v1420 = vpack.c.b16 %v1316, %v1314
        %v1421 = vpack.c.b16 %v1317, %v1315
        %v1422 = vpack.c.b16 %v1320, %v1318
        %v1423 = vpack.c.b16 %v1321, %v1319
        %v1424 = vpack.c.b16 %v1324, %v1322
        %v1425 = vpack.c.b16 %v1325, %v1323
        %v1426 = vpack.c.b16 %v1328, %v1326
        %v1427 = vpack.c.b16 %v1329, %v1327
        %v1428 = vpack.c.b16 %v1332, %v1330
        %v1429 = vpack.c.b16 %v1333, %v1331
        %v1430 = vpack.c.b16 %v1336, %v1334
        %v1431 = vpack.c.b16 %v1337, %v1335
        %v1432 = vpack.c.b16 %v1340, %v1338
        %v1433 = vpack.c.b16 %v1341, %v1339
        %v1434 = vpack.c.b16 %v1344, %v1342
        %v1435 = vpack.c.b16 %v1345, %v1343
        %v1436 = vpack.c.b16 %v1348, %v1346
        %v1437 = vpack.c.b16 %v1349, %v1347
        %v1438 = vpack.c.b16 %v1352, %v1350
        %v1439 = vpack.c.b16 %v1353, %v1351
        %v1440 = vpack.c.b16 %v1356, %v1354
        %v1441 = vpack.c.b16 %v1357, %v1355
        %v1442 = vpack.c.b16 %v1360, %v1358
        %v1443 = vpack.c.b16 %v1361, %v1359
        %v1444 = vpack.c.b16 %v1364, %v1362
        %v1445 = vpack.c.b16 %v1365, %v1363
        %v1446 = vpack.c.b16 %v1368, %v1366
        %v1447 = vpack.c.b16 %v1369, %v1367
        %v1448 = vpack.c.b16 %v1372, %v1370
        %v1449 = vpack.c.b16 %v1373, %v1371
        %v1450 = vpack.c.b16 %v1376, %v1374
        %v1451 = vpack.c.b16 %v1377, %v1375
        %v1452 = vpack.c.b16 %v1380, %v1378
        %v1453 = vpack.c.b16 %v1381, %v1379
        %v1454 = vpack.c.b16 %v1384, %v1382
        %v1455 = vpack.c.b16 %v1385, %v1383
        %v1456 = vpack.c.b16 %v1388, %v1386
        %v1457 = vpack.c.b16 %v1389, %v1387
        %v1458 = vpack.c.b16 %v1392, %v1390
        %v1459 = vpack.c.b16 %v1393, %v1391
        %v1460 = vpack.c.b16 %v1396, %v1394
        %v1461 = vpack.c.b16 %v1397, %v1395
        %1526 = vmatprep.subr.bf16.mxu0 %v1399
        %1527 = vmatpush1.bf16.msra.mxu0 %v1398
        %1528 = vmatprep.subr.bf16.mxu0 %v1401
        %1529 = vmatpush1.bf16.msra.mxu0 %v1400
        %1530 = vmatprep.subr.bf16.mxu0 %v1403
        %1531 = vmatpush1.bf16.msra.mxu0 %v1402
        %1532 = vmatprep.subr.bf16.mxu0 %v1405
        %1533 = vmatpush1.bf16.msra.mxu0 %v1404
        %1534 = vmatprep.subr.bf16.mxu0 %v1407
        %1535 = vmatpush1.bf16.msra.mxu0 %v1406
        %1536 = vmatprep.subr.bf16.mxu0 %v1409
        %1537 = vmatpush1.bf16.msra.mxu0 %v1408
        %1538 = vmatprep.subr.bf16.mxu0 %v1411
        %1539 = vmatpush1.bf16.msra.mxu0 %v1410
        %1540 = vmatprep.subr.bf16.mxu0 %v1413
        %1541 = vmatpush1.bf16.msra.mxu0 %v1412
        %1542 = vmatprep.subr.bf16.mxu0 %v1415
        %1543 = vmatpush1.bf16.msra.mxu0 %v1414
        %1544 = vmatprep.subr.bf16.mxu0 %v1417
        %1545 = vmatpush1.bf16.msra.mxu0 %v1416
        %1546 = vmatprep.subr.bf16.mxu0 %v1419
        %1547 = vmatpush1.bf16.msra.mxu0 %v1418
        %1548 = vmatprep.subr.bf16.mxu0 %v1421
        %1549 = vmatpush1.bf16.msra.mxu0 %v1420
        %1550 = vmatprep.subr.bf16.mxu0 %v1423
        %1551 = vmatpush1.bf16.msra.mxu0 %v1422
        %1552 = vmatprep.subr.bf16.mxu0 %v1425
        %1553 = vmatpush1.bf16.msra.mxu0 %v1424
        %1554 = vmatprep.subr.bf16.mxu0 %v1427
        %1555 = vmatpush1.bf16.msra.mxu0 %v1426
        %1556 = vmatprep.subr.bf16.mxu0 %v1429
        %1557 = vmatpush1.bf16.msra.mxu0 %v1428
        %1558 = vmatprep.mubr.bf16.mxu0 %v1131
        %1559 = vmatmul.mubr.bf16.gmra.mrb[0].mxu0 %v1130
        %v1560 = vpop.f32.mrb[0].mxu0
        %v1561 = vadd.f32 0.0, %v1560
        %v1562 = vpop.f32.mrb[0].mxu0
        %v1563 = vadd.f32 0.0, %v1562
        %v1564 = vpop.f32.mrb[0].mxu0
        %v1565 = vadd.f32 0.0, %v1564
        %v1566 = vpop.f32.mrb[0].mxu0
        %v1567 = vadd.f32 0.0, %v1566
        %1568 = vmatprep.mubr.bf16.mxu0 %v1135
        %1569 = vmatmul.mubr.bf16.gmra.mrb[0].mxu0 %v1134
        %v1570 = vpop.f32.mrb[0].mxu0
        %v1571 = vadd.f32 0.0, %v1570
        %v1572 = vpop.f32.mrb[0].mxu0
        %v1573 = vadd.f32 0.0, %v1572
        %v1574 = vpop.f32.mrb[0].mxu0
        %v1575 = vadd.f32 0.0, %v1574
        %v1576 = vpop.f32.mrb[0].mxu0
        %v1577 = vadd.f32 0.0, %v1576
        %1578 = vmatprep.mubr.bf16.mxu0 %v1139
        %1579 = vmatmul.mubr.bf16.gmra.mrb[0].mxu0 %v1138
        %v1580 = vpop.f32.mrb[0].mxu0
        %v1581 = vadd.f32 0.0, %v1580
        %v1582 = vpop.f32.mrb[0].mxu0
        %v1583 = vadd.f32 0.0, %v1582
        %v1584 = vpop.f32.mrb[0].mxu0
        %v1585 = vadd.f32 0.0, %v1584
        %v1586 = vpop.f32.mrb[0].mxu0
        %v1587 = vadd.f32 0.0, %v1586
        %1588 = vdwg.mxu0
        %1589 = vmatprep.subr.bf16.mxu0 %v1431
        %1590 = vmatpush1.bf16.msra.mxu0 %v1430
        %1591 = vmatprep.subr.bf16.mxu0 %v1433
        %1592 = vmatpush1.bf16.msra.mxu0 %v1432
        %1593 = vmatprep.subr.bf16.mxu0 %v1435
        %1594 = vmatpush1.bf16.msra.mxu0 %v1434
        %1595 = vmatprep.subr.bf16.mxu0 %v1437
        %1596 = vmatpush1.bf16.msra.mxu0 %v1436
        %1597 = vmatprep.subr.bf16.mxu0 %v1439
        %1598 = vmatpush1.bf16.msra.mxu0 %v1438
        %1599 = vmatprep.subr.bf16.mxu0 %v1441
        %1600 = vmatpush1.bf16.msra.mxu0 %v1440
        %1601 = vmatprep.subr.bf16.mxu0 %v1443
        %1602 = vmatpush1.bf16.msra.mxu0 %v1442
        %1603 = vmatprep.subr.bf16.mxu0 %v1445
        %1604 = vmatpush1.bf16.msra.mxu0 %v1444
        %1605 = vmatprep.subr.bf16.mxu0 %v1447
        %1606 = vmatpush1.bf16.msra.mxu0 %v1446
        %1607 = vmatprep.subr.bf16.mxu0 %v1449
        %1608 = vmatpush1.bf16.msra.mxu0 %v1448
        %1609 = vmatprep.subr.bf16.mxu0 %v1451
        %1610 = vmatpush1.bf16.msra.mxu0 %v1450
        %1611 = vmatprep.subr.bf16.mxu0 %v1453
        %1612 = vmatpush1.bf16.msra.mxu0 %v1452
        %1613 = vmatprep.subr.bf16.mxu0 %v1455
        %1614 = vmatpush1.bf16.msra.mxu0 %v1454
        %1615 = vmatprep.subr.bf16.mxu0 %v1457
        %1616 = vmatpush1.bf16.msra.mxu0 %v1456
        %1617 = vmatprep.subr.bf16.mxu0 %v1459
        %1618 = vmatpush1.bf16.msra.mxu0 %v1458
        %1619 = vmatprep.subr.bf16.mxu0 %v1461
        %1620 = vmatpush1.bf16.msra.mxu0 %v1460
        %1621 = vmatprep.mubr.bf16.mxu0 %v1133
        %1622 = vmatmul.mubr.bf16.gmra.mrb[0].mxu0 %v1132
        %v1623 = vpop.f32.mrb[0].mxu0
        %v1624 = vadd.f32 %v1561, %v1623
        %v1625 = vpop.f32.mrb[0].mxu0
        %v1626 = vadd.f32 %v1563, %v1625
        %v1627 = vpop.f32.mrb[0].mxu0
        %v1628 = vadd.f32 %v1565, %v1627
        %v1629 = vpop.f32.mrb[0].mxu0
        %v1630 = vadd.f32 %v1567, %v1629
        %1631 = vmatprep.mubr.bf16.mxu0 %v1137
        %1632 = vmatmul.mubr.bf16.gmra.mrb[0].mxu0 %v1136
        %v1633 = vpop.f32.mrb[0].mxu0
        %v1634 = vadd.f32 %v1571, %v1633
        %v1635 = vpop.f32.mrb[0].mxu0
        %v1636 = vadd.f32 %v1573, %v1635
        %v1637 = vpop.f32.mrb[0].mxu0
        %v1638 = vadd.f32 %v1575, %v1637
        %v1639 = vpop.f32.mrb[0].mxu0
        %v1640 = vadd.f32 %v1577, %v1639
        %1641 = vmatprep.mubr.bf16.mxu0 %v1141
        %1642 = vmatmul.mubr.bf16.gmra.mrb[0].mxu0 %v1140
        %v1643 = vpop.f32.mrb[0].mxu0
        %v1644 = vadd.f32 %v1581, %v1643
        %v1645 = vpop.f32.mrb[0].mxu0
        %v1646 = vadd.f32 %v1583, %v1645
        %v1647 = vpop.f32.mrb[0].mxu0
        %v1648 = vadd.f32 %v1585, %v1647
        %v1649 = vpop.f32.mrb[0].mxu0
        %v1650 = vadd.f32 %v1587, %v1649
        %1651 = vdwg.mxu0
        %v1652 = vadd.f32 %v1118, %v1624
        %v1653 = vadd.f32 %v1119, %v1626
        %v1654 = vadd.f32 %v1120, %v1628
        %v1655 = vadd.f32 %v1121, %v1630
        %v1656 = vadd.f32 %v1122, %v1634
        %v1657 = vadd.f32 %v1123, %v1636
        %v1658 = vadd.f32 %v1124, %v1638
        %v1659 = vadd.f32 %v1125, %v1640
        %v1660 = vadd.f32 %v1126, %v1644
        %v1661 = vadd.f32 %v1127, %v1646
        %v1662 = vadd.f32 %v1128, %v1648
        %v1663 = vadd.f32 %v1129, %v1650
        %1664 = vst [vmem:[#allocation2] sm:$0xff] %v1652
        %1665 = vst [vmem:[#allocation2 + $0x8] sm:$0xff] %v1653
        %1666 = vst [vmem:[#allocation2 + $0x10] sm:$0xff] %v1654
        %1667 = vst [vmem:[#allocation2 + $0x18] sm:$0xff] %v1655
        %1668 = vst [vmem:[#allocation2 + $0x20] sm:$0xff] %v1656
        %1669 = vst [vmem:[#allocation2 + $0x28] sm:$0xff] %v1657
        %1670 = vst [vmem:[#allocation2 + $0x30] sm:$0xff] %v1658
        %1671 = vst [vmem:[#allocation2 + $0x38] sm:$0xff] %v1659
        %1672 = vst [vmem:[#allocation2 + $0x40] sm:$0xff] %v1660
        %1673 = vst [vmem:[#allocation2 + $0x48] sm:$0xff] %v1661
        %1674 = vst [vmem:[#allocation2 + $0x50] sm:$0xff] %v1662
        %1675 = vst [vmem:[#allocation2 + $0x58] sm:$0xff] %v1663
        %p1676 = scmp.eq.s32.totalorder %s23, 1
        // Predicated region
        $region76: #{vit_forward.8} parent=66 // pred_check
          %p1677 = pneg %p1676
        $region77: #{vit_forward.8} parent=66 // pred_check_branch
          %1679 = sbr.rel (%p1677) target = $region79
        $region78: #{vit_forward.8} parent=66 // pred_region
          %v1680 = vunpack.c.l.bf16 %v526
          %v1681 = vunpack.c.h.bf16 %v526
          %v1682 = vunpack.c.l.bf16 %v527
          %v1683 = vunpack.c.h.bf16 %v527
          %v1684 = vunpack.c.l.bf16 %v528
          %v1685 = vunpack.c.h.bf16 %v528
          %v1686 = vunpack.c.l.bf16 %v529
          %v1687 = vunpack.c.h.bf16 %v529
          %v1688 = vunpack.c.l.bf16 %v530
          %v1689 = vunpack.c.h.bf16 %v530
          %v1690 = vunpack.c.l.bf16 %v531
          %v1691 = vunpack.c.h.bf16 %v531
          %v1692 = vld [vmem:[#allocation2] sm:$0xff]
          %v1693 = vld [vmem:[#allocation2 + $0x8] sm:$0xff]
          %v1694 = vld [vmem:[#allocation2 + $0x10] sm:$0xff]
          %v1695 = vld [vmem:[#allocation2 + $0x18] sm:$0xff]
          %v1696 = vld [vmem:[#allocation2 + $0x20] sm:$0xff]
          %v1697 = vld [vmem:[#allocation2 + $0x28] sm:$0xff]
          %v1698 = vld [vmem:[#allocation2 + $0x30] sm:$0xff]
          %v1699 = vld [vmem:[#allocation2 + $0x38] sm:$0xff]
          %v1700 = vld [vmem:[#allocation2 + $0x40] sm:$0xff]
          %v1701 = vld [vmem:[#allocation2 + $0x48] sm:$0xff]
          %v1702 = vld [vmem:[#allocation2 + $0x50] sm:$0xff]
          %v1703 = vld [vmem:[#allocation2 + $0x58] sm:$0xff]
          %v1704 = vadd.f32 %v1680, %v1692
          %v1705 = vadd.f32 %v1681, %v1693
          %v1706 = vadd.f32 %v1682, %v1694
          %v1707 = vadd.f32 %v1683, %v1695
          %v1708 = vadd.f32 %v1684, %v1696
          %v1709 = vadd.f32 %v1685, %v1697
          %v1710 = vadd.f32 %v1686, %v1698
          %v1711 = vadd.f32 %v1687, %v1699
          %v1712 = vadd.f32 %v1688, %v1700
          %v1713 = vadd.f32 %v1689, %v1701
          %v1714 = vadd.f32 %v1690, %v1702
          %v1715 = vadd.f32 %v1691, %v1703
          %v1716 = vld [vmem:[%s4] sm:$0x3]
          %v1718 = vlaneseq
          %v1719 = vshrl.u32 %v1718, 7
          %v1720 = vsub.s32 0, %v1719
          %v1721 = vrot.slane %v1716, %v1720
          %v1722 = vlaneseq
          %v1723 = vshrl.u32 %v1722, 7
          %v1724 = vsub.s32 1, %v1723
          %v1725 = vrot.slane %v1716, %v1724
          %v1728 = vadd.f32 %v1704, %v1721
          %v1729 = vadd.f32 %v1705, %v1725
          %v1730 = vadd.f32 %v1706, %v1721
          %v1731 = vadd.f32 %v1707, %v1725
          %v1732 = vadd.f32 %v1708, %v1721
          %v1733 = vadd.f32 %v1709, %v1725
          %v1734 = vadd.f32 %v1710, %v1721
          %v1735 = vadd.f32 %v1711, %v1725
          %v1736 = vadd.f32 %v1712, %v1721
          %v1737 = vadd.f32 %v1713, %v1725
          %v1738 = vadd.f32 %v1714, %v1721
          %v1739 = vadd.f32 %v1715, %v1725
          %v1740 = vadd.f32 %v1728, %v1729
          %1741 = vadd.xlane.f32.xlu0 %v1740
          %v1742 = vpop.xlane.xlu0 %1741
          %v1743 = vadd.f32 %v1730, %v1731
          %1744 = vadd.xlane.f32.xlu0 %v1743
          %v1745 = vpop.xlane.xlu0 %1744
          %v1746 = vadd.f32 %v1732, %v1733
          %1747 = vadd.xlane.f32.xlu0 %v1746
          %v1748 = vpop.xlane.xlu0 %1747
          %v1749 = vadd.f32 %v1734, %v1735
          %1750 = vadd.xlane.f32.xlu0 %v1749
          %v1751 = vpop.xlane.xlu0 %1750
          %v1752 = vadd.f32 %v1736, %v1737
          %1753 = vadd.xlane.f32.xlu0 %v1752
          %v1754 = vpop.xlane.xlu0 %1753
          %v1755 = vadd.f32 %v1738, %v1739
          %1756 = vadd.xlane.f32.xlu0 %v1755
          %v1757 = vpop.xlane.xlu0 %1756
          %v1758 = vrcp.pop 256.0
          %v1759 = vmul.f32 %v1742, %v1758
          %v1760 = vmul.f32 %v1745, %v1758
          %v1761 = vmul.f32 %v1748, %v1758
          %v1762 = vmul.f32 %v1751, %v1758
          %v1763 = vmul.f32 %v1754, %v1758
          %v1764 = vmul.f32 %v1757, %v1758
          %v1765 = vsub.f32 %v1728, %v1759
          %v1766 = vsub.f32 %v1729, %v1759
          %v1767 = vsub.f32 %v1730, %v1760
          %v1768 = vsub.f32 %v1731, %v1760
          %v1769 = vsub.f32 %v1732, %v1761
          %v1770 = vsub.f32 %v1733, %v1761
          %v1771 = vsub.f32 %v1734, %v1762
          %v1772 = vsub.f32 %v1735, %v1762
          %v1773 = vsub.f32 %v1736, %v1763
          %v1774 = vsub.f32 %v1737, %v1763
          %v1775 = vsub.f32 %v1738, %v1764
          %v1776 = vsub.f32 %v1739, %v1764
          %v1777 = vmul.f32 %v1765, %v1765
          %v1778 = vmul.f32 %v1766, %v1766
          %v1779 = vmul.f32 %v1767, %v1767
          %v1780 = vmul.f32 %v1768, %v1768
          %v1781 = vmul.f32 %v1769, %v1769
          %v1782 = vmul.f32 %v1770, %v1770
          %v1783 = vmul.f32 %v1771, %v1771
          %v1784 = vmul.f32 %v1772, %v1772
          %v1785 = vmul.f32 %v1773, %v1773
          %v1786 = vmul.f32 %v1774, %v1774
          %v1787 = vmul.f32 %v1775, %v1775
          %v1788 = vmul.f32 %v1776, %v1776
          %v1789 = vadd.f32 %v1777, %v1778
          %1790 = vadd.xlane.f32.xlu0 %v1789
          %v1791 = vpop.xlane.xlu0 %1790
          %v1792 = vadd.f32 %v1779, %v1780
          %1793 = vadd.xlane.f32.xlu0 %v1792
          %v1794 = vpop.xlane.xlu0 %1793
          %v1795 = vadd.f32 %v1781, %v1782
          %1796 = vadd.xlane.f32.xlu0 %v1795
          %v1797 = vpop.xlane.xlu0 %1796
          %v1798 = vadd.f32 %v1783, %v1784
          %1799 = vadd.xlane.f32.xlu0 %v1798
          %v1800 = vpop.xlane.xlu0 %1799
          %v1801 = vadd.f32 %v1785, %v1786
          %1802 = vadd.xlane.f32.xlu0 %v1801
          %v1803 = vpop.xlane.xlu0 %1802
          %v1804 = vadd.f32 %v1787, %v1788
          %1805 = vadd.xlane.f32.xlu0 %v1804
          %v1806 = vpop.xlane.xlu0 %1805
          %v1807 = vmul.f32 %v1791, %v1758
          %v1808 = vmul.f32 %v1794, %v1758
          %v1809 = vmul.f32 %v1797, %v1758
          %v1810 = vmul.f32 %v1800, %v1758
          %v1811 = vmul.f32 %v1803, %v1758
          %v1812 = vmul.f32 %v1806, %v1758
          %v1813 = vadd.f32 %v1807, 1e-05
          %v1814 = vadd.f32 %v1808, 1e-05
          %v1815 = vadd.f32 %v1809, 1e-05
          %v1816 = vadd.f32 %v1810, 1e-05
          %v1817 = vadd.f32 %v1811, 1e-05
          %v1818 = vadd.f32 %v1812, 1e-05
          %v1819 = vrsqrt.pop %v1813
          %v1820 = vrsqrt.pop %v1814
          %v1821 = vrsqrt.pop %v1815
          %v1822 = vrsqrt.pop %v1816
          %v1823 = vrsqrt.pop %v1817
          %v1824 = vrsqrt.pop %v1818
          %v1825 = vmul.f32 %v1765, %v1819
          %v1826 = vmul.f32 %v1766, %v1819
          %v1827 = vmul.f32 %v1767, %v1820
          %v1828 = vmul.f32 %v1768, %v1820
          %v1829 = vmul.f32 %v1769, %v1821
          %v1830 = vmul.f32 %v1770, %v1821
          %v1831 = vmul.f32 %v1771, %v1822
          %v1832 = vmul.f32 %v1772, %v1822
          %v1833 = vmul.f32 %v1773, %v1823
          %v1834 = vmul.f32 %v1774, %v1823
          %v1835 = vmul.f32 %v1775, %v1824
          %v1836 = vmul.f32 %v1776, %v1824
          %v1837 = vld [vmem:[%s5] sm:$0x3]
          %v1839 = vlaneseq
          %v1840 = vshrl.u32 %v1839, 7
          %v1841 = vsub.s32 0, %v1840
          %v1842 = vrot.slane %v1837, %v1841
          %v1843 = vlaneseq
          %v1844 = vshrl.u32 %v1843, 7
          %v1845 = vsub.s32 1, %v1844
          %v1846 = vrot.slane %v1837, %v1845
          %v1849 = vmul.f32 %v1825, %v1842
          %v1850 = vmul.f32 %v1826, %v1846
          %v1851 = vmul.f32 %v1827, %v1842
          %v1852 = vmul.f32 %v1828, %v1846
          %v1853 = vmul.f32 %v1829, %v1842
          %v1854 = vmul.f32 %v1830, %v1846
          %v1855 = vmul.f32 %v1831, %v1842
          %v1856 = vmul.f32 %v1832, %v1846
          %v1857 = vmul.f32 %v1833, %v1842
          %v1858 = vmul.f32 %v1834, %v1846
          %v1859 = vmul.f32 %v1835, %v1842
          %v1860 = vmul.f32 %v1836, %v1846
          %v1861 = vld [vmem:[%s6] sm:$0x3]
          %v1863 = vlaneseq
          %v1864 = vshrl.u32 %v1863, 7
          %v1865 = vsub.s32 0, %v1864
          %v1866 = vrot.slane %v1861, %v1865
          %v1867 = vlaneseq
          %v1868 = vshrl.u32 %v1867, 7
          %v1869 = vsub.s32 1, %v1868
          %v1870 = vrot.slane %v1861, %v1869
          %v1873 = vadd.f32 %v1849, %v1866
          %v1874 = vadd.f32 %v1850, %v1870
          %v1875 = vadd.f32 %v1851, %v1866
          %v1876 = vadd.f32 %v1852, %v1870
          %v1877 = vadd.f32 %v1853, %v1866
          %v1878 = vadd.f32 %v1854, %v1870
          %v1879 = vadd.f32 %v1855, %v1866
          %v1880 = vadd.f32 %v1856, %v1870
          %v1881 = vadd.f32 %v1857, %v1866
          %v1882 = vadd.f32 %v1858, %v1870
          %v1883 = vadd.f32 %v1859, %v1866
          %v1884 = vadd.f32 %v1860, %v1870
          %v1885 = vpack.c.bf16 %v1875, %v1873
          %v1886 = vpack.c.bf16 %v1876, %v1874
          %v1887 = vpack.c.bf16 %v1879, %v1877
          %v1888 = vpack.c.bf16 %v1880, %v1878
          %v1889 = vpack.c.bf16 %v1883, %v1881
          %v1890 = vpack.c.bf16 %v1884, %v1882
          %v1897 = vunpack.c.l.b16 %v1885
          %v1898 = vunpack.c.l.b16 %v1886
          %v1899 = vunpack.c.h.b16 %v1885
          %v1900 = vunpack.c.h.b16 %v1886
          %v1901 = vunpack.c.l.b16 %v1887
          %v1902 = vunpack.c.l.b16 %v1888
          %v1903 = vunpack.c.h.b16 %v1887
          %v1904 = vunpack.c.h.b16 %v1888
          %v1905 = vunpack.c.l.b16 %v1889
          %v1906 = vunpack.c.l.b16 %v1890
          %v1907 = vunpack.c.h.b16 %v1889
          %v1908 = vunpack.c.h.b16 %v1890
          %v1909 = vpack.c.b16 %v1898, %v1897
          %v1910 = vpack.c.b16 %v1900, %v1899
          %v1911 = vpack.c.b16 %v1902, %v1901
          %v1912 = vpack.c.b16 %v1904, %v1903
          %v1913 = vpack.c.b16 %v1906, %v1905
          %v1914 = vpack.c.b16 %v1908, %v1907
          %1921 = vst [vmem:[%s508] sm:$0xff] %v1909
          %1922 = vst [vmem:[%s508 + $0x8] sm:$0xff] %v1910
          %1923 = vst [vmem:[%s508 + $0x10] sm:$0xff] %v1911
          %1924 = vst [vmem:[%s508 + $0x18] sm:$0xff] %v1912
          %1925 = vst [vmem:[%s508 + $0x20] sm:$0xff] %v1913
          %1926 = vst [vmem:[%s508 + $0x28] sm:$0xff] %v1914
        $region79: #{vit_forward.8} parent=66 // pred_fallthru
          _
        %s1927 = smul.u32 6, %s22
        %p1928 = scmp.lt.s32.totalorder %s1927, 5
        %s1929 = scalar_select %p1928, %s1927, 5
        %s1930 = smul.addr %s1929, 2
        %s1931 = smul.addr %s1930, 4
        %s1932 = scalar_lea.vmem %s7, %s1931
        // Predicated region
        $region80: #{vit_forward.8} parent=66 // pred_check
          %p1933 = pneg %p215
        $region81: #{vit_forward.8} parent=66 // pred_check_branch
          %1935 = sbr.rel (%p1933) target = $region83
        $region82: #{vit_forward.8} parent=66 // pred_region
          %s1936 = smul.u32 6, %s22
        $region83: #{vit_forward.8} parent=66 // pred_fallthru
          _
        // Predicated region
        $region84: #{vit_forward.8} parent=66 // pred_check
          %p1937 = pneg %p215
        $region85: #{vit_forward.8} parent=66 // pred_check_branch
          %1939 = sbr.rel (%p1937) target = $region87
        $region86: #{vit_forward.8} parent=66 // pred_region
          %s1940 = smul.u32 6, %s22
          %p1941 = scmp.lt.s32.totalorder %s1940, 5
          %s1942 = scalar_select %p1941, %s1940, 5
          %s1943 = smul.addr %s1942, 2
          %s1944 = smul.addr %s1943, 4
          %s1945 = scalar_lea.vmem %s7, %s1944
        $region87: #{vit_forward.8} parent=66 // pred_fallthru
          _
      $region67: #{vit_forward.8} parent=5 // pred_fallthru
        _
      %p1946 = scmp.le.s32.totalorder 2, %s13
      // Predicated region
      $region88: #{vit_forward.8} parent=5 // pred_check
        %p1947 = pneg %p1946
      $region89: #{vit_forward.8} parent=5 // pred_check_branch
        %1949 = sbr.rel (%p1947) target = $region91
      $region90: #{vit_forward.8} parent=5 // pred_region
        %s1950 = ssub.s32 %s13, 2
      $region91: #{vit_forward.8} parent=5 // pred_fallthru
        _
    $region6: #{vit_forward.8} parent=1 // loop_footer
      %s17 = sadd.s32 1, %s13
    $region7: #{vit_forward.8} parent=1 // loop_footer_branch
      %12 = sbr.rel target = $region3
    $region8: #{vit_forward.8} parent=1 // loop_exit
      _

// kernel: vit_forward.7
$region0: #{vit_forward.7}
  #allocation0 [shape = 'u32[]', space=smem, size = 0x4, offset = 0x4, fixed_abs, tag = 'smem constant byte address 0x4 - core index']
  #allocation1 [shape = 'u32[144,128]{1,0:T(1,128)}', space=vmem, size = 0x12000, scoped, tag = 'internal scratch']
  %s0 = inlined_call_operand.vmem [shape: bf16[2,24,256], index: 0, kind: input, shape index: {}]
  %s1 = inlined_call_operand.hbm [shape: bf16[256,768], index: 1, kind: input, shape index: {}]
  %s2 = inlined_call_operand.vmem [shape: f32[1,768], index: 2, kind: input, shape index: {}]
  %s3 = inlined_call_operand.vmem [shape: bf16[256,256], index: 3, kind: input, shape index: {}]
  %s4 = inlined_call_operand.vmem [shape: f32[1,256], index: 4, kind: input, shape index: {}]
  %s5 = inlined_call_operand.vmem [shape: f32[1,256], index: 5, kind: input, shape index: {}]
  %s6 = inlined_call_operand.vmem [shape: f32[1,256], index: 6, kind: input, shape index: {}]
  %s7 = inlined_call_operand.vmem [shape: bf16[2,24,256], index: 7, kind: output, shape index: {}]
  %s8 = sld [smem:[#allocation0]]
  $region65: #{vit_forward.7} parent=0
    _
  %s10 = ssub.s32 1, %s8
  %s11 = scalar_select 0, %s10, %s8
  $region1: #{vit_forward.7} parent=0
    #allocation2 [shape = 'u8[393216]{0}', space=vmem, size = 0x60000, scoped, tag = 'input window, operand 1, single buffered']
    #allocation3 [shape = 's32[2]{0}', space=sflag, size = 0x8, scoped, tag = 'scoped memory for vit_forward.7']
    %12 = vsyncpa [#allocation3], 0
    loop: start=0, step=1, limit=4
    $region2: #{vit_forward.7} parent=1 // loop_pre_header
      _
    $region3: #{vit_forward.7} parent=1 // loop_header
      %s14 = sphi 0, %s18
      %p15 = scmp.ge.s32.totalorder %s14, 4
      %s24 = sphi 0, %s26
      %s27 = sphi 0, %s24
      %s28 = sphi 0, %s27
      %s44 = sphi 0, %s28
      %s48 = sphi 0, %s48
      %s50 = sphi 0, %s48
      %s51 = sphi 0, %s50
      %s65 = sphi 0, %s51
      %s69 = sphi 0, %s69
      %s71 = sphi 0, %s69
      %s72 = sphi 0, %s71
      %s86 = sphi 0, %s72
      %s90 = sphi 0, %s90
      %s92 = sphi 0, %s90
      %s93 = sphi 0, %s92
      %s107 = sphi 0, %s93
      %s111 = sphi 0, %s111
      %s113 = sphi 0, %s111
      %s114 = sphi 0, %s113
      %s128 = sphi 0, %s114
      %s132 = sphi 0, %s132
      %s134 = sphi 0, %s132
      %s135 = sphi 0, %s134
      %s149 = sphi 0, %s135
      %s153 = sphi 0, %s153
      %s155 = sphi 0, %s153
      %s156 = sphi 0, %s155
      %s170 = sphi 0, %s156
      %s176 = sphi 0, %s178
      %s179 = sphi 0, %s176
      %s180 = sphi 0, %s179
      %s196 = sphi 0, %s180
    $region4: #{vit_forward.7} parent=1 // loop_header_branch
      %17 = sbr.rel (%p15) target = $region8
    $region5: #{vit_forward.7} parent=1 // loop_body
      %s19 = ssub.s32 %s14, 1
      %s20 = ssub.s32 %s14, 2
      %s21 = sadd.s32 %s14, 1
      %s22 = ssub.s32 %s14, %s21
      %p23 = scmp.eq.s32.totalorder %s22, 0
      %s25 = sadd.s32 %s24, 1
      %s26 = scalar_select %p23, %s24, %s25
      %p29 = pneg %p23
      %p30 = scmp.eq.s32.totalorder %s14, 1
      %p31 = por %p29, %p30
      %p32 = scmp.ne.s32.totalorder %s24, %s27
      %p33 = scmp.eq.s32.totalorder %s14, 0
      %p34 = por %p32, %p33
      %p35 = scmp.ne.s32.totalorder %s24, %s27
      %p36 = scmp.eq.s32.totalorder %s19, 1
      %p37 = por %p35, %p36
      %p38 = scmp.ne.s32.totalorder %s27, %s28
      %p39 = scmp.eq.s32.totalorder %s19, 0
      %p40 = por %p38, %p39
      %p41 = scmp.ne.s32.totalorder %s27, %s28
      %p42 = scmp.eq.s32.totalorder %s20, 1
      %p43 = por %p41, %p42
      %p45 = scmp.ne.s32.totalorder %s28, %s44
      %p46 = scmp.eq.s32.totalorder %s20, 0
      %p47 = por %p45, %p46
      %s49 = sadd.s32 %s48, 1
      %p52 = scmp.eq.s32.totalorder %s14, 1
      %p53 = scmp.ne.s32.totalorder %s48, %s50
      %p54 = scmp.eq.s32.totalorder %s14, 0
      %p55 = por %p53, %p54
      %p56 = scmp.ne.s32.totalorder %s48, %s50
      %p57 = scmp.eq.s32.totalorder %s19, 1
      %p58 = por %p56, %p57
      %p59 = scmp.ne.s32.totalorder %s50, %s51
      %p60 = scmp.eq.s32.totalorder %s19, 0
      %p61 = por %p59, %p60
      %p62 = scmp.ne.s32.totalorder %s50, %s51
      %p63 = scmp.eq.s32.totalorder %s20, 1
      %p64 = por %p62, %p63
      %p66 = scmp.ne.s32.totalorder %s51, %s65
      %p67 = scmp.eq.s32.totalorder %s20, 0
      %p68 = por %p66, %p67
      %s70 = sadd.s32 %s69, 1
      %p73 = scmp.eq.s32.totalorder %s14, 1
      %p74 = scmp.ne.s32.totalorder %s69, %s71
      %p75 = scmp.eq.s32.totalorder %s14, 0
      %p76 = por %p74, %p75
      %p77 = scmp.ne.s32.totalorder %s69, %s71
      %p78 = scmp.eq.s32.totalorder %s19, 1
      %p79 = por %p77, %p78
      %p80 = scmp.ne.s32.totalorder %s71, %s72
      %p81 = scmp.eq.s32.totalorder %s19, 0
      %p82 = por %p80, %p81
      %p83 = scmp.ne.s32.totalorder %s71, %s72
      %p84 = scmp.eq.s32.totalorder %s20, 1
      %p85 = por %p83, %p84
      %p87 = scmp.ne.s32.totalorder %s72, %s86
      %p88 = scmp.eq.s32.totalorder %s20, 0
      %p89 = por %p87, %p88
      %s91 = sadd.s32 %s90, 1
      %p94 = scmp.eq.s32.totalorder %s14, 1
      %p95 = scmp.ne.s32.totalorder %s90, %s92
      %p96 = scmp.eq.s32.totalorder %s14, 0
      %p97 = por %p95, %p96
      %p98 = scmp.ne.s32.totalorder %s90, %s92
      %p99 = scmp.eq.s32.totalorder %s19, 1
      %p100 = por %p98, %p99
      %p101 = scmp.ne.s32.totalorder %s92, %s93
      %p102 = scmp.eq.s32.totalorder %s19, 0
      %p103 = por %p101, %p102
      %p104 = scmp.ne.s32.totalorder %s92, %s93
      %p105 = scmp.eq.s32.totalorder %s20, 1
      %p106 = por %p104, %p105
      %p108 = scmp.ne.s32.totalorder %s93, %s107
      %p109 = scmp.eq.s32.totalorder %s20, 0
      %p110 = por %p108, %p109
      %s112 = sadd.s32 %s111, 1
      %p115 = scmp.eq.s32.totalorder %s14, 1
      %p116 = scmp.ne.s32.totalorder %s111, %s113
      %p117 = scmp.eq.s32.totalorder %s14, 0
      %p118 = por %p116, %p117
      %p119 = scmp.ne.s32.totalorder %s111, %s113
      %p120 = scmp.eq.s32.totalorder %s19, 1
      %p121 = por %p119, %p120
      %p122 = scmp.ne.s32.totalorder %s113, %s114
      %p123 = scmp.eq.s32.totalorder %s19, 0
      %p124 = por %p122, %p123
      %p125 = scmp.ne.s32.totalorder %s113, %s114
      %p126 = scmp.eq.s32.totalorder %s20, 1
      %p127 = por %p125, %p126
      %p129 = scmp.ne.s32.totalorder %s114, %s128
      %p130 = scmp.eq.s32.totalorder %s20, 0
      %p131 = por %p129, %p130
      %s133 = sadd.s32 %s132, 1
      %p136 = scmp.eq.s32.totalorder %s14, 1
      %p137 = scmp.ne.s32.totalorder %s132, %s134
      %p138 = scmp.eq.s32.totalorder %s14, 0
      %p139 = por %p137, %p138
      %p140 = scmp.ne.s32.totalorder %s132, %s134
      %p141 = scmp.eq.s32.totalorder %s19, 1
      %p142 = por %p140, %p141
      %p143 = scmp.ne.s32.totalorder %s134, %s135
      %p144 = scmp.eq.s32.totalorder %s19, 0
      %p145 = por %p143, %p144
      %p146 = scmp.ne.s32.totalorder %s134, %s135
      %p147 = scmp.eq.s32.totalorder %s20, 1
      %p148 = por %p146, %p147
      %p150 = scmp.ne.s32.totalorder %s135, %s149
      %p151 = scmp.eq.s32.totalorder %s20, 0
      %p152 = por %p150, %p151
      %s154 = sadd.s32 %s153, 1
      %p157 = scmp.eq.s32.totalorder %s14, 1
      %p158 = scmp.ne.s32.totalorder %s153, %s155
      %p159 = scmp.eq.s32.totalorder %s14, 0
      %p160 = por %p158, %p159
      %p161 = scmp.ne.s32.totalorder %s153, %s155
      %p162 = scmp.eq.s32.totalorder %s19, 1
      %p163 = por %p161, %p162
      %p164 = scmp.ne.s32.totalorder %s155, %s156
      %p165 = scmp.eq.s32.totalorder %s19, 0
      %p166 = por %p164, %p165
      %p167 = scmp.ne.s32.totalorder %s155, %s156
      %p168 = scmp.eq.s32.totalorder %s20, 1
      %p169 = por %p167, %p168
      %p171 = scmp.ne.s32.totalorder %s156, %s170
      %p172 = scmp.eq.s32.totalorder %s20, 0
      %p173 = por %p171, %p172
      %s174 = ssub.s32 %s14, %s21
      %p175 = scmp.eq.s32.totalorder %s174, 0
      %s177 = sadd.s32 %s176, 1
      %s178 = scalar_select %p175, %s176, %s177
      %p181 = pneg %p175
      %p182 = scmp.eq.s32.totalorder %s14, 1
      %p183 = por %p181, %p182
      %p184 = scmp.ne.s32.totalorder %s176, %s179
      %p185 = scmp.eq.s32.totalorder %s14, 0
      %p186 = por %p184, %p185
      %p187 = scmp.ne.s32.totalorder %s176, %s179
      %p188 = scmp.eq.s32.totalorder %s19, 1
      %p189 = por %p187, %p188
      %p190 = scmp.ne.s32.totalorder %s179, %s180
      %p191 = scmp.eq.s32.totalorder %s19, 0
      %p192 = por %p190, %p191
      %p193 = scmp.ne.s32.totalorder %s179, %s180
      %p194 = scmp.eq.s32.totalorder %s20, 1
      %p195 = por %p193, %p194
      %p197 = scmp.ne.s32.totalorder %s180, %s196
      %p198 = scmp.eq.s32.totalorder %s20, 0
      %p199 = por %p197, %p198
      %p200 = scmp.le.s32.totalorder 1, %s14
      %p201 = scmp.lt.s32.totalorder %s14, 3
      %p202 = pnand %p200, %p201
      %p203 = pneg %p202
      // Predicated region
      $region9: #{vit_forward.7} parent=5 // pred_check
        _
      $region10: #{vit_forward.7} parent=5 // pred_check_branch
        %205 = sbr.rel (%p202) target = $region12
      $region11: #{vit_forward.7} parent=5 // pred_region
        %s206 = ssub.s32 %s14, 1
        // Predicated region
        $region13: #{vit_forward.7} parent=11 // pred_check
          %p207 = pneg %p61
        $region14: #{vit_forward.7} parent=11 // pred_check_branch
          %209 = sbr.rel (%p207) target = $region16
        $region15: #{vit_forward.7} parent=11 // pred_region
          %s211 = ssub.s32 12288, 12288
          %212 = vsyncadd [#allocation3], %s211
          %s213 = sshll.u32 [#allocation2], 4
          %s214 = int_to_ptr.vmem [resolvable:$true] %s213
          %219 = dma.hbm_to_vmem [thread:$0]  %s1, 12288, %s214, [#allocation3], 384, 384, 24
        $region16: #{vit_forward.7} parent=11 // pred_fallthru
          _
        // Predicated region
        $region17: #{vit_forward.7} parent=11 // pred_check
          %p220 = pneg %p82
        $region18: #{vit_forward.7} parent=11 // pred_check_branch
          %222 = sbr.rel (%p220) target = $region20
        $region19: #{vit_forward.7} parent=11 // pred_region
          _
        $region20: #{vit_forward.7} parent=11 // pred_fallthru
          _
        // Predicated region
        $region21: #{vit_forward.7} parent=11 // pred_check
          %p223 = pneg %p103
        $region22: #{vit_forward.7} parent=11 // pred_check_branch
          %225 = sbr.rel (%p223) target = $region24
        $region23: #{vit_forward.7} parent=11 // pred_region
          _
        $region24: #{vit_forward.7} parent=11 // pred_fallthru
          _
        // Predicated region
        $region25: #{vit_forward.7} parent=11 // pred_check
          %p226 = pneg %p124
        $region26: #{vit_forward.7} parent=11 // pred_check_branch
          %228 = sbr.rel (%p226) target = $region28
        $region27: #{vit_forward.7} parent=11 // pred_region
          _
        $region28: #{vit_forward.7} parent=11 // pred_fallthru
          _
        // Predicated region
        $region29: #{vit_forward.7} parent=11 // pred_check
          %p229 = pneg %p145
        $region30: #{vit_forward.7} parent=11 // pred_check_branch
          %231 = sbr.rel (%p229) target = $region32
        $region31: #{vit_forward.7} parent=11 // pred_region
          _
        $region32: #{vit_forward.7} parent=11 // pred_fallthru
          _
        // Predicated region
        $region33: #{vit_forward.7} parent=11 // pred_check
          %p232 = pneg %p166
        $region34: #{vit_forward.7} parent=11 // pred_check_branch
          %234 = sbr.rel (%p232) target = $region36
        $region35: #{vit_forward.7} parent=11 // pred_region
          _
        $region36: #{vit_forward.7} parent=11 // pred_fallthru
          _
      $region12: #{vit_forward.7} parent=5 // pred_fallthru
        _
      %p235 = scmp.lt.s32.totalorder %s14, 2
      // Predicated region
      $region37: #{vit_forward.7} parent=5 // pred_check
        %p236 = pneg %p235
      $region38: #{vit_forward.7} parent=5 // pred_check_branch
        %238 = sbr.rel (%p236) target = $region40
      $region39: #{vit_forward.7} parent=5 // pred_region
        // Predicated region
        $region41: #{vit_forward.7} parent=39 // pred_check
          %p239 = pneg %p34
        $region42: #{vit_forward.7} parent=39 // pred_check_branch
          %241 = sbr.rel (%p239) target = $region44
        $region43: #{vit_forward.7} parent=39 // pred_region
          %p242 = scmp.lt.s32.totalorder %s14, 1
          %s243 = scalar_select %p242, %s14, 1
          %s244 = smul.addr %s243, 6
          %s245 = smul.addr %s244, 4
          %s246 = scalar_lea.vmem %s0, %s245
        $region44: #{vit_forward.7} parent=39 // pred_fallthru
          _
      $region40: #{vit_forward.7} parent=5 // pred_fallthru
        _
      %p247 = scmp.le.s32.totalorder 1, %s14
      %p248 = scmp.lt.s32.totalorder %s14, 3
      %p249 = pnand %p247, %p248
      %p250 = pneg %p249
      // Predicated region
      $region45: #{vit_forward.7} parent=5 // pred_check
        _
      $region46: #{vit_forward.7} parent=5 // pred_check_branch
        %252 = sbr.rel (%p249) target = $region48
      $region47: #{vit_forward.7} parent=5 // pred_region
        %s253 = ssub.s32 %s14, 1
        // Predicated region
        $region49: #{vit_forward.7} parent=47 // pred_check
          %p254 = pneg %p61
        $region50: #{vit_forward.7} parent=47 // pred_check_branch
          %256 = sbr.rel (%p254) target = $region52
        $region51: #{vit_forward.7} parent=47 // pred_region
          %257 = dma.done [#allocation3], 12288
        $region52: #{vit_forward.7} parent=47 // pred_fallthru
          _
        %p258 = scmp.lt.s32.totalorder %s19, 1
        %s259 = scalar_select %p258, %s19, 1
        %s260 = smul.addr %s259, 6
        %s261 = smul.addr %s260, 4
        %s262 = scalar_lea.vmem %s0, %s261
        %p263 = pneg %p40
        %p264 = pneg %p37
        %p265 = pneg %p61
        %p266 = pneg %p58
        %p267 = pneg %p82
        %p268 = pneg %p79
        %p269 = pneg %p103
        %p270 = pneg %p100
        %p271 = pneg %p124
        %p272 = pneg %p121
        %p273 = pneg %p145
        %p274 = pneg %p142
        %p275 = pneg %p166
        %p276 = pneg %p163
        %p277 = pneg %p192
        %p278 = pneg %p189
        %p279 = scmp.lt.s32.totalorder %s19, 1
        %s280 = scalar_select %p279, %s19, 1
        %s281 = smul.addr %s280, 6
        %s282 = smul.addr %s281, 4
        %s283 = scalar_lea.vmem %s7, %s282
        %p284 = scmp.lt.s32.totalorder %s19, 1
        %s285 = scalar_select %p284, %s19, 1
        %s286 = smul.addr %s285, 6
        %s287 = smul.addr %s286, 4
        %s288 = scalar_lea.vmem %s0, %s287
        %p289 = scmp.lt.s32.totalorder %s19, 1
        %s290 = scalar_select %p289, %s19, 1
        %s291 = smul.addr %s290, 6
        %s292 = smul.addr %s291, 4
        %s293 = scalar_lea.vmem %s7, %s292
        %v295 = vld [vmem:[%s288] sm:$0xff]
        %v296 = vld [vmem:[%s288 + $0x8] sm:$0xff]
        %v297 = vld [vmem:[%s288 + $0x10] sm:$0xff]
        %v298 = vld [vmem:[#allocation2] sm:$0xff]
        %v299 = vld [vmem:[#allocation2 + $0x8] sm:$0xff]
        %v300 = vld [vmem:[#allocation2 + $0x10] sm:$0xff]
        %v301 = vld [vmem:[#allocation2 + $0x18] sm:$0xff]
        %v302 = vld [vmem:[#allocation2 + $0x20] sm:$0xff]
        %v303 = vld [vmem:[#allocation2 + $0x28] sm:$0xff]
        %v304 = vld [vmem:[#allocation2 + $0x30] sm:$0xff]
        %v305 = vld [vmem:[#allocation2 + $0x38] sm:$0xff]
        %v306 = vld [vmem:[#allocation2 + $0x40] sm:$0xff]
        %v307 = vld [vmem:[#allocation2 + $0x48] sm:$0xff]
        %v308 = vld [vmem:[#allocation2 + $0x50] sm:$0xff]
        %v309 = vld [vmem:[#allocation2 + $0x58] sm:$0xff]
        %v310 = vld [vmem:[#allocation2 + $0x60] sm:$0xff]
        %v311 = vld [vmem:[#allocation2 + $0x68] sm:$0xff]
        %v312 = vld [vmem:[#allocation2 + $0x70] sm:$0xff]
        %v313 = vld [vmem:[#allocation2 + $0x78] sm:$0xff]
        %v314 = vld [vmem:[#allocation2 + $0x80] sm:$0xff]
        %v315 = vld [vmem:[#allocation2 + $0x88] sm:$0xff]
        %v316 = vld [vmem:[#allocation2 + $0x90] sm:$0xff]
        %v317 = vld [vmem:[#allocation2 + $0x98] sm:$0xff]
        %v318 = vld [vmem:[#allocation2 + $0xa0] sm:$0xff]
        %v319 = vld [vmem:[#allocation2 + $0xa8] sm:$0xff]
        %v320 = vld [vmem:[#allocation2 + $0xb0] sm:$0xff]
        %v321 = vld [vmem:[#allocation2 + $0xb8] sm:$0xff]
        %v322 = vld [vmem:[#allocation2 + $0xc0] sm:$0xff]
        %v323 = vld [vmem:[#allocation2 + $0xc8] sm:$0xff]
        %v324 = vld [vmem:[#allocation2 + $0xd0] sm:$0xff]
        %v325 = vld [vmem:[#allocation2 + $0xd8] sm:$0xff]
        %v326 = vld [vmem:[#allocation2 + $0xe0] sm:$0xff]
        %v327 = vld [vmem:[#allocation2 + $0xe8] sm:$0xff]
        %v328 = vld [vmem:[#allocation2 + $0xf0] sm:$0xff]
        %v329 = vld [vmem:[#allocation2 + $0xf8] sm:$0xff]
        %v330 = vld [vmem:[#allocation2 + $0x100] sm:$0xff]
        %v331 = vld [vmem:[#allocation2 + $0x108] sm:$0xff]
        %v332 = vld [vmem:[#allocation2 + $0x110] sm:$0xff]
        %v333 = vld [vmem:[#allocation2 + $0x118] sm:$0xff]
        %v334 = vld [vmem:[#allocation2 + $0x120] sm:$0xff]
        %v335 = vld [vmem:[#allocation2 + $0x128] sm:$0xff]
        %v336 = vld [vmem:[#allocation2 + $0x130] sm:$0xff]
        %v337 = vld [vmem:[#allocation2 + $0x138] sm:$0xff]
        %v338 = vld [vmem:[#allocation2 + $0x140] sm:$0xff]
        %v339 = vld [vmem:[#allocation2 + $0x148] sm:$0xff]
        %v340 = vld [vmem:[#allocation2 + $0x150] sm:$0xff]
        %v341 = vld [vmem:[#allocation2 + $0x158] sm:$0xff]
        %v342 = vld [vmem:[#allocation2 + $0x160] sm:$0xff]
        %v343 = vld [vmem:[#allocation2 + $0x168] sm:$0xff]
        %v344 = vld [vmem:[#allocation2 + $0x170] sm:$0xff]
        %v345 = vld [vmem:[#allocation2 + $0x178] sm:$0xff]
        %v346 = vld [vmem:[#allocation2 + $0x180] sm:$0xff]
        %v347 = vld [vmem:[#allocation2 + $0x188] sm:$0xff]
        %v348 = vld [vmem:[#allocation2 + $0x190] sm:$0xff]
        %v349 = vld [vmem:[#allocation2 + $0x198] sm:$0xff]
        %v350 = vld [vmem:[#allocation2 + $0x1a0] sm:$0xff]
        %v351 = vld [vmem:[#allocation2 + $0x1a8] sm:$0xff]
        %v352 = vld [vmem:[#allocation2 + $0x1b0] sm:$0xff]
        %v353 = vld [vmem:[#allocation2 + $0x1b8] sm:$0xff]
        %v354 = vld [vmem:[#allocation2 + $0x1c0] sm:$0xff]
        %v355 = vld [vmem:[#allocation2 + $0x1c8] sm:$0xff]
        %v356 = vld [vmem:[#allocation2 + $0x1d0] sm:$0xff]
        %v357 = vld [vmem:[#allocation2 + $0x1d8] sm:$0xff]
        %v358 = vld [vmem:[#allocation2 + $0x1e0] sm:$0xff]
        %v359 = vld [vmem:[#allocation2 + $0x1e8] sm:$0xff]
        %v360 = vld [vmem:[#allocation2 + $0x1f0] sm:$0xff]
        %v361 = vld [vmem:[#allocation2 + $0x1f8] sm:$0xff]
        %v362 = vld [vmem:[#allocation2 + $0x200] sm:$0xff]
        %v363 = vld [vmem:[#allocation2 + $0x208] sm:$0xff]
        %v364 = vld [vmem:[#allocation2 + $0x210] sm:$0xff]
        %v365 = vld [vmem:[#allocation2 + $0x218] sm:$0xff]
        %v366 = vld [vmem:[#allocation2 + $0x220] sm:$0xff]
        %v367 = vld [vmem:[#allocation2 + $0x228] sm:$0xff]
        %v368 = vld [vmem:[#allocation2 + $0x230] sm:$0xff]
        %v369 = vld [vmem:[#allocation2 + $0x238] sm:$0xff]
        %v370 = vld [vmem:[#allocation2 + $0x240] sm:$0xff]
        %v371 = vld [vmem:[#allocation2 + $0x248] sm:$0xff]
        %v372 = vld [vmem:[#allocation2 + $0x250] sm:$0xff]
        %v373 = vld [vmem:[#allocation2 + $0x258] sm:$0xff]
        %v374 = vld [vmem:[#allocation2 + $0x260] sm:$0xff]
        %v375 = vld [vmem:[#allocation2 + $0x268] sm:$0xff]
        %v376 = vld [vmem:[#allocation2 + $0x270] sm:$0xff]
        %v377 = vld [vmem:[#allocation2 + $0x278] sm:$0xff]
        %v378 = vld [vmem:[#allocation2 + $0x280] sm:$0xff]
        %v379 = vld [vmem:[#allocation2 + $0x288] sm:$0xff]
        %v380 = vld [vmem:[#allocation2 + $0x290] sm:$0xff]
        %v381 = vld [vmem:[#allocation2 + $0x298] sm:$0xff]
        %v382 = vld [vmem:[#allocation2 + $0x2a0] sm:$0xff]
        %v383 = vld [vmem:[#allocation2 + $0x2a8] sm:$0xff]
        %v384 = vld [vmem:[#allocation2 + $0x2b0] sm:$0xff]
        %v385 = vld [vmem:[#allocation2 + $0x2b8] sm:$0xff]
        %v386 = vld [vmem:[#allocation2 + $0x2c0] sm:$0xff]
        %v387 = vld [vmem:[#allocation2 + $0x2c8] sm:$0xff]
        %v388 = vld [vmem:[#allocation2 + $0x2d0] sm:$0xff]
        %v389 = vld [vmem:[#allocation2 + $0x2d8] sm:$0xff]
        %v390 = vld [vmem:[#allocation2 + $0x2e0] sm:$0xff]
        %v391 = vld [vmem:[#allocation2 + $0x2e8] sm:$0xff]
        %v392 = vld [vmem:[#allocation2 + $0x2f0] sm:$0xff]
        %v393 = vld [vmem:[#allocation2 + $0x2f8] sm:$0xff]
        %v394 = vld [vmem:[%s2] sm:$0x3f]
        %v396 = vlaneseq
        %v397 = vshrl.u32 %v396, 7
        %v398 = vsub.s32 0, %v397
        %v399 = vrot.slane %v394, %v398
        %v400 = vlaneseq
        %v401 = vshrl.u32 %v400, 7
        %v402 = vsub.s32 1, %v401
        %v403 = vrot.slane %v394, %v402
        %v404 = vlaneseq
        %v405 = vshrl.u32 %v404, 7
        %v406 = vsub.s32 2, %v405
        %v407 = vrot.slane %v394, %v406
        %v408 = vlaneseq
        %v409 = vshrl.u32 %v408, 7
        %v410 = vsub.s32 3, %v409
        %v411 = vrot.slane %v394, %v410
        %v412 = vlaneseq
        %v413 = vshrl.u32 %v412, 7
        %v414 = vsub.s32 4, %v413
        %v415 = vrot.slane %v394, %v414
        %v416 = vlaneseq
        %v417 = vshrl.u32 %v416, 7
        %v418 = vsub.s32 5, %v417
        %v419 = vrot.slane %v394, %v418
        %v429 = vunpack.c.l.b16 %v295
        %v430 = vunpack.c.h.b16 %v295
        %v431 = vunpack.c.l.b16 %v296
        %v432 = vunpack.c.h.b16 %v296
        %v433 = vunpack.c.l.b16 %v297
        %v434 = vunpack.c.h.b16 %v297
        %v435 = vpack.c.b16 %v431, %v429
        %v436 = vpack.c.b16 %v432, %v430
        %v437 = vpack.c.b16 %v433, %v433
        %v438 = vpack.c.b16 %v434, %v434
        %v539 = vunpack.c.l.b16 %v298
        %v540 = vunpack.c.h.b16 %v298
        %v541 = vunpack.c.l.b16 %v299
        %v542 = vunpack.c.h.b16 %v299
        %v543 = vunpack.c.l.b16 %v300
        %v544 = vunpack.c.h.b16 %v300
        %v545 = vunpack.c.l.b16 %v301
        %v546 = vunpack.c.h.b16 %v301
        %v547 = vunpack.c.l.b16 %v302
        %v548 = vunpack.c.h.b16 %v302
        %v549 = vunpack.c.l.b16 %v303
        %v550 = vunpack.c.h.b16 %v303
        %v551 = vunpack.c.l.b16 %v304
        %v552 = vunpack.c.h.b16 %v304
        %v553 = vunpack.c.l.b16 %v305
        %v554 = vunpack.c.h.b16 %v305
        %v555 = vunpack.c.l.b16 %v306
        %v556 = vunpack.c.h.b16 %v306
        %v557 = vunpack.c.l.b16 %v307
        %v558 = vunpack.c.h.b16 %v307
        %v559 = vunpack.c.l.b16 %v308
        %v560 = vunpack.c.h.b16 %v308
        %v561 = vunpack.c.l.b16 %v309
        %v562 = vunpack.c.h.b16 %v309
        %v563 = vunpack.c.l.b16 %v310
        %v564 = vunpack.c.h.b16 %v310
        %v565 = vunpack.c.l.b16 %v311
        %v566 = vunpack.c.h.b16 %v311
        %v567 = vunpack.c.l.b16 %v312
        %v568 = vunpack.c.h.b16 %v312
        %v569 = vunpack.c.l.b16 %v313
        %v570 = vunpack.c.h.b16 %v313
        %v571 = vunpack.c.l.b16 %v314
        %v572 = vunpack.c.h.b16 %v314
        %v573 = vunpack.c.l.b16 %v315
        %v574 = vunpack.c.h.b16 %v315
        %v575 = vunpack.c.l.b16 %v316
        %v576 = vunpack.c.h.b16 %v316
        %v577 = vunpack.c.l.b16 %v317
        %v578 = vunpack.c.h.b16 %v317
        %v579 = vunpack.c.l.b16 %v318
        %v580 = vunpack.c.h.b16 %v318
        %v581 = vunpack.c.l.b16 %v319
        %v582 = vunpack.c.h.b16 %v319
        %v583 = vunpack.c.l.b16 %v320
        %v584 = vunpack.c.h.b16 %v320
        %v585 = vunpack.c.l.b16 %v321
        %v586 = vunpack.c.h.b16 %v321
        %v587 = vunpack.c.l.b16 %v322
        %v588 = vunpack.c.h.b16 %v322
        %v589 = vunpack.c.l.b16 %v323
        %v590 = vunpack.c.h.b16 %v323
        %v591 = vunpack.c.l.b16 %v324
        %v592 = vunpack.c.h.b16 %v324
        %v593 = vunpack.c.l.b16 %v325
        %v594 = vunpack.c.h.b16 %v325
        %v595 = vunpack.c.l.b16 %v326
        %v596 = vunpack.c.h.b16 %v326
        %v597 = vunpack.c.l.b16 %v327
        %v598 = vunpack.c.h.b16 %v327
        %v599 = vunpack.c.l.b16 %v328
        %v600 = vunpack.c.h.b16 %v328
        %v601 = vunpack.c.l.b16 %v329
        %v602 = vunpack.c.h.b16 %v329
        %v603 = vunpack.c.l.b16 %v330
        %v604 = vunpack.c.h.b16 %v330
        %v605 = vunpack.c.l.b16 %v331
        %v606 = vunpack.c.h.b16 %v331
        %v607 = vunpack.c.l.b16 %v332
        %v608 = vunpack.c.h.b16 %v332
        %v609 = vunpack.c.l.b16 %v333
        %v610 = vunpack.c.h.b16 %v333
        %v611 = vunpack.c.l.b16 %v334
        %v612 = vunpack.c.h.b16 %v334
        %v613 = vunpack.c.l.b16 %v335
        %v614 = vunpack.c.h.b16 %v335
        %v615 = vunpack.c.l.b16 %v336
        %v616 = vunpack.c.h.b16 %v336
        %v617 = vunpack.c.l.b16 %v337
        %v618 = vunpack.c.h.b16 %v337
        %v619 = vunpack.c.l.b16 %v338
        %v620 = vunpack.c.h.b16 %v338
        %v621 = vunpack.c.l.b16 %v339
        %v622 = vunpack.c.h.b16 %v339
        %v623 = vunpack.c.l.b16 %v340
        %v624 = vunpack.c.h.b16 %v340
        %v625 = vunpack.c.l.b16 %v341
        %v626 = vunpack.c.h.b16 %v341
        %v627 = vunpack.c.l.b16 %v342
        %v628 = vunpack.c.h.b16 %v342
        %v629 = vunpack.c.l.b16 %v343
        %v630 = vunpack.c.h.b16 %v343
        %v631 = vunpack.c.l.b16 %v344
        %v632 = vunpack.c.h.b16 %v344
        %v633 = vunpack.c.l.b16 %v345
        %v634 = vunpack.c.h.b16 %v345
        %v635 = vunpack.c.l.b16 %v346
        %v636 = vunpack.c.h.b16 %v346
        %v637 = vunpack.c.l.b16 %v347
        %v638 = vunpack.c.h.b16 %v347
        %v639 = vunpack.c.l.b16 %v348
        %v640 = vunpack.c.h.b16 %v348
        %v641 = vunpack.c.l.b16 %v349
        %v642 = vunpack.c.h.b16 %v349
        %v643 = vunpack.c.l.b16 %v350
        %v644 = vunpack.c.h.b16 %v350
        %v645 = vunpack.c.l.b16 %v351
        %v646 = vunpack.c.h.b16 %v351
        %v647 = vunpack.c.l.b16 %v352
        %v648 = vunpack.c.h.b16 %v352
        %v649 = vunpack.c.l.b16 %v353
        %v650 = vunpack.c.h.b16 %v353
        %v651 = vunpack.c.l.b16 %v354
        %v652 = vunpack.c.h.b16 %v354
        %v653 = vunpack.c.l.b16 %v355
        %v654 = vunpack.c.h.b16 %v355
        %v655 = vunpack.c.l.b16 %v356
        %v656 = vunpack.c.h.b16 %v356
        %v657 = vunpack.c.l.b16 %v357
        %v658 = vunpack.c.h.b16 %v357
        %v659 = vunpack.c.l.b16 %v358
        %v660 = vunpack.c.h.b16 %v358
        %v661 = vunpack.c.l.b16 %v359
        %v662 = vunpack.c.h.b16 %v359
        %v663 = vunpack.c.l.b16 %v360
        %v664 = vunpack.c.h.b16 %v360
        %v665 = vunpack.c.l.b16 %v361
        %v666 = vunpack.c.h.b16 %v361
        %v667 = vunpack.c.l.b16 %v362
        %v668 = vunpack.c.h.b16 %v362
        %v669 = vunpack.c.l.b16 %v363
        %v670 = vunpack.c.h.b16 %v363
        %v671 = vunpack.c.l.b16 %v364
        %v672 = vunpack.c.h.b16 %v364
        %v673 = vunpack.c.l.b16 %v365
        %v674 = vunpack.c.h.b16 %v365
        %v675 = vunpack.c.l.b16 %v366
        %v676 = vunpack.c.h.b16 %v366
        %v677 = vunpack.c.l.b16 %v367
        %v678 = vunpack.c.h.b16 %v367
        %v679 = vunpack.c.l.b16 %v368
        %v680 = vunpack.c.h.b16 %v368
        %v681 = vunpack.c.l.b16 %v369
        %v682 = vunpack.c.h.b16 %v369
        %v683 = vunpack.c.l.b16 %v370
        %v684 = vunpack.c.h.b16 %v370
        %v685 = vunpack.c.l.b16 %v371
        %v686 = vunpack.c.h.b16 %v371
        %v687 = vunpack.c.l.b16 %v372
        %v688 = vunpack.c.h.b16 %v372
        %v689 = vunpack.c.l.b16 %v373
        %v690 = vunpack.c.h.b16 %v373
        %v691 = vunpack.c.l.b16 %v374
        %v692 = vunpack.c.h.b16 %v374
        %v693 = vunpack.c.l.b16 %v375
        %v694 = vunpack.c.h.b16 %v375
        %v695 = vunpack.c.l.b16 %v376
        %v696 = vunpack.c.h.b16 %v376
        %v697 = vunpack.c.l.b16 %v377
        %v698 = vunpack.c.h.b16 %v377
        %v699 = vunpack.c.l.b16 %v378
        %v700 = vunpack.c.h.b16 %v378
        %v701 = vunpack.c.l.b16 %v379
        %v702 = vunpack.c.h.b16 %v379
        %v703 = vunpack.c.l.b16 %v380
        %v704 = vunpack.c.h.b16 %v380
        %v705 = vunpack.c.l.b16 %v381
        %v706 = vunpack.c.h.b16 %v381
        %v707 = vunpack.c.l.b16 %v382
        %v708 = vunpack.c.h.b16 %v382
        %v709 = vunpack.c.l.b16 %v383
        %v710 = vunpack.c.h.b16 %v383
        %v711 = vunpack.c.l.b16 %v384
        %v712 = vunpack.c.h.b16 %v384
        %v713 = vunpack.c.l.b16 %v385
        %v714 = vunpack.c.h.b16 %v385
        %v715 = vunpack.c.l.b16 %v386
        %v716 = vunpack.c.h.b16 %v386
        %v717 = vunpack.c.l.b16 %v387
        %v718 = vunpack.c.h.b16 %v387
        %v719 = vunpack.c.l.b16 %v388
        %v720 = vunpack.c.h.b16 %v388
        %v721 = vunpack.c.l.b16 %v389
        %v722 = vunpack.c.h.b16 %v389
        %v723 = vunpack.c.l.b16 %v390
        %v724 = vunpack.c.h.b16 %v390
        %v725 = vunpack.c.l.b16 %v391
        %v726 = vunpack.c.h.b16 %v391
        %v727 = vunpack.c.l.b16 %v392
        %v728 = vunpack.c.h.b16 %v392
        %v729 = vunpack.c.l.b16 %v393
        %v730 = vunpack.c.h.b16 %v393
        %v731 = vpack.c.b16 %v545, %v539
        %v732 = vpack.c.b16 %v546, %v540
        %v733 = vpack.c.b16 %v547, %v541
        %v734 = vpack.c.b16 %v548, %v542
        %v735 = vpack.c.b16 %v549, %v543
        %v736 = vpack.c.b16 %v550, %v544
        %v737 = vpack.c.b16 %v557, %v551
        %v738 = vpack.c.b16 %v558, %v552
        %v739 = vpack.c.b16 %v559, %v553
        %v740 = vpack.c.b16 %v560, %v554
        %v741 = vpack.c.b16 %v561, %v555
        %v742 = vpack.c.b16 %v562, %v556
        %v743 = vpack.c.b16 %v569, %v563
        %v744 = vpack.c.b16 %v570, %v564
        %v745 = vpack.c.b16 %v571, %v565
        %v746 = vpack.c.b16 %v572, %v566
        %v747 = vpack.c.b16 %v573, %v567
        %v748 = vpack.c.b16 %v574, %v568
        %v749 = vpack.c.b16 %v581, %v575
        %v750 = vpack.c.b16 %v582, %v576
        %v751 = vpack.c.b16 %v583, %v577
        %v752 = vpack.c.b16 %v584, %v578
        %v753 = vpack.c.b16 %v585, %v579
        %v754 = vpack.c.b16 %v586, %v580
        %v755 = vpack.c.b16 %v593, %v587
        %v756 = vpack.c.b16 %v594, %v588
        %v757 = vpack.c.b16 %v595, %v589
        %v758 = vpack.c.b16 %v596, %v590
        %v759 = vpack.c.b16 %v597, %v591
        %v760 = vpack.c.b16 %v598, %v592
        %v761 = vpack.c.b16 %v605, %v599
        %v762 = vpack.c.b16 %v606, %v600
        %v763 = vpack.c.b16 %v607, %v601
        %v764 = vpack.c.b16 %v608, %v602
        %v765 = vpack.c.b16 %v609, %v603
        %v766 = vpack.c.b16 %v610, %v604
        %v767 = vpack.c.b16 %v617, %v611
        %v768 = vpack.c.b16 %v618, %v612
        %v769 = vpack.c.b16 %v619, %v613
        %v770 = vpack.c.b16 %v620, %v614
        %v771 = vpack.c.b16 %v621, %v615
        %v772 = vpack.c.b16 %v622, %v616
        %v773 = vpack.c.b16 %v629, %v623
        %v774 = vpack.c.b16 %v630, %v624
        %v775 = vpack.c.b16 %v631, %v625
        %v776 = vpack.c.b16 %v632, %v626
        %v777 = vpack.c.b16 %v633, %v627
        %v778 = vpack.c.b16 %v634, %v628
        %v779 = vpack.c.b16 %v641, %v635
        %v780 = vpack.c.b16 %v642, %v636
        %v781 = vpack.c.b16 %v643, %v637
        %v782 = vpack.c.b16 %v644, %v638
        %v783 = vpack.c.b16 %v645, %v639
        %v784 = vpack.c.b16 %v646, %v640
        %v785 = vpack.c.b16 %v653, %v647
        %v786 = vpack.c.b16 %v654, %v648
        %v787 = vpack.c.b16 %v655, %v649
        %v788 = vpack.c.b16 %v656, %v650
        %v789 = vpack.c.b16 %v657, %v651
        %v790 = vpack.c.b16 %v658, %v652
        %v791 = vpack.c.b16 %v665, %v659
        %v792 = vpack.c.b16 %v666, %v660
        %v793 = vpack.c.b16 %v667, %v661
        %v794 = vpack.c.b16 %v668, %v662
        %v795 = vpack.c.b16 %v669, %v663
        %v796 = vpack.c.b16 %v670, %v664
        %v797 = vpack.c.b16 %v677, %v671
        %v798 = vpack.c.b16 %v678, %v672
        %v799 = vpack.c.b16 %v679, %v673
        %v800 = vpack.c.b16 %v680, %v674
        %v801 = vpack.c.b16 %v681, %v675
        %v802 = vpack.c.b16 %v682, %v676
        %v803 = vpack.c.b16 %v689, %v683
        %v804 = vpack.c.b16 %v690, %v684
        %v805 = vpack.c.b16 %v691, %v685
        %v806 = vpack.c.b16 %v692, %v686
        %v807 = vpack.c.b16 %v693, %v687
        %v808 = vpack.c.b16 %v694, %v688
        %v809 = vpack.c.b16 %v701, %v695
        %v810 = vpack.c.b16 %v702, %v696
        %v811 = vpack.c.b16 %v703, %v697
        %v812 = vpack.c.b16 %v704, %v698
        %v813 = vpack.c.b16 %v705, %v699
        %v814 = vpack.c.b16 %v706, %v700
        %v815 = vpack.c.b16 %v713, %v707
        %v816 = vpack.c.b16 %v714, %v708
        %v817 = vpack.c.b16 %v715, %v709
        %v818 = vpack.c.b16 %v716, %v710
        %v819 = vpack.c.b16 %v717, %v711
        %v820 = vpack.c.b16 %v718, %v712
        %v821 = vpack.c.b16 %v725, %v719
        %v822 = vpack.c.b16 %v726, %v720
        %v823 = vpack.c.b16 %v727, %v721
        %v824 = vpack.c.b16 %v728, %v722
        %v825 = vpack.c.b16 %v729, %v723
        %v826 = vpack.c.b16 %v730, %v724
        %923 = vmatprep.subr.bf16.mxu0 %v732
        %924 = vmatpush1.bf16.msra.mxu0 %v731
        %925 = vmatprep.subr.bf16.mxu0 %v738
        %926 = vmatpush1.bf16.msra.mxu0 %v737
        %927 = vmatprep.subr.bf16.mxu0 %v744
        %928 = vmatpush1.bf16.msra.mxu0 %v743
        %929 = vmatprep.subr.bf16.mxu0 %v750
        %930 = vmatpush1.bf16.msra.mxu0 %v749
        %931 = vmatprep.subr.bf16.mxu0 %v756
        %932 = vmatpush1.bf16.msra.mxu0 %v755
        %933 = vmatprep.subr.bf16.mxu0 %v762
        %934 = vmatpush1.bf16.msra.mxu0 %v761
        %935 = vmatprep.subr.bf16.mxu0 %v768
        %936 = vmatpush1.bf16.msra.mxu0 %v767
        %937 = vmatprep.subr.bf16.mxu0 %v774
        %938 = vmatpush1.bf16.msra.mxu0 %v773
        %939 = vmatprep.subr.bf16.mxu0 %v780
        %940 = vmatpush1.bf16.msra.mxu0 %v779
        %941 = vmatprep.subr.bf16.mxu0 %v786
        %942 = vmatpush1.bf16.msra.mxu0 %v785
        %943 = vmatprep.subr.bf16.mxu0 %v792
        %944 = vmatpush1.bf16.msra.mxu0 %v791
        %945 = vmatprep.subr.bf16.mxu0 %v798
        %946 = vmatpush1.bf16.msra.mxu0 %v797
        %947 = vmatprep.subr.bf16.mxu0 %v804
        %948 = vmatpush1.bf16.msra.mxu0 %v803
        %949 = vmatprep.subr.bf16.mxu0 %v810
        %950 = vmatpush1.bf16.msra.mxu0 %v809
        %951 = vmatprep.subr.bf16.mxu0 %v816
        %952 = vmatpush1.bf16.msra.mxu0 %v815
        %953 = vmatprep.subr.bf16.mxu0 %v822
        %954 = vmatpush1.bf16.msra.mxu0 %v821
        %955 = vmatprep.mubr.bf16.mxu0 %v436
        %956 = vmatmul.mubr.bf16.gmra.mrb[0].mxu0 %v435
        %v957 = vpop.f32.mrb[0].mxu0
        %v958 = vadd.f32 %v399, %v957
        %v959 = vpop.f32.mrb[0].mxu0
        %v960 = vadd.f32 %v403, %v959
        %v961 = vpop.f32.mrb[0].mxu0
        %v962 = vadd.f32 %v399, %v961
        %v963 = vpop.f32.mrb[0].mxu0
        %v964 = vadd.f32 %v403, %v963
        %965 = vmatprep.mubr.bf16.mxu0 %v438
        %966 = vmatmul.mubr.bf16.gmra.mrb[0].mxu0 %v437
        %v967 = vpop.f32.mrb[0].mxu0
        %v968 = vadd.f32 %v399, %v967
        %v969 = vpop.f32.mrb[0].mxu0
        %v970 = vadd.f32 %v403, %v969
        %v971 = vpop.f32.mrb[0].mxu0
        %v972 = vpop.f32.mrb[0].mxu0
        %973 = vdwg.mxu0
        %974 = vmatprep.subr.bf16.mxu0 %v734
        %975 = vmatpush1.bf16.msra.mxu0 %v733
        %976 = vmatprep.subr.bf16.mxu0 %v740
        %977 = vmatpush1.bf16.msra.mxu0 %v739
        %978 = vmatprep.subr.bf16.mxu0 %v746
        %979 = vmatpush1.bf16.msra.mxu0 %v745
        %980 = vmatprep.subr.bf16.mxu0 %v752
        %981 = vmatpush1.bf16.msra.mxu0 %v751
        %982 = vmatprep.subr.bf16.mxu0 %v758
        %983 = vmatpush1.bf16.msra.mxu0 %v757
        %984 = vmatprep.subr.bf16.mxu0 %v764
        %985 = vmatpush1.bf16.msra.mxu0 %v763
        %986 = vmatprep.subr.bf16.mxu0 %v770
        %987 = vmatpush1.bf16.msra.mxu0 %v769
        %988 = vmatprep.subr.bf16.mxu0 %v776
        %989 = vmatpush1.bf16.msra.mxu0 %v775
        %990 = vmatprep.subr.bf16.mxu0 %v782
        %991 = vmatpush1.bf16.msra.mxu0 %v781
        %992 = vmatprep.subr.bf16.mxu0 %v788
        %993 = vmatpush1.bf16.msra.mxu0 %v787
        %994 = vmatprep.subr.bf16.mxu0 %v794
        %995 = vmatpush1.bf16.msra.mxu0 %v793
        %996 = vmatprep.subr.bf16.mxu0 %v800
        %997 = vmatpush1.bf16.msra.mxu0 %v799
        %998 = vmatprep.subr.bf16.mxu0 %v806
        %999 = vmatpush1.bf16.msra.mxu0 %v805
        %1000 = vmatprep.subr.bf16.mxu0 %v812
        %1001 = vmatpush1.bf16.msra.mxu0 %v811
        %1002 = vmatprep.subr.bf16.mxu0 %v818
        %1003 = vmatpush1.bf16.msra.mxu0 %v817
        %1004 = vmatprep.subr.bf16.mxu0 %v824
        %1005 = vmatpush1.bf16.msra.mxu0 %v823
        %1006 = vmatprep.mubr.bf16.mxu0 %v436
        %1007 = vmatmul.mubr.bf16.gmra.mrb[0].mxu0 %v435
        %v1008 = vpop.f32.mrb[0].mxu0
        %v1009 = vadd.f32 %v407, %v1008
        %v1010 = vpop.f32.mrb[0].mxu0
        %v1011 = vadd.f32 %v411, %v1010
        %v1012 = vpop.f32.mrb[0].mxu0
        %v1013 = vadd.f32 %v407, %v1012
        %v1014 = vpop.f32.mrb[0].mxu0
        %v1015 = vadd.f32 %v411, %v1014
        %1016 = vmatprep.mubr.bf16.mxu0 %v438
        %1017 = vmatmul.mubr.bf16.gmra.mrb[0].mxu0 %v437
        %v1018 = vpop.f32.mrb[0].mxu0
        %v1019 = vadd.f32 %v407, %v1018
        %v1020 = vpop.f32.mrb[0].mxu0
        %v1021 = vadd.f32 %v411, %v1020
        %v1022 = vpop.f32.mrb[0].mxu0
        %v1023 = vpop.f32.mrb[0].mxu0
        %1024 = vdwg.mxu0
        %1025 = vmatprep.subr.bf16.mxu0 %v736
        %1026 = vmatpush1.bf16.msra.mxu0 %v735
        %1027 = vmatprep.subr.bf16.mxu0 %v742
        %1028 = vmatpush1.bf16.msra.mxu0 %v741
        %1029 = vmatprep.subr.bf16.mxu0 %v748
        %1030 = vmatpush1.bf16.msra.mxu0 %v747
        %1031 = vmatprep.subr.bf16.mxu0 %v754
        %1032 = vmatpush1.bf16.msra.mxu0 %v753
        %1033 = vmatprep.subr.bf16.mxu0 %v760
        %1034 = vmatpush1.bf16.msra.mxu0 %v759
        %1035 = vmatprep.subr.bf16.mxu0 %v766
        %1036 = vmatpush1.bf16.msra.mxu0 %v765
        %1037 = vmatprep.subr.bf16.mxu0 %v772
        %1038 = vmatpush1.bf16.msra.mxu0 %v771
        %1039 = vmatprep.subr.bf16.mxu0 %v778
        %1040 = vmatpush1.bf16.msra.mxu0 %v777
        %1041 = vmatprep.subr.bf16.mxu0 %v784
        %1042 = vmatpush1.bf16.msra.mxu0 %v783
        %1043 = vmatprep.subr.bf16.mxu0 %v790
        %1044 = vmatpush1.bf16.msra.mxu0 %v789
        %1045 = vmatprep.subr.bf16.mxu0 %v796
        %1046 = vmatpush1.bf16.msra.mxu0 %v795
        %1047 = vmatprep.subr.bf16.mxu0 %v802
        %1048 = vmatpush1.bf16.msra.mxu0 %v801
        %1049 = vmatprep.subr.bf16.mxu0 %v808
        %1050 = vmatpush1.bf16.msra.mxu0 %v807
        %1051 = vmatprep.subr.bf16.mxu0 %v814
        %1052 = vmatpush1.bf16.msra.mxu0 %v813
        %1053 = vmatprep.subr.bf16.mxu0 %v820
        %1054 = vmatpush1.bf16.msra.mxu0 %v819
        %1055 = vmatprep.subr.bf16.mxu0 %v826
        %1056 = vmatpush1.bf16.msra.mxu0 %v825
        %1057 = vmatprep.mubr.bf16.mxu0 %v436
        %1058 = vmatmul.mubr.bf16.gmra.mrb[0].mxu0 %v435
        %v1059 = vpop.f32.mrb[0].mxu0
        %v1060 = vadd.f32 %v415, %v1059
        %v1061 = vpop.f32.mrb[0].mxu0
        %v1062 = vadd.f32 %v419, %v1061
        %v1063 = vpop.f32.mrb[0].mxu0
        %v1064 = vadd.f32 %v415, %v1063
        %v1065 = vpop.f32.mrb[0].mxu0
        %v1066 = vadd.f32 %v419, %v1065
        %1067 = vmatprep.mubr.bf16.mxu0 %v438
        %1068 = vmatmul.mubr.bf16.gmra.mrb[0].mxu0 %v437
        %v1069 = vpop.f32.mrb[0].mxu0
        %v1070 = vadd.f32 %v415, %v1069
        %v1071 = vpop.f32.mrb[0].mxu0
        %v1072 = vadd.f32 %v419, %v1071
        %v1073 = vpop.f32.mrb[0].mxu0
        %v1074 = vpop.f32.mrb[0].mxu0
        %1075 = vdwg.mxu0
        %v1076 = vlaneseq
        %v1077 = vand.u32 %v1076, 127
        %vm1078 = vcmp.lt.s32.totalorder %v1077, 17
        %v1079 = vpack.c.bf16 %v962, %v958
        %v1080 = vpack.c.bf16 %v968, %v968
        %v1081 = vpack.c.bf16 %v1013, %v1009
        %v1082 = vpack.c.bf16 %v1019, %v1019
        %v1083 = vpack.c.bf16 %v1064, %v1060
        %v1084 = vpack.c.bf16 %v1070, %v1070
        %1085 = vmatprep.subr.bf16.mxu0 0
        %1086 = vmatpush1.bf16.xpose.msra.mxu0 %v1081
        %1087 = vmatprep.subr.bf16.mxu0 0
        %1088 = vmatpush1.bf16.xpose.msra.mxu0 %v1082
        %1089 = vmatprep.subr.bf16.mxu0 0
        %1090 = vmatpush1.bf16.xpose.msra.mxu0 0
        %1091 = vmatprep.subr.bf16.mxu0 0
        %1092 = vmatpush1.bf16.xpose.msra.mxu0 0
        %1093 = vmatprep.subr.bf16.mxu0 0
        %1094 = vmatpush1.bf16.xpose.msra.mxu0 0
        %1095 = vmatprep.subr.bf16.mxu0 0
        %1096 = vmatpush1.bf16.xpose.msra.mxu0 0
        %1097 = vmatprep.subr.bf16.mxu0 0
        %1098 = vmatpush1.bf16.xpose.msra.mxu0 0
        %1099 = vmatprep.subr.bf16.mxu0 0
        %1100 = vmatpush1.bf16.xpose.msra.mxu0 0
        %1101 = vmatprep.subr.bf16.mxu0 0
        %1102 = vmatpush1.bf16.xpose.msra.mxu0 0
        %1103 = vmatprep.subr.bf16.mxu0 0
        %1104 = vmatpush1.bf16.xpose.msra.mxu0 0
        %1105 = vmatprep.subr.bf16.mxu0 0
        %1106 = vmatpush1.bf16.xpose.msra.mxu0 0
        %1107 = vmatprep.subr.bf16.mxu0 0
        %1108 = vmatpush1.bf16.xpose.msra.mxu0 0
        %1109 = vmatprep.subr.bf16.mxu0 0
        %1110 = vmatpush1.bf16.xpose.msra.mxu0 0
        %1111 = vmatprep.subr.bf16.mxu0 0
        %1112 = vmatpush1.bf16.xpose.msra.mxu0 0
        %1113 = vmatprep.subr.bf16.mxu0 0
        %1114 = vmatpush1.bf16.xpose.msra.mxu0 0
        %1115 = vmatprep.subr.bf16.mxu0 0
        %1116 = vmatpush1.bf16.xpose.msra.mxu0 0
        %1117 = vmatprep.mubr.bf16.mxu0 0
        %1118 = vmatmul.mubr.bf16.gmra.mrb[0].mxu0 %v1079
        %v1119 = vpop.f32.mrb[0].mxu0
        %v1120 = vadd.f32 0.0, %v1119
        %v1121 = vpop.f32.mrb[0].mxu0
        %v1122 = vpop.f32.mrb[0].mxu0
        %v1123 = vadd.f32 0.0, %v1122
        %v1124 = vpop.f32.mrb[0].mxu0
        %1125 = vmatprep.mubr.bf16.mxu0 0
        %1126 = vmatmul.mubr.bf16.gmra.mrb[0].mxu0 %v1080
        %v1127 = vpop.f32.mrb[0].mxu0
        %v1128 = vadd.f32 0.0, %v1127
        %v1129 = vpop.f32.mrb[0].mxu0
        %v1130 = vpop.f32.mrb[0].mxu0
        %v1131 = vpop.f32.mrb[0].mxu0
        %1132 = vdwg.mxu0
        %v1133 = vmul.f32 %v1120, 0.088388346
        %v1134 = vmul.f32 %v1123, 0.088388346
        %v1135 = vmul.f32 %v1128, 0.088388346
        %v1136 = vsel %vm1078, %v1133, -1e+30
        %v1137 = vsel %vm1078, %v1134, -1e+30
        %v1138 = vsel %vm1078, %v1135, -1e+30
        %vm1139 = vcmask 195584
        %v1140 = vsel %vm1139, %v1136, -inf
        %1141 = vmax.xlane.f32.xlu0 %v1140
        %v1142 = vpop.xlane.xlu0 %1141
        %v1143 = vsel %vm1139, %v1137, -inf
        %1144 = vmax.xlane.f32.xlu0 %v1143
        %v1145 = vpop.xlane.xlu0 %1144
        %v1146 = vsel %vm1139, %v1138, -inf
        %1147 = vmax.xlane.f32.xlu0 %v1146
        %v1148 = vpop.xlane.xlu0 %1147
        %v1149 = vsub.f32 %v1136, %v1142
        %v1150 = vsub.f32 %v1137, %v1145
        %v1151 = vsub.f32 %v1138, %v1148
        %v1152 = vmul.f32 %v1149, 1.442695
        %v1153 = vpow.pop %v1152
        %v1154 = vmul.f32 %v1150, 1.442695
        %v1155 = vpow.pop %v1154
        %v1156 = vmul.f32 %v1151, 1.442695
        %v1157 = vpow.pop %v1156
        %v1158 = vsel %vm1139, %v1153, 0.0
        %1159 = vadd.xlane.f32.xlu0 %v1158
        %v1160 = vpop.xlane.xlu0 %1159
        %v1161 = vsel %vm1139, %v1155, 0.0
        %1162 = vadd.xlane.f32.xlu0 %v1161
        %v1163 = vpop.xlane.xlu0 %1162
        %v1164 = vsel %vm1139, %v1157, 0.0
        %1165 = vadd.xlane.f32.xlu0 %v1164
        %v1166 = vpop.xlane.xlu0 %1165
        %v1167 = vrcp.pop %v1160
        %v1168 = vrcp.pop %v1163
        %v1169 = vrcp.pop %v1166
        %v1170 = vmul.f32 %v1153, %v1167
        %v1171 = vmul.f32 %v1155, %v1168
        %v1172 = vmul.f32 %v1157, %v1169
        %v1173 = vpack.c.bf16 %v1171, %v1170
        %v1174 = vpack.c.bf16 %v1172, %v1172
        %v1176 = vsel %vm1139, %v1173, 0
        %v1179 = vsel %vm1139, %v1174, 0
        %vm1181 = vcmask 1043456
        %v1183 = vsel %vm1181, %v1084, 0
        %1185 = vmatprep.subr.bf16.mxu0 0
        %1186 = vmatpush1.bf16.msra.mxu0 %v1083
        %1187 = vmatprep.subr.bf16.mxu0 0
        %1188 = vmatpush1.bf16.msra.mxu0 %v1183
        %1189 = vmatprep.subr.bf16.mxu0 0
        %1190 = vmatpush1.bf16.msra.mxu0 0
        %1191 = vmatprep.subr.bf16.mxu0 0
        %1192 = vmatpush1.bf16.msra.mxu0 0
        %1193 = vmatprep.subr.bf16.mxu0 0
        %1194 = vmatpush1.bf16.msra.mxu0 0
        %1195 = vmatprep.subr.bf16.mxu0 0
        %1196 = vmatpush1.bf16.msra.mxu0 0
        %1197 = vmatprep.subr.bf16.mxu0 0
        %1198 = vmatpush1.bf16.msra.mxu0 0
        %1199 = vmatprep.subr.bf16.mxu0 0
        %1200 = vmatpush1.bf16.msra.mxu0 0
        %1201 = vmatprep.subr.bf16.mxu0 0
        %1202 = vmatpush1.bf16.msra.mxu0 0
        %1203 = vmatprep.subr.bf16.mxu0 0
        %1204 = vmatpush1.bf16.msra.mxu0 0
        %1205 = vmatprep.subr.bf16.mxu0 0
        %1206 = vmatpush1.bf16.msra.mxu0 0
        %1207 = vmatprep.subr.bf16.mxu0 0
        %1208 = vmatpush1.bf16.msra.mxu0 0
        %1209 = vmatprep.subr.bf16.mxu0 0
        %1210 = vmatpush1.bf16.msra.mxu0 0
        %1211 = vmatprep.subr.bf16.mxu0 0
        %1212 = vmatpush1.bf16.msra.mxu0 0
        %1213 = vmatprep.subr.bf16.mxu0 0
        %1214 = vmatpush1.bf16.msra.mxu0 0
        %1215 = vmatprep.subr.bf16.mxu0 0
        %1216 = vmatpush1.bf16.msra.mxu0 0
        %1217 = vmatprep.mubr.bf16.mxu0 0
        %1218 = vmatmul.mubr.bf16.gmra.mrb[0].mxu0 %v1176
        %v1219 = vpop.f32.mrb[0].mxu0
        %v1220 = vadd.f32 0.0, %v1219
        %v1221 = vpop.f32.mrb[0].mxu0
        %v1222 = vpop.f32.mrb[0].mxu0
        %v1223 = vadd.f32 0.0, %v1222
        %v1224 = vpop.f32.mrb[0].mxu0
        %1225 = vmatprep.mubr.bf16.mxu0 0
        %1226 = vmatmul.mubr.bf16.gmra.mrb[0].mxu0 %v1179
        %v1227 = vpop.f32.mrb[0].mxu0
        %v1228 = vadd.f32 0.0, %v1227
        %v1229 = vpop.f32.mrb[0].mxu0
        %v1230 = vpop.f32.mrb[0].mxu0
        %v1231 = vpop.f32.mrb[0].mxu0
        %1232 = vdwg.mxu0
        %v1233 = vpack.c.bf16 %v964, %v960
        %v1234 = vpack.c.bf16 %v970, %v970
        %v1235 = vpack.c.bf16 %v1015, %v1011
        %v1236 = vpack.c.bf16 %v1021, %v1021
        %v1237 = vpack.c.bf16 %v1066, %v1062
        %v1238 = vpack.c.bf16 %v1072, %v1072
        %1239 = vmatprep.subr.bf16.mxu0 0
        %1240 = vmatpush1.bf16.xpose.msra.mxu0 %v1235
        %1241 = vmatprep.subr.bf16.mxu0 0
        %1242 = vmatpush1.bf16.xpose.msra.mxu0 %v1236
        %1243 = vmatprep.subr.bf16.mxu0 0
        %1244 = vmatpush1.bf16.xpose.msra.mxu0 0
        %1245 = vmatprep.subr.bf16.mxu0 0
        %1246 = vmatpush1.bf16.xpose.msra.mxu0 0
        %1247 = vmatprep.subr.bf16.mxu0 0
        %1248 = vmatpush1.bf16.xpose.msra.mxu0 0
        %1249 = vmatprep.subr.bf16.mxu0 0
        %1250 = vmatpush1.bf16.xpose.msra.mxu0 0
        %1251 = vmatprep.subr.bf16.mxu0 0
        %1252 = vmatpush1.bf16.xpose.msra.mxu0 0
        %1253 = vmatprep.subr.bf16.mxu0 0
        %1254 = vmatpush1.bf16.xpose.msra.mxu0 0
        %1255 = vmatprep.subr.bf16.mxu0 0
        %1256 = vmatpush1.bf16.xpose.msra.mxu0 0
        %1257 = vmatprep.subr.bf16.mxu0 0
        %1258 = vmatpush1.bf16.xpose.msra.mxu0 0
        %1259 = vmatprep.subr.bf16.mxu0 0
        %1260 = vmatpush1.bf16.xpose.msra.mxu0 0
        %1261 = vmatprep.subr.bf16.mxu0 0
        %1262 = vmatpush1.bf16.xpose.msra.mxu0 0
        %1263 = vmatprep.subr.bf16.mxu0 0
        %1264 = vmatpush1.bf16.xpose.msra.mxu0 0
        %1265 = vmatprep.subr.bf16.mxu0 0
        %1266 = vmatpush1.bf16.xpose.msra.mxu0 0
        %1267 = vmatprep.subr.bf16.mxu0 0
        %1268 = vmatpush1.bf16.xpose.msra.mxu0 0
        %1269 = vmatprep.subr.bf16.mxu0 0
        %1270 = vmatpush1.bf16.xpose.msra.mxu0 0
        %1271 = vmatprep.mubr.bf16.mxu0 0
        %1272 = vmatmul.mubr.bf16.gmra.mrb[0].mxu0 %v1233
        %v1273 = vpop.f32.mrb[0].mxu0
        %v1274 = vadd.f32 0.0, %v1273
        %v1275 = vpop.f32.mrb[0].mxu0
        %v1276 = vpop.f32.mrb[0].mxu0
        %v1277 = vadd.f32 0.0, %v1276
        %v1278 = vpop.f32.mrb[0].mxu0
        %1279 = vmatprep.mubr.bf16.mxu0 0
        %1280 = vmatmul.mubr.bf16.gmra.mrb[0].mxu0 %v1234
        %v1281 = vpop.f32.mrb[0].mxu0
        %v1282 = vadd.f32 0.0, %v1281
        %v1283 = vpop.f32.mrb[0].mxu0
        %v1284 = vpop.f32.mrb[0].mxu0
        %v1285 = vpop.f32.mrb[0].mxu0
        %1286 = vdwg.mxu0
        %v1287 = vmul.f32 %v1274, 0.088388346
        %v1288 = vmul.f32 %v1277, 0.088388346
        %v1289 = vmul.f32 %v1282, 0.088388346
        %v1290 = vsel %vm1078, %v1287, -1e+30
        %v1291 = vsel %vm1078, %v1288, -1e+30
        %v1292 = vsel %vm1078, %v1289, -1e+30
        %v1293 = vsel %vm1139, %v1290, -inf
        %1294 = vmax.xlane.f32.xlu0 %v1293
        %v1295 = vpop.xlane.xlu0 %1294
        %v1296 = vsel %vm1139, %v1291, -inf
        %1297 = vmax.xlane.f32.xlu0 %v1296
        %v1298 = vpop.xlane.xlu0 %1297
        %v1299 = vsel %vm1139, %v1292, -inf
        %1300 = vmax.xlane.f32.xlu0 %v1299
        %v1301 = vpop.xlane.xlu0 %1300
        %v1302 = vsub.f32 %v1290, %v1295
        %v1303 = vsub.f32 %v1291, %v1298
        %v1304 = vsub.f32 %v1292, %v1301
        %v1305 = vmul.f32 %v1302, 1.442695
        %v1306 = vpow.pop %v1305
        %v1307 = vmul.f32 %v1303, 1.442695
        %v1308 = vpow.pop %v1307
        %v1309 = vmul.f32 %v1304, 1.442695
        %v1310 = vpow.pop %v1309
        %v1311 = vsel %vm1139, %v1306, 0.0
        %1312 = vadd.xlane.f32.xlu0 %v1311
        %v1313 = vpop.xlane.xlu0 %1312
        %v1314 = vsel %vm1139, %v1308, 0.0
        %1315 = vadd.xlane.f32.xlu0 %v1314
        %v1316 = vpop.xlane.xlu0 %1315
        %v1317 = vsel %vm1139, %v1310, 0.0
        %1318 = vadd.xlane.f32.xlu0 %v1317
        %v1319 = vpop.xlane.xlu0 %1318
        %v1320 = vrcp.pop %v1313
        %v1321 = vrcp.pop %v1316
        %v1322 = vrcp.pop %v1319
        %v1323 = vmul.f32 %v1306, %v1320
        %v1324 = vmul.f32 %v1308, %v1321
        %v1325 = vmul.f32 %v1310, %v1322
        %v1326 = vpack.c.bf16 %v1324, %v1323
        %v1327 = vpack.c.bf16 %v1325, %v1325
        %v1329 = vsel %vm1139, %v1326, 0
        %v1332 = vsel %vm1139, %v1327, 0
        %v1335 = vsel %vm1181, %v1238, 0
        %1337 = vmatprep.subr.bf16.mxu0 0
        %1338 = vmatpush1.bf16.msra.mxu0 %v1237
        %1339 = vmatprep.subr.bf16.mxu0 0
        %1340 = vmatpush1.bf16.msra.mxu0 %v1335
        %1341 = vmatprep.subr.bf16.mxu0 0
        %1342 = vmatpush1.bf16.msra.mxu0 0
        %1343 = vmatprep.subr.bf16.mxu0 0
        %1344 = vmatpush1.bf16.msra.mxu0 0
        %1345 = vmatprep.subr.bf16.mxu0 0
        %1346 = vmatpush1.bf16.msra.mxu0 0
        %1347 = vmatprep.subr.bf16.mxu0 0
        %1348 = vmatpush1.bf16.msra.mxu0 0
        %1349 = vmatprep.subr.bf16.mxu0 0
        %1350 = vmatpush1.bf16.msra.mxu0 0
        %1351 = vmatprep.subr.bf16.mxu0 0
        %1352 = vmatpush1.bf16.msra.mxu0 0
        %1353 = vmatprep.subr.bf16.mxu0 0
        %1354 = vmatpush1.bf16.msra.mxu0 0
        %1355 = vmatprep.subr.bf16.mxu0 0
        %1356 = vmatpush1.bf16.msra.mxu0 0
        %1357 = vmatprep.subr.bf16.mxu0 0
        %1358 = vmatpush1.bf16.msra.mxu0 0
        %1359 = vmatprep.subr.bf16.mxu0 0
        %1360 = vmatpush1.bf16.msra.mxu0 0
        %1361 = vmatprep.subr.bf16.mxu0 0
        %1362 = vmatpush1.bf16.msra.mxu0 0
        %1363 = vmatprep.subr.bf16.mxu0 0
        %1364 = vmatpush1.bf16.msra.mxu0 0
        %1365 = vmatprep.subr.bf16.mxu0 0
        %1366 = vmatpush1.bf16.msra.mxu0 0
        %1367 = vmatprep.subr.bf16.mxu0 0
        %1368 = vmatpush1.bf16.msra.mxu0 0
        %1369 = vmatprep.mubr.bf16.mxu0 0
        %1370 = vmatmul.mubr.bf16.gmra.mrb[0].mxu0 %v1329
        %v1371 = vpop.f32.mrb[0].mxu0
        %v1372 = vadd.f32 0.0, %v1371
        %v1373 = vpop.f32.mrb[0].mxu0
        %v1374 = vpop.f32.mrb[0].mxu0
        %v1375 = vadd.f32 0.0, %v1374
        %v1376 = vpop.f32.mrb[0].mxu0
        %1377 = vmatprep.mubr.bf16.mxu0 0
        %1378 = vmatmul.mubr.bf16.gmra.mrb[0].mxu0 %v1332
        %v1379 = vpop.f32.mrb[0].mxu0
        %v1380 = vadd.f32 0.0, %v1379
        %v1381 = vpop.f32.mrb[0].mxu0
        %v1382 = vpop.f32.mrb[0].mxu0
        %v1383 = vpop.f32.mrb[0].mxu0
        %1384 = vdwg.mxu0
        %v1385 = vpack.c.bf16 %v1223, %v1220
        %v1386 = vpack.c.bf16 %v1375, %v1372
        %v1387 = vpack.c.bf16 %v1228, %v1228
        %v1388 = vpack.c.bf16 %v1380, %v1380
        %v1389 = vld [vmem:[%s3] sm:$0xff]
        %v1390 = vld [vmem:[%s3 + $0x8] sm:$0xff]
        %v1391 = vld [vmem:[%s3 + $0x10] sm:$0xff]
        %v1392 = vld [vmem:[%s3 + $0x18] sm:$0xff]
        %v1393 = vld [vmem:[%s3 + $0x20] sm:$0xff]
        %v1394 = vld [vmem:[%s3 + $0x28] sm:$0xff]
        %v1395 = vld [vmem:[%s3 + $0x30] sm:$0xff]
        %v1396 = vld [vmem:[%s3 + $0x38] sm:$0xff]
        %v1397 = vld [vmem:[%s3 + $0x40] sm:$0xff]
        %v1398 = vld [vmem:[%s3 + $0x48] sm:$0xff]
        %v1399 = vld [vmem:[%s3 + $0x50] sm:$0xff]
        %v1400 = vld [vmem:[%s3 + $0x58] sm:$0xff]
        %v1401 = vld [vmem:[%s3 + $0x60] sm:$0xff]
        %v1402 = vld [vmem:[%s3 + $0x68] sm:$0xff]
        %v1403 = vld [vmem:[%s3 + $0x70] sm:$0xff]
        %v1404 = vld [vmem:[%s3 + $0x78] sm:$0xff]
        %v1405 = vld [vmem:[%s3 + $0x80] sm:$0xff]
        %v1406 = vld [vmem:[%s3 + $0x88] sm:$0xff]
        %v1407 = vld [vmem:[%s3 + $0x90] sm:$0xff]
        %v1408 = vld [vmem:[%s3 + $0x98] sm:$0xff]
        %v1409 = vld [vmem:[%s3 + $0xa0] sm:$0xff]
        %v1410 = vld [vmem:[%s3 + $0xa8] sm:$0xff]
        %v1411 = vld [vmem:[%s3 + $0xb0] sm:$0xff]
        %v1412 = vld [vmem:[%s3 + $0xb8] sm:$0xff]
        %v1413 = vld [vmem:[%s3 + $0xc0] sm:$0xff]
        %v1414 = vld [vmem:[%s3 + $0xc8] sm:$0xff]
        %v1415 = vld [vmem:[%s3 + $0xd0] sm:$0xff]
        %v1416 = vld [vmem:[%s3 + $0xd8] sm:$0xff]
        %v1417 = vld [vmem:[%s3 + $0xe0] sm:$0xff]
        %v1418 = vld [vmem:[%s3 + $0xe8] sm:$0xff]
        %v1419 = vld [vmem:[%s3 + $0xf0] sm:$0xff]
        %v1420 = vld [vmem:[%s3 + $0xf8] sm:$0xff]
        %v1453 = vunpack.c.l.b16 %v1389
        %v1454 = vunpack.c.h.b16 %v1389
        %v1455 = vunpack.c.l.b16 %v1390
        %v1456 = vunpack.c.h.b16 %v1390
        %v1457 = vunpack.c.l.b16 %v1391
        %v1458 = vunpack.c.h.b16 %v1391
        %v1459 = vunpack.c.l.b16 %v1392
        %v1460 = vunpack.c.h.b16 %v1392
        %v1461 = vunpack.c.l.b16 %v1393
        %v1462 = vunpack.c.h.b16 %v1393
        %v1463 = vunpack.c.l.b16 %v1394
        %v1464 = vunpack.c.h.b16 %v1394
        %v1465 = vunpack.c.l.b16 %v1395
        %v1466 = vunpack.c.h.b16 %v1395
        %v1467 = vunpack.c.l.b16 %v1396
        %v1468 = vunpack.c.h.b16 %v1396
        %v1469 = vunpack.c.l.b16 %v1397
        %v1470 = vunpack.c.h.b16 %v1397
        %v1471 = vunpack.c.l.b16 %v1398
        %v1472 = vunpack.c.h.b16 %v1398
        %v1473 = vunpack.c.l.b16 %v1399
        %v1474 = vunpack.c.h.b16 %v1399
        %v1475 = vunpack.c.l.b16 %v1400
        %v1476 = vunpack.c.h.b16 %v1400
        %v1477 = vunpack.c.l.b16 %v1401
        %v1478 = vunpack.c.h.b16 %v1401
        %v1479 = vunpack.c.l.b16 %v1402
        %v1480 = vunpack.c.h.b16 %v1402
        %v1481 = vunpack.c.l.b16 %v1403
        %v1482 = vunpack.c.h.b16 %v1403
        %v1483 = vunpack.c.l.b16 %v1404
        %v1484 = vunpack.c.h.b16 %v1404
        %v1485 = vunpack.c.l.b16 %v1405
        %v1486 = vunpack.c.h.b16 %v1405
        %v1487 = vunpack.c.l.b16 %v1406
        %v1488 = vunpack.c.h.b16 %v1406
        %v1489 = vunpack.c.l.b16 %v1407
        %v1490 = vunpack.c.h.b16 %v1407
        %v1491 = vunpack.c.l.b16 %v1408
        %v1492 = vunpack.c.h.b16 %v1408
        %v1493 = vunpack.c.l.b16 %v1409
        %v1494 = vunpack.c.h.b16 %v1409
        %v1495 = vunpack.c.l.b16 %v1410
        %v1496 = vunpack.c.h.b16 %v1410
        %v1497 = vunpack.c.l.b16 %v1411
        %v1498 = vunpack.c.h.b16 %v1411
        %v1499 = vunpack.c.l.b16 %v1412
        %v1500 = vunpack.c.h.b16 %v1412
        %v1501 = vunpack.c.l.b16 %v1413
        %v1502 = vunpack.c.h.b16 %v1413
        %v1503 = vunpack.c.l.b16 %v1414
        %v1504 = vunpack.c.h.b16 %v1414
        %v1505 = vunpack.c.l.b16 %v1415
        %v1506 = vunpack.c.h.b16 %v1415
        %v1507 = vunpack.c.l.b16 %v1416
        %v1508 = vunpack.c.h.b16 %v1416
        %v1509 = vunpack.c.l.b16 %v1417
        %v1510 = vunpack.c.h.b16 %v1417
        %v1511 = vunpack.c.l.b16 %v1418
        %v1512 = vunpack.c.h.b16 %v1418
        %v1513 = vunpack.c.l.b16 %v1419
        %v1514 = vunpack.c.h.b16 %v1419
        %v1515 = vunpack.c.l.b16 %v1420
        %v1516 = vunpack.c.h.b16 %v1420
        %v1517 = vpack.c.b16 %v1455, %v1453
        %v1518 = vpack.c.b16 %v1456, %v1454
        %v1519 = vpack.c.b16 %v1459, %v1457
        %v1520 = vpack.c.b16 %v1460, %v1458
        %v1521 = vpack.c.b16 %v1463, %v1461
        %v1522 = vpack.c.b16 %v1464, %v1462
        %v1523 = vpack.c.b16 %v1467, %v1465
        %v1524 = vpack.c.b16 %v1468, %v1466
        %v1525 = vpack.c.b16 %v1471, %v1469
        %v1526 = vpack.c.b16 %v1472, %v1470
        %v1527 = vpack.c.b16 %v1475, %v1473
        %v1528 = vpack.c.b16 %v1476, %v1474
        %v1529 = vpack.c.b16 %v1479, %v1477
        %v1530 = vpack.c.b16 %v1480, %v1478
        %v1531 = vpack.c.b16 %v1483, %v1481
        %v1532 = vpack.c.b16 %v1484, %v1482
        %v1533 = vpack.c.b16 %v1487, %v1485
        %v1534 = vpack.c.b16 %v1488, %v1486
        %v1535 = vpack.c.b16 %v1491, %v1489
        %v1536 = vpack.c.b16 %v1492, %v1490
        %v1537 = vpack.c.b16 %v1495, %v1493
        %v1538 = vpack.c.b16 %v1496, %v1494
        %v1539 = vpack.c.b16 %v1499, %v1497
        %v1540 = vpack.c.b16 %v1500, %v1498
        %v1541 = vpack.c.b16 %v1503, %v1501
        %v1542 = vpack.c.b16 %v1504, %v1502
        %v1543 = vpack.c.b16 %v1507, %v1505
        %v1544 = vpack.c.b16 %v1508, %v1506
        %v1545 = vpack.c.b16 %v1511, %v1509
        %v1546 = vpack.c.b16 %v1512, %v1510
        %v1547 = vpack.c.b16 %v1515, %v1513
        %v1548 = vpack.c.b16 %v1516, %v1514
        %1581 = vmatprep.subr.bf16.mxu0 %v1518
        %1582 = vmatpush1.bf16.msra.mxu0 %v1517
        %1583 = vmatprep.subr.bf16.mxu0 %v1520
        %1584 = vmatpush1.bf16.msra.mxu0 %v1519
        %1585 = vmatprep.subr.bf16.mxu0 %v1522
        %1586 = vmatpush1.bf16.msra.mxu0 %v1521
        %1587 = vmatprep.subr.bf16.mxu0 %v1524
        %1588 = vmatpush1.bf16.msra.mxu0 %v1523
        %1589 = vmatprep.subr.bf16.mxu0 %v1526
        %1590 = vmatpush1.bf16.msra.mxu0 %v1525
        %1591 = vmatprep.subr.bf16.mxu0 %v1528
        %1592 = vmatpush1.bf16.msra.mxu0 %v1527
        %1593 = vmatprep.subr.bf16.mxu0 %v1530
        %1594 = vmatpush1.bf16.msra.mxu0 %v1529
        %1595 = vmatprep.subr.bf16.mxu0 %v1532
        %1596 = vmatpush1.bf16.msra.mxu0 %v1531
        %1597 = vmatprep.subr.bf16.mxu0 %v1534
        %1598 = vmatpush1.bf16.msra.mxu0 %v1533
        %1599 = vmatprep.subr.bf16.mxu0 %v1536
        %1600 = vmatpush1.bf16.msra.mxu0 %v1535
        %1601 = vmatprep.subr.bf16.mxu0 %v1538
        %1602 = vmatpush1.bf16.msra.mxu0 %v1537
        %1603 = vmatprep.subr.bf16.mxu0 %v1540
        %1604 = vmatpush1.bf16.msra.mxu0 %v1539
        %1605 = vmatprep.subr.bf16.mxu0 %v1542
        %1606 = vmatpush1.bf16.msra.mxu0 %v1541
        %1607 = vmatprep.subr.bf16.mxu0 %v1544
        %1608 = vmatpush1.bf16.msra.mxu0 %v1543
        %1609 = vmatprep.subr.bf16.mxu0 %v1546
        %1610 = vmatpush1.bf16.msra.mxu0 %v1545
        %1611 = vmatprep.subr.bf16.mxu0 %v1548
        %1612 = vmatpush1.bf16.msra.mxu0 %v1547
        %1613 = vmatprep.mubr.bf16.mxu0 %v1386
        %1614 = vmatmul.mubr.bf16.gmra.mrb[0].mxu0 %v1385
        %v1615 = vpop.f32.mrb[0].mxu0
        %v1616 = vadd.f32 0.0, %v1615
        %v1617 = vpop.f32.mrb[0].mxu0
        %v1618 = vadd.f32 0.0, %v1617
        %v1619 = vpop.f32.mrb[0].mxu0
        %v1620 = vadd.f32 0.0, %v1619
        %v1621 = vpop.f32.mrb[0].mxu0
        %v1622 = vadd.f32 0.0, %v1621
        %1623 = vmatprep.mubr.bf16.mxu0 %v1388
        %1624 = vmatmul.mubr.bf16.gmra.mrb[0].mxu0 %v1387
        %v1625 = vpop.f32.mrb[0].mxu0
        %v1626 = vadd.f32 0.0, %v1625
        %v1627 = vpop.f32.mrb[0].mxu0
        %v1628 = vadd.f32 0.0, %v1627
        %v1629 = vpop.f32.mrb[0].mxu0
        %v1630 = vpop.f32.mrb[0].mxu0
        %1631 = vdwg.mxu0
        %v1632 = vunpack.c.l.bf16 %v295
        %v1633 = vunpack.c.h.bf16 %v295
        %v1634 = vunpack.c.l.bf16 %v296
        %v1635 = vunpack.c.h.bf16 %v296
        %v1636 = vunpack.c.l.bf16 %v297
        %v1637 = vunpack.c.h.bf16 %v297
        %v1638 = vadd.f32 %v1632, %v1616
        %v1639 = vadd.f32 %v1633, %v1618
        %v1640 = vadd.f32 %v1634, %v1620
        %v1641 = vadd.f32 %v1635, %v1622
        %v1642 = vadd.f32 %v1636, %v1626
        %v1643 = vadd.f32 %v1637, %v1628
        %v1644 = vld [vmem:[%s4] sm:$0x3]
        %v1646 = vlaneseq
        %v1647 = vshrl.u32 %v1646, 7
        %v1648 = vsub.s32 0, %v1647
        %v1649 = vrot.slane %v1644, %v1648
        %v1650 = vlaneseq
        %v1651 = vshrl.u32 %v1650, 7
        %v1652 = vsub.s32 1, %v1651
        %v1653 = vrot.slane %v1644, %v1652
        %v1656 = vadd.f32 %v1638, %v1649
        %v1657 = vadd.f32 %v1639, %v1653
        %v1658 = vadd.f32 %v1640, %v1649
        %v1659 = vadd.f32 %v1641, %v1653
        %v1660 = vadd.f32 %v1642, %v1649
        %v1661 = vadd.f32 %v1643, %v1653
        %v1662 = vadd.f32 %v1656, %v1657
        %1663 = vadd.xlane.f32.xlu0 %v1662
        %v1664 = vpop.xlane.xlu0 %1663
        %v1665 = vadd.f32 %v1658, %v1659
        %1666 = vadd.xlane.f32.xlu0 %v1665
        %v1667 = vpop.xlane.xlu0 %1666
        %v1668 = vadd.f32 %v1660, %v1661
        %1669 = vadd.xlane.f32.xlu0 %v1668
        %v1670 = vpop.xlane.xlu0 %1669
        %v1671 = vrcp.pop 256.0
        %v1672 = vmul.f32 %v1664, %v1671
        %v1673 = vmul.f32 %v1667, %v1671
        %v1674 = vmul.f32 %v1670, %v1671
        %v1675 = vsub.f32 %v1656, %v1672
        %v1676 = vsub.f32 %v1657, %v1672
        %v1677 = vsub.f32 %v1658, %v1673
        %v1678 = vsub.f32 %v1659, %v1673
        %v1679 = vsub.f32 %v1660, %v1674
        %v1680 = vsub.f32 %v1661, %v1674
        %v1681 = vmul.f32 %v1675, %v1675
        %v1682 = vmul.f32 %v1676, %v1676
        %v1683 = vmul.f32 %v1677, %v1677
        %v1684 = vmul.f32 %v1678, %v1678
        %v1685 = vmul.f32 %v1679, %v1679
        %v1686 = vmul.f32 %v1680, %v1680
        %v1687 = vadd.f32 %v1681, %v1682
        %1688 = vadd.xlane.f32.xlu0 %v1687
        %v1689 = vpop.xlane.xlu0 %1688
        %v1690 = vadd.f32 %v1683, %v1684
        %1691 = vadd.xlane.f32.xlu0 %v1690
        %v1692 = vpop.xlane.xlu0 %1691
        %v1693 = vadd.f32 %v1685, %v1686
        %1694 = vadd.xlane.f32.xlu0 %v1693
        %v1695 = vpop.xlane.xlu0 %1694
        %v1696 = vmul.f32 %v1689, %v1671
        %v1697 = vmul.f32 %v1692, %v1671
        %v1698 = vmul.f32 %v1695, %v1671
        %v1699 = vadd.f32 %v1696, 1e-05
        %v1700 = vadd.f32 %v1697, 1e-05
        %v1701 = vadd.f32 %v1698, 1e-05
        %v1702 = vrsqrt.pop %v1699
        %v1703 = vrsqrt.pop %v1700
        %v1704 = vrsqrt.pop %v1701
        %v1705 = vmul.f32 %v1675, %v1702
        %v1706 = vmul.f32 %v1676, %v1702
        %v1707 = vmul.f32 %v1677, %v1703
        %v1708 = vmul.f32 %v1678, %v1703
        %v1709 = vmul.f32 %v1679, %v1704
        %v1710 = vmul.f32 %v1680, %v1704
        %v1711 = vld [vmem:[%s5] sm:$0x3]
        %v1713 = vlaneseq
        %v1714 = vshrl.u32 %v1713, 7
        %v1715 = vsub.s32 0, %v1714
        %v1716 = vrot.slane %v1711, %v1715
        %v1717 = vlaneseq
        %v1718 = vshrl.u32 %v1717, 7
        %v1719 = vsub.s32 1, %v1718
        %v1720 = vrot.slane %v1711, %v1719
        %v1723 = vmul.f32 %v1705, %v1716
        %v1724 = vmul.f32 %v1706, %v1720
        %v1725 = vmul.f32 %v1707, %v1716
        %v1726 = vmul.f32 %v1708, %v1720
        %v1727 = vmul.f32 %v1709, %v1716
        %v1728 = vmul.f32 %v1710, %v1720
        %v1729 = vld [vmem:[%s6] sm:$0x3]
        %v1731 = vlaneseq
        %v1732 = vshrl.u32 %v1731, 7
        %v1733 = vsub.s32 0, %v1732
        %v1734 = vrot.slane %v1729, %v1733
        %v1735 = vlaneseq
        %v1736 = vshrl.u32 %v1735, 7
        %v1737 = vsub.s32 1, %v1736
        %v1738 = vrot.slane %v1729, %v1737
        %v1741 = vadd.f32 %v1723, %v1734
        %v1742 = vadd.f32 %v1724, %v1738
        %v1743 = vadd.f32 %v1725, %v1734
        %v1744 = vadd.f32 %v1726, %v1738
        %v1745 = vadd.f32 %v1727, %v1734
        %v1746 = vadd.f32 %v1728, %v1738
        %v1747 = vpack.c.bf16 %v1743, %v1741
        %v1748 = vpack.c.bf16 %v1744, %v1742
        %v1749 = vpack.c.bf16 %v1745, %v1745
        %v1750 = vpack.c.bf16 %v1746, %v1746
        %v1755 = vunpack.c.l.b16 %v1747
        %v1756 = vunpack.c.l.b16 %v1748
        %v1757 = vunpack.c.h.b16 %v1747
        %v1758 = vunpack.c.h.b16 %v1748
        %v1759 = vunpack.c.l.b16 %v1749
        %v1760 = vunpack.c.l.b16 %v1750
        %v1761 = vpack.c.b16 %v1756, %v1755
        %v1762 = vpack.c.b16 %v1758, %v1757
        %v1763 = vpack.c.b16 %v1760, %v1759
        %1767 = vst [vmem:[%s293] sm:$0xff] %v1761
        %1768 = vst [vmem:[%s293 + $0x8] sm:$0xff] %v1762
        %1769 = vst [vmem:[%s293 + $0x10] sm:$0xff] %v1763
        %p1770 = scmp.lt.s32.totalorder %s19, 1
        %s1771 = scalar_select %p1770, %s19, 1
        %s1772 = smul.addr %s1771, 6
        %s1773 = smul.addr %s1772, 4
        %s1774 = scalar_lea.vmem %s7, %s1773
        // Predicated region
        $region53: #{vit_forward.7} parent=47 // pred_check
          %p1775 = pneg %p189
        $region54: #{vit_forward.7} parent=47 // pred_check_branch
          %1777 = sbr.rel (%p1775) target = $region56
        $region55: #{vit_forward.7} parent=47 // pred_region
          _
        $region56: #{vit_forward.7} parent=47 // pred_fallthru
          _
      $region48: #{vit_forward.7} parent=5 // pred_fallthru
        _
      %p1778 = scmp.le.s32.totalorder 2, %s14
      // Predicated region
      $region57: #{vit_forward.7} parent=5 // pred_check
        %p1779 = pneg %p1778
      $region58: #{vit_forward.7} parent=5 // pred_check_branch
        %1781 = sbr.rel (%p1779) target = $region60
      $region59: #{vit_forward.7} parent=5 // pred_region
        %s1782 = ssub.s32 %s14, 2
        // Predicated region
        $region61: #{vit_forward.7} parent=59 // pred_check
          %p1783 = pneg %p195
        $region62: #{vit_forward.7} parent=59 // pred_check_branch
          %1785 = sbr.rel (%p1783) target = $region64
        $region63: #{vit_forward.7} parent=59 // pred_region
          %p1786 = scmp.lt.s32.totalorder %s20, 1
          %s1787 = scalar_select %p1786, %s20, 1
          %s1788 = smul.addr %s1787, 6
          %s1789 = smul.addr %s1788, 4
          %s1790 = scalar_lea.vmem %s7, %s1789
        $region64: #{vit_forward.7} parent=59 // pred_fallthru
          _
      $region60: #{vit_forward.7} parent=5 // pred_fallthru
        _
    $region6: #{vit_forward.7} parent=1 // loop_footer
      %s18 = sadd.s32 1, %s14
    $region7: #{vit_forward.7} parent=1 // loop_footer_branch
      %13 = sbr.rel target = $region3
    $region8: #{vit_forward.7} parent=1 // loop_exit
      _
    %1791 = vsyncpa [#allocation3], 1
    %s1792 = scalar_lea.sflag [#allocation3], 1
    %1793 = vsyncpa %s1792, 1

// kernel: vit_forward.11
$region0: #{vit_forward.11}
  #allocation0 [shape = 'u32[]', space=smem, size = 0x4, offset = 0x4, fixed_abs, tag = 'smem constant byte address 0x4 - core index']
  #allocation1 [shape = 'u32[144,128]{1,0:T(1,128)}', space=vmem, size = 0x12000, scoped, tag = 'internal scratch']
  %s0 = inlined_call_operand.vmem [shape: bf16[2,256], index: 0, kind: input, shape index: {}]
  %s1 = inlined_call_operand.vmem [shape: bf16[256,128], index: 1, kind: input, shape index: {}]
  %s2 = inlined_call_operand.vmem [shape: f32[1,128], index: 2, kind: input, shape index: {}]
  %s3 = inlined_call_operand.hbm [shape: f32[2,128], index: 3, kind: output, shape index: {}]
  %s4 = sld [smem:[#allocation0]]
  $region22: #{vit_forward.11} parent=0
    _
  %s6 = ssub.s32 1, %s4
  %s7 = scalar_select 0, %s6, %s4
  $region1: #{vit_forward.11} parent=0
    #allocation2 [shape = 'u8[1024]{0}', space=vmem, size = 0x400, scoped, tag = 'output window, operand 0, single buffered']
    #allocation3 [shape = 's32[1]{0}', space=sflag, size = 0x4, scoped, tag = 'scoped memory for vit_forward.11']
    %8 = vsyncpa [#allocation3], 0
    // Predicated region
    $region2: #{vit_forward.11} parent=1 // pred_check
      _
    $region3: #{vit_forward.11} parent=1 // pred_check_branch
      %10 = sbr.rel (0) target = $region5
    $region4: #{vit_forward.11} parent=1 // pred_region
      _
    $region5: #{vit_forward.11} parent=1 // pred_fallthru
      _
    // Predicated region
    $region6: #{vit_forward.11} parent=1 // pred_check
      _
    $region7: #{vit_forward.11} parent=1 // pred_check_branch
      %12 = sbr.rel (0) target = $region9
    $region8: #{vit_forward.11} parent=1 // pred_region
      _
    $region9: #{vit_forward.11} parent=1 // pred_fallthru
      _
    // Predicated region
    $region10: #{vit_forward.11} parent=1 // pred_check
      _
    $region11: #{vit_forward.11} parent=1 // pred_check_branch
      %14 = sbr.rel (0) target = $region13
    $region12: #{vit_forward.11} parent=1 // pred_region
      _
    $region13: #{vit_forward.11} parent=1 // pred_fallthru
      _
    %v16 = vld [vmem:[%s0] sm:$0x3]
    %v17 = vunpack.c.l.bf16 %v16
    %v20 = vunpack.c.l.s4 1983009808
    %v21 = vunpack.c.0.s8 %v20
    %v22 = vlaneseq
    %v23 = vshrl.u32 %v22, 7
    %v24 = vsub.s32 %v21, %v23
    %v25 = vrot.slane %v17, %v24
    %v26 = vcombine.high %v25, %v25
    %vm29 = vcmask 1041408
    %v30 = vsel %vm29, %v25, 0.0
    %v31 = vsel %vm29, %v26, 0.0
    %v32 = vadd.f32 %v30, %v31
    %33 = vadd.xlane.f32.xlu0 %v32
    %v34 = vpop.xlane.xlu0 %33
    %v35 = vrcp.pop 256.0
    %v36 = vmul.f32 %v34, %v35
    %v39 = vunpack.c.l.s4 269488144
    %v40 = vunpack.c.0.s8 %v39
    %v41 = vlaneseq
    %v42 = vshrl.u32 %v41, 7
    %v43 = vsub.s32 %v40, %v42
    %v44 = vrot.slane %v36, %v43
    %v46 = vsub.f32 %v17, %v44
    %v47 = vmul.f32 %v46, %v46
    %v50 = vunpack.c.l.s4 1983009808
    %v51 = vunpack.c.0.s8 %v50
    %v52 = vlaneseq
    %v53 = vshrl.u32 %v52, 7
    %v54 = vsub.s32 %v51, %v53
    %v55 = vrot.slane %v47, %v54
    %v56 = vcombine.high %v55, %v55
    %v59 = vsel %vm29, %v55, 0.0
    %v60 = vsel %vm29, %v56, 0.0
    %v61 = vadd.f32 %v59, %v60
    %62 = vadd.xlane.f32.xlu0 %v61
    %v63 = vpop.xlane.xlu0 %62
    %v64 = vmul.f32 %v63, %v35
    %v65 = vadd.f32 %v64, 1e-05
    %v66 = vrsqrt.pop %v65
    %v69 = vunpack.c.l.s4 269488144
    %v70 = vunpack.c.0.s8 %v69
    %v71 = vlaneseq
    %v72 = vshrl.u32 %v71, 7
    %v73 = vsub.s32 %v70, %v72
    %v74 = vrot.slane %v66, %v73
    %v76 = vmul.f32 %v46, %v74
    %v79 = vunpack.c.l.s4 1983009808
    %v80 = vunpack.c.0.s8 %v79
    %v81 = vlaneseq
    %v82 = vshrl.u32 %v81, 7
    %v83 = vsub.s32 %v80, %v82
    %v84 = vrot.slane %v76, %v83
    %v85 = vcombine.high %v84, %v84
    %v88 = vpack.c.bf16 %v84, %v84
    %v89 = vpack.c.bf16 %v85, %v85
    %v90 = vld [vmem:[%s1] sm:$0xf]
    %v91 = vld [vmem:[%s1 + $0x4] sm:$0xf]
    %v92 = vld [vmem:[%s1 + $0x8] sm:$0xf]
    %v93 = vld [vmem:[%s1 + $0xc] sm:$0xf]
    %v94 = vld [vmem:[%s1 + $0x10] sm:$0xf]
    %v95 = vld [vmem:[%s1 + $0x14] sm:$0xf]
    %v96 = vld [vmem:[%s1 + $0x18] sm:$0xf]
    %v97 = vld [vmem:[%s1 + $0x1c] sm:$0xf]
    %v98 = vld [vmem:[%s1 + $0x20] sm:$0xf]
    %v99 = vld [vmem:[%s1 + $0x24] sm:$0xf]
    %v100 = vld [vmem:[%s1 + $0x28] sm:$0xf]
    %v101 = vld [vmem:[%s1 + $0x2c] sm:$0xf]
    %v102 = vld [vmem:[%s1 + $0x30] sm:$0xf]
    %v103 = vld [vmem:[%s1 + $0x34] sm:$0xf]
    %v104 = vld [vmem:[%s1 + $0x38] sm:$0xf]
    %v105 = vld [vmem:[%s1 + $0x3c] sm:$0xf]
    %v106 = vld [vmem:[%s1 + $0x40] sm:$0xf]
    %v107 = vld [vmem:[%s1 + $0x44] sm:$0xf]
    %v108 = vld [vmem:[%s1 + $0x48] sm:$0xf]
    %v109 = vld [vmem:[%s1 + $0x4c] sm:$0xf]
    %v110 = vld [vmem:[%s1 + $0x50] sm:$0xf]
    %v111 = vld [vmem:[%s1 + $0x54] sm:$0xf]
    %v112 = vld [vmem:[%s1 + $0x58] sm:$0xf]
    %v113 = vld [vmem:[%s1 + $0x5c] sm:$0xf]
    %v114 = vld [vmem:[%s1 + $0x60] sm:$0xf]
    %v115 = vld [vmem:[%s1 + $0x64] sm:$0xf]
    %v116 = vld [vmem:[%s1 + $0x68] sm:$0xf]
    %v117 = vld [vmem:[%s1 + $0x6c] sm:$0xf]
    %v118 = vld [vmem:[%s1 + $0x70] sm:$0xf]
    %v119 = vld [vmem:[%s1 + $0x74] sm:$0xf]
    %v120 = vld [vmem:[%s1 + $0x78] sm:$0xf]
    %v121 = vld [vmem:[%s1 + $0x7c] sm:$0xf]
    %v122 = vld [vmem:[%s2] sm:$0x1]
    %v124 = vlaneseq
    %v125 = vshrl.u32 %v124, 7
    %v126 = vsub.s32 0, %v125
    %v127 = vrot.slane %v122, %v126
    %v161 = vunpack.c.l.b16 %v90
    %v162 = vunpack.c.l.b16 %v91
    %v163 = vunpack.c.l.b16 %v92
    %v164 = vunpack.c.l.b16 %v93
    %v165 = vunpack.c.l.b16 %v94
    %v166 = vunpack.c.l.b16 %v95
    %v167 = vunpack.c.l.b16 %v96
    %v168 = vunpack.c.l.b16 %v97
    %v169 = vunpack.c.l.b16 %v98
    %v170 = vunpack.c.l.b16 %v99
    %v171 = vunpack.c.l.b16 %v100
    %v172 = vunpack.c.l.b16 %v101
    %v173 = vunpack.c.l.b16 %v102
    %v174 = vunpack.c.l.b16 %v103
    %v175 = vunpack.c.l.b16 %v104
    %v176 = vunpack.c.l.b16 %v105
    %v177 = vunpack.c.l.b16 %v106
    %v178 = vunpack.c.l.b16 %v107
    %v179 = vunpack.c.l.b16 %v108
    %v180 = vunpack.c.l.b16 %v109
    %v181 = vunpack.c.l.b16 %v110
    %v182 = vunpack.c.l.b16 %v111
    %v183 = vunpack.c.l.b16 %v112
    %v184 = vunpack.c.l.b16 %v113
    %v185 = vunpack.c.l.b16 %v114
    %v186 = vunpack.c.l.b16 %v115
    %v187 = vunpack.c.l.b16 %v116
    %v188 = vunpack.c.l.b16 %v117
    %v189 = vunpack.c.l.b16 %v118
    %v190 = vunpack.c.l.b16 %v119
    %v191 = vunpack.c.l.b16 %v120
    %v192 = vunpack.c.l.b16 %v121
    %v193 = vpack.c.b16 %v162, %v161
    %v194 = vpack.c.b16 %v164, %v163
    %v195 = vpack.c.b16 %v166, %v165
    %v196 = vpack.c.b16 %v168, %v167
    %v197 = vpack.c.b16 %v170, %v169
    %v198 = vpack.c.b16 %v172, %v171
    %v199 = vpack.c.b16 %v174, %v173
    %v200 = vpack.c.b16 %v176, %v175
    %v201 = vpack.c.b16 %v178, %v177
    %v202 = vpack.c.b16 %v180, %v179
    %v203 = vpack.c.b16 %v182, %v181
    %v204 = vpack.c.b16 %v184, %v183
    %v205 = vpack.c.b16 %v186, %v185
    %v206 = vpack.c.b16 %v188, %v187
    %v207 = vpack.c.b16 %v190, %v189
    %v208 = vpack.c.b16 %v192, %v191
    %225 = vmatprep.subr.bf16.mxu0 0
    %226 = vmatpush1.bf16.msra.mxu0 %v193
    %227 = vmatprep.subr.bf16.mxu0 0
    %228 = vmatpush1.bf16.msra.mxu0 %v194
    %229 = vmatprep.subr.bf16.mxu0 0
    %230 = vmatpush1.bf16.msra.mxu0 %v195
    %231 = vmatprep.subr.bf16.mxu0 0
    %232 = vmatpush1.bf16.msra.mxu0 %v196
    %233 = vmatprep.subr.bf16.mxu0 0
    %234 = vmatpush1.bf16.msra.mxu0 %v197
    %235 = vmatprep.subr.bf16.mxu0 0
    %236 = vmatpush1.bf16.msra.mxu0 %v198
    %237 = vmatprep.subr.bf16.mxu0 0
    %238 = vmatpush1.bf16.msra.mxu0 %v199
    %239 = vmatprep.subr.bf16.mxu0 0
    %240 = vmatpush1.bf16.msra.mxu0 %v200
    %241 = vmatprep.subr.bf16.mxu0 0
    %242 = vmatpush1.bf16.msra.mxu0 %v201
    %243 = vmatprep.subr.bf16.mxu0 0
    %244 = vmatpush1.bf16.msra.mxu0 %v202
    %245 = vmatprep.subr.bf16.mxu0 0
    %246 = vmatpush1.bf16.msra.mxu0 %v203
    %247 = vmatprep.subr.bf16.mxu0 0
    %248 = vmatpush1.bf16.msra.mxu0 %v204
    %249 = vmatprep.subr.bf16.mxu0 0
    %250 = vmatpush1.bf16.msra.mxu0 %v205
    %251 = vmatprep.subr.bf16.mxu0 0
    %252 = vmatpush1.bf16.msra.mxu0 %v206
    %253 = vmatprep.subr.bf16.mxu0 0
    %254 = vmatpush1.bf16.msra.mxu0 %v207
    %255 = vmatprep.subr.bf16.mxu0 0
    %256 = vmatpush1.bf16.msra.mxu0 %v208
    %257 = vmatprep.mubr.bf16.mxu0 %v89
    %258 = vmatmul.mubr.bf16.gmra.mrb[0].mxu0 %v88
    %v259 = vpop.f32.mrb[0].mxu0
    %v260 = vadd.f32 %v127, %v259
    %v261 = vpop.f32.mrb[0].mxu0
    %v262 = vpop.f32.mrb[0].mxu0
    %v263 = vpop.f32.mrb[0].mxu0
    %264 = vdwg.mxu0
    %265 = vst [vmem:[#allocation2] sm:$0x3] %v260
    // Predicated region
    $region14: #{vit_forward.11} parent=1 // pred_check
      _
    $region15: #{vit_forward.11} parent=1 // pred_check_branch
      %267 = sbr.rel (0) target = $region17
    $region16: #{vit_forward.11} parent=1 // pred_region
      %s269 = ssub.s32 32, 32
      %270 = vsyncadd [#allocation3], %s269
      %s272 = sshll.u32 [#allocation2], 4
      %s273 = int_to_ptr.vmem [resolvable:$true] %s272
      %275 = dma.vmem_to_hbm [thread:$0]  %s273, 32, %s3, [#allocation3]
    $region17: #{vit_forward.11} parent=1 // pred_fallthru
      _
    // Predicated region
    $region18: #{vit_forward.11} parent=1 // pred_check
      _
    $region19: #{vit_forward.11} parent=1 // pred_check_branch
      %277 = sbr.rel (0) target = $region21
    $region20: #{vit_forward.11} parent=1 // pred_region
      %278 = dma.done [#allocation3], 32
    $region21: #{vit_forward.11} parent=1 // pred_fallthru
      _
    %279 = vsyncpa [#allocation3], 1

</llo_original>
